<compile_context>
chip_gen: v5e
topology: v5e:2x2
jax: 0.10.0
libtpu: 0.0.40
codegen_flags: <defaults>
</compile_context>

<pallas_src>
import functools

import jax
import jax.numpy as jnp
from jax.experimental import pallas as pl
from jax.experimental.pallas import tpu as pltpu


def _round_up(x: int, m: int) -> int:
    return (x + m - 1) // m * m


def _pick_tile_h(h: int, wp: int) -> int:
    """Largest divisor of h that keeps the matmul M-dim reasonably deep."""
    cap = max(8, 256 // wp)
    th = max(1, min(h, cap))
    while h % th:
        th -= 1
    return th


# ----------------------------------------------------------------------------
# Kernel: one (batch, H-tile) block per grid step.
# ----------------------------------------------------------------------------
def _basic_block_kernel(x_ref, w1_ref, b1_ref, w2_ref, b2_ref, o_ref,
                        acc1_ref, hid_ref, acc2_ref, *, dilation: int):
    """
    x_ref:    (1, H+4d, Wp, Cin)   padded NHWC image (resident per batch elem)
    w1_ref:   (9, Cin, Cout)       conv1 weights, BN1 scale folded, bf16
    b1_ref:   (1, Cout)            BN1 bias (beta - mean*scale), f32
    w2_ref:   (9, Cout, Cout)      conv2 weights, BN2 scale folded, bf16
    b2_ref:   (1, Cout)            BN2 bias, f32
    o_ref:    (1, TH, W, Cout)     output tile
    acc1_ref: ((TH+2d)*Wp, Cout)   f32 VMEM accumulator for conv1
    hid_ref:  (TH+2d, Wp, Cout)    f32 VMEM intermediate (conv2's padded input)
    acc2_ref: (TH*Wp, Cout)        f32 VMEM accumulator for conv2
    """
    d = dilation
    cin = x_ref.shape[-1]
    _, th, w_valid, cout = o_ref.shape
    wp = x_ref.shape[2]
    h_total = x_ref.shape[1] - 4 * d          # original image height
    r1 = th + 2 * d                           # conv1 rows incl. conv2 halo

    t = pl.program_id(1)
    row0 = pl.multiple_of(t * th, th)         # tile start row (x_pad coords)

    def shift_cols(arr, s):
        # jnp.roll convention: out[..., j, :] = arr[..., (j - s) % wp, :]
        s = s % wp
        if s == 0:
            return arr
        return pltpu.roll(arr, s, axis=1)

    # ---- conv1 (BN1 scale folded) over TH+2d rows, full padded width -------
    for ky in range(3):
        band = x_ref[0, pl.ds(row0 + ky * d, r1), :, :]           # (r1,wp,cin)
        for kx in range(3):
            tap = shift_cols(band, -(kx * d))                     # col j <- j+kx*d
            tap = tap.reshape(r1 * wp, cin).astype(jnp.bfloat16)  # bf16 MXU operand
            contrib = jnp.dot(tap, w1_ref[3 * ky + kx],
                              preferred_element_type=jnp.float32)
            if ky == 0 and kx == 0:
                acc1_ref[...] = contrib
            else:
                acc1_ref[...] += contrib

    hidden = jnp.maximum(acc1_ref[...] + b1_ref[...].astype(jnp.float32), 0.0)
    hidden = hidden.reshape(r1, wp, cout)

    # Zero junk columns (>= W) and halo rows outside the image (they are
    # conv2's zero padding), then shift right by d into the padded frame.
    col = jax.lax.broadcasted_iota(jnp.int32, (r1, wp, 1), 1)
    row = jax.lax.broadcasted_iota(jnp.int32, (r1, wp, 1), 0) + (row0 - d)
    keep = (col < w_valid) & (row >= 0) & (row < h_total)
    hid_ref[...] = shift_cols(jnp.where(keep, hidden, 0.0), d)

    # ---- conv2 (BN2 scale folded) over TH rows ------------------------------
    for ky in range(3):
        band = hid_ref[ky * d: ky * d + th, :, :]                 # (th,wp,cout)
        for kx in range(3):
            tap = shift_cols(band, -(kx * d))
            tap = tap.reshape(th * wp, cout).astype(jnp.bfloat16)
            contrib = jnp.dot(tap, w2_ref[3 * ky + kx],
                              preferred_element_type=jnp.float32)
            if ky == 0 and kx == 0:
                acc2_ref[...] = contrib
            else:
                acc2_ref[...] += contrib

    # ---- bias + identity residual (exact f32) + ReLU, lane-dense store ------
    res = x_ref[0, pl.ds(row0 + 2 * d, th), :, :]
    res = shift_cols(res, -d).astype(jnp.float32)                 # left-align
    out = acc2_ref[...].reshape(th, wp, cout) \
        + b2_ref[...].astype(jnp.float32) + res
    out = jnp.maximum(out, 0.0)
    o_ref[0] = out[:, :w_valid, :].astype(o_ref.dtype)


# ----------------------------------------------------------------------------
# Wrapper: BN folding + layout plumbing (parameter setup, not the hot path).
# ----------------------------------------------------------------------------
@functools.partial(jax.jit, static_argnames=("stride", "dilation", "eps"))
def basic_block(x, conv1_w, bn1, conv2_w, bn2, *,
                stride: int = 1, dilation: int = 1, eps: float = 1e-5):
    """Pallas equivalent of BasicBlock(inplanes, planes).forward(x); x is NCHW.

    bn1 / bn2 are (gamma, beta, running_mean, running_var) tuples.
    """
    if stride != 1:
        raise NotImplementedError("stride != 1 requires an external residual")

    n, cin, h, w = x.shape
    cout = conv1_w.shape[0]
    assert conv1_w.shape == (cout, cin, 3, 3)
    assert conv2_w.shape == (cout, cout, 3, 3)
    assert cin == cout, "identity residual requires inplanes == planes"
    d = dilation

    g1, be1, m1, v1 = bn1
    g2, be2, m2, v2 = bn2
    s1 = g1 / jnp.sqrt(v1 + eps)
    s2 = g2 / jnp.sqrt(v2 + eps)

    # Fold BN scale into conv weights; (Cout,Cin,3,3) -> (9,Cin,Cout), bf16.
    w1 = jnp.transpose(conv1_w * s1[:, None, None, None], (2, 3, 1, 0))
    w1 = w1.reshape(9, cin, cout).astype(jnp.bfloat16)
    w2 = jnp.transpose(conv2_w * s2[:, None, None, None], (2, 3, 1, 0))
    w2 = w2.reshape(9, cout, cout).astype(jnp.bfloat16)
    b1 = (be1 - m1 * s1).reshape(1, cout).astype(jnp.float32)
    b2 = (be2 - m2 * s2).reshape(1, cout).astype(jnp.float32)

    # NCHW -> NHWC; pad H by 2d (conv1 pad + conv2 halo), W left by d and
    # right up to a multiple of 8 (aligned sublane tiling / free reshapes).
    wp = _round_up(w + 2 * d, 8)
    x_nhwc = jnp.transpose(x, (0, 2, 3, 1))
    x_pad = jnp.pad(x_nhwc, ((0, 0), (2 * d, 2 * d), (d, wp - w - d), (0, 0)))

    th = _pick_tile_h(h, wp)
    r1 = th + 2 * d
    grid = (n, h // th)

    flops = 2 * 9 * n * h * w * (cin * cout + cout * cout)
    bytes_accessed = (x_pad.size * x_pad.dtype.itemsize
                      + n * h * w * cout * x.dtype.itemsize
                      + w1.size * w1.dtype.itemsize
                      + w2.size * w2.dtype.itemsize)
    cost = pl.CostEstimate(flops=flops, transcendentals=0,
                           bytes_accessed=bytes_accessed)

    kernel = functools.partial(_basic_block_kernel, dilation=d)
    out_nhwc = pl.pallas_call(
        kernel,
        out_shape=jax.ShapeDtypeStruct((n, h, w, cout), x.dtype),
        grid_spec=pltpu.PrefetchScalarGridSpec(
            num_scalar_prefetch=0,
            grid=grid,
            in_specs=[
                # Padded image: resident across the H-tile axis (index ignores t).
                pl.BlockSpec((1, h + 4 * d, wp, cin), lambda b, t: (b, 0, 0, 0)),
                pl.BlockSpec((9, cin, cout), lambda b, t: (0, 0, 0)),
                pl.BlockSpec((1, cout), lambda b, t: (0, 0)),
                pl.BlockSpec((9, cout, cout), lambda b, t: (0, 0, 0)),
                pl.BlockSpec((1, cout), lambda b, t: (0, 0)),
            ],
            out_specs=pl.BlockSpec((1, th, w, cout), lambda b, t: (b, t, 0, 0)),
            scratch_shapes=[
                pltpu.VMEM((r1 * wp, cout), jnp.float32),   # conv1 accumulator
                pltpu.VMEM((r1, wp, cout), jnp.float32),    # padded intermediate
                pltpu.VMEM((th * wp, cout), jnp.float32),   # conv2 accumulator
            ],
        ),
        compiler_params=pltpu.CompilerParams(
            dimension_semantics=("parallel", "parallel"),
            vmem_limit_bytes=48 * 1024 * 1024,
        ),
        cost_estimate=cost,
    )(x_pad, w1, b1, w2, b2)

    return jnp.transpose(out_nhwc, (0, 3, 1, 2))


# ----------------------------------------------------------------------------
# Pure-JAX reference (XLA conv, f32) for a numerical sanity check.
# ----------------------------------------------------------------------------
def _reference(x, conv1_w, bn1, conv2_w, bn2, *, dilation=1, eps=1e-5):
    def bn(y, p):
        g, b, m, v = p
        s = (g / jnp.sqrt(v + eps))[None, :, None, None]
        return (y - m[None, :, None, None]) * s + b[None, :, None, None]

    dn = jax.lax.conv_dimension_numbers(x.shape, conv1_w.shape,
                                        ("NCHW", "OIHW", "NCHW"))
    pad = ((dilation, dilation), (dilation, dilation))
    y = jax.lax.conv_general_dilated(x, conv1_w, (1, 1), pad,
                                     rhs_dilation=(dilation, dilation),
                                     dimension_numbers=dn)
    y = jnp.maximum(bn(y, bn1), 0.0)
    z = jax.lax.conv_general_dilated(y, conv2_w, (1, 1), pad,
                                     rhs_dilation=(dilation, dilation),
                                     dimension_numbers=dn)
    z = bn(z, bn2)
    return jnp.maximum(z + x, 0.0)


if __name__ == "__main__":
    key = jax.random.PRNGKey(0)
    # Small DLA-style feature map: batch=2, channels=128 (lane-dense), 16x16.
    n, c, h, w = 2, 128, 16, 16
    dilation = 1

    ks = jax.random.split(key, 11)
    x = jax.random.normal(ks[0], (n, c, h, w), jnp.float32)
    std = (2.0 / (9 * c)) ** 0.5
    conv1_w = std * jax.random.normal(ks[1], (c, c, 3, 3), jnp.float32)
    conv2_w = std * jax.random.normal(ks[2], (c, c, 3, 3), jnp.float32)
    bn1 = (jax.random.uniform(ks[3], (c,), jnp.float32, 0.5, 1.5),
           0.1 * jax.random.normal(ks[4], (c,), jnp.float32),
           0.1 * jax.random.normal(ks[5], (c,), jnp.float32),
           jax.random.uniform(ks[6], (c,), jnp.float32, 0.5, 1.5))
    bn2 = (jax.random.uniform(ks[7], (c,), jnp.float32, 0.5, 1.5),
           0.1 * jax.random.normal(ks[8], (c,), jnp.float32),
           0.1 * jax.random.normal(ks[9], (c,), jnp.float32),
           jax.random.uniform(ks[10], (c,), jnp.float32, 0.5, 1.5))

    y = basic_block(x, conv1_w, bn1, conv2_w, bn2, stride=1, dilation=dilation)
    y = jax.block_until_ready(y)
    assert y.shape == (n, c, h, w), y.shape
    assert y.dtype == x.dtype

    y_ref = jax.block_until_ready(
        _reference(x, conv1_w, bn1, conv2_w, bn2, dilation=dilation))
    # bf16 MXU operands (f32 accumulation) -> tolerance loosened vs f32 run.
    max_err = float(jnp.max(jnp.abs(y - y_ref)))
    rms_rel = float(jnp.sqrt(jnp.mean((y - y_ref) ** 2)
                             / (jnp.mean(y_ref ** 2) + 1e-12)))
    assert max_err < 2e-1, f"max abs err vs reference: {max_err}"
    assert rms_rel < 2e-2, f"relative RMS err vs reference: {rms_rel}"

    print("KERNEL_OK")
</pallas_src>

<mosaic_0001>
module attributes {stable_mosaic.version = 11 : i64} {
  func.func @_basic_block_kernel(%arg0: i32, %arg1: i32, %arg2: memref<1x20x24x128xf32, #tpu.memory_space<vmem>>, %arg3: memref<9x128x128xbf16, #tpu.memory_space<vmem>>, %arg4: memref<1x128xf32, #tpu.memory_space<vmem>>, %arg5: memref<9x128x128xbf16, #tpu.memory_space<vmem>>, %arg6: memref<1x128xf32, #tpu.memory_space<vmem>>, %arg7: memref<1x8x16x128xf32, #tpu.memory_space<vmem>>, %arg8: memref<240x128xf32, #tpu.memory_space<vmem>>, %arg9: memref<10x24x128xf32, #tpu.memory_space<vmem>>, %arg10: memref<192x128xf32, #tpu.memory_space<vmem>>) attributes {dimension_semantics = [#tpu.dimension_semantics<parallel>, #tpu.dimension_semantics<parallel>], iteration_bounds = array<i64: 2, 2>, scalar_prefetch = 0 : i64, scratch_operands = 3 : i64, tpu.core_type = #tpu.core_type<tc>, window_params = [{transform_indices = @transform_0, window_bounds = array<i64: 1, 20, 24, 128>}, {pipeline_mode = #tpu.pipeline_mode<synchronous>, transform_indices = @transform_1, window_bounds = array<i64: 9, 128, 128>}, {pipeline_mode = #tpu.pipeline_mode<synchronous>, transform_indices = @transform_2, window_bounds = array<i64: 1, 128>}, {pipeline_mode = #tpu.pipeline_mode<synchronous>, transform_indices = @transform_3, window_bounds = array<i64: 9, 128, 128>}, {pipeline_mode = #tpu.pipeline_mode<synchronous>, transform_indices = @transform_4, window_bounds = array<i64: 1, 128>}, {transform_indices = @transform_5, window_bounds = array<i64: 1, 8, 16, 128>}]} {
    %c8_i32 = arith.constant 8 : i32
    %0 = arith.muli %arg1, %c8_i32 : i32
    %1 = tpu.assume_multiple %0, 8 : i32
    %c0_i32 = arith.constant 0 : i32
    %2 = arith.addi %1, %c0_i32 : i32
    %c0 = arith.constant 0 : index
    %3 = arith.index_cast %2 : i32 to index
    %c0_0 = arith.constant 0 : index
    %c0_1 = arith.constant 0 : index
    %4 = vector.load %arg2[%c0, %3, %c0_0, %c0_1] : memref<1x20x24x128xf32, #tpu.memory_space<vmem>>, vector<1x10x24x128xf32>
    %5 = vector.shape_cast %4 : vector<1x10x24x128xf32> to vector<10x24x128xf32>
    %6 = vector.shape_cast %5 : vector<10x24x128xf32> to vector<240x128xf32>
    %7 = arith.truncf %6 : vector<240x128xf32> to vector<240x128xbf16>
    %c0_2 = arith.constant 0 : index
    %c0_3 = arith.constant 0 : index
    %c0_4 = arith.constant 0 : index
    %8 = vector.load %arg3[%c0_2, %c0_3, %c0_4] : memref<9x128x128xbf16, #tpu.memory_space<vmem>>, vector<1x128x128xbf16>
    %9 = vector.shape_cast %8 : vector<1x128x128xbf16> to vector<128x128xbf16>
    %cst = arith.constant dense<0.000000e+00> : vector<240x128xf32>
    %10 = tpu.matmul %7, %9, %cst {dimension_numbers = #tpu.dot_dimension_numbers<[1], [0], [0], [1], [0, 0, 1, 1], [], []>} : vector<240x128xbf16>, vector<128x128xbf16>, vector<240x128xf32> -> vector<240x128xf32>
    %c0_5 = arith.constant 0 : index
    %c0_6 = arith.constant 0 : index
    %11 = vector.load %arg8[%c0_5, %c0_6] : memref<240x128xf32, #tpu.memory_space<vmem>>, vector<240x128xf32>
    tpu.vector_store %arg8[%c0_5, %c0_6], %10 {strides = array<i32>} : memref<240x128xf32, #tpu.memory_space<vmem>>, vector<240x128xf32>,
    %c23_i32 = arith.constant 23 : i32
    %12 = tpu.dynamic_rotate %5 by %c23_i32 dim 1 : vector<10x24x128xf32>, i32 -> vector<10x24x128xf32>
    %13 = vector.shape_cast %12 : vector<10x24x128xf32> to vector<240x128xf32>
    %14 = arith.truncf %13 : vector<240x128xf32> to vector<240x128xbf16>
    %c1 = arith.constant 1 : index
    %c0_7 = arith.constant 0 : index
    %c0_8 = arith.constant 0 : index
    %15 = vector.load %arg3[%c1, %c0_7, %c0_8] : memref<9x128x128xbf16, #tpu.memory_space<vmem>>, vector<1x128x128xbf16>
    %16 = vector.shape_cast %15 : vector<1x128x128xbf16> to vector<128x128xbf16>
    %cst_9 = arith.constant dense<0.000000e+00> : vector<240x128xf32>
    %17 = tpu.matmul %14, %16, %cst_9 {dimension_numbers = #tpu.dot_dimension_numbers<[1], [0], [0], [1], [0, 0, 1, 1], [], []>} : vector<240x128xbf16>, vector<128x128xbf16>, vector<240x128xf32> -> vector<240x128xf32>
    %c0_10 = arith.constant 0 : index
    %c0_11 = arith.constant 0 : index
    %18 = vector.load %arg8[%c0_10, %c0_11] : memref<240x128xf32, #tpu.memory_space<vmem>>, vector<240x128xf32>
    %19 = arith.addf %18, %17 : vector<240x128xf32>
    %c0_12 = arith.constant 0 : index
    %c0_13 = arith.constant 0 : index
    %20 = vector.load %arg8[%c0_12, %c0_13] : memref<240x128xf32, #tpu.memory_space<vmem>>, vector<240x128xf32>
    tpu.vector_store %arg8[%c0_12, %c0_13], %19 {strides = array<i32>} : memref<240x128xf32, #tpu.memory_space<vmem>>, vector<240x128xf32>,
    %c22_i32 = arith.constant 22 : i32
    %21 = tpu.dynamic_rotate %5 by %c22_i32 dim 1 : vector<10x24x128xf32>, i32 -> vector<10x24x128xf32>
    %22 = vector.shape_cast %21 : vector<10x24x128xf32> to vector<240x128xf32>
    %23 = arith.truncf %22 : vector<240x128xf32> to vector<240x128xbf16>
    %c2 = arith.constant 2 : index
    %c0_14 = arith.constant 0 : index
    %c0_15 = arith.constant 0 : index
    %24 = vector.load %arg3[%c2, %c0_14, %c0_15] : memref<9x128x128xbf16, #tpu.memory_space<vmem>>, vector<1x128x128xbf16>
    %25 = vector.shape_cast %24 : vector<1x128x128xbf16> to vector<128x128xbf16>
    %cst_16 = arith.constant dense<0.000000e+00> : vector<240x128xf32>
    %26 = tpu.matmul %23, %25, %cst_16 {dimension_numbers = #tpu.dot_dimension_numbers<[1], [0], [0], [1], [0, 0, 1, 1], [], []>} : vector<240x128xbf16>, vector<128x128xbf16>, vector<240x128xf32> -> vector<240x128xf32>
    %c0_17 = arith.constant 0 : index
    %c0_18 = arith.constant 0 : index
    %27 = vector.load %arg8[%c0_17, %c0_18] : memref<240x128xf32, #tpu.memory_space<vmem>>, vector<240x128xf32>
    %28 = arith.addf %27, %26 : vector<240x128xf32>
    %c0_19 = arith.constant 0 : index
    %c0_20 = arith.constant 0 : index
    %29 = vector.load %arg8[%c0_19, %c0_20] : memref<240x128xf32, #tpu.memory_space<vmem>>, vector<240x128xf32>
    tpu.vector_store %arg8[%c0_19, %c0_20], %28 {strides = array<i32>} : memref<240x128xf32, #tpu.memory_space<vmem>>, vector<240x128xf32>,
    %c1_i32 = arith.constant 1 : i32
    %30 = arith.addi %1, %c1_i32 : i32
    %c0_21 = arith.constant 0 : index
    %31 = arith.index_cast %30 : i32 to index
    %c0_22 = arith.constant 0 : index
    %c0_23 = arith.constant 0 : index
    %32 = vector.load %arg2[%c0_21, %31, %c0_22, %c0_23] : memref<1x20x24x128xf32, #tpu.memory_space<vmem>>, vector<1x10x24x128xf32>
    %33 = vector.shape_cast %32 : vector<1x10x24x128xf32> to vector<10x24x128xf32>
    %34 = vector.shape_cast %33 : vector<10x24x128xf32> to vector<240x128xf32>
    %35 = arith.truncf %34 : vector<240x128xf32> to vector<240x128xbf16>
    %c3 = arith.constant 3 : index
    %c0_24 = arith.constant 0 : index
    %c0_25 = arith.constant 0 : index
    %36 = vector.load %arg3[%c3, %c0_24, %c0_25] : memref<9x128x128xbf16, #tpu.memory_space<vmem>>, vector<1x128x128xbf16>
    %37 = vector.shape_cast %36 : vector<1x128x128xbf16> to vector<128x128xbf16>
    %cst_26 = arith.constant dense<0.000000e+00> : vector<240x128xf32>
    %38 = tpu.matmul %35, %37, %cst_26 {dimension_numbers = #tpu.dot_dimension_numbers<[1], [0], [0], [1], [0, 0, 1, 1], [], []>} : vector<240x128xbf16>, vector<128x128xbf16>, vector<240x128xf32> -> vector<240x128xf32>
    %c0_27 = arith.constant 0 : index
    %c0_28 = arith.constant 0 : index
    %39 = vector.load %arg8[%c0_27, %c0_28] : memref<240x128xf32, #tpu.memory_space<vmem>>, vector<240x128xf32>
    %40 = arith.addf %39, %38 : vector<240x128xf32>
    %c0_29 = arith.constant 0 : index
    %c0_30 = arith.constant 0 : index
    %41 = vector.load %arg8[%c0_29, %c0_30] : memref<240x128xf32, #tpu.memory_space<vmem>>, vector<240x128xf32>
    tpu.vector_store %arg8[%c0_29, %c0_30], %40 {strides = array<i32>} : memref<240x128xf32, #tpu.memory_space<vmem>>, vector<240x128xf32>,
    %c23_i32_31 = arith.constant 23 : i32
    %42 = tpu.dynamic_rotate %33 by %c23_i32_31 dim 1 : vector<10x24x128xf32>, i32 -> vector<10x24x128xf32>
    %43 = vector.shape_cast %42 : vector<10x24x128xf32> to vector<240x128xf32>
    %44 = arith.truncf %43 : vector<240x128xf32> to vector<240x128xbf16>
    %c4 = arith.constant 4 : index
    %c0_32 = arith.constant 0 : index
    %c0_33 = arith.constant 0 : index
    %45 = vector.load %arg3[%c4, %c0_32, %c0_33] : memref<9x128x128xbf16, #tpu.memory_space<vmem>>, vector<1x128x128xbf16>
    %46 = vector.shape_cast %45 : vector<1x128x128xbf16> to vector<128x128xbf16>
    %cst_34 = arith.constant dense<0.000000e+00> : vector<240x128xf32>
    %47 = tpu.matmul %44, %46, %cst_34 {dimension_numbers = #tpu.dot_dimension_numbers<[1], [0], [0], [1], [0, 0, 1, 1], [], []>} : vector<240x128xbf16>, vector<128x128xbf16>, vector<240x128xf32> -> vector<240x128xf32>
    %c0_35 = arith.constant 0 : index
    %c0_36 = arith.constant 0 : index
    %48 = vector.load %arg8[%c0_35, %c0_36] : memref<240x128xf32, #tpu.memory_space<vmem>>, vector<240x128xf32>
    %49 = arith.addf %48, %47 : vector<240x128xf32>
    %c0_37 = arith.constant 0 : index
    %c0_38 = arith.constant 0 : index
    %50 = vector.load %arg8[%c0_37, %c0_38] : memref<240x128xf32, #tpu.memory_space<vmem>>, vector<240x128xf32>
    tpu.vector_store %arg8[%c0_37, %c0_38], %49 {strides = array<i32>} : memref<240x128xf32, #tpu.memory_space<vmem>>, vector<240x128xf32>,
    %c22_i32_39 = arith.constant 22 : i32
    %51 = tpu.dynamic_rotate %33 by %c22_i32_39 dim 1 : vector<10x24x128xf32>, i32 -> vector<10x24x128xf32>
    %52 = vector.shape_cast %51 : vector<10x24x128xf32> to vector<240x128xf32>
    %53 = arith.truncf %52 : vector<240x128xf32> to vector<240x128xbf16>
    %c5 = arith.constant 5 : index
    %c0_40 = arith.constant 0 : index
    %c0_41 = arith.constant 0 : index
    %54 = vector.load %arg3[%c5, %c0_40, %c0_41] : memref<9x128x128xbf16, #tpu.memory_space<vmem>>, vector<1x128x128xbf16>
    %55 = vector.shape_cast %54 : vector<1x128x128xbf16> to vector<128x128xbf16>
    %cst_42 = arith.constant dense<0.000000e+00> : vector<240x128xf32>
    %56 = tpu.matmul %53, %55, %cst_42 {dimension_numbers = #tpu.dot_dimension_numbers<[1], [0], [0], [1], [0, 0, 1, 1], [], []>} : vector<240x128xbf16>, vector<128x128xbf16>, vector<240x128xf32> -> vector<240x128xf32>
    %c0_43 = arith.constant 0 : index
    %c0_44 = arith.constant 0 : index
    %57 = vector.load %arg8[%c0_43, %c0_44] : memref<240x128xf32, #tpu.memory_space<vmem>>, vector<240x128xf32>
    %58 = arith.addf %57, %56 : vector<240x128xf32>
    %c0_45 = arith.constant 0 : index
    %c0_46 = arith.constant 0 : index
    %59 = vector.load %arg8[%c0_45, %c0_46] : memref<240x128xf32, #tpu.memory_space<vmem>>, vector<240x128xf32>
    tpu.vector_store %arg8[%c0_45, %c0_46], %58 {strides = array<i32>} : memref<240x128xf32, #tpu.memory_space<vmem>>, vector<240x128xf32>,
    %c2_i32 = arith.constant 2 : i32
    %60 = arith.addi %1, %c2_i32 : i32
    %c0_47 = arith.constant 0 : index
    %61 = arith.index_cast %60 : i32 to index
    %c0_48 = arith.constant 0 : index
    %c0_49 = arith.constant 0 : index
    %62 = vector.load %arg2[%c0_47, %61, %c0_48, %c0_49] : memref<1x20x24x128xf32, #tpu.memory_space<vmem>>, vector<1x10x24x128xf32>
    %63 = vector.shape_cast %62 : vector<1x10x24x128xf32> to vector<10x24x128xf32>
    %64 = vector.shape_cast %63 : vector<10x24x128xf32> to vector<240x128xf32>
    %65 = arith.truncf %64 : vector<240x128xf32> to vector<240x128xbf16>
    %c6 = arith.constant 6 : index
    %c0_50 = arith.constant 0 : index
    %c0_51 = arith.constant 0 : index
    %66 = vector.load %arg3[%c6, %c0_50, %c0_51] : memref<9x128x128xbf16, #tpu.memory_space<vmem>>, vector<1x128x128xbf16>
    %67 = vector.shape_cast %66 : vector<1x128x128xbf16> to vector<128x128xbf16>
    %cst_52 = arith.constant dense<0.000000e+00> : vector<240x128xf32>
    %68 = tpu.matmul %65, %67, %cst_52 {dimension_numbers = #tpu.dot_dimension_numbers<[1], [0], [0], [1], [0, 0, 1, 1], [], []>} : vector<240x128xbf16>, vector<128x128xbf16>, vector<240x128xf32> -> vector<240x128xf32>
    %c0_53 = arith.constant 0 : index
    %c0_54 = arith.constant 0 : index
    %69 = vector.load %arg8[%c0_53, %c0_54] : memref<240x128xf32, #tpu.memory_space<vmem>>, vector<240x128xf32>
    %70 = arith.addf %69, %68 : vector<240x128xf32>
    %c0_55 = arith.constant 0 : index
    %c0_56 = arith.constant 0 : index
    %71 = vector.load %arg8[%c0_55, %c0_56] : memref<240x128xf32, #tpu.memory_space<vmem>>, vector<240x128xf32>
    tpu.vector_store %arg8[%c0_55, %c0_56], %70 {strides = array<i32>} : memref<240x128xf32, #tpu.memory_space<vmem>>, vector<240x128xf32>,
    %c23_i32_57 = arith.constant 23 : i32
    %72 = tpu.dynamic_rotate %63 by %c23_i32_57 dim 1 : vector<10x24x128xf32>, i32 -> vector<10x24x128xf32>
    %73 = vector.shape_cast %72 : vector<10x24x128xf32> to vector<240x128xf32>
    %74 = arith.truncf %73 : vector<240x128xf32> to vector<240x128xbf16>
    %c7 = arith.constant 7 : index
    %c0_58 = arith.constant 0 : index
    %c0_59 = arith.constant 0 : index
    %75 = vector.load %arg3[%c7, %c0_58, %c0_59] : memref<9x128x128xbf16, #tpu.memory_space<vmem>>, vector<1x128x128xbf16>
    %76 = vector.shape_cast %75 : vector<1x128x128xbf16> to vector<128x128xbf16>
    %cst_60 = arith.constant dense<0.000000e+00> : vector<240x128xf32>
    %77 = tpu.matmul %74, %76, %cst_60 {dimension_numbers = #tpu.dot_dimension_numbers<[1], [0], [0], [1], [0, 0, 1, 1], [], []>} : vector<240x128xbf16>, vector<128x128xbf16>, vector<240x128xf32> -> vector<240x128xf32>
    %c0_61 = arith.constant 0 : index
    %c0_62 = arith.constant 0 : index
    %78 = vector.load %arg8[%c0_61, %c0_62] : memref<240x128xf32, #tpu.memory_space<vmem>>, vector<240x128xf32>
    %79 = arith.addf %78, %77 : vector<240x128xf32>
    %c0_63 = arith.constant 0 : index
    %c0_64 = arith.constant 0 : index
    %80 = vector.load %arg8[%c0_63, %c0_64] : memref<240x128xf32, #tpu.memory_space<vmem>>, vector<240x128xf32>
    tpu.vector_store %arg8[%c0_63, %c0_64], %79 {strides = array<i32>} : memref<240x128xf32, #tpu.memory_space<vmem>>, vector<240x128xf32>,
    %c22_i32_65 = arith.constant 22 : i32
    %81 = tpu.dynamic_rotate %63 by %c22_i32_65 dim 1 : vector<10x24x128xf32>, i32 -> vector<10x24x128xf32>
    %82 = vector.shape_cast %81 : vector<10x24x128xf32> to vector<240x128xf32>
    %83 = arith.truncf %82 : vector<240x128xf32> to vector<240x128xbf16>
    %c8 = arith.constant 8 : index
    %c0_66 = arith.constant 0 : index
    %c0_67 = arith.constant 0 : index
    %84 = vector.load %arg3[%c8, %c0_66, %c0_67] : memref<9x128x128xbf16, #tpu.memory_space<vmem>>, vector<1x128x128xbf16>
    %85 = vector.shape_cast %84 : vector<1x128x128xbf16> to vector<128x128xbf16>
    %cst_68 = arith.constant dense<0.000000e+00> : vector<240x128xf32>
    %86 = tpu.matmul %83, %85, %cst_68 {dimension_numbers = #tpu.dot_dimension_numbers<[1], [0], [0], [1], [0, 0, 1, 1], [], []>} : vector<240x128xbf16>, vector<128x128xbf16>, vector<240x128xf32> -> vector<240x128xf32>
    %c0_69 = arith.constant 0 : index
    %c0_70 = arith.constant 0 : index
    %87 = vector.load %arg8[%c0_69, %c0_70] : memref<240x128xf32, #tpu.memory_space<vmem>>, vector<240x128xf32>
    %88 = arith.addf %87, %86 : vector<240x128xf32>
    %c0_71 = arith.constant 0 : index
    %c0_72 = arith.constant 0 : index
    %89 = vector.load %arg8[%c0_71, %c0_72] : memref<240x128xf32, #tpu.memory_space<vmem>>, vector<240x128xf32>
    tpu.vector_store %arg8[%c0_71, %c0_72], %88 {strides = array<i32>} : memref<240x128xf32, #tpu.memory_space<vmem>>, vector<240x128xf32>,
    %c0_73 = arith.constant 0 : index
    %c0_74 = arith.constant 0 : index
    %90 = vector.load %arg8[%c0_73, %c0_74] : memref<240x128xf32, #tpu.memory_space<vmem>>, vector<240x128xf32>
    %c0_75 = arith.constant 0 : index
    %c0_76 = arith.constant 0 : index
    %91 = vector.load %arg4[%c0_75, %c0_76] : memref<1x128xf32, #tpu.memory_space<vmem>>, vector<1x128xf32>
    %92 = vector.broadcast %91 : vector<1x128xf32> to vector<240x128xf32>
    %93 = arith.addf %90, %92 : vector<240x128xf32>
    %cst_77 = arith.constant 0.000000e+00 : f32
    %94 = vector.broadcast %cst_77 : f32 to vector<240x128xf32>
    %95 = arith.maximumf %93, %94 : vector<240x128xf32>
    %96 = vector.shape_cast %95 : vector<240x128xf32> to vector<10x24x128xf32>
    %97 = tpu.iota {dimensions = array<i32: 1>} : vector<10x24x1xi32>
    %98 = tpu.iota {dimensions = array<i32: 0>} : vector<10x24x1xi32>
    %c1_i32_78 = arith.constant 1 : i32
    %99 = arith.subi %1, %c1_i32_78 : i32
    %100 = vector.broadcast %99 : i32 to vector<10x24x1xi32>
    %101 = arith.addi %98, %100 : vector<10x24x1xi32>
    %c16_i32 = arith.constant 16 : i32
    %102 = vector.broadcast %c16_i32 : i32 to vector<10x24x1xi32>
    %103 = arith.cmpi slt, %97, %102 : vector<10x24x1xi32>
    %c0_i32_79 = arith.constant 0 : i32
    %104 = vector.broadcast %c0_i32_79 : i32 to vector<10x24x1xi32>
    %105 = arith.cmpi sge, %101, %104 : vector<10x24x1xi32>
    %106 = arith.andi %103, %105 : vector<10x24x1xi1>
    %c16_i32_80 = arith.constant 16 : i32
    %107 = vector.broadcast %c16_i32_80 : i32 to vector<10x24x1xi32>
    %108 = arith.cmpi slt, %101, %107 : vector<10x24x1xi32>
    %109 = arith.andi %106, %108 : vector<10x24x1xi1>
    %cst_81 = arith.constant 0.000000e+00 : f32
    %110 = vector.shape_cast %109 : vector<10x24x1xi1> to vector<10x24x1xi1>
    %111 = vector.broadcast %110 : vector<10x24x1xi1> to vector<10x24x128xi1>
    %112 = vector.broadcast %cst_81 : f32 to vector<10x24x128xf32>
    %113 = arith.select %111, %96, %112 : vector<10x24x128xi1>, vector<10x24x128xf32>
    %c1_i32_82 = arith.constant 1 : i32
    %114 = tpu.dynamic_rotate %113 by %c1_i32_82 dim 1 : vector<10x24x128xf32>, i32 -> vector<10x24x128xf32>
    %c0_83 = arith.constant 0 : index
    %c0_84 = arith.constant 0 : index
    %c0_85 = arith.constant 0 : index
    %115 = vector.load %arg9[%c0_83, %c0_84, %c0_85] : memref<10x24x128xf32, #tpu.memory_space<vmem>>, vector<10x24x128xf32>
    tpu.vector_store %arg9[%c0_83, %c0_84, %c0_85], %114 {strides = array<i32>} : memref<10x24x128xf32, #tpu.memory_space<vmem>>, vector<10x24x128xf32>,
    %c0_86 = arith.constant 0 : index
    %c0_87 = arith.constant 0 : index
    %c0_88 = arith.constant 0 : index
    %116 = vector.load %arg9[%c0_86, %c0_87, %c0_88] : memref<10x24x128xf32, #tpu.memory_space<vmem>>, vector<8x24x128xf32>
    %117 = vector.shape_cast %116 : vector<8x24x128xf32> to vector<192x128xf32>
    %118 = arith.truncf %117 : vector<192x128xf32> to vector<192x128xbf16>
    %c0_89 = arith.constant 0 : index
    %c0_90 = arith.constant 0 : index
    %c0_91 = arith.constant 0 : index
    %119 = vector.load %arg5[%c0_89, %c0_90, %c0_91] : memref<9x128x128xbf16, #tpu.memory_space<vmem>>, vector<1x128x128xbf16>
    %120 = vector.shape_cast %119 : vector<1x128x128xbf16> to vector<128x128xbf16>
    %cst_92 = arith.constant dense<0.000000e+00> : vector<192x128xf32>
    %121 = tpu.matmul %118, %120, %cst_92 {dimension_numbers = #tpu.dot_dimension_numbers<[1], [0], [0], [1], [0, 0, 1, 1], [], []>} : vector<192x128xbf16>, vector<128x128xbf16>, vector<192x128xf32> -> vector<192x128xf32>
    %c0_93 = arith.constant 0 : index
    %c0_94 = arith.constant 0 : index
    %122 = vector.load %arg10[%c0_93, %c0_94] : memref<192x128xf32, #tpu.memory_space<vmem>>, vector<192x128xf32>
    tpu.vector_store %arg10[%c0_93, %c0_94], %121 {strides = array<i32>} : memref<192x128xf32, #tpu.memory_space<vmem>>, vector<192x128xf32>,
    %c23_i32_95 = arith.constant 23 : i32
    %123 = tpu.dynamic_rotate %116 by %c23_i32_95 dim 1 : vector<8x24x128xf32>, i32 -> vector<8x24x128xf32>
    %124 = vector.shape_cast %123 : vector<8x24x128xf32> to vector<192x128xf32>
    %125 = arith.truncf %124 : vector<192x128xf32> to vector<192x128xbf16>
    %c1_96 = arith.constant 1 : index
    %c0_97 = arith.constant 0 : index
    %c0_98 = arith.constant 0 : index
    %126 = vector.load %arg5[%c1_96, %c0_97, %c0_98] : memref<9x128x128xbf16, #tpu.memory_space<vmem>>, vector<1x128x128xbf16>
    %127 = vector.shape_cast %126 : vector<1x128x128xbf16> to vector<128x128xbf16>
    %cst_99 = arith.constant dense<0.000000e+00> : vector<192x128xf32>
    %128 = tpu.matmul %125, %127, %cst_99 {dimension_numbers = #tpu.dot_dimension_numbers<[1], [0], [0], [1], [0, 0, 1, 1], [], []>} : vector<192x128xbf16>, vector<128x128xbf16>, vector<192x128xf32> -> vector<192x128xf32>
    %c0_100 = arith.constant 0 : index
    %c0_101 = arith.constant 0 : index
    %129 = vector.load %arg10[%c0_100, %c0_101] : memref<192x128xf32, #tpu.memory_space<vmem>>, vector<192x128xf32>
    %130 = arith.addf %129, %128 : vector<192x128xf32>
    %c0_102 = arith.constant 0 : index
    %c0_103 = arith.constant 0 : index
    %131 = vector.load %arg10[%c0_102, %c0_103] : memref<192x128xf32, #tpu.memory_space<vmem>>, vector<192x128xf32>
    tpu.vector_store %arg10[%c0_102, %c0_103], %130 {strides = array<i32>} : memref<192x128xf32, #tpu.memory_space<vmem>>, vector<192x128xf32>,
    %c22_i32_104 = arith.constant 22 : i32
    %132 = tpu.dynamic_rotate %116 by %c22_i32_104 dim 1 : vector<8x24x128xf32>, i32 -> vector<8x24x128xf32>
    %133 = vector.shape_cast %132 : vector<8x24x128xf32> to vector<192x128xf32>
    %134 = arith.truncf %133 : vector<192x128xf32> to vector<192x128xbf16>
    %c2_105 = arith.constant 2 : index
    %c0_106 = arith.constant 0 : index
    %c0_107 = arith.constant 0 : index
    %135 = vector.load %arg5[%c2_105, %c0_106, %c0_107] : memref<9x128x128xbf16, #tpu.memory_space<vmem>>, vector<1x128x128xbf16>
    %136 = vector.shape_cast %135 : vector<1x128x128xbf16> to vector<128x128xbf16>
    %cst_108 = arith.constant dense<0.000000e+00> : vector<192x128xf32>
    %137 = tpu.matmul %134, %136, %cst_108 {dimension_numbers = #tpu.dot_dimension_numbers<[1], [0], [0], [1], [0, 0, 1, 1], [], []>} : vector<192x128xbf16>, vector<128x128xbf16>, vector<192x128xf32> -> vector<192x128xf32>
    %c0_109 = arith.constant 0 : index
    %c0_110 = arith.constant 0 : index
    %138 = vector.load %arg10[%c0_109, %c0_110] : memref<192x128xf32, #tpu.memory_space<vmem>>, vector<192x128xf32>
    %139 = arith.addf %138, %137 : vector<192x128xf32>
    %c0_111 = arith.constant 0 : index
    %c0_112 = arith.constant 0 : index
    %140 = vector.load %arg10[%c0_111, %c0_112] : memref<192x128xf32, #tpu.memory_space<vmem>>, vector<192x128xf32>
    tpu.vector_store %arg10[%c0_111, %c0_112], %139 {strides = array<i32>} : memref<192x128xf32, #tpu.memory_space<vmem>>, vector<192x128xf32>,
    %c1_113 = arith.constant 1 : index
    %c0_114 = arith.constant 0 : index
    %c0_115 = arith.constant 0 : index
    %141 = vector.load %arg9[%c1_113, %c0_114, %c0_115] : memref<10x24x128xf32, #tpu.memory_space<vmem>>, vector<8x24x128xf32>
    %142 = vector.shape_cast %141 : vector<8x24x128xf32> to vector<192x128xf32>
    %143 = arith.truncf %142 : vector<192x128xf32> to vector<192x128xbf16>
    %c3_116 = arith.constant 3 : index
    %c0_117 = arith.constant 0 : index
    %c0_118 = arith.constant 0 : index
    %144 = vector.load %arg5[%c3_116, %c0_117, %c0_118] : memref<9x128x128xbf16, #tpu.memory_space<vmem>>, vector<1x128x128xbf16>
    %145 = vector.shape_cast %144 : vector<1x128x128xbf16> to vector<128x128xbf16>
    %cst_119 = arith.constant dense<0.000000e+00> : vector<192x128xf32>
    %146 = tpu.matmul %143, %145, %cst_119 {dimension_numbers = #tpu.dot_dimension_numbers<[1], [0], [0], [1], [0, 0, 1, 1], [], []>} : vector<192x128xbf16>, vector<128x128xbf16>, vector<192x128xf32> -> vector<192x128xf32>
    %c0_120 = arith.constant 0 : index
    %c0_121 = arith.constant 0 : index
    %147 = vector.load %arg10[%c0_120, %c0_121] : memref<192x128xf32, #tpu.memory_space<vmem>>, vector<192x128xf32>
    %148 = arith.addf %147, %146 : vector<192x128xf32>
    %c0_122 = arith.constant 0 : index
    %c0_123 = arith.constant 0 : index
    %149 = vector.load %arg10[%c0_122, %c0_123] : memref<192x128xf32, #tpu.memory_space<vmem>>, vector<192x128xf32>
    tpu.vector_store %arg10[%c0_122, %c0_123], %148 {strides = array<i32>} : memref<192x128xf32, #tpu.memory_space<vmem>>, vector<192x128xf32>,
    %c23_i32_124 = arith.constant 23 : i32
    %150 = tpu.dynamic_rotate %141 by %c23_i32_124 dim 1 : vector<8x24x128xf32>, i32 -> vector<8x24x128xf32>
    %151 = vector.shape_cast %150 : vector<8x24x128xf32> to vector<192x128xf32>
    %152 = arith.truncf %151 : vector<192x128xf32> to vector<192x128xbf16>
    %c4_125 = arith.constant 4 : index
    %c0_126 = arith.constant 0 : index
    %c0_127 = arith.constant 0 : index
    %153 = vector.load %arg5[%c4_125, %c0_126, %c0_127] : memref<9x128x128xbf16, #tpu.memory_space<vmem>>, vector<1x128x128xbf16>
    %154 = vector.shape_cast %153 : vector<1x128x128xbf16> to vector<128x128xbf16>
    %cst_128 = arith.constant dense<0.000000e+00> : vector<192x128xf32>
    %155 = tpu.matmul %152, %154, %cst_128 {dimension_numbers = #tpu.dot_dimension_numbers<[1], [0], [0], [1], [0, 0, 1, 1], [], []>} : vector<192x128xbf16>, vector<128x128xbf16>, vector<192x128xf32> -> vector<192x128xf32>
    %c0_129 = arith.constant 0 : index
    %c0_130 = arith.constant 0 : index
    %156 = vector.load %arg10[%c0_129, %c0_130] : memref<192x128xf32, #tpu.memory_space<vmem>>, vector<192x128xf32>
    %157 = arith.addf %156, %155 : vector<192x128xf32>
    %c0_131 = arith.constant 0 : index
    %c0_132 = arith.constant 0 : index
    %158 = vector.load %arg10[%c0_131, %c0_132] : memref<192x128xf32, #tpu.memory_space<vmem>>, vector<192x128xf32>
    tpu.vector_store %arg10[%c0_131, %c0_132], %157 {strides = array<i32>} : memref<192x128xf32, #tpu.memory_space<vmem>>, vector<192x128xf32>,
    %c22_i32_133 = arith.constant 22 : i32
    %159 = tpu.dynamic_rotate %141 by %c22_i32_133 dim 1 : vector<8x24x128xf32>, i32 -> vector<8x24x128xf32>
    %160 = vector.shape_cast %159 : vector<8x24x128xf32> to vector<192x128xf32>
    %161 = arith.truncf %160 : vector<192x128xf32> to vector<192x128xbf16>
    %c5_134 = arith.constant 5 : index
    %c0_135 = arith.constant 0 : index
    %c0_136 = arith.constant 0 : index
    %162 = vector.load %arg5[%c5_134, %c0_135, %c0_136] : memref<9x128x128xbf16, #tpu.memory_space<vmem>>, vector<1x128x128xbf16>
    %163 = vector.shape_cast %162 : vector<1x128x128xbf16> to vector<128x128xbf16>
    %cst_137 = arith.constant dense<0.000000e+00> : vector<192x128xf32>
    %164 = tpu.matmul %161, %163, %cst_137 {dimension_numbers = #tpu.dot_dimension_numbers<[1], [0], [0], [1], [0, 0, 1, 1], [], []>} : vector<192x128xbf16>, vector<128x128xbf16>, vector<192x128xf32> -> vector<192x128xf32>
    %c0_138 = arith.constant 0 : index
    %c0_139 = arith.constant 0 : index
    %165 = vector.load %arg10[%c0_138, %c0_139] : memref<192x128xf32, #tpu.memory_space<vmem>>, vector<192x128xf32>
    %166 = arith.addf %165, %164 : vector<192x128xf32>
    %c0_140 = arith.constant 0 : index
    %c0_141 = arith.constant 0 : index
    %167 = vector.load %arg10[%c0_140, %c0_141] : memref<192x128xf32, #tpu.memory_space<vmem>>, vector<192x128xf32>
    tpu.vector_store %arg10[%c0_140, %c0_141], %166 {strides = array<i32>} : memref<192x128xf32, #tpu.memory_space<vmem>>, vector<192x128xf32>,
    %c2_142 = arith.constant 2 : index
    %c0_143 = arith.constant 0 : index
    %c0_144 = arith.constant 0 : index
    %168 = vector.load %arg9[%c2_142, %c0_143, %c0_144] : memref<10x24x128xf32, #tpu.memory_space<vmem>>, vector<8x24x128xf32>
    %169 = vector.shape_cast %168 : vector<8x24x128xf32> to vector<192x128xf32>
    %170 = arith.truncf %169 : vector<192x128xf32> to vector<192x128xbf16>
    %c6_145 = arith.constant 6 : index
    %c0_146 = arith.constant 0 : index
    %c0_147 = arith.constant 0 : index
    %171 = vector.load %arg5[%c6_145, %c0_146, %c0_147] : memref<9x128x128xbf16, #tpu.memory_space<vmem>>, vector<1x128x128xbf16>
    %172 = vector.shape_cast %171 : vector<1x128x128xbf16> to vector<128x128xbf16>
    %cst_148 = arith.constant dense<0.000000e+00> : vector<192x128xf32>
    %173 = tpu.matmul %170, %172, %cst_148 {dimension_numbers = #tpu.dot_dimension_numbers<[1], [0], [0], [1], [0, 0, 1, 1], [], []>} : vector<192x128xbf16>, vector<128x128xbf16>, vector<192x128xf32> -> vector<192x128xf32>
    %c0_149 = arith.constant 0 : index
    %c0_150 = arith.constant 0 : index
    %174 = vector.load %arg10[%c0_149, %c0_150] : memref<192x128xf32, #tpu.memory_space<vmem>>, vector<192x128xf32>
    %175 = arith.addf %174, %173 : vector<192x128xf32>
    %c0_151 = arith.constant 0 : index
    %c0_152 = arith.constant 0 : index
    %176 = vector.load %arg10[%c0_151, %c0_152] : memref<192x128xf32, #tpu.memory_space<vmem>>, vector<192x128xf32>
    tpu.vector_store %arg10[%c0_151, %c0_152], %175 {strides = array<i32>} : memref<192x128xf32, #tpu.memory_space<vmem>>, vector<192x128xf32>,
    %c23_i32_153 = arith.constant 23 : i32
    %177 = tpu.dynamic_rotate %168 by %c23_i32_153 dim 1 : vector<8x24x128xf32>, i32 -> vector<8x24x128xf32>
    %178 = vector.shape_cast %177 : vector<8x24x128xf32> to vector<192x128xf32>
    %179 = arith.truncf %178 : vector<192x128xf32> to vector<192x128xbf16>
    %c7_154 = arith.constant 7 : index
    %c0_155 = arith.constant 0 : index
    %c0_156 = arith.constant 0 : index
    %180 = vector.load %arg5[%c7_154, %c0_155, %c0_156] : memref<9x128x128xbf16, #tpu.memory_space<vmem>>, vector<1x128x128xbf16>
    %181 = vector.shape_cast %180 : vector<1x128x128xbf16> to vector<128x128xbf16>
    %cst_157 = arith.constant dense<0.000000e+00> : vector<192x128xf32>
    %182 = tpu.matmul %179, %181, %cst_157 {dimension_numbers = #tpu.dot_dimension_numbers<[1], [0], [0], [1], [0, 0, 1, 1], [], []>} : vector<192x128xbf16>, vector<128x128xbf16>, vector<192x128xf32> -> vector<192x128xf32>
    %c0_158 = arith.constant 0 : index
    %c0_159 = arith.constant 0 : index
    %183 = vector.load %arg10[%c0_158, %c0_159] : memref<192x128xf32, #tpu.memory_space<vmem>>, vector<192x128xf32>
    %184 = arith.addf %183, %182 : vector<192x128xf32>
    %c0_160 = arith.constant 0 : index
    %c0_161 = arith.constant 0 : index
    %185 = vector.load %arg10[%c0_160, %c0_161] : memref<192x128xf32, #tpu.memory_space<vmem>>, vector<192x128xf32>
    tpu.vector_store %arg10[%c0_160, %c0_161], %184 {strides = array<i32>} : memref<192x128xf32, #tpu.memory_space<vmem>>, vector<192x128xf32>,
    %c22_i32_162 = arith.constant 22 : i32
    %186 = tpu.dynamic_rotate %168 by %c22_i32_162 dim 1 : vector<8x24x128xf32>, i32 -> vector<8x24x128xf32>
    %187 = vector.shape_cast %186 : vector<8x24x128xf32> to vector<192x128xf32>
    %188 = arith.truncf %187 : vector<192x128xf32> to vector<192x128xbf16>
    %c8_163 = arith.constant 8 : index
    %c0_164 = arith.constant 0 : index
    %c0_165 = arith.constant 0 : index
    %189 = vector.load %arg5[%c8_163, %c0_164, %c0_165] : memref<9x128x128xbf16, #tpu.memory_space<vmem>>, vector<1x128x128xbf16>
    %190 = vector.shape_cast %189 : vector<1x128x128xbf16> to vector<128x128xbf16>
    %cst_166 = arith.constant dense<0.000000e+00> : vector<192x128xf32>
    %191 = tpu.matmul %188, %190, %cst_166 {dimension_numbers = #tpu.dot_dimension_numbers<[1], [0], [0], [1], [0, 0, 1, 1], [], []>} : vector<192x128xbf16>, vector<128x128xbf16>, vector<192x128xf32> -> vector<192x128xf32>
    %c0_167 = arith.constant 0 : index
    %c0_168 = arith.constant 0 : index
    %192 = vector.load %arg10[%c0_167, %c0_168] : memref<192x128xf32, #tpu.memory_space<vmem>>, vector<192x128xf32>
    %193 = arith.addf %192, %191 : vector<192x128xf32>
    %c0_169 = arith.constant 0 : index
    %c0_170 = arith.constant 0 : index
    %194 = vector.load %arg10[%c0_169, %c0_170] : memref<192x128xf32, #tpu.memory_space<vmem>>, vector<192x128xf32>
    tpu.vector_store %arg10[%c0_169, %c0_170], %193 {strides = array<i32>} : memref<192x128xf32, #tpu.memory_space<vmem>>, vector<192x128xf32>,
    %c2_i32_171 = arith.constant 2 : i32
    %195 = arith.addi %1, %c2_i32_171 : i32
    %c0_172 = arith.constant 0 : index
    %196 = arith.index_cast %195 : i32 to index
    %c0_173 = arith.constant 0 : index
    %c0_174 = arith.constant 0 : index
    %197 = vector.load %arg2[%c0_172, %196, %c0_173, %c0_174] : memref<1x20x24x128xf32, #tpu.memory_space<vmem>>, vector<1x8x24x128xf32>
    %198 = vector.shape_cast %197 : vector<1x8x24x128xf32> to vector<8x24x128xf32>
    %c23_i32_175 = arith.constant 23 : i32
    %199 = tpu.dynamic_rotate %198 by %c23_i32_175 dim 1 : vector<8x24x128xf32>, i32 -> vector<8x24x128xf32>
    %c0_176 = arith.constant 0 : index
    %c0_177 = arith.constant 0 : index
    %200 = vector.load %arg10[%c0_176, %c0_177] : memref<192x128xf32, #tpu.memory_space<vmem>>, vector<192x128xf32>
    %201 = vector.shape_cast %200 : vector<192x128xf32> to vector<8x24x128xf32>
    %c0_178 = arith.constant 0 : index
    %c0_179 = arith.constant 0 : index
    %202 = vector.load %arg6[%c0_178, %c0_179] : memref<1x128xf32, #tpu.memory_space<vmem>>, vector<1x128xf32>
    %203 = vector.shape_cast %202 : vector<1x128xf32> to vector<1x1x128xf32>
    %204 = vector.broadcast %203 : vector<1x1x128xf32> to vector<8x24x128xf32>
    %205 = arith.addf %201, %204 : vector<8x24x128xf32>
    %206 = arith.addf %205, %199 : vector<8x24x128xf32>
    %cst_180 = arith.constant 0.000000e+00 : f32
    %207 = vector.broadcast %cst_180 : f32 to vector<8x24x128xf32>
    %208 = arith.maximumf %206, %207 : vector<8x24x128xf32>
    %209 = vector.extract_strided_slice %208 {offsets = [0, 0, 0], sizes = [8, 16, 128], strides = [1, 1, 1]} : vector<8x24x128xf32> to vector<8x16x128xf32>
    %c0_181 = arith.constant 0 : index
    %c0_182 = arith.constant 0 : index
    %c0_183 = arith.constant 0 : index
    %c0_184 = arith.constant 0 : index
    %210 = vector.load %arg7[%c0_181, %c0_182, %c0_183, %c0_184] : memref<1x8x16x128xf32, #tpu.memory_space<vmem>>, vector<1x8x16x128xf32>
    %211 = vector.shape_cast %210 : vector<1x8x16x128xf32> to vector<8x16x128xf32>
    %212 = vector.shape_cast %209 : vector<8x16x128xf32> to vector<1x8x16x128xf32>
    tpu.vector_store %arg7[%c0_181, %c0_182, %c0_183, %c0_184], %212 {strides = array<i32>} : memref<1x8x16x128xf32, #tpu.memory_space<vmem>>, vector<1x8x16x128xf32>,
    return
  }
  func.func @transform_0(%arg0: i32, %arg1: i32) -> (i32, i32, i32, i32) {
    %c0_i32 = arith.constant 0 : i32
    %c0_i32_0 = arith.constant 0 : i32
    %c0_i32_1 = arith.constant 0 : i32
    %c0_i32_2 = arith.constant 0 : i32
    return %arg0, %c0_i32, %c0_i32_0, %c0_i32_1 : i32, i32, i32, i32
  }
  func.func @transform_1(%arg0: i32, %arg1: i32) -> (i32, i32, i32) {
    %c0_i32 = arith.constant 0 : i32
    %c0_i32_0 = arith.constant 0 : i32
    %c0_i32_1 = arith.constant 0 : i32
    %c0_i32_2 = arith.constant 0 : i32
    return %c0_i32, %c0_i32_0, %c0_i32_1 : i32, i32, i32
  }
  func.func @transform_2(%arg0: i32, %arg1: i32) -> (i32, i32) {
    %c0_i32 = arith.constant 0 : i32
    %c0_i32_0 = arith.constant 0 : i32
    %c0_i32_1 = arith.constant 0 : i32
    return %c0_i32, %c0_i32_0 : i32, i32
  }
  func.func @transform_3(%arg0: i32, %arg1: i32) -> (i32, i32, i32) {
    %c0_i32 = arith.constant 0 : i32
    %c0_i32_0 = arith.constant 0 : i32
    %c0_i32_1 = arith.constant 0 : i32
    %c0_i32_2 = arith.constant 0 : i32
    return %c0_i32, %c0_i32_0, %c0_i32_1 : i32, i32, i32
  }
  func.func @transform_4(%arg0: i32, %arg1: i32) -> (i32, i32) {
    %c0_i32 = arith.constant 0 : i32
    %c0_i32_0 = arith.constant 0 : i32
    %c0_i32_1 = arith.constant 0 : i32
    return %c0_i32, %c0_i32_0 : i32, i32
  }
  func.func @transform_5(%arg0: i32, %arg1: i32) -> (i32, i32, i32, i32) {
    %c0_i32 = arith.constant 0 : i32
    %c0_i32_0 = arith.constant 0 : i32
    %c0_i32_1 = arith.constant 0 : i32
    return %arg0, %arg1, %c0_i32, %c0_i32_0 : i32, i32, i32, i32
  }
}

</mosaic_0001>

<llo_original>
// kernel: basic_block.1
$region0: #{basic_block.1}
  #allocation0 [shape = 'u32[]', space=smem, size = 0x4, offset = 0x4, fixed_abs, tag = 'smem constant byte address 0x4 - core index']
  #allocation1 [shape = 'u32[72,128]{1,0:T(1,128)}', space=vmem, size = 0x9000, scoped, tag = 'internal scratch']
  #allocation2 [shape = 'f32[240,128]{1,0:T(8,128)}', space=vmem, size = 0x1e000, scoped, tag = 'scratch operand']
  #allocation3 [shape = 'f32[10,24,128]{2,1,0:T(8,128)}', space=vmem, size = 0x1e000, scoped, tag = 'scratch operand']
  #allocation4 [shape = 'f32[192,128]{1,0:T(8,128)}', space=vmem, size = 0x18000, scoped, tag = 'scratch operand']
  %s0 = inlined_call_operand.vmem [shape: f32[2,20,24,128], index: 0, kind: input, shape index: {}]
  %s1 = inlined_call_operand.vmem [shape: bf16[9,128,128], index: 1, kind: input, shape index: {}]
  %s2 = inlined_call_operand.vmem [shape: f32[1,128], index: 2, kind: input, shape index: {}]
  %s3 = inlined_call_operand.vmem [shape: bf16[9,128,128], index: 3, kind: input, shape index: {}]
  %s4 = inlined_call_operand.vmem [shape: f32[1,128], index: 4, kind: input, shape index: {}]
  %s5 = inlined_call_operand.hbm [shape: f32[2,16,16,128], index: 5, kind: output, shape index: {}]
  %s6 = sld [smem:[#allocation0]]
  $region53: #{basic_block.1} parent=0
    _
  %s8 = ssub.s32 1, %s6
  %s9 = scalar_select 0, %s8, %s6
  $region1: #{basic_block.1} parent=0
    #allocation5 [shape = 'u8[131072]{0}', space=vmem, size = 0x20000, scoped, tag = 'output window, operand 0']
    #allocation6 [shape = 's32[2]{0}', space=sflag, size = 0x8, scoped, tag = 'scoped memory for basic_block.1']
    %10 = vsyncpa [#allocation6], 0
    %s11 = scalar_lea.sflag [#allocation6], 1
    %12 = vsyncpa %s11, 0
    loop: start=0, step=1, limit=6
    $region2: #{basic_block.1} parent=1 // loop_pre_header
      _
    $region3: #{basic_block.1} parent=1 // loop_header
      %s14 = sphi 0, %s18
      %p15 = scmp.ge.s32.totalorder %s14, 6
      %s21 = sphi 0, %s33
      %s22 = sphi 0, %s29
      %s23 = sphi 0, %s21
      %s24 = sphi 0, %s22
      %s25 = sphi 0, %s23
      %s26 = sphi 0, %s24
      %s36 = sphi 0, %s38
      %s39 = sphi 0, %s36
      %s40 = sphi 0, %s39
      %s56 = sphi 0, %s40
      %s60 = sphi 0, %s60
      %s62 = sphi 0, %s60
      %s63 = sphi 0, %s62
      %s77 = sphi 0, %s63
      %s81 = sphi 0, %s81
      %s83 = sphi 0, %s81
      %s84 = sphi 0, %s83
      %s98 = sphi 0, %s84
      %s102 = sphi 0, %s102
      %s104 = sphi 0, %s102
      %s105 = sphi 0, %s104
      %s119 = sphi 0, %s105
      %s123 = sphi 0, %s123
      %s125 = sphi 0, %s123
      %s126 = sphi 0, %s125
      %s140 = sphi 0, %s126
      %s148 = sphi 0, %s150
      %s151 = sphi 0, %s148
      %s152 = sphi 0, %s151
      %s168 = sphi 0, %s152
    $region4: #{basic_block.1} parent=1 // loop_header_branch
      %17 = sbr.rel (%p15) target = $region8
    $region5: #{basic_block.1} parent=1 // loop_body
      %s19 = ssub.s32 %s14, 1
      %s20 = ssub.s32 %s14, 2
      %s27 = sadd.s32 1, %s22
      %p28 = scmp.ge.s32.totalorder %s27, 2
      %s29 = scalar_select %p28, 0, %s27
      %s30 = sadd.s32 1, %s21
      %s31 = scalar_select %p28, %s30, %s21
      %p32 = scmp.ge.s32.totalorder %s31, 2
      %s33 = scalar_select %p32, 0, %s31
      %s34 = ssub.s32 %s21, %s33
      %p35 = scmp.eq.s32.totalorder %s34, 0
      %s37 = sadd.s32 %s36, 1
      %s38 = scalar_select %p35, %s36, %s37
      %p41 = pneg %p35
      %p42 = scmp.eq.s32.totalorder %s14, 3
      %p43 = por %p41, %p42
      %p44 = scmp.ne.s32.totalorder %s36, %s39
      %p45 = scmp.eq.s32.totalorder %s14, 0
      %p46 = por %p44, %p45
      %p47 = scmp.ne.s32.totalorder %s36, %s39
      %p48 = scmp.eq.s32.totalorder %s19, 3
      %p49 = por %p47, %p48
      %p50 = scmp.ne.s32.totalorder %s39, %s40
      %p51 = scmp.eq.s32.totalorder %s19, 0
      %p52 = por %p50, %p51
      %p53 = scmp.ne.s32.totalorder %s39, %s40
      %p54 = scmp.eq.s32.totalorder %s20, 3
      %p55 = por %p53, %p54
      %p57 = scmp.ne.s32.totalorder %s40, %s56
      %p58 = scmp.eq.s32.totalorder %s20, 0
      %p59 = por %p57, %p58
      %s61 = sadd.s32 %s60, 1
      %p64 = scmp.eq.s32.totalorder %s14, 3
      %p65 = scmp.ne.s32.totalorder %s60, %s62
      %p66 = scmp.eq.s32.totalorder %s14, 0
      %p67 = por %p65, %p66
      %p68 = scmp.ne.s32.totalorder %s60, %s62
      %p69 = scmp.eq.s32.totalorder %s19, 3
      %p70 = por %p68, %p69
      %p71 = scmp.ne.s32.totalorder %s62, %s63
      %p72 = scmp.eq.s32.totalorder %s19, 0
      %p73 = por %p71, %p72
      %p74 = scmp.ne.s32.totalorder %s62, %s63
      %p75 = scmp.eq.s32.totalorder %s20, 3
      %p76 = por %p74, %p75
      %p78 = scmp.ne.s32.totalorder %s63, %s77
      %p79 = scmp.eq.s32.totalorder %s20, 0
      %p80 = por %p78, %p79
      %s82 = sadd.s32 %s81, 1
      %p85 = scmp.eq.s32.totalorder %s14, 3
      %p86 = scmp.ne.s32.totalorder %s81, %s83
      %p87 = scmp.eq.s32.totalorder %s14, 0
      %p88 = por %p86, %p87
      %p89 = scmp.ne.s32.totalorder %s81, %s83
      %p90 = scmp.eq.s32.totalorder %s19, 3
      %p91 = por %p89, %p90
      %p92 = scmp.ne.s32.totalorder %s83, %s84
      %p93 = scmp.eq.s32.totalorder %s19, 0
      %p94 = por %p92, %p93
      %p95 = scmp.ne.s32.totalorder %s83, %s84
      %p96 = scmp.eq.s32.totalorder %s20, 3
      %p97 = por %p95, %p96
      %p99 = scmp.ne.s32.totalorder %s84, %s98
      %p100 = scmp.eq.s32.totalorder %s20, 0
      %p101 = por %p99, %p100
      %s103 = sadd.s32 %s102, 1
      %p106 = scmp.eq.s32.totalorder %s14, 3
      %p107 = scmp.ne.s32.totalorder %s102, %s104
      %p108 = scmp.eq.s32.totalorder %s14, 0
      %p109 = por %p107, %p108
      %p110 = scmp.ne.s32.totalorder %s102, %s104
      %p111 = scmp.eq.s32.totalorder %s19, 3
      %p112 = por %p110, %p111
      %p113 = scmp.ne.s32.totalorder %s104, %s105
      %p114 = scmp.eq.s32.totalorder %s19, 0
      %p115 = por %p113, %p114
      %p116 = scmp.ne.s32.totalorder %s104, %s105
      %p117 = scmp.eq.s32.totalorder %s20, 3
      %p118 = por %p116, %p117
      %p120 = scmp.ne.s32.totalorder %s105, %s119
      %p121 = scmp.eq.s32.totalorder %s20, 0
      %p122 = por %p120, %p121
      %s124 = sadd.s32 %s123, 1
      %p127 = scmp.eq.s32.totalorder %s14, 3
      %p128 = scmp.ne.s32.totalorder %s123, %s125
      %p129 = scmp.eq.s32.totalorder %s14, 0
      %p130 = por %p128, %p129
      %p131 = scmp.ne.s32.totalorder %s123, %s125
      %p132 = scmp.eq.s32.totalorder %s19, 3
      %p133 = por %p131, %p132
      %p134 = scmp.ne.s32.totalorder %s125, %s126
      %p135 = scmp.eq.s32.totalorder %s19, 0
      %p136 = por %p134, %p135
      %p137 = scmp.ne.s32.totalorder %s125, %s126
      %p138 = scmp.eq.s32.totalorder %s20, 3
      %p139 = por %p137, %p138
      %p141 = scmp.ne.s32.totalorder %s126, %s140
      %p142 = scmp.eq.s32.totalorder %s20, 0
      %p143 = por %p141, %p142
      %s144 = ssub.s32 %s21, %s33
      %s145 = ssub.s32 %s22, %s29
      %s146 = sor.u32 %s144, %s145
      %p147 = scmp.eq.s32.totalorder %s146, 0
      %s149 = sadd.s32 %s148, 1
      %s150 = scalar_select %p147, %s148, %s149
      %p153 = pneg %p147
      %p154 = scmp.eq.s32.totalorder %s14, 3
      %p155 = por %p153, %p154
      %p156 = scmp.ne.s32.totalorder %s148, %s151
      %p157 = scmp.eq.s32.totalorder %s14, 0
      %p158 = por %p156, %p157
      %p159 = scmp.ne.s32.totalorder %s148, %s151
      %p160 = scmp.eq.s32.totalorder %s19, 3
      %p161 = por %p159, %p160
      %p162 = scmp.ne.s32.totalorder %s151, %s152
      %p163 = scmp.eq.s32.totalorder %s19, 0
      %p164 = por %p162, %p163
      %p165 = scmp.ne.s32.totalorder %s151, %s152
      %p166 = scmp.eq.s32.totalorder %s20, 3
      %p167 = por %p165, %p166
      %p169 = scmp.ne.s32.totalorder %s152, %s168
      %p170 = scmp.eq.s32.totalorder %s20, 0
      %p171 = por %p169, %p170
      %p172 = scmp.le.s32.totalorder 1, %s14
      %p173 = scmp.lt.s32.totalorder %s14, 5
      %p174 = pnand %p172, %p173
      %p175 = pneg %p174
      // Predicated region
      $region9: #{basic_block.1} parent=5 // pred_check
        _
      $region10: #{basic_block.1} parent=5 // pred_check_branch
        %177 = sbr.rel (%p174) target = $region12
      $region11: #{basic_block.1} parent=5 // pred_region
        %s178 = ssub.s32 %s14, 1
        // Predicated region
        $region13: #{basic_block.1} parent=11 // pred_check
          %p179 = pneg %p73
        $region14: #{basic_block.1} parent=11 // pred_check_branch
          %181 = sbr.rel (%p179) target = $region16
        $region15: #{basic_block.1} parent=11 // pred_region
          _
        $region16: #{basic_block.1} parent=11 // pred_fallthru
          _
        // Predicated region
        $region17: #{basic_block.1} parent=11 // pred_check
          %p182 = pneg %p94
        $region18: #{basic_block.1} parent=11 // pred_check_branch
          %184 = sbr.rel (%p182) target = $region20
        $region19: #{basic_block.1} parent=11 // pred_region
          _
        $region20: #{basic_block.1} parent=11 // pred_fallthru
          _
        // Predicated region
        $region21: #{basic_block.1} parent=11 // pred_check
          %p185 = pneg %p115
        $region22: #{basic_block.1} parent=11 // pred_check_branch
          %187 = sbr.rel (%p185) target = $region24
        $region23: #{basic_block.1} parent=11 // pred_region
          _
        $region24: #{basic_block.1} parent=11 // pred_fallthru
          _
        // Predicated region
        $region25: #{basic_block.1} parent=11 // pred_check
          %p188 = pneg %p136
        $region26: #{basic_block.1} parent=11 // pred_check_branch
          %190 = sbr.rel (%p188) target = $region28
        $region27: #{basic_block.1} parent=11 // pred_region
          _
        $region28: #{basic_block.1} parent=11 // pred_fallthru
          _
      $region12: #{basic_block.1} parent=5 // pred_fallthru
        _
      %p191 = scmp.lt.s32.totalorder %s14, 4
      // Predicated region
      $region29: #{basic_block.1} parent=5 // pred_check
        %p192 = pneg %p191
      $region30: #{basic_block.1} parent=5 // pred_check_branch
        %194 = sbr.rel (%p192) target = $region32
      $region31: #{basic_block.1} parent=5 // pred_region
        // Predicated region
        $region33: #{basic_block.1} parent=31 // pred_check
          %p195 = pneg %p46
        $region34: #{basic_block.1} parent=31 // pred_check_branch
          %197 = sbr.rel (%p195) target = $region36
        $region35: #{basic_block.1} parent=31 // pred_region
          %p198 = scmp.lt.s32.totalorder %s21, 1
          %s199 = scalar_select %p198, %s21, 1
          %s200 = smul.addr %s199, 60
          %s201 = smul.addr %s200, 8
          %s202 = scalar_lea.vmem %s0, %s201
        $region36: #{basic_block.1} parent=31 // pred_fallthru
          _
      $region32: #{basic_block.1} parent=5 // pred_fallthru
        _
      %p203 = scmp.le.s32.totalorder 1, %s14
      %p204 = scmp.lt.s32.totalorder %s14, 5
      %p205 = pnand %p203, %p204
      %p206 = pneg %p205
      // Predicated region
      $region37: #{basic_block.1} parent=5 // pred_check
        _
      $region38: #{basic_block.1} parent=5 // pred_check_branch
        %208 = sbr.rel (%p205) target = $region40
      $region39: #{basic_block.1} parent=5 // pred_region
        %s209 = ssub.s32 %s14, 1
        %p210 = scmp.lt.s32.totalorder %s23, 1
        %s211 = scalar_select %p210, %s23, 1
        %s212 = smul.addr %s211, 60
        %s213 = smul.addr %s212, 8
        %s214 = scalar_lea.vmem %s0, %s213
        %p215 = pneg %p52
        %p216 = pneg %p49
        %p217 = pneg %p73
        %p218 = pneg %p70
        %p219 = pneg %p94
        %p220 = pneg %p91
        %p221 = pneg %p115
        %p222 = pneg %p112
        %p223 = pneg %p136
        %p224 = pneg %p133
        %p225 = pneg %p164
        %p226 = pneg %p161
        %s227 = sand.u32 %s151, 1
        %s228 = scalar_lea.sflag [#allocation6], %s227
        %s229 = sand.u32 %s151, 1
        %s230 = smul.addr %s229, 128
        %s231 = scalar_lea.vmem [#allocation5], %s230
        %p232 = scmp.lt.s32.totalorder %s23, 1
        %s233 = scalar_select %p232, %s23, 1
        %s234 = smul.addr %s233, 60
        %s235 = smul.addr %s234, 8
        %s236 = scalar_lea.vmem %s0, %s235
        %s237 = smul.u32 8, %s24
        %s238 = smul.u32 %s24, 8
        %s239 = smul.u32 %s238, 24
        %s240 = scalar_lea.vmem %s236, %s239
        %v241 = vld [vmem:[%s240] sm:$0xff]
        %v242 = vld [vmem:[%s240 + $0x8] sm:$0xff]
        %v243 = vld [vmem:[%s240 + $0x10] sm:$0xff]
        %v244 = vld [vmem:[%s240 + $0x18] sm:$0xff]
        %v245 = vld [vmem:[%s240 + $0x20] sm:$0xff]
        %v246 = vld [vmem:[%s240 + $0x28] sm:$0xff]
        %v247 = vld [vmem:[%s240 + $0x30] sm:$0xff]
        %v248 = vld [vmem:[%s240 + $0x38] sm:$0xff]
        %v249 = vld [vmem:[%s240 + $0x40] sm:$0xff]
        %v250 = vld [vmem:[%s240 + $0x48] sm:$0xff]
        %v251 = vld [vmem:[%s240 + $0x50] sm:$0xff]
        %v252 = vld [vmem:[%s240 + $0x58] sm:$0xff]
        %v253 = vld [vmem:[%s240 + $0x60] sm:$0xff]
        %v254 = vld [vmem:[%s240 + $0x68] sm:$0xff]
        %v255 = vld [vmem:[%s240 + $0x70] sm:$0xff]
        %v256 = vld [vmem:[%s240 + $0x78] sm:$0xff]
        %v257 = vld [vmem:[%s240 + $0x80] sm:$0xff]
        %v258 = vld [vmem:[%s240 + $0x88] sm:$0xff]
        %v259 = vld [vmem:[%s240 + $0x90] sm:$0xff]
        %v260 = vld [vmem:[%s240 + $0x98] sm:$0xff]
        %v261 = vld [vmem:[%s240 + $0xa0] sm:$0xff]
        %v262 = vld [vmem:[%s240 + $0xa8] sm:$0xff]
        %v263 = vld [vmem:[%s240 + $0xb0] sm:$0xff]
        %v264 = vld [vmem:[%s240 + $0xb8] sm:$0xff]
        %v265 = vld [vmem:[%s240 + $0xc0] sm:$0xff]
        %v266 = vld [vmem:[%s240 + $0xc8] sm:$0xff]
        %v267 = vld [vmem:[%s240 + $0xd0] sm:$0xff]
        %v268 = vld [vmem:[%s240 + $0xd8] sm:$0xff]
        %v269 = vld [vmem:[%s240 + $0xe0] sm:$0xff]
        %v270 = vld [vmem:[%s240 + $0xe8] sm:$0xff]
        %v271 = vpack.c.bf16 %v242, %v241
        %v272 = vpack.c.bf16 %v244, %v243
        %v273 = vpack.c.bf16 %v246, %v245
        %v274 = vpack.c.bf16 %v248, %v247
        %v275 = vpack.c.bf16 %v250, %v249
        %v276 = vpack.c.bf16 %v252, %v251
        %v277 = vpack.c.bf16 %v254, %v253
        %v278 = vpack.c.bf16 %v256, %v255
        %v279 = vpack.c.bf16 %v258, %v257
        %v280 = vpack.c.bf16 %v260, %v259
        %v281 = vpack.c.bf16 %v262, %v261
        %v282 = vpack.c.bf16 %v264, %v263
        %v283 = vpack.c.bf16 %v266, %v265
        %v284 = vpack.c.bf16 %v268, %v267
        %v285 = vpack.c.bf16 %v270, %v269
        %v286 = vld [vmem:[%s1] sm:$0xf]
        %v287 = vld [vmem:[%s1 + $0x4] sm:$0xf]
        %v288 = vld [vmem:[%s1 + $0x8] sm:$0xf]
        %v289 = vld [vmem:[%s1 + $0xc] sm:$0xf]
        %v290 = vld [vmem:[%s1 + $0x10] sm:$0xf]
        %v291 = vld [vmem:[%s1 + $0x14] sm:$0xf]
        %v292 = vld [vmem:[%s1 + $0x18] sm:$0xf]
        %v293 = vld [vmem:[%s1 + $0x1c] sm:$0xf]
        %v294 = vld [vmem:[%s1 + $0x20] sm:$0xf]
        %v295 = vld [vmem:[%s1 + $0x24] sm:$0xf]
        %v296 = vld [vmem:[%s1 + $0x28] sm:$0xf]
        %v297 = vld [vmem:[%s1 + $0x2c] sm:$0xf]
        %v298 = vld [vmem:[%s1 + $0x30] sm:$0xf]
        %v299 = vld [vmem:[%s1 + $0x34] sm:$0xf]
        %v300 = vld [vmem:[%s1 + $0x38] sm:$0xf]
        %v301 = vld [vmem:[%s1 + $0x3c] sm:$0xf]
        %v318 = vunpack.c.l.b16 %v286
        %v319 = vunpack.c.l.b16 %v287
        %v320 = vunpack.c.l.b16 %v288
        %v321 = vunpack.c.l.b16 %v289
        %v322 = vunpack.c.l.b16 %v290
        %v323 = vunpack.c.l.b16 %v291
        %v324 = vunpack.c.l.b16 %v292
        %v325 = vunpack.c.l.b16 %v293
        %v326 = vunpack.c.l.b16 %v294
        %v327 = vunpack.c.l.b16 %v295
        %v328 = vunpack.c.l.b16 %v296
        %v329 = vunpack.c.l.b16 %v297
        %v330 = vunpack.c.l.b16 %v298
        %v331 = vunpack.c.l.b16 %v299
        %v332 = vunpack.c.l.b16 %v300
        %v333 = vunpack.c.l.b16 %v301
        %v334 = vpack.c.b16 %v319, %v318
        %v335 = vpack.c.b16 %v321, %v320
        %v336 = vpack.c.b16 %v323, %v322
        %v337 = vpack.c.b16 %v325, %v324
        %v338 = vpack.c.b16 %v327, %v326
        %v339 = vpack.c.b16 %v329, %v328
        %v340 = vpack.c.b16 %v331, %v330
        %v341 = vpack.c.b16 %v333, %v332
        %350 = vmatpush.bf16.msra.mxu0 %v341
        %351 = vmatpush.bf16.msra.mxu0 %v340
        %352 = vmatpush.bf16.msra.mxu0 %v339
        %353 = vmatpush.bf16.msra.mxu0 %v338
        %354 = vmatpush.bf16.msra.mxu0 %v337
        %355 = vmatpush.bf16.msra.mxu0 %v336
        %356 = vmatpush.bf16.msra.mxu0 %v335
        %357 = vmatpush.bf16.msra.mxu0 %v334
        %358 = vmatmul.bf16.gmra.mxu0 %v271
        %v359 = vpop.f32.mrf.mxu0
        %v360 = vadd.f32 0.0, %v359
        %v361 = vpop.f32.mrf.mxu0
        %v362 = vadd.f32 0.0, %v361
        %363 = vmatmul.bf16.gmra.mxu0 %v272
        %v364 = vpop.f32.mrf.mxu0
        %v365 = vadd.f32 0.0, %v364
        %v366 = vpop.f32.mrf.mxu0
        %v367 = vadd.f32 0.0, %v366
        %368 = vmatmul.bf16.gmra.mxu0 %v273
        %v369 = vpop.f32.mrf.mxu0
        %v370 = vadd.f32 0.0, %v369
        %v371 = vpop.f32.mrf.mxu0
        %v372 = vadd.f32 0.0, %v371
        %373 = vmatmul.bf16.gmra.mxu0 %v274
        %v374 = vpop.f32.mrf.mxu0
        %v375 = vadd.f32 0.0, %v374
        %v376 = vpop.f32.mrf.mxu0
        %v377 = vadd.f32 0.0, %v376
        %378 = vmatmul.bf16.gmra.mxu0 %v275
        %v379 = vpop.f32.mrf.mxu0
        %v380 = vadd.f32 0.0, %v379
        %v381 = vpop.f32.mrf.mxu0
        %v382 = vadd.f32 0.0, %v381
        %383 = vmatmul.bf16.gmra.mxu0 %v276
        %v384 = vpop.f32.mrf.mxu0
        %v385 = vadd.f32 0.0, %v384
        %v386 = vpop.f32.mrf.mxu0
        %v387 = vadd.f32 0.0, %v386
        %388 = vmatmul.bf16.gmra.mxu0 %v277
        %v389 = vpop.f32.mrf.mxu0
        %v390 = vadd.f32 0.0, %v389
        %v391 = vpop.f32.mrf.mxu0
        %v392 = vadd.f32 0.0, %v391
        %393 = vmatmul.bf16.gmra.mxu0 %v278
        %v394 = vpop.f32.mrf.mxu0
        %v395 = vadd.f32 0.0, %v394
        %v396 = vpop.f32.mrf.mxu0
        %v397 = vadd.f32 0.0, %v396
        %398 = vmatmul.bf16.gmra.mxu0 %v279
        %v399 = vpop.f32.mrf.mxu0
        %v400 = vadd.f32 0.0, %v399
        %v401 = vpop.f32.mrf.mxu0
        %v402 = vadd.f32 0.0, %v401
        %403 = vmatmul.bf16.gmra.mxu0 %v280
        %v404 = vpop.f32.mrf.mxu0
        %v405 = vadd.f32 0.0, %v404
        %v406 = vpop.f32.mrf.mxu0
        %v407 = vadd.f32 0.0, %v406
        %408 = vmatmul.bf16.gmra.mxu0 %v281
        %v409 = vpop.f32.mrf.mxu0
        %v410 = vadd.f32 0.0, %v409
        %v411 = vpop.f32.mrf.mxu0
        %v412 = vadd.f32 0.0, %v411
        %413 = vmatmul.bf16.gmra.mxu0 %v282
        %v414 = vpop.f32.mrf.mxu0
        %v415 = vadd.f32 0.0, %v414
        %v416 = vpop.f32.mrf.mxu0
        %v417 = vadd.f32 0.0, %v416
        %418 = vmatmul.bf16.gmra.mxu0 %v283
        %v419 = vpop.f32.mrf.mxu0
        %v420 = vadd.f32 0.0, %v419
        %v421 = vpop.f32.mrf.mxu0
        %v422 = vadd.f32 0.0, %v421
        %423 = vmatmul.bf16.gmra.mxu0 %v284
        %v424 = vpop.f32.mrf.mxu0
        %v425 = vadd.f32 0.0, %v424
        %v426 = vpop.f32.mrf.mxu0
        %v427 = vadd.f32 0.0, %v426
        %428 = vmatmul.bf16.gmra.mxu0 %v285
        %v429 = vpop.f32.mrf.mxu0
        %v430 = vadd.f32 0.0, %v429
        %v431 = vpop.f32.mrf.mxu0
        %v432 = vadd.f32 0.0, %v431
        %433 = vdwg.mxu0
        %434 = vst [vmem:[#allocation2] sm:$0xff] %v360
        %435 = vst [vmem:[#allocation2 + $0x8] sm:$0xff] %v362
        %436 = vst [vmem:[#allocation2 + $0x10] sm:$0xff] %v365
        %437 = vst [vmem:[#allocation2 + $0x18] sm:$0xff] %v367
        %438 = vst [vmem:[#allocation2 + $0x20] sm:$0xff] %v370
        %439 = vst [vmem:[#allocation2 + $0x28] sm:$0xff] %v372
        %440 = vst [vmem:[#allocation2 + $0x30] sm:$0xff] %v375
        %441 = vst [vmem:[#allocation2 + $0x38] sm:$0xff] %v377
        %442 = vst [vmem:[#allocation2 + $0x40] sm:$0xff] %v380
        %443 = vst [vmem:[#allocation2 + $0x48] sm:$0xff] %v382
        %444 = vst [vmem:[#allocation2 + $0x50] sm:$0xff] %v385
        %445 = vst [vmem:[#allocation2 + $0x58] sm:$0xff] %v387
        %446 = vst [vmem:[#allocation2 + $0x60] sm:$0xff] %v390
        %447 = vst [vmem:[#allocation2 + $0x68] sm:$0xff] %v392
        %448 = vst [vmem:[#allocation2 + $0x70] sm:$0xff] %v395
        %449 = vst [vmem:[#allocation2 + $0x78] sm:$0xff] %v397
        %450 = vst [vmem:[#allocation2 + $0x80] sm:$0xff] %v400
        %451 = vst [vmem:[#allocation2 + $0x88] sm:$0xff] %v402
        %452 = vst [vmem:[#allocation2 + $0x90] sm:$0xff] %v405
        %453 = vst [vmem:[#allocation2 + $0x98] sm:$0xff] %v407
        %454 = vst [vmem:[#allocation2 + $0xa0] sm:$0xff] %v410
        %455 = vst [vmem:[#allocation2 + $0xa8] sm:$0xff] %v412
        %456 = vst [vmem:[#allocation2 + $0xb0] sm:$0xff] %v415
        %457 = vst [vmem:[#allocation2 + $0xb8] sm:$0xff] %v417
        %458 = vst [vmem:[#allocation2 + $0xc0] sm:$0xff] %v420
        %459 = vst [vmem:[#allocation2 + $0xc8] sm:$0xff] %v422
        %460 = vst [vmem:[#allocation2 + $0xd0] sm:$0xff] %v425
        %461 = vst [vmem:[#allocation2 + $0xd8] sm:$0xff] %v427
        %462 = vst [vmem:[#allocation2 + $0xe0] sm:$0xff] %v430
        %463 = vst [vmem:[#allocation2 + $0xe8] sm:$0xff] %v432
        %v464 = vrot.slane %v241, 1
        %v465 = vrot.slane %v244, 1
        %v466 = vrot.slane %v247, 1
        %v467 = vrot.slane %v250, 1
        %v468 = vrot.slane %v253, 1
        %v469 = vrot.slane %v256, 1
        %v470 = vrot.slane %v259, 1
        %v471 = vrot.slane %v262, 1
        %v472 = vrot.slane %v265, 1
        %v473 = vrot.slane %v268, 1
        %v474 = vrot.slane %v242, 1
        %v475 = vrot.slane %v245, 1
        %v476 = vrot.slane %v248, 1
        %v477 = vrot.slane %v251, 1
        %v478 = vrot.slane %v254, 1
        %v479 = vrot.slane %v257, 1
        %v480 = vrot.slane %v260, 1
        %v481 = vrot.slane %v263, 1
        %v482 = vrot.slane %v266, 1
        %v483 = vrot.slane %v269, 1
        %v484 = vrot.slane %v243, 1
        %v485 = vrot.slane %v246, 1
        %v486 = vrot.slane %v249, 1
        %v487 = vrot.slane %v252, 1
        %v488 = vrot.slane %v255, 1
        %v489 = vrot.slane %v258, 1
        %v490 = vrot.slane %v261, 1
        %v491 = vrot.slane %v264, 1
        %v492 = vrot.slane %v267, 1
        %v493 = vrot.slane %v270, 1
        %v494 = vlaneseq
        %v495 = vshrl.u32 %v494, 7
        %vm496 = vcmp.lt.s32.totalorder %v495, 7
        %v497 = vsel %vm496, %v474, %v484
        %v498 = vsel %vm496, %v475, %v485
        %v499 = vsel %vm496, %v476, %v486
        %v500 = vsel %vm496, %v477, %v487
        %v501 = vsel %vm496, %v478, %v488
        %v502 = vsel %vm496, %v479, %v489
        %v503 = vsel %vm496, %v480, %v490
        %v504 = vsel %vm496, %v481, %v491
        %v505 = vsel %vm496, %v482, %v492
        %v506 = vsel %vm496, %v483, %v493
        %v507 = vsel %vm496, %v464, %v474
        %v508 = vsel %vm496, %v465, %v475
        %v509 = vsel %vm496, %v466, %v476
        %v510 = vsel %vm496, %v467, %v477
        %v511 = vsel %vm496, %v468, %v478
        %v512 = vsel %vm496, %v469, %v479
        %v513 = vsel %vm496, %v470, %v480
        %v514 = vsel %vm496, %v471, %v481
        %v515 = vsel %vm496, %v472, %v482
        %v516 = vsel %vm496, %v473, %v483
        %v517 = vsel %vm496, %v484, %v464
        %v518 = vsel %vm496, %v485, %v465
        %v519 = vsel %vm496, %v486, %v466
        %v520 = vsel %vm496, %v487, %v467
        %v521 = vsel %vm496, %v488, %v468
        %v522 = vsel %vm496, %v489, %v469
        %v523 = vsel %vm496, %v490, %v470
        %v524 = vsel %vm496, %v491, %v471
        %v525 = vsel %vm496, %v492, %v472
        %v526 = vsel %vm496, %v493, %v473
        %v527 = vpack.c.bf16 %v497, %v507
        %v528 = vpack.c.bf16 %v508, %v517
        %v529 = vpack.c.bf16 %v518, %v498
        %v530 = vpack.c.bf16 %v499, %v509
        %v531 = vpack.c.bf16 %v510, %v519
        %v532 = vpack.c.bf16 %v520, %v500
        %v533 = vpack.c.bf16 %v501, %v511
        %v534 = vpack.c.bf16 %v512, %v521
        %v535 = vpack.c.bf16 %v522, %v502
        %v536 = vpack.c.bf16 %v503, %v513
        %v537 = vpack.c.bf16 %v514, %v523
        %v538 = vpack.c.bf16 %v524, %v504
        %v539 = vpack.c.bf16 %v505, %v515
        %v540 = vpack.c.bf16 %v516, %v525
        %v541 = vpack.c.bf16 %v526, %v506
        %s542 = scalar_lea.vmem %s1, 64
        %v543 = vld [vmem:[%s542] sm:$0xf]
        %v544 = vld [vmem:[%s542 + $0x4] sm:$0xf]
        %v545 = vld [vmem:[%s542 + $0x8] sm:$0xf]
        %v546 = vld [vmem:[%s542 + $0xc] sm:$0xf]
        %v547 = vld [vmem:[%s542 + $0x10] sm:$0xf]
        %v548 = vld [vmem:[%s542 + $0x14] sm:$0xf]
        %v549 = vld [vmem:[%s542 + $0x18] sm:$0xf]
        %v550 = vld [vmem:[%s542 + $0x1c] sm:$0xf]
        %v551 = vld [vmem:[%s542 + $0x20] sm:$0xf]
        %v552 = vld [vmem:[%s542 + $0x24] sm:$0xf]
        %v553 = vld [vmem:[%s542 + $0x28] sm:$0xf]
        %v554 = vld [vmem:[%s542 + $0x2c] sm:$0xf]
        %v555 = vld [vmem:[%s542 + $0x30] sm:$0xf]
        %v556 = vld [vmem:[%s542 + $0x34] sm:$0xf]
        %v557 = vld [vmem:[%s542 + $0x38] sm:$0xf]
        %v558 = vld [vmem:[%s542 + $0x3c] sm:$0xf]
        %v575 = vunpack.c.l.b16 %v543
        %v576 = vunpack.c.l.b16 %v544
        %v577 = vunpack.c.l.b16 %v545
        %v578 = vunpack.c.l.b16 %v546
        %v579 = vunpack.c.l.b16 %v547
        %v580 = vunpack.c.l.b16 %v548
        %v581 = vunpack.c.l.b16 %v549
        %v582 = vunpack.c.l.b16 %v550
        %v583 = vunpack.c.l.b16 %v551
        %v584 = vunpack.c.l.b16 %v552
        %v585 = vunpack.c.l.b16 %v553
        %v586 = vunpack.c.l.b16 %v554
        %v587 = vunpack.c.l.b16 %v555
        %v588 = vunpack.c.l.b16 %v556
        %v589 = vunpack.c.l.b16 %v557
        %v590 = vunpack.c.l.b16 %v558
        %v591 = vpack.c.b16 %v576, %v575
        %v592 = vpack.c.b16 %v578, %v577
        %v593 = vpack.c.b16 %v580, %v579
        %v594 = vpack.c.b16 %v582, %v581
        %v595 = vpack.c.b16 %v584, %v583
        %v596 = vpack.c.b16 %v586, %v585
        %v597 = vpack.c.b16 %v588, %v587
        %v598 = vpack.c.b16 %v590, %v589
        %607 = vmatpush.bf16.msra.mxu0 %v598
        %608 = vmatpush.bf16.msra.mxu0 %v597
        %609 = vmatpush.bf16.msra.mxu0 %v596
        %610 = vmatpush.bf16.msra.mxu0 %v595
        %611 = vmatpush.bf16.msra.mxu0 %v594
        %612 = vmatpush.bf16.msra.mxu0 %v593
        %613 = vmatpush.bf16.msra.mxu0 %v592
        %614 = vmatpush.bf16.msra.mxu0 %v591
        %615 = vmatmul.bf16.gmra.mxu0 %v527
        %v616 = vpop.f32.mrf.mxu0
        %v617 = vadd.f32 0.0, %v616
        %v618 = vpop.f32.mrf.mxu0
        %v619 = vadd.f32 0.0, %v618
        %620 = vmatmul.bf16.gmra.mxu0 %v528
        %v621 = vpop.f32.mrf.mxu0
        %v622 = vadd.f32 0.0, %v621
        %v623 = vpop.f32.mrf.mxu0
        %v624 = vadd.f32 0.0, %v623
        %625 = vmatmul.bf16.gmra.mxu0 %v529
        %v626 = vpop.f32.mrf.mxu0
        %v627 = vadd.f32 0.0, %v626
        %v628 = vpop.f32.mrf.mxu0
        %v629 = vadd.f32 0.0, %v628
        %630 = vmatmul.bf16.gmra.mxu0 %v530
        %v631 = vpop.f32.mrf.mxu0
        %v632 = vadd.f32 0.0, %v631
        %v633 = vpop.f32.mrf.mxu0
        %v634 = vadd.f32 0.0, %v633
        %635 = vmatmul.bf16.gmra.mxu0 %v531
        %v636 = vpop.f32.mrf.mxu0
        %v637 = vadd.f32 0.0, %v636
        %v638 = vpop.f32.mrf.mxu0
        %v639 = vadd.f32 0.0, %v638
        %640 = vmatmul.bf16.gmra.mxu0 %v532
        %v641 = vpop.f32.mrf.mxu0
        %v642 = vadd.f32 0.0, %v641
        %v643 = vpop.f32.mrf.mxu0
        %v644 = vadd.f32 0.0, %v643
        %645 = vmatmul.bf16.gmra.mxu0 %v533
        %v646 = vpop.f32.mrf.mxu0
        %v647 = vadd.f32 0.0, %v646
        %v648 = vpop.f32.mrf.mxu0
        %v649 = vadd.f32 0.0, %v648
        %650 = vmatmul.bf16.gmra.mxu0 %v534
        %v651 = vpop.f32.mrf.mxu0
        %v652 = vadd.f32 0.0, %v651
        %v653 = vpop.f32.mrf.mxu0
        %v654 = vadd.f32 0.0, %v653
        %655 = vmatmul.bf16.gmra.mxu0 %v535
        %v656 = vpop.f32.mrf.mxu0
        %v657 = vadd.f32 0.0, %v656
        %v658 = vpop.f32.mrf.mxu0
        %v659 = vadd.f32 0.0, %v658
        %660 = vmatmul.bf16.gmra.mxu0 %v536
        %v661 = vpop.f32.mrf.mxu0
        %v662 = vadd.f32 0.0, %v661
        %v663 = vpop.f32.mrf.mxu0
        %v664 = vadd.f32 0.0, %v663
        %665 = vmatmul.bf16.gmra.mxu0 %v537
        %v666 = vpop.f32.mrf.mxu0
        %v667 = vadd.f32 0.0, %v666
        %v668 = vpop.f32.mrf.mxu0
        %v669 = vadd.f32 0.0, %v668
        %670 = vmatmul.bf16.gmra.mxu0 %v538
        %v671 = vpop.f32.mrf.mxu0
        %v672 = vadd.f32 0.0, %v671
        %v673 = vpop.f32.mrf.mxu0
        %v674 = vadd.f32 0.0, %v673
        %675 = vmatmul.bf16.gmra.mxu0 %v539
        %v676 = vpop.f32.mrf.mxu0
        %v677 = vadd.f32 0.0, %v676
        %v678 = vpop.f32.mrf.mxu0
        %v679 = vadd.f32 0.0, %v678
        %680 = vmatmul.bf16.gmra.mxu0 %v540
        %v681 = vpop.f32.mrf.mxu0
        %v682 = vadd.f32 0.0, %v681
        %v683 = vpop.f32.mrf.mxu0
        %v684 = vadd.f32 0.0, %v683
        %685 = vmatmul.bf16.gmra.mxu0 %v541
        %v686 = vpop.f32.mrf.mxu0
        %v687 = vadd.f32 0.0, %v686
        %v688 = vpop.f32.mrf.mxu0
        %v689 = vadd.f32 0.0, %v688
        %690 = vdwg.mxu0
        %v691 = vld [vmem:[#allocation2] sm:$0xff]
        %v692 = vld [vmem:[#allocation2 + $0x8] sm:$0xff]
        %v693 = vld [vmem:[#allocation2 + $0x10] sm:$0xff]
        %v694 = vld [vmem:[#allocation2 + $0x18] sm:$0xff]
        %v695 = vld [vmem:[#allocation2 + $0x20] sm:$0xff]
        %v696 = vld [vmem:[#allocation2 + $0x28] sm:$0xff]
        %v697 = vld [vmem:[#allocation2 + $0x30] sm:$0xff]
        %v698 = vld [vmem:[#allocation2 + $0x38] sm:$0xff]
        %v699 = vld [vmem:[#allocation2 + $0x40] sm:$0xff]
        %v700 = vld [vmem:[#allocation2 + $0x48] sm:$0xff]
        %v701 = vld [vmem:[#allocation2 + $0x50] sm:$0xff]
        %v702 = vld [vmem:[#allocation2 + $0x58] sm:$0xff]
        %v703 = vld [vmem:[#allocation2 + $0x60] sm:$0xff]
        %v704 = vld [vmem:[#allocation2 + $0x68] sm:$0xff]
        %v705 = vld [vmem:[#allocation2 + $0x70] sm:$0xff]
        %v706 = vld [vmem:[#allocation2 + $0x78] sm:$0xff]
        %v707 = vld [vmem:[#allocation2 + $0x80] sm:$0xff]
        %v708 = vld [vmem:[#allocation2 + $0x88] sm:$0xff]
        %v709 = vld [vmem:[#allocation2 + $0x90] sm:$0xff]
        %v710 = vld [vmem:[#allocation2 + $0x98] sm:$0xff]
        %v711 = vld [vmem:[#allocation2 + $0xa0] sm:$0xff]
        %v712 = vld [vmem:[#allocation2 + $0xa8] sm:$0xff]
        %v713 = vld [vmem:[#allocation2 + $0xb0] sm:$0xff]
        %v714 = vld [vmem:[#allocation2 + $0xb8] sm:$0xff]
        %v715 = vld [vmem:[#allocation2 + $0xc0] sm:$0xff]
        %v716 = vld [vmem:[#allocation2 + $0xc8] sm:$0xff]
        %v717 = vld [vmem:[#allocation2 + $0xd0] sm:$0xff]
        %v718 = vld [vmem:[#allocation2 + $0xd8] sm:$0xff]
        %v719 = vld [vmem:[#allocation2 + $0xe0] sm:$0xff]
        %v720 = vld [vmem:[#allocation2 + $0xe8] sm:$0xff]
        %v721 = vadd.f32 %v691, %v617
        %v722 = vadd.f32 %v692, %v619
        %v723 = vadd.f32 %v693, %v622
        %v724 = vadd.f32 %v694, %v624
        %v725 = vadd.f32 %v695, %v627
        %v726 = vadd.f32 %v696, %v629
        %v727 = vadd.f32 %v697, %v632
        %v728 = vadd.f32 %v698, %v634
        %v729 = vadd.f32 %v699, %v637
        %v730 = vadd.f32 %v700, %v639
        %v731 = vadd.f32 %v701, %v642
        %v732 = vadd.f32 %v702, %v644
        %v733 = vadd.f32 %v703, %v647
        %v734 = vadd.f32 %v704, %v649
        %v735 = vadd.f32 %v705, %v652
        %v736 = vadd.f32 %v706, %v654
        %v737 = vadd.f32 %v707, %v657
        %v738 = vadd.f32 %v708, %v659
        %v739 = vadd.f32 %v709, %v662
        %v740 = vadd.f32 %v710, %v664
        %v741 = vadd.f32 %v711, %v667
        %v742 = vadd.f32 %v712, %v669
        %v743 = vadd.f32 %v713, %v672
        %v744 = vadd.f32 %v714, %v674
        %v745 = vadd.f32 %v715, %v677
        %v746 = vadd.f32 %v716, %v679
        %v747 = vadd.f32 %v717, %v682
        %v748 = vadd.f32 %v718, %v684
        %v749 = vadd.f32 %v719, %v687
        %v750 = vadd.f32 %v720, %v689
        %751 = vst [vmem:[#allocation2] sm:$0xff] %v721
        %752 = vst [vmem:[#allocation2 + $0x8] sm:$0xff] %v722
        %753 = vst [vmem:[#allocation2 + $0x10] sm:$0xff] %v723
        %754 = vst [vmem:[#allocation2 + $0x18] sm:$0xff] %v724
        %755 = vst [vmem:[#allocation2 + $0x20] sm:$0xff] %v725
        %756 = vst [vmem:[#allocation2 + $0x28] sm:$0xff] %v726
        %757 = vst [vmem:[#allocation2 + $0x30] sm:$0xff] %v727
        %758 = vst [vmem:[#allocation2 + $0x38] sm:$0xff] %v728
        %759 = vst [vmem:[#allocation2 + $0x40] sm:$0xff] %v729
        %760 = vst [vmem:[#allocation2 + $0x48] sm:$0xff] %v730
        %761 = vst [vmem:[#allocation2 + $0x50] sm:$0xff] %v731
        %762 = vst [vmem:[#allocation2 + $0x58] sm:$0xff] %v732
        %763 = vst [vmem:[#allocation2 + $0x60] sm:$0xff] %v733
        %764 = vst [vmem:[#allocation2 + $0x68] sm:$0xff] %v734
        %765 = vst [vmem:[#allocation2 + $0x70] sm:$0xff] %v735
        %766 = vst [vmem:[#allocation2 + $0x78] sm:$0xff] %v736
        %767 = vst [vmem:[#allocation2 + $0x80] sm:$0xff] %v737
        %768 = vst [vmem:[#allocation2 + $0x88] sm:$0xff] %v738
        %769 = vst [vmem:[#allocation2 + $0x90] sm:$0xff] %v739
        %770 = vst [vmem:[#allocation2 + $0x98] sm:$0xff] %v740
        %771 = vst [vmem:[#allocation2 + $0xa0] sm:$0xff] %v741
        %772 = vst [vmem:[#allocation2 + $0xa8] sm:$0xff] %v742
        %773 = vst [vmem:[#allocation2 + $0xb0] sm:$0xff] %v743
        %774 = vst [vmem:[#allocation2 + $0xb8] sm:$0xff] %v744
        %775 = vst [vmem:[#allocation2 + $0xc0] sm:$0xff] %v745
        %776 = vst [vmem:[#allocation2 + $0xc8] sm:$0xff] %v746
        %777 = vst [vmem:[#allocation2 + $0xd0] sm:$0xff] %v747
        %778 = vst [vmem:[#allocation2 + $0xd8] sm:$0xff] %v748
        %779 = vst [vmem:[#allocation2 + $0xe0] sm:$0xff] %v749
        %780 = vst [vmem:[#allocation2 + $0xe8] sm:$0xff] %v750
        %v781 = vrot.slane %v241, 2
        %v782 = vrot.slane %v244, 2
        %v783 = vrot.slane %v247, 2
        %v784 = vrot.slane %v250, 2
        %v785 = vrot.slane %v253, 2
        %v786 = vrot.slane %v256, 2
        %v787 = vrot.slane %v259, 2
        %v788 = vrot.slane %v262, 2
        %v789 = vrot.slane %v265, 2
        %v790 = vrot.slane %v268, 2
        %v791 = vrot.slane %v242, 2
        %v792 = vrot.slane %v245, 2
        %v793 = vrot.slane %v248, 2
        %v794 = vrot.slane %v251, 2
        %v795 = vrot.slane %v254, 2
        %v796 = vrot.slane %v257, 2
        %v797 = vrot.slane %v260, 2
        %v798 = vrot.slane %v263, 2
        %v799 = vrot.slane %v266, 2
        %v800 = vrot.slane %v269, 2
        %v801 = vrot.slane %v243, 2
        %v802 = vrot.slane %v246, 2
        %v803 = vrot.slane %v249, 2
        %v804 = vrot.slane %v252, 2
        %v805 = vrot.slane %v255, 2
        %v806 = vrot.slane %v258, 2
        %v807 = vrot.slane %v261, 2
        %v808 = vrot.slane %v264, 2
        %v809 = vrot.slane %v267, 2
        %v810 = vrot.slane %v270, 2
        %vm811 = vcmp.lt.s32.totalorder %v495, 6
        %v812 = vsel %vm811, %v791, %v801
        %v813 = vsel %vm811, %v792, %v802
        %v814 = vsel %vm811, %v793, %v803
        %v815 = vsel %vm811, %v794, %v804
        %v816 = vsel %vm811, %v795, %v805
        %v817 = vsel %vm811, %v796, %v806
        %v818 = vsel %vm811, %v797, %v807
        %v819 = vsel %vm811, %v798, %v808
        %v820 = vsel %vm811, %v799, %v809
        %v821 = vsel %vm811, %v800, %v810
        %v822 = vsel %vm811, %v781, %v791
        %v823 = vsel %vm811, %v782, %v792
        %v824 = vsel %vm811, %v783, %v793
        %v825 = vsel %vm811, %v784, %v794
        %v826 = vsel %vm811, %v785, %v795
        %v827 = vsel %vm811, %v786, %v796
        %v828 = vsel %vm811, %v787, %v797
        %v829 = vsel %vm811, %v788, %v798
        %v830 = vsel %vm811, %v789, %v799
        %v831 = vsel %vm811, %v790, %v800
        %v832 = vsel %vm811, %v801, %v781
        %v833 = vsel %vm811, %v802, %v782
        %v834 = vsel %vm811, %v803, %v783
        %v835 = vsel %vm811, %v804, %v784
        %v836 = vsel %vm811, %v805, %v785
        %v837 = vsel %vm811, %v806, %v786
        %v838 = vsel %vm811, %v807, %v787
        %v839 = vsel %vm811, %v808, %v788
        %v840 = vsel %vm811, %v809, %v789
        %v841 = vsel %vm811, %v810, %v790
        %v842 = vpack.c.bf16 %v812, %v822
        %v843 = vpack.c.bf16 %v823, %v832
        %v844 = vpack.c.bf16 %v833, %v813
        %v845 = vpack.c.bf16 %v814, %v824
        %v846 = vpack.c.bf16 %v825, %v834
        %v847 = vpack.c.bf16 %v835, %v815
        %v848 = vpack.c.bf16 %v816, %v826
        %v849 = vpack.c.bf16 %v827, %v836
        %v850 = vpack.c.bf16 %v837, %v817
        %v851 = vpack.c.bf16 %v818, %v828
        %v852 = vpack.c.bf16 %v829, %v838
        %v853 = vpack.c.bf16 %v839, %v819
        %v854 = vpack.c.bf16 %v820, %v830
        %v855 = vpack.c.bf16 %v831, %v840
        %v856 = vpack.c.bf16 %v841, %v821
        %s857 = scalar_lea.vmem %s1, 128
        %v858 = vld [vmem:[%s857] sm:$0xf]
        %v859 = vld [vmem:[%s857 + $0x4] sm:$0xf]
        %v860 = vld [vmem:[%s857 + $0x8] sm:$0xf]
        %v861 = vld [vmem:[%s857 + $0xc] sm:$0xf]
        %v862 = vld [vmem:[%s857 + $0x10] sm:$0xf]
        %v863 = vld [vmem:[%s857 + $0x14] sm:$0xf]
        %v864 = vld [vmem:[%s857 + $0x18] sm:$0xf]
        %v865 = vld [vmem:[%s857 + $0x1c] sm:$0xf]
        %v866 = vld [vmem:[%s857 + $0x20] sm:$0xf]
        %v867 = vld [vmem:[%s857 + $0x24] sm:$0xf]
        %v868 = vld [vmem:[%s857 + $0x28] sm:$0xf]
        %v869 = vld [vmem:[%s857 + $0x2c] sm:$0xf]
        %v870 = vld [vmem:[%s857 + $0x30] sm:$0xf]
        %v871 = vld [vmem:[%s857 + $0x34] sm:$0xf]
        %v872 = vld [vmem:[%s857 + $0x38] sm:$0xf]
        %v873 = vld [vmem:[%s857 + $0x3c] sm:$0xf]
        %v890 = vunpack.c.l.b16 %v858
        %v891 = vunpack.c.l.b16 %v859
        %v892 = vunpack.c.l.b16 %v860
        %v893 = vunpack.c.l.b16 %v861
        %v894 = vunpack.c.l.b16 %v862
        %v895 = vunpack.c.l.b16 %v863
        %v896 = vunpack.c.l.b16 %v864
        %v897 = vunpack.c.l.b16 %v865
        %v898 = vunpack.c.l.b16 %v866
        %v899 = vunpack.c.l.b16 %v867
        %v900 = vunpack.c.l.b16 %v868
        %v901 = vunpack.c.l.b16 %v869
        %v902 = vunpack.c.l.b16 %v870
        %v903 = vunpack.c.l.b16 %v871
        %v904 = vunpack.c.l.b16 %v872
        %v905 = vunpack.c.l.b16 %v873
        %v906 = vpack.c.b16 %v891, %v890
        %v907 = vpack.c.b16 %v893, %v892
        %v908 = vpack.c.b16 %v895, %v894
        %v909 = vpack.c.b16 %v897, %v896
        %v910 = vpack.c.b16 %v899, %v898
        %v911 = vpack.c.b16 %v901, %v900
        %v912 = vpack.c.b16 %v903, %v902
        %v913 = vpack.c.b16 %v905, %v904
        %922 = vmatpush.bf16.msra.mxu0 %v913
        %923 = vmatpush.bf16.msra.mxu0 %v912
        %924 = vmatpush.bf16.msra.mxu0 %v911
        %925 = vmatpush.bf16.msra.mxu0 %v910
        %926 = vmatpush.bf16.msra.mxu0 %v909
        %927 = vmatpush.bf16.msra.mxu0 %v908
        %928 = vmatpush.bf16.msra.mxu0 %v907
        %929 = vmatpush.bf16.msra.mxu0 %v906
        %930 = vmatmul.bf16.gmra.mxu0 %v842
        %v931 = vpop.f32.mrf.mxu0
        %v932 = vadd.f32 0.0, %v931
        %v933 = vpop.f32.mrf.mxu0
        %v934 = vadd.f32 0.0, %v933
        %935 = vmatmul.bf16.gmra.mxu0 %v843
        %v936 = vpop.f32.mrf.mxu0
        %v937 = vadd.f32 0.0, %v936
        %v938 = vpop.f32.mrf.mxu0
        %v939 = vadd.f32 0.0, %v938
        %940 = vmatmul.bf16.gmra.mxu0 %v844
        %v941 = vpop.f32.mrf.mxu0
        %v942 = vadd.f32 0.0, %v941
        %v943 = vpop.f32.mrf.mxu0
        %v944 = vadd.f32 0.0, %v943
        %945 = vmatmul.bf16.gmra.mxu0 %v845
        %v946 = vpop.f32.mrf.mxu0
        %v947 = vadd.f32 0.0, %v946
        %v948 = vpop.f32.mrf.mxu0
        %v949 = vadd.f32 0.0, %v948
        %950 = vmatmul.bf16.gmra.mxu0 %v846
        %v951 = vpop.f32.mrf.mxu0
        %v952 = vadd.f32 0.0, %v951
        %v953 = vpop.f32.mrf.mxu0
        %v954 = vadd.f32 0.0, %v953
        %955 = vmatmul.bf16.gmra.mxu0 %v847
        %v956 = vpop.f32.mrf.mxu0
        %v957 = vadd.f32 0.0, %v956
        %v958 = vpop.f32.mrf.mxu0
        %v959 = vadd.f32 0.0, %v958
        %960 = vmatmul.bf16.gmra.mxu0 %v848
        %v961 = vpop.f32.mrf.mxu0
        %v962 = vadd.f32 0.0, %v961
        %v963 = vpop.f32.mrf.mxu0
        %v964 = vadd.f32 0.0, %v963
        %965 = vmatmul.bf16.gmra.mxu0 %v849
        %v966 = vpop.f32.mrf.mxu0
        %v967 = vadd.f32 0.0, %v966
        %v968 = vpop.f32.mrf.mxu0
        %v969 = vadd.f32 0.0, %v968
        %970 = vmatmul.bf16.gmra.mxu0 %v850
        %v971 = vpop.f32.mrf.mxu0
        %v972 = vadd.f32 0.0, %v971
        %v973 = vpop.f32.mrf.mxu0
        %v974 = vadd.f32 0.0, %v973
        %975 = vmatmul.bf16.gmra.mxu0 %v851
        %v976 = vpop.f32.mrf.mxu0
        %v977 = vadd.f32 0.0, %v976
        %v978 = vpop.f32.mrf.mxu0
        %v979 = vadd.f32 0.0, %v978
        %980 = vmatmul.bf16.gmra.mxu0 %v852
        %v981 = vpop.f32.mrf.mxu0
        %v982 = vadd.f32 0.0, %v981
        %v983 = vpop.f32.mrf.mxu0
        %v984 = vadd.f32 0.0, %v983
        %985 = vmatmul.bf16.gmra.mxu0 %v853
        %v986 = vpop.f32.mrf.mxu0
        %v987 = vadd.f32 0.0, %v986
        %v988 = vpop.f32.mrf.mxu0
        %v989 = vadd.f32 0.0, %v988
        %990 = vmatmul.bf16.gmra.mxu0 %v854
        %v991 = vpop.f32.mrf.mxu0
        %v992 = vadd.f32 0.0, %v991
        %v993 = vpop.f32.mrf.mxu0
        %v994 = vadd.f32 0.0, %v993
        %995 = vmatmul.bf16.gmra.mxu0 %v855
        %v996 = vpop.f32.mrf.mxu0
        %v997 = vadd.f32 0.0, %v996
        %v998 = vpop.f32.mrf.mxu0
        %v999 = vadd.f32 0.0, %v998
        %1000 = vmatmul.bf16.gmra.mxu0 %v856
        %v1001 = vpop.f32.mrf.mxu0
        %v1002 = vadd.f32 0.0, %v1001
        %v1003 = vpop.f32.mrf.mxu0
        %v1004 = vadd.f32 0.0, %v1003
        %1005 = vdwg.mxu0
        %v1006 = vld [vmem:[#allocation2] sm:$0xff]
        %v1007 = vld [vmem:[#allocation2 + $0x8] sm:$0xff]
        %v1008 = vld [vmem:[#allocation2 + $0x10] sm:$0xff]
        %v1009 = vld [vmem:[#allocation2 + $0x18] sm:$0xff]
        %v1010 = vld [vmem:[#allocation2 + $0x20] sm:$0xff]
        %v1011 = vld [vmem:[#allocation2 + $0x28] sm:$0xff]
        %v1012 = vld [vmem:[#allocation2 + $0x30] sm:$0xff]
        %v1013 = vld [vmem:[#allocation2 + $0x38] sm:$0xff]
        %v1014 = vld [vmem:[#allocation2 + $0x40] sm:$0xff]
        %v1015 = vld [vmem:[#allocation2 + $0x48] sm:$0xff]
        %v1016 = vld [vmem:[#allocation2 + $0x50] sm:$0xff]
        %v1017 = vld [vmem:[#allocation2 + $0x58] sm:$0xff]
        %v1018 = vld [vmem:[#allocation2 + $0x60] sm:$0xff]
        %v1019 = vld [vmem:[#allocation2 + $0x68] sm:$0xff]
        %v1020 = vld [vmem:[#allocation2 + $0x70] sm:$0xff]
        %v1021 = vld [vmem:[#allocation2 + $0x78] sm:$0xff]
        %v1022 = vld [vmem:[#allocation2 + $0x80] sm:$0xff]
        %v1023 = vld [vmem:[#allocation2 + $0x88] sm:$0xff]
        %v1024 = vld [vmem:[#allocation2 + $0x90] sm:$0xff]
        %v1025 = vld [vmem:[#allocation2 + $0x98] sm:$0xff]
        %v1026 = vld [vmem:[#allocation2 + $0xa0] sm:$0xff]
        %v1027 = vld [vmem:[#allocation2 + $0xa8] sm:$0xff]
        %v1028 = vld [vmem:[#allocation2 + $0xb0] sm:$0xff]
        %v1029 = vld [vmem:[#allocation2 + $0xb8] sm:$0xff]
        %v1030 = vld [vmem:[#allocation2 + $0xc0] sm:$0xff]
        %v1031 = vld [vmem:[#allocation2 + $0xc8] sm:$0xff]
        %v1032 = vld [vmem:[#allocation2 + $0xd0] sm:$0xff]
        %v1033 = vld [vmem:[#allocation2 + $0xd8] sm:$0xff]
        %v1034 = vld [vmem:[#allocation2 + $0xe0] sm:$0xff]
        %v1035 = vld [vmem:[#allocation2 + $0xe8] sm:$0xff]
        %v1036 = vadd.f32 %v1006, %v932
        %v1037 = vadd.f32 %v1007, %v934
        %v1038 = vadd.f32 %v1008, %v937
        %v1039 = vadd.f32 %v1009, %v939
        %v1040 = vadd.f32 %v1010, %v942
        %v1041 = vadd.f32 %v1011, %v944
        %v1042 = vadd.f32 %v1012, %v947
        %v1043 = vadd.f32 %v1013, %v949
        %v1044 = vadd.f32 %v1014, %v952
        %v1045 = vadd.f32 %v1015, %v954
        %v1046 = vadd.f32 %v1016, %v957
        %v1047 = vadd.f32 %v1017, %v959
        %v1048 = vadd.f32 %v1018, %v962
        %v1049 = vadd.f32 %v1019, %v964
        %v1050 = vadd.f32 %v1020, %v967
        %v1051 = vadd.f32 %v1021, %v969
        %v1052 = vadd.f32 %v1022, %v972
        %v1053 = vadd.f32 %v1023, %v974
        %v1054 = vadd.f32 %v1024, %v977
        %v1055 = vadd.f32 %v1025, %v979
        %v1056 = vadd.f32 %v1026, %v982
        %v1057 = vadd.f32 %v1027, %v984
        %v1058 = vadd.f32 %v1028, %v987
        %v1059 = vadd.f32 %v1029, %v989
        %v1060 = vadd.f32 %v1030, %v992
        %v1061 = vadd.f32 %v1031, %v994
        %v1062 = vadd.f32 %v1032, %v997
        %v1063 = vadd.f32 %v1033, %v999
        %v1064 = vadd.f32 %v1034, %v1002
        %v1065 = vadd.f32 %v1035, %v1004
        %1066 = vst [vmem:[#allocation2] sm:$0xff] %v1036
        %1067 = vst [vmem:[#allocation2 + $0x8] sm:$0xff] %v1037
        %1068 = vst [vmem:[#allocation2 + $0x10] sm:$0xff] %v1038
        %1069 = vst [vmem:[#allocation2 + $0x18] sm:$0xff] %v1039
        %1070 = vst [vmem:[#allocation2 + $0x20] sm:$0xff] %v1040
        %1071 = vst [vmem:[#allocation2 + $0x28] sm:$0xff] %v1041
        %1072 = vst [vmem:[#allocation2 + $0x30] sm:$0xff] %v1042
        %1073 = vst [vmem:[#allocation2 + $0x38] sm:$0xff] %v1043
        %1074 = vst [vmem:[#allocation2 + $0x40] sm:$0xff] %v1044
        %1075 = vst [vmem:[#allocation2 + $0x48] sm:$0xff] %v1045
        %1076 = vst [vmem:[#allocation2 + $0x50] sm:$0xff] %v1046
        %1077 = vst [vmem:[#allocation2 + $0x58] sm:$0xff] %v1047
        %1078 = vst [vmem:[#allocation2 + $0x60] sm:$0xff] %v1048
        %1079 = vst [vmem:[#allocation2 + $0x68] sm:$0xff] %v1049
        %1080 = vst [vmem:[#allocation2 + $0x70] sm:$0xff] %v1050
        %1081 = vst [vmem:[#allocation2 + $0x78] sm:$0xff] %v1051
        %1082 = vst [vmem:[#allocation2 + $0x80] sm:$0xff] %v1052
        %1083 = vst [vmem:[#allocation2 + $0x88] sm:$0xff] %v1053
        %1084 = vst [vmem:[#allocation2 + $0x90] sm:$0xff] %v1054
        %1085 = vst [vmem:[#allocation2 + $0x98] sm:$0xff] %v1055
        %1086 = vst [vmem:[#allocation2 + $0xa0] sm:$0xff] %v1056
        %1087 = vst [vmem:[#allocation2 + $0xa8] sm:$0xff] %v1057
        %1088 = vst [vmem:[#allocation2 + $0xb0] sm:$0xff] %v1058
        %1089 = vst [vmem:[#allocation2 + $0xb8] sm:$0xff] %v1059
        %1090 = vst [vmem:[#allocation2 + $0xc0] sm:$0xff] %v1060
        %1091 = vst [vmem:[#allocation2 + $0xc8] sm:$0xff] %v1061
        %1092 = vst [vmem:[#allocation2 + $0xd0] sm:$0xff] %v1062
        %1093 = vst [vmem:[#allocation2 + $0xd8] sm:$0xff] %v1063
        %1094 = vst [vmem:[#allocation2 + $0xe0] sm:$0xff] %v1064
        %1095 = vst [vmem:[#allocation2 + $0xe8] sm:$0xff] %v1065
        %s1096 = sadd.s32 %s238, 1
        %s1097 = smul.u32 %s1096, 24
        %s1098 = scalar_lea.vmem %s236, %s1097
        %v1099 = vld [vmem:[%s1098] sm:$0xff]
        %v1100 = vld [vmem:[%s1098 + $0x8] sm:$0xff]
        %v1101 = vld [vmem:[%s1098 + $0x10] sm:$0xff]
        %v1102 = vld [vmem:[%s1098 + $0x18] sm:$0xff]
        %v1103 = vld [vmem:[%s1098 + $0x20] sm:$0xff]
        %v1104 = vld [vmem:[%s1098 + $0x28] sm:$0xff]
        %v1105 = vld [vmem:[%s1098 + $0x30] sm:$0xff]
        %v1106 = vld [vmem:[%s1098 + $0x38] sm:$0xff]
        %v1107 = vld [vmem:[%s1098 + $0x40] sm:$0xff]
        %v1108 = vld [vmem:[%s1098 + $0x48] sm:$0xff]
        %v1109 = vld [vmem:[%s1098 + $0x50] sm:$0xff]
        %v1110 = vld [vmem:[%s1098 + $0x58] sm:$0xff]
        %v1111 = vld [vmem:[%s1098 + $0x60] sm:$0xff]
        %v1112 = vld [vmem:[%s1098 + $0x68] sm:$0xff]
        %v1113 = vld [vmem:[%s1098 + $0x70] sm:$0xff]
        %v1114 = vld [vmem:[%s1098 + $0x78] sm:$0xff]
        %v1115 = vld [vmem:[%s1098 + $0x80] sm:$0xff]
        %v1116 = vld [vmem:[%s1098 + $0x88] sm:$0xff]
        %v1117 = vld [vmem:[%s1098 + $0x90] sm:$0xff]
        %v1118 = vld [vmem:[%s1098 + $0x98] sm:$0xff]
        %v1119 = vld [vmem:[%s1098 + $0xa0] sm:$0xff]
        %v1120 = vld [vmem:[%s1098 + $0xa8] sm:$0xff]
        %v1121 = vld [vmem:[%s1098 + $0xb0] sm:$0xff]
        %v1122 = vld [vmem:[%s1098 + $0xb8] sm:$0xff]
        %v1123 = vld [vmem:[%s1098 + $0xc0] sm:$0xff]
        %v1124 = vld [vmem:[%s1098 + $0xc8] sm:$0xff]
        %v1125 = vld [vmem:[%s1098 + $0xd0] sm:$0xff]
        %v1126 = vld [vmem:[%s1098 + $0xd8] sm:$0xff]
        %v1127 = vld [vmem:[%s1098 + $0xe0] sm:$0xff]
        %v1128 = vld [vmem:[%s1098 + $0xe8] sm:$0xff]
        %v1129 = vpack.c.bf16 %v1100, %v1099
        %v1130 = vpack.c.bf16 %v1102, %v1101
        %v1131 = vpack.c.bf16 %v1104, %v1103
        %v1132 = vpack.c.bf16 %v1106, %v1105
        %v1133 = vpack.c.bf16 %v1108, %v1107
        %v1134 = vpack.c.bf16 %v1110, %v1109
        %v1135 = vpack.c.bf16 %v1112, %v1111
        %v1136 = vpack.c.bf16 %v1114, %v1113
        %v1137 = vpack.c.bf16 %v1116, %v1115
        %v1138 = vpack.c.bf16 %v1118, %v1117
        %v1139 = vpack.c.bf16 %v1120, %v1119
        %v1140 = vpack.c.bf16 %v1122, %v1121
        %v1141 = vpack.c.bf16 %v1124, %v1123
        %v1142 = vpack.c.bf16 %v1126, %v1125
        %v1143 = vpack.c.bf16 %v1128, %v1127
        %s1144 = scalar_lea.vmem %s1, 192
        %v1145 = vld [vmem:[%s1144] sm:$0xf]
        %v1146 = vld [vmem:[%s1144 + $0x4] sm:$0xf]
        %v1147 = vld [vmem:[%s1144 + $0x8] sm:$0xf]
        %v1148 = vld [vmem:[%s1144 + $0xc] sm:$0xf]
        %v1149 = vld [vmem:[%s1144 + $0x10] sm:$0xf]
        %v1150 = vld [vmem:[%s1144 + $0x14] sm:$0xf]
        %v1151 = vld [vmem:[%s1144 + $0x18] sm:$0xf]
        %v1152 = vld [vmem:[%s1144 + $0x1c] sm:$0xf]
        %v1153 = vld [vmem:[%s1144 + $0x20] sm:$0xf]
        %v1154 = vld [vmem:[%s1144 + $0x24] sm:$0xf]
        %v1155 = vld [vmem:[%s1144 + $0x28] sm:$0xf]
        %v1156 = vld [vmem:[%s1144 + $0x2c] sm:$0xf]
        %v1157 = vld [vmem:[%s1144 + $0x30] sm:$0xf]
        %v1158 = vld [vmem:[%s1144 + $0x34] sm:$0xf]
        %v1159 = vld [vmem:[%s1144 + $0x38] sm:$0xf]
        %v1160 = vld [vmem:[%s1144 + $0x3c] sm:$0xf]
        %v1177 = vunpack.c.l.b16 %v1145
        %v1178 = vunpack.c.l.b16 %v1146
        %v1179 = vunpack.c.l.b16 %v1147
        %v1180 = vunpack.c.l.b16 %v1148
        %v1181 = vunpack.c.l.b16 %v1149
        %v1182 = vunpack.c.l.b16 %v1150
        %v1183 = vunpack.c.l.b16 %v1151
        %v1184 = vunpack.c.l.b16 %v1152
        %v1185 = vunpack.c.l.b16 %v1153
        %v1186 = vunpack.c.l.b16 %v1154
        %v1187 = vunpack.c.l.b16 %v1155
        %v1188 = vunpack.c.l.b16 %v1156
        %v1189 = vunpack.c.l.b16 %v1157
        %v1190 = vunpack.c.l.b16 %v1158
        %v1191 = vunpack.c.l.b16 %v1159
        %v1192 = vunpack.c.l.b16 %v1160
        %v1193 = vpack.c.b16 %v1178, %v1177
        %v1194 = vpack.c.b16 %v1180, %v1179
        %v1195 = vpack.c.b16 %v1182, %v1181
        %v1196 = vpack.c.b16 %v1184, %v1183
        %v1197 = vpack.c.b16 %v1186, %v1185
        %v1198 = vpack.c.b16 %v1188, %v1187
        %v1199 = vpack.c.b16 %v1190, %v1189
        %v1200 = vpack.c.b16 %v1192, %v1191
        %1209 = vmatpush.bf16.msra.mxu0 %v1200
        %1210 = vmatpush.bf16.msra.mxu0 %v1199
        %1211 = vmatpush.bf16.msra.mxu0 %v1198
        %1212 = vmatpush.bf16.msra.mxu0 %v1197
        %1213 = vmatpush.bf16.msra.mxu0 %v1196
        %1214 = vmatpush.bf16.msra.mxu0 %v1195
        %1215 = vmatpush.bf16.msra.mxu0 %v1194
        %1216 = vmatpush.bf16.msra.mxu0 %v1193
        %1217 = vmatmul.bf16.gmra.mxu0 %v1129
        %v1218 = vpop.f32.mrf.mxu0
        %v1219 = vadd.f32 0.0, %v1218
        %v1220 = vpop.f32.mrf.mxu0
        %v1221 = vadd.f32 0.0, %v1220
        %1222 = vmatmul.bf16.gmra.mxu0 %v1130
        %v1223 = vpop.f32.mrf.mxu0
        %v1224 = vadd.f32 0.0, %v1223
        %v1225 = vpop.f32.mrf.mxu0
        %v1226 = vadd.f32 0.0, %v1225
        %1227 = vmatmul.bf16.gmra.mxu0 %v1131
        %v1228 = vpop.f32.mrf.mxu0
        %v1229 = vadd.f32 0.0, %v1228
        %v1230 = vpop.f32.mrf.mxu0
        %v1231 = vadd.f32 0.0, %v1230
        %1232 = vmatmul.bf16.gmra.mxu0 %v1132
        %v1233 = vpop.f32.mrf.mxu0
        %v1234 = vadd.f32 0.0, %v1233
        %v1235 = vpop.f32.mrf.mxu0
        %v1236 = vadd.f32 0.0, %v1235
        %1237 = vmatmul.bf16.gmra.mxu0 %v1133
        %v1238 = vpop.f32.mrf.mxu0
        %v1239 = vadd.f32 0.0, %v1238
        %v1240 = vpop.f32.mrf.mxu0
        %v1241 = vadd.f32 0.0, %v1240
        %1242 = vmatmul.bf16.gmra.mxu0 %v1134
        %v1243 = vpop.f32.mrf.mxu0
        %v1244 = vadd.f32 0.0, %v1243
        %v1245 = vpop.f32.mrf.mxu0
        %v1246 = vadd.f32 0.0, %v1245
        %1247 = vmatmul.bf16.gmra.mxu0 %v1135
        %v1248 = vpop.f32.mrf.mxu0
        %v1249 = vadd.f32 0.0, %v1248
        %v1250 = vpop.f32.mrf.mxu0
        %v1251 = vadd.f32 0.0, %v1250
        %1252 = vmatmul.bf16.gmra.mxu0 %v1136
        %v1253 = vpop.f32.mrf.mxu0
        %v1254 = vadd.f32 0.0, %v1253
        %v1255 = vpop.f32.mrf.mxu0
        %v1256 = vadd.f32 0.0, %v1255
        %1257 = vmatmul.bf16.gmra.mxu0 %v1137
        %v1258 = vpop.f32.mrf.mxu0
        %v1259 = vadd.f32 0.0, %v1258
        %v1260 = vpop.f32.mrf.mxu0
        %v1261 = vadd.f32 0.0, %v1260
        %1262 = vmatmul.bf16.gmra.mxu0 %v1138
        %v1263 = vpop.f32.mrf.mxu0
        %v1264 = vadd.f32 0.0, %v1263
        %v1265 = vpop.f32.mrf.mxu0
        %v1266 = vadd.f32 0.0, %v1265
        %1267 = vmatmul.bf16.gmra.mxu0 %v1139
        %v1268 = vpop.f32.mrf.mxu0
        %v1269 = vadd.f32 0.0, %v1268
        %v1270 = vpop.f32.mrf.mxu0
        %v1271 = vadd.f32 0.0, %v1270
        %1272 = vmatmul.bf16.gmra.mxu0 %v1140
        %v1273 = vpop.f32.mrf.mxu0
        %v1274 = vadd.f32 0.0, %v1273
        %v1275 = vpop.f32.mrf.mxu0
        %v1276 = vadd.f32 0.0, %v1275
        %1277 = vmatmul.bf16.gmra.mxu0 %v1141
        %v1278 = vpop.f32.mrf.mxu0
        %v1279 = vadd.f32 0.0, %v1278
        %v1280 = vpop.f32.mrf.mxu0
        %v1281 = vadd.f32 0.0, %v1280
        %1282 = vmatmul.bf16.gmra.mxu0 %v1142
        %v1283 = vpop.f32.mrf.mxu0
        %v1284 = vadd.f32 0.0, %v1283
        %v1285 = vpop.f32.mrf.mxu0
        %v1286 = vadd.f32 0.0, %v1285
        %1287 = vmatmul.bf16.gmra.mxu0 %v1143
        %v1288 = vpop.f32.mrf.mxu0
        %v1289 = vadd.f32 0.0, %v1288
        %v1290 = vpop.f32.mrf.mxu0
        %v1291 = vadd.f32 0.0, %v1290
        %1292 = vdwg.mxu0
        %v1293 = vld [vmem:[#allocation2] sm:$0xff]
        %v1294 = vld [vmem:[#allocation2 + $0x8] sm:$0xff]
        %v1295 = vld [vmem:[#allocation2 + $0x10] sm:$0xff]
        %v1296 = vld [vmem:[#allocation2 + $0x18] sm:$0xff]
        %v1297 = vld [vmem:[#allocation2 + $0x20] sm:$0xff]
        %v1298 = vld [vmem:[#allocation2 + $0x28] sm:$0xff]
        %v1299 = vld [vmem:[#allocation2 + $0x30] sm:$0xff]
        %v1300 = vld [vmem:[#allocation2 + $0x38] sm:$0xff]
        %v1301 = vld [vmem:[#allocation2 + $0x40] sm:$0xff]
        %v1302 = vld [vmem:[#allocation2 + $0x48] sm:$0xff]
        %v1303 = vld [vmem:[#allocation2 + $0x50] sm:$0xff]
        %v1304 = vld [vmem:[#allocation2 + $0x58] sm:$0xff]
        %v1305 = vld [vmem:[#allocation2 + $0x60] sm:$0xff]
        %v1306 = vld [vmem:[#allocation2 + $0x68] sm:$0xff]
        %v1307 = vld [vmem:[#allocation2 + $0x70] sm:$0xff]
        %v1308 = vld [vmem:[#allocation2 + $0x78] sm:$0xff]
        %v1309 = vld [vmem:[#allocation2 + $0x80] sm:$0xff]
        %v1310 = vld [vmem:[#allocation2 + $0x88] sm:$0xff]
        %v1311 = vld [vmem:[#allocation2 + $0x90] sm:$0xff]
        %v1312 = vld [vmem:[#allocation2 + $0x98] sm:$0xff]
        %v1313 = vld [vmem:[#allocation2 + $0xa0] sm:$0xff]
        %v1314 = vld [vmem:[#allocation2 + $0xa8] sm:$0xff]
        %v1315 = vld [vmem:[#allocation2 + $0xb0] sm:$0xff]
        %v1316 = vld [vmem:[#allocation2 + $0xb8] sm:$0xff]
        %v1317 = vld [vmem:[#allocation2 + $0xc0] sm:$0xff]
        %v1318 = vld [vmem:[#allocation2 + $0xc8] sm:$0xff]
        %v1319 = vld [vmem:[#allocation2 + $0xd0] sm:$0xff]
        %v1320 = vld [vmem:[#allocation2 + $0xd8] sm:$0xff]
        %v1321 = vld [vmem:[#allocation2 + $0xe0] sm:$0xff]
        %v1322 = vld [vmem:[#allocation2 + $0xe8] sm:$0xff]
        %v1323 = vadd.f32 %v1293, %v1219
        %v1324 = vadd.f32 %v1294, %v1221
        %v1325 = vadd.f32 %v1295, %v1224
        %v1326 = vadd.f32 %v1296, %v1226
        %v1327 = vadd.f32 %v1297, %v1229
        %v1328 = vadd.f32 %v1298, %v1231
        %v1329 = vadd.f32 %v1299, %v1234
        %v1330 = vadd.f32 %v1300, %v1236
        %v1331 = vadd.f32 %v1301, %v1239
        %v1332 = vadd.f32 %v1302, %v1241
        %v1333 = vadd.f32 %v1303, %v1244
        %v1334 = vadd.f32 %v1304, %v1246
        %v1335 = vadd.f32 %v1305, %v1249
        %v1336 = vadd.f32 %v1306, %v1251
        %v1337 = vadd.f32 %v1307, %v1254
        %v1338 = vadd.f32 %v1308, %v1256
        %v1339 = vadd.f32 %v1309, %v1259
        %v1340 = vadd.f32 %v1310, %v1261
        %v1341 = vadd.f32 %v1311, %v1264
        %v1342 = vadd.f32 %v1312, %v1266
        %v1343 = vadd.f32 %v1313, %v1269
        %v1344 = vadd.f32 %v1314, %v1271
        %v1345 = vadd.f32 %v1315, %v1274
        %v1346 = vadd.f32 %v1316, %v1276
        %v1347 = vadd.f32 %v1317, %v1279
        %v1348 = vadd.f32 %v1318, %v1281
        %v1349 = vadd.f32 %v1319, %v1284
        %v1350 = vadd.f32 %v1320, %v1286
        %v1351 = vadd.f32 %v1321, %v1289
        %v1352 = vadd.f32 %v1322, %v1291
        %1353 = vst [vmem:[#allocation2] sm:$0xff] %v1323
        %1354 = vst [vmem:[#allocation2 + $0x8] sm:$0xff] %v1324
        %1355 = vst [vmem:[#allocation2 + $0x10] sm:$0xff] %v1325
        %1356 = vst [vmem:[#allocation2 + $0x18] sm:$0xff] %v1326
        %1357 = vst [vmem:[#allocation2 + $0x20] sm:$0xff] %v1327
        %1358 = vst [vmem:[#allocation2 + $0x28] sm:$0xff] %v1328
        %1359 = vst [vmem:[#allocation2 + $0x30] sm:$0xff] %v1329
        %1360 = vst [vmem:[#allocation2 + $0x38] sm:$0xff] %v1330
        %1361 = vst [vmem:[#allocation2 + $0x40] sm:$0xff] %v1331
        %1362 = vst [vmem:[#allocation2 + $0x48] sm:$0xff] %v1332
        %1363 = vst [vmem:[#allocation2 + $0x50] sm:$0xff] %v1333
        %1364 = vst [vmem:[#allocation2 + $0x58] sm:$0xff] %v1334
        %1365 = vst [vmem:[#allocation2 + $0x60] sm:$0xff] %v1335
        %1366 = vst [vmem:[#allocation2 + $0x68] sm:$0xff] %v1336
        %1367 = vst [vmem:[#allocation2 + $0x70] sm:$0xff] %v1337
        %1368 = vst [vmem:[#allocation2 + $0x78] sm:$0xff] %v1338
        %1369 = vst [vmem:[#allocation2 + $0x80] sm:$0xff] %v1339
        %1370 = vst [vmem:[#allocation2 + $0x88] sm:$0xff] %v1340
        %1371 = vst [vmem:[#allocation2 + $0x90] sm:$0xff] %v1341
        %1372 = vst [vmem:[#allocation2 + $0x98] sm:$0xff] %v1342
        %1373 = vst [vmem:[#allocation2 + $0xa0] sm:$0xff] %v1343
        %1374 = vst [vmem:[#allocation2 + $0xa8] sm:$0xff] %v1344
        %1375 = vst [vmem:[#allocation2 + $0xb0] sm:$0xff] %v1345
        %1376 = vst [vmem:[#allocation2 + $0xb8] sm:$0xff] %v1346
        %1377 = vst [vmem:[#allocation2 + $0xc0] sm:$0xff] %v1347
        %1378 = vst [vmem:[#allocation2 + $0xc8] sm:$0xff] %v1348
        %1379 = vst [vmem:[#allocation2 + $0xd0] sm:$0xff] %v1349
        %1380 = vst [vmem:[#allocation2 + $0xd8] sm:$0xff] %v1350
        %1381 = vst [vmem:[#allocation2 + $0xe0] sm:$0xff] %v1351
        %1382 = vst [vmem:[#allocation2 + $0xe8] sm:$0xff] %v1352
        %v1383 = vrot.slane %v1099, 1
        %v1384 = vrot.slane %v1102, 1
        %v1385 = vrot.slane %v1105, 1
        %v1386 = vrot.slane %v1108, 1
        %v1387 = vrot.slane %v1111, 1
        %v1388 = vrot.slane %v1114, 1
        %v1389 = vrot.slane %v1117, 1
        %v1390 = vrot.slane %v1120, 1
        %v1391 = vrot.slane %v1123, 1
        %v1392 = vrot.slane %v1126, 1
        %v1393 = vrot.slane %v1100, 1
        %v1394 = vrot.slane %v1103, 1
        %v1395 = vrot.slane %v1106, 1
        %v1396 = vrot.slane %v1109, 1
        %v1397 = vrot.slane %v1112, 1
        %v1398 = vrot.slane %v1115, 1
        %v1399 = vrot.slane %v1118, 1
        %v1400 = vrot.slane %v1121, 1
        %v1401 = vrot.slane %v1124, 1
        %v1402 = vrot.slane %v1127, 1
        %v1403 = vrot.slane %v1101, 1
        %v1404 = vrot.slane %v1104, 1
        %v1405 = vrot.slane %v1107, 1
        %v1406 = vrot.slane %v1110, 1
        %v1407 = vrot.slane %v1113, 1
        %v1408 = vrot.slane %v1116, 1
        %v1409 = vrot.slane %v1119, 1
        %v1410 = vrot.slane %v1122, 1
        %v1411 = vrot.slane %v1125, 1
        %v1412 = vrot.slane %v1128, 1
        %v1413 = vsel %vm496, %v1393, %v1403
        %v1414 = vsel %vm496, %v1394, %v1404
        %v1415 = vsel %vm496, %v1395, %v1405
        %v1416 = vsel %vm496, %v1396, %v1406
        %v1417 = vsel %vm496, %v1397, %v1407
        %v1418 = vsel %vm496, %v1398, %v1408
        %v1419 = vsel %vm496, %v1399, %v1409
        %v1420 = vsel %vm496, %v1400, %v1410
        %v1421 = vsel %vm496, %v1401, %v1411
        %v1422 = vsel %vm496, %v1402, %v1412
        %v1423 = vsel %vm496, %v1383, %v1393
        %v1424 = vsel %vm496, %v1384, %v1394
        %v1425 = vsel %vm496, %v1385, %v1395
        %v1426 = vsel %vm496, %v1386, %v1396
        %v1427 = vsel %vm496, %v1387, %v1397
        %v1428 = vsel %vm496, %v1388, %v1398
        %v1429 = vsel %vm496, %v1389, %v1399
        %v1430 = vsel %vm496, %v1390, %v1400
        %v1431 = vsel %vm496, %v1391, %v1401
        %v1432 = vsel %vm496, %v1392, %v1402
        %v1433 = vsel %vm496, %v1403, %v1383
        %v1434 = vsel %vm496, %v1404, %v1384
        %v1435 = vsel %vm496, %v1405, %v1385
        %v1436 = vsel %vm496, %v1406, %v1386
        %v1437 = vsel %vm496, %v1407, %v1387
        %v1438 = vsel %vm496, %v1408, %v1388
        %v1439 = vsel %vm496, %v1409, %v1389
        %v1440 = vsel %vm496, %v1410, %v1390
        %v1441 = vsel %vm496, %v1411, %v1391
        %v1442 = vsel %vm496, %v1412, %v1392
        %v1443 = vpack.c.bf16 %v1413, %v1423
        %v1444 = vpack.c.bf16 %v1424, %v1433
        %v1445 = vpack.c.bf16 %v1434, %v1414
        %v1446 = vpack.c.bf16 %v1415, %v1425
        %v1447 = vpack.c.bf16 %v1426, %v1435
        %v1448 = vpack.c.bf16 %v1436, %v1416
        %v1449 = vpack.c.bf16 %v1417, %v1427
        %v1450 = vpack.c.bf16 %v1428, %v1437
        %v1451 = vpack.c.bf16 %v1438, %v1418
        %v1452 = vpack.c.bf16 %v1419, %v1429
        %v1453 = vpack.c.bf16 %v1430, %v1439
        %v1454 = vpack.c.bf16 %v1440, %v1420
        %v1455 = vpack.c.bf16 %v1421, %v1431
        %v1456 = vpack.c.bf16 %v1432, %v1441
        %v1457 = vpack.c.bf16 %v1442, %v1422
        %s1458 = scalar_lea.vmem %s1, 256
        %v1459 = vld [vmem:[%s1458] sm:$0xf]
        %v1460 = vld [vmem:[%s1458 + $0x4] sm:$0xf]
        %v1461 = vld [vmem:[%s1458 + $0x8] sm:$0xf]
        %v1462 = vld [vmem:[%s1458 + $0xc] sm:$0xf]
        %v1463 = vld [vmem:[%s1458 + $0x10] sm:$0xf]
        %v1464 = vld [vmem:[%s1458 + $0x14] sm:$0xf]
        %v1465 = vld [vmem:[%s1458 + $0x18] sm:$0xf]
        %v1466 = vld [vmem:[%s1458 + $0x1c] sm:$0xf]
        %v1467 = vld [vmem:[%s1458 + $0x20] sm:$0xf]
        %v1468 = vld [vmem:[%s1458 + $0x24] sm:$0xf]
        %v1469 = vld [vmem:[%s1458 + $0x28] sm:$0xf]
        %v1470 = vld [vmem:[%s1458 + $0x2c] sm:$0xf]
        %v1471 = vld [vmem:[%s1458 + $0x30] sm:$0xf]
        %v1472 = vld [vmem:[%s1458 + $0x34] sm:$0xf]
        %v1473 = vld [vmem:[%s1458 + $0x38] sm:$0xf]
        %v1474 = vld [vmem:[%s1458 + $0x3c] sm:$0xf]
        %v1491 = vunpack.c.l.b16 %v1459
        %v1492 = vunpack.c.l.b16 %v1460
        %v1493 = vunpack.c.l.b16 %v1461
        %v1494 = vunpack.c.l.b16 %v1462
        %v1495 = vunpack.c.l.b16 %v1463
        %v1496 = vunpack.c.l.b16 %v1464
        %v1497 = vunpack.c.l.b16 %v1465
        %v1498 = vunpack.c.l.b16 %v1466
        %v1499 = vunpack.c.l.b16 %v1467
        %v1500 = vunpack.c.l.b16 %v1468
        %v1501 = vunpack.c.l.b16 %v1469
        %v1502 = vunpack.c.l.b16 %v1470
        %v1503 = vunpack.c.l.b16 %v1471
        %v1504 = vunpack.c.l.b16 %v1472
        %v1505 = vunpack.c.l.b16 %v1473
        %v1506 = vunpack.c.l.b16 %v1474
        %v1507 = vpack.c.b16 %v1492, %v1491
        %v1508 = vpack.c.b16 %v1494, %v1493
        %v1509 = vpack.c.b16 %v1496, %v1495
        %v1510 = vpack.c.b16 %v1498, %v1497
        %v1511 = vpack.c.b16 %v1500, %v1499
        %v1512 = vpack.c.b16 %v1502, %v1501
        %v1513 = vpack.c.b16 %v1504, %v1503
        %v1514 = vpack.c.b16 %v1506, %v1505
        %1523 = vmatpush.bf16.msra.mxu0 %v1514
        %1524 = vmatpush.bf16.msra.mxu0 %v1513
        %1525 = vmatpush.bf16.msra.mxu0 %v1512
        %1526 = vmatpush.bf16.msra.mxu0 %v1511
        %1527 = vmatpush.bf16.msra.mxu0 %v1510
        %1528 = vmatpush.bf16.msra.mxu0 %v1509
        %1529 = vmatpush.bf16.msra.mxu0 %v1508
        %1530 = vmatpush.bf16.msra.mxu0 %v1507
        %1531 = vmatmul.bf16.gmra.mxu0 %v1443
        %v1532 = vpop.f32.mrf.mxu0
        %v1533 = vadd.f32 0.0, %v1532
        %v1534 = vpop.f32.mrf.mxu0
        %v1535 = vadd.f32 0.0, %v1534
        %1536 = vmatmul.bf16.gmra.mxu0 %v1444
        %v1537 = vpop.f32.mrf.mxu0
        %v1538 = vadd.f32 0.0, %v1537
        %v1539 = vpop.f32.mrf.mxu0
        %v1540 = vadd.f32 0.0, %v1539
        %1541 = vmatmul.bf16.gmra.mxu0 %v1445
        %v1542 = vpop.f32.mrf.mxu0
        %v1543 = vadd.f32 0.0, %v1542
        %v1544 = vpop.f32.mrf.mxu0
        %v1545 = vadd.f32 0.0, %v1544
        %1546 = vmatmul.bf16.gmra.mxu0 %v1446
        %v1547 = vpop.f32.mrf.mxu0
        %v1548 = vadd.f32 0.0, %v1547
        %v1549 = vpop.f32.mrf.mxu0
        %v1550 = vadd.f32 0.0, %v1549
        %1551 = vmatmul.bf16.gmra.mxu0 %v1447
        %v1552 = vpop.f32.mrf.mxu0
        %v1553 = vadd.f32 0.0, %v1552
        %v1554 = vpop.f32.mrf.mxu0
        %v1555 = vadd.f32 0.0, %v1554
        %1556 = vmatmul.bf16.gmra.mxu0 %v1448
        %v1557 = vpop.f32.mrf.mxu0
        %v1558 = vadd.f32 0.0, %v1557
        %v1559 = vpop.f32.mrf.mxu0
        %v1560 = vadd.f32 0.0, %v1559
        %1561 = vmatmul.bf16.gmra.mxu0 %v1449
        %v1562 = vpop.f32.mrf.mxu0
        %v1563 = vadd.f32 0.0, %v1562
        %v1564 = vpop.f32.mrf.mxu0
        %v1565 = vadd.f32 0.0, %v1564
        %1566 = vmatmul.bf16.gmra.mxu0 %v1450
        %v1567 = vpop.f32.mrf.mxu0
        %v1568 = vadd.f32 0.0, %v1567
        %v1569 = vpop.f32.mrf.mxu0
        %v1570 = vadd.f32 0.0, %v1569
        %1571 = vmatmul.bf16.gmra.mxu0 %v1451
        %v1572 = vpop.f32.mrf.mxu0
        %v1573 = vadd.f32 0.0, %v1572
        %v1574 = vpop.f32.mrf.mxu0
        %v1575 = vadd.f32 0.0, %v1574
        %1576 = vmatmul.bf16.gmra.mxu0 %v1452
        %v1577 = vpop.f32.mrf.mxu0
        %v1578 = vadd.f32 0.0, %v1577
        %v1579 = vpop.f32.mrf.mxu0
        %v1580 = vadd.f32 0.0, %v1579
        %1581 = vmatmul.bf16.gmra.mxu0 %v1453
        %v1582 = vpop.f32.mrf.mxu0
        %v1583 = vadd.f32 0.0, %v1582
        %v1584 = vpop.f32.mrf.mxu0
        %v1585 = vadd.f32 0.0, %v1584
        %1586 = vmatmul.bf16.gmra.mxu0 %v1454
        %v1587 = vpop.f32.mrf.mxu0
        %v1588 = vadd.f32 0.0, %v1587
        %v1589 = vpop.f32.mrf.mxu0
        %v1590 = vadd.f32 0.0, %v1589
        %1591 = vmatmul.bf16.gmra.mxu0 %v1455
        %v1592 = vpop.f32.mrf.mxu0
        %v1593 = vadd.f32 0.0, %v1592
        %v1594 = vpop.f32.mrf.mxu0
        %v1595 = vadd.f32 0.0, %v1594
        %1596 = vmatmul.bf16.gmra.mxu0 %v1456
        %v1597 = vpop.f32.mrf.mxu0
        %v1598 = vadd.f32 0.0, %v1597
        %v1599 = vpop.f32.mrf.mxu0
        %v1600 = vadd.f32 0.0, %v1599
        %1601 = vmatmul.bf16.gmra.mxu0 %v1457
        %v1602 = vpop.f32.mrf.mxu0
        %v1603 = vadd.f32 0.0, %v1602
        %v1604 = vpop.f32.mrf.mxu0
        %v1605 = vadd.f32 0.0, %v1604
        %1606 = vdwg.mxu0
        %v1607 = vld [vmem:[#allocation2] sm:$0xff]
        %v1608 = vld [vmem:[#allocation2 + $0x8] sm:$0xff]
        %v1609 = vld [vmem:[#allocation2 + $0x10] sm:$0xff]
        %v1610 = vld [vmem:[#allocation2 + $0x18] sm:$0xff]
        %v1611 = vld [vmem:[#allocation2 + $0x20] sm:$0xff]
        %v1612 = vld [vmem:[#allocation2 + $0x28] sm:$0xff]
        %v1613 = vld [vmem:[#allocation2 + $0x30] sm:$0xff]
        %v1614 = vld [vmem:[#allocation2 + $0x38] sm:$0xff]
        %v1615 = vld [vmem:[#allocation2 + $0x40] sm:$0xff]
        %v1616 = vld [vmem:[#allocation2 + $0x48] sm:$0xff]
        %v1617 = vld [vmem:[#allocation2 + $0x50] sm:$0xff]
        %v1618 = vld [vmem:[#allocation2 + $0x58] sm:$0xff]
        %v1619 = vld [vmem:[#allocation2 + $0x60] sm:$0xff]
        %v1620 = vld [vmem:[#allocation2 + $0x68] sm:$0xff]
        %v1621 = vld [vmem:[#allocation2 + $0x70] sm:$0xff]
        %v1622 = vld [vmem:[#allocation2 + $0x78] sm:$0xff]
        %v1623 = vld [vmem:[#allocation2 + $0x80] sm:$0xff]
        %v1624 = vld [vmem:[#allocation2 + $0x88] sm:$0xff]
        %v1625 = vld [vmem:[#allocation2 + $0x90] sm:$0xff]
        %v1626 = vld [vmem:[#allocation2 + $0x98] sm:$0xff]
        %v1627 = vld [vmem:[#allocation2 + $0xa0] sm:$0xff]
        %v1628 = vld [vmem:[#allocation2 + $0xa8] sm:$0xff]
        %v1629 = vld [vmem:[#allocation2 + $0xb0] sm:$0xff]
        %v1630 = vld [vmem:[#allocation2 + $0xb8] sm:$0xff]
        %v1631 = vld [vmem:[#allocation2 + $0xc0] sm:$0xff]
        %v1632 = vld [vmem:[#allocation2 + $0xc8] sm:$0xff]
        %v1633 = vld [vmem:[#allocation2 + $0xd0] sm:$0xff]
        %v1634 = vld [vmem:[#allocation2 + $0xd8] sm:$0xff]
        %v1635 = vld [vmem:[#allocation2 + $0xe0] sm:$0xff]
        %v1636 = vld [vmem:[#allocation2 + $0xe8] sm:$0xff]
        %v1637 = vadd.f32 %v1607, %v1533
        %v1638 = vadd.f32 %v1608, %v1535
        %v1639 = vadd.f32 %v1609, %v1538
        %v1640 = vadd.f32 %v1610, %v1540
        %v1641 = vadd.f32 %v1611, %v1543
        %v1642 = vadd.f32 %v1612, %v1545
        %v1643 = vadd.f32 %v1613, %v1548
        %v1644 = vadd.f32 %v1614, %v1550
        %v1645 = vadd.f32 %v1615, %v1553
        %v1646 = vadd.f32 %v1616, %v1555
        %v1647 = vadd.f32 %v1617, %v1558
        %v1648 = vadd.f32 %v1618, %v1560
        %v1649 = vadd.f32 %v1619, %v1563
        %v1650 = vadd.f32 %v1620, %v1565
        %v1651 = vadd.f32 %v1621, %v1568
        %v1652 = vadd.f32 %v1622, %v1570
        %v1653 = vadd.f32 %v1623, %v1573
        %v1654 = vadd.f32 %v1624, %v1575
        %v1655 = vadd.f32 %v1625, %v1578
        %v1656 = vadd.f32 %v1626, %v1580
        %v1657 = vadd.f32 %v1627, %v1583
        %v1658 = vadd.f32 %v1628, %v1585
        %v1659 = vadd.f32 %v1629, %v1588
        %v1660 = vadd.f32 %v1630, %v1590
        %v1661 = vadd.f32 %v1631, %v1593
        %v1662 = vadd.f32 %v1632, %v1595
        %v1663 = vadd.f32 %v1633, %v1598
        %v1664 = vadd.f32 %v1634, %v1600
        %v1665 = vadd.f32 %v1635, %v1603
        %v1666 = vadd.f32 %v1636, %v1605
        %1667 = vst [vmem:[#allocation2] sm:$0xff] %v1637
        %1668 = vst [vmem:[#allocation2 + $0x8] sm:$0xff] %v1638
        %1669 = vst [vmem:[#allocation2 + $0x10] sm:$0xff] %v1639
        %1670 = vst [vmem:[#allocation2 + $0x18] sm:$0xff] %v1640
        %1671 = vst [vmem:[#allocation2 + $0x20] sm:$0xff] %v1641
        %1672 = vst [vmem:[#allocation2 + $0x28] sm:$0xff] %v1642
        %1673 = vst [vmem:[#allocation2 + $0x30] sm:$0xff] %v1643
        %1674 = vst [vmem:[#allocation2 + $0x38] sm:$0xff] %v1644
        %1675 = vst [vmem:[#allocation2 + $0x40] sm:$0xff] %v1645
        %1676 = vst [vmem:[#allocation2 + $0x48] sm:$0xff] %v1646
        %1677 = vst [vmem:[#allocation2 + $0x50] sm:$0xff] %v1647
        %1678 = vst [vmem:[#allocation2 + $0x58] sm:$0xff] %v1648
        %1679 = vst [vmem:[#allocation2 + $0x60] sm:$0xff] %v1649
        %1680 = vst [vmem:[#allocation2 + $0x68] sm:$0xff] %v1650
        %1681 = vst [vmem:[#allocation2 + $0x70] sm:$0xff] %v1651
        %1682 = vst [vmem:[#allocation2 + $0x78] sm:$0xff] %v1652
        %1683 = vst [vmem:[#allocation2 + $0x80] sm:$0xff] %v1653
        %1684 = vst [vmem:[#allocation2 + $0x88] sm:$0xff] %v1654
        %1685 = vst [vmem:[#allocation2 + $0x90] sm:$0xff] %v1655
        %1686 = vst [vmem:[#allocation2 + $0x98] sm:$0xff] %v1656
        %1687 = vst [vmem:[#allocation2 + $0xa0] sm:$0xff] %v1657
        %1688 = vst [vmem:[#allocation2 + $0xa8] sm:$0xff] %v1658
        %1689 = vst [vmem:[#allocation2 + $0xb0] sm:$0xff] %v1659
        %1690 = vst [vmem:[#allocation2 + $0xb8] sm:$0xff] %v1660
        %1691 = vst [vmem:[#allocation2 + $0xc0] sm:$0xff] %v1661
        %1692 = vst [vmem:[#allocation2 + $0xc8] sm:$0xff] %v1662
        %1693 = vst [vmem:[#allocation2 + $0xd0] sm:$0xff] %v1663
        %1694 = vst [vmem:[#allocation2 + $0xd8] sm:$0xff] %v1664
        %1695 = vst [vmem:[#allocation2 + $0xe0] sm:$0xff] %v1665
        %1696 = vst [vmem:[#allocation2 + $0xe8] sm:$0xff] %v1666
        %v1697 = vrot.slane %v1099, 2
        %v1698 = vrot.slane %v1102, 2
        %v1699 = vrot.slane %v1105, 2
        %v1700 = vrot.slane %v1108, 2
        %v1701 = vrot.slane %v1111, 2
        %v1702 = vrot.slane %v1114, 2
        %v1703 = vrot.slane %v1117, 2
        %v1704 = vrot.slane %v1120, 2
        %v1705 = vrot.slane %v1123, 2
        %v1706 = vrot.slane %v1126, 2
        %v1707 = vrot.slane %v1100, 2
        %v1708 = vrot.slane %v1103, 2
        %v1709 = vrot.slane %v1106, 2
        %v1710 = vrot.slane %v1109, 2
        %v1711 = vrot.slane %v1112, 2
        %v1712 = vrot.slane %v1115, 2
        %v1713 = vrot.slane %v1118, 2
        %v1714 = vrot.slane %v1121, 2
        %v1715 = vrot.slane %v1124, 2
        %v1716 = vrot.slane %v1127, 2
        %v1717 = vrot.slane %v1101, 2
        %v1718 = vrot.slane %v1104, 2
        %v1719 = vrot.slane %v1107, 2
        %v1720 = vrot.slane %v1110, 2
        %v1721 = vrot.slane %v1113, 2
        %v1722 = vrot.slane %v1116, 2
        %v1723 = vrot.slane %v1119, 2
        %v1724 = vrot.slane %v1122, 2
        %v1725 = vrot.slane %v1125, 2
        %v1726 = vrot.slane %v1128, 2
        %v1727 = vsel %vm811, %v1707, %v1717
        %v1728 = vsel %vm811, %v1708, %v1718
        %v1729 = vsel %vm811, %v1709, %v1719
        %v1730 = vsel %vm811, %v1710, %v1720
        %v1731 = vsel %vm811, %v1711, %v1721
        %v1732 = vsel %vm811, %v1712, %v1722
        %v1733 = vsel %vm811, %v1713, %v1723
        %v1734 = vsel %vm811, %v1714, %v1724
        %v1735 = vsel %vm811, %v1715, %v1725
        %v1736 = vsel %vm811, %v1716, %v1726
        %v1737 = vsel %vm811, %v1697, %v1707
        %v1738 = vsel %vm811, %v1698, %v1708
        %v1739 = vsel %vm811, %v1699, %v1709
        %v1740 = vsel %vm811, %v1700, %v1710
        %v1741 = vsel %vm811, %v1701, %v1711
        %v1742 = vsel %vm811, %v1702, %v1712
        %v1743 = vsel %vm811, %v1703, %v1713
        %v1744 = vsel %vm811, %v1704, %v1714
        %v1745 = vsel %vm811, %v1705, %v1715
        %v1746 = vsel %vm811, %v1706, %v1716
        %v1747 = vsel %vm811, %v1717, %v1697
        %v1748 = vsel %vm811, %v1718, %v1698
        %v1749 = vsel %vm811, %v1719, %v1699
        %v1750 = vsel %vm811, %v1720, %v1700
        %v1751 = vsel %vm811, %v1721, %v1701
        %v1752 = vsel %vm811, %v1722, %v1702
        %v1753 = vsel %vm811, %v1723, %v1703
        %v1754 = vsel %vm811, %v1724, %v1704
        %v1755 = vsel %vm811, %v1725, %v1705
        %v1756 = vsel %vm811, %v1726, %v1706
        %v1757 = vpack.c.bf16 %v1727, %v1737
        %v1758 = vpack.c.bf16 %v1738, %v1747
        %v1759 = vpack.c.bf16 %v1748, %v1728
        %v1760 = vpack.c.bf16 %v1729, %v1739
        %v1761 = vpack.c.bf16 %v1740, %v1749
        %v1762 = vpack.c.bf16 %v1750, %v1730
        %v1763 = vpack.c.bf16 %v1731, %v1741
        %v1764 = vpack.c.bf16 %v1742, %v1751
        %v1765 = vpack.c.bf16 %v1752, %v1732
        %v1766 = vpack.c.bf16 %v1733, %v1743
        %v1767 = vpack.c.bf16 %v1744, %v1753
        %v1768 = vpack.c.bf16 %v1754, %v1734
        %v1769 = vpack.c.bf16 %v1735, %v1745
        %v1770 = vpack.c.bf16 %v1746, %v1755
        %v1771 = vpack.c.bf16 %v1756, %v1736
        %s1772 = scalar_lea.vmem %s1, 320
        %v1773 = vld [vmem:[%s1772] sm:$0xf]
        %v1774 = vld [vmem:[%s1772 + $0x4] sm:$0xf]
        %v1775 = vld [vmem:[%s1772 + $0x8] sm:$0xf]
        %v1776 = vld [vmem:[%s1772 + $0xc] sm:$0xf]
        %v1777 = vld [vmem:[%s1772 + $0x10] sm:$0xf]
        %v1778 = vld [vmem:[%s1772 + $0x14] sm:$0xf]
        %v1779 = vld [vmem:[%s1772 + $0x18] sm:$0xf]
        %v1780 = vld [vmem:[%s1772 + $0x1c] sm:$0xf]
        %v1781 = vld [vmem:[%s1772 + $0x20] sm:$0xf]
        %v1782 = vld [vmem:[%s1772 + $0x24] sm:$0xf]
        %v1783 = vld [vmem:[%s1772 + $0x28] sm:$0xf]
        %v1784 = vld [vmem:[%s1772 + $0x2c] sm:$0xf]
        %v1785 = vld [vmem:[%s1772 + $0x30] sm:$0xf]
        %v1786 = vld [vmem:[%s1772 + $0x34] sm:$0xf]
        %v1787 = vld [vmem:[%s1772 + $0x38] sm:$0xf]
        %v1788 = vld [vmem:[%s1772 + $0x3c] sm:$0xf]
        %v1805 = vunpack.c.l.b16 %v1773
        %v1806 = vunpack.c.l.b16 %v1774
        %v1807 = vunpack.c.l.b16 %v1775
        %v1808 = vunpack.c.l.b16 %v1776
        %v1809 = vunpack.c.l.b16 %v1777
        %v1810 = vunpack.c.l.b16 %v1778
        %v1811 = vunpack.c.l.b16 %v1779
        %v1812 = vunpack.c.l.b16 %v1780
        %v1813 = vunpack.c.l.b16 %v1781
        %v1814 = vunpack.c.l.b16 %v1782
        %v1815 = vunpack.c.l.b16 %v1783
        %v1816 = vunpack.c.l.b16 %v1784
        %v1817 = vunpack.c.l.b16 %v1785
        %v1818 = vunpack.c.l.b16 %v1786
        %v1819 = vunpack.c.l.b16 %v1787
        %v1820 = vunpack.c.l.b16 %v1788
        %v1821 = vpack.c.b16 %v1806, %v1805
        %v1822 = vpack.c.b16 %v1808, %v1807
        %v1823 = vpack.c.b16 %v1810, %v1809
        %v1824 = vpack.c.b16 %v1812, %v1811
        %v1825 = vpack.c.b16 %v1814, %v1813
        %v1826 = vpack.c.b16 %v1816, %v1815
        %v1827 = vpack.c.b16 %v1818, %v1817
        %v1828 = vpack.c.b16 %v1820, %v1819
        %1837 = vmatpush.bf16.msra.mxu0 %v1828
        %1838 = vmatpush.bf16.msra.mxu0 %v1827
        %1839 = vmatpush.bf16.msra.mxu0 %v1826
        %1840 = vmatpush.bf16.msra.mxu0 %v1825
        %1841 = vmatpush.bf16.msra.mxu0 %v1824
        %1842 = vmatpush.bf16.msra.mxu0 %v1823
        %1843 = vmatpush.bf16.msra.mxu0 %v1822
        %1844 = vmatpush.bf16.msra.mxu0 %v1821
        %1845 = vmatmul.bf16.gmra.mxu0 %v1757
        %v1846 = vpop.f32.mrf.mxu0
        %v1847 = vadd.f32 0.0, %v1846
        %v1848 = vpop.f32.mrf.mxu0
        %v1849 = vadd.f32 0.0, %v1848
        %1850 = vmatmul.bf16.gmra.mxu0 %v1758
        %v1851 = vpop.f32.mrf.mxu0
        %v1852 = vadd.f32 0.0, %v1851
        %v1853 = vpop.f32.mrf.mxu0
        %v1854 = vadd.f32 0.0, %v1853
        %1855 = vmatmul.bf16.gmra.mxu0 %v1759
        %v1856 = vpop.f32.mrf.mxu0
        %v1857 = vadd.f32 0.0, %v1856
        %v1858 = vpop.f32.mrf.mxu0
        %v1859 = vadd.f32 0.0, %v1858
        %1860 = vmatmul.bf16.gmra.mxu0 %v1760
        %v1861 = vpop.f32.mrf.mxu0
        %v1862 = vadd.f32 0.0, %v1861
        %v1863 = vpop.f32.mrf.mxu0
        %v1864 = vadd.f32 0.0, %v1863
        %1865 = vmatmul.bf16.gmra.mxu0 %v1761
        %v1866 = vpop.f32.mrf.mxu0
        %v1867 = vadd.f32 0.0, %v1866
        %v1868 = vpop.f32.mrf.mxu0
        %v1869 = vadd.f32 0.0, %v1868
        %1870 = vmatmul.bf16.gmra.mxu0 %v1762
        %v1871 = vpop.f32.mrf.mxu0
        %v1872 = vadd.f32 0.0, %v1871
        %v1873 = vpop.f32.mrf.mxu0
        %v1874 = vadd.f32 0.0, %v1873
        %1875 = vmatmul.bf16.gmra.mxu0 %v1763
        %v1876 = vpop.f32.mrf.mxu0
        %v1877 = vadd.f32 0.0, %v1876
        %v1878 = vpop.f32.mrf.mxu0
        %v1879 = vadd.f32 0.0, %v1878
        %1880 = vmatmul.bf16.gmra.mxu0 %v1764
        %v1881 = vpop.f32.mrf.mxu0
        %v1882 = vadd.f32 0.0, %v1881
        %v1883 = vpop.f32.mrf.mxu0
        %v1884 = vadd.f32 0.0, %v1883
        %1885 = vmatmul.bf16.gmra.mxu0 %v1765
        %v1886 = vpop.f32.mrf.mxu0
        %v1887 = vadd.f32 0.0, %v1886
        %v1888 = vpop.f32.mrf.mxu0
        %v1889 = vadd.f32 0.0, %v1888
        %1890 = vmatmul.bf16.gmra.mxu0 %v1766
        %v1891 = vpop.f32.mrf.mxu0
        %v1892 = vadd.f32 0.0, %v1891
        %v1893 = vpop.f32.mrf.mxu0
        %v1894 = vadd.f32 0.0, %v1893
        %1895 = vmatmul.bf16.gmra.mxu0 %v1767
        %v1896 = vpop.f32.mrf.mxu0
        %v1897 = vadd.f32 0.0, %v1896
        %v1898 = vpop.f32.mrf.mxu0
        %v1899 = vadd.f32 0.0, %v1898
        %1900 = vmatmul.bf16.gmra.mxu0 %v1768
        %v1901 = vpop.f32.mrf.mxu0
        %v1902 = vadd.f32 0.0, %v1901
        %v1903 = vpop.f32.mrf.mxu0
        %v1904 = vadd.f32 0.0, %v1903
        %1905 = vmatmul.bf16.gmra.mxu0 %v1769
        %v1906 = vpop.f32.mrf.mxu0
        %v1907 = vadd.f32 0.0, %v1906
        %v1908 = vpop.f32.mrf.mxu0
        %v1909 = vadd.f32 0.0, %v1908
        %1910 = vmatmul.bf16.gmra.mxu0 %v1770
        %v1911 = vpop.f32.mrf.mxu0
        %v1912 = vadd.f32 0.0, %v1911
        %v1913 = vpop.f32.mrf.mxu0
        %v1914 = vadd.f32 0.0, %v1913
        %1915 = vmatmul.bf16.gmra.mxu0 %v1771
        %v1916 = vpop.f32.mrf.mxu0
        %v1917 = vadd.f32 0.0, %v1916
        %v1918 = vpop.f32.mrf.mxu0
        %v1919 = vadd.f32 0.0, %v1918
        %1920 = vdwg.mxu0
        %v1921 = vld [vmem:[#allocation2] sm:$0xff]
        %v1922 = vld [vmem:[#allocation2 + $0x8] sm:$0xff]
        %v1923 = vld [vmem:[#allocation2 + $0x10] sm:$0xff]
        %v1924 = vld [vmem:[#allocation2 + $0x18] sm:$0xff]
        %v1925 = vld [vmem:[#allocation2 + $0x20] sm:$0xff]
        %v1926 = vld [vmem:[#allocation2 + $0x28] sm:$0xff]
        %v1927 = vld [vmem:[#allocation2 + $0x30] sm:$0xff]
        %v1928 = vld [vmem:[#allocation2 + $0x38] sm:$0xff]
        %v1929 = vld [vmem:[#allocation2 + $0x40] sm:$0xff]
        %v1930 = vld [vmem:[#allocation2 + $0x48] sm:$0xff]
        %v1931 = vld [vmem:[#allocation2 + $0x50] sm:$0xff]
        %v1932 = vld [vmem:[#allocation2 + $0x58] sm:$0xff]
        %v1933 = vld [vmem:[#allocation2 + $0x60] sm:$0xff]
        %v1934 = vld [vmem:[#allocation2 + $0x68] sm:$0xff]
        %v1935 = vld [vmem:[#allocation2 + $0x70] sm:$0xff]
        %v1936 = vld [vmem:[#allocation2 + $0x78] sm:$0xff]
        %v1937 = vld [vmem:[#allocation2 + $0x80] sm:$0xff]
        %v1938 = vld [vmem:[#allocation2 + $0x88] sm:$0xff]
        %v1939 = vld [vmem:[#allocation2 + $0x90] sm:$0xff]
        %v1940 = vld [vmem:[#allocation2 + $0x98] sm:$0xff]
        %v1941 = vld [vmem:[#allocation2 + $0xa0] sm:$0xff]
        %v1942 = vld [vmem:[#allocation2 + $0xa8] sm:$0xff]
        %v1943 = vld [vmem:[#allocation2 + $0xb0] sm:$0xff]
        %v1944 = vld [vmem:[#allocation2 + $0xb8] sm:$0xff]
        %v1945 = vld [vmem:[#allocation2 + $0xc0] sm:$0xff]
        %v1946 = vld [vmem:[#allocation2 + $0xc8] sm:$0xff]
        %v1947 = vld [vmem:[#allocation2 + $0xd0] sm:$0xff]
        %v1948 = vld [vmem:[#allocation2 + $0xd8] sm:$0xff]
        %v1949 = vld [vmem:[#allocation2 + $0xe0] sm:$0xff]
        %v1950 = vld [vmem:[#allocation2 + $0xe8] sm:$0xff]
        %v1951 = vadd.f32 %v1921, %v1847
        %v1952 = vadd.f32 %v1922, %v1849
        %v1953 = vadd.f32 %v1923, %v1852
        %v1954 = vadd.f32 %v1924, %v1854
        %v1955 = vadd.f32 %v1925, %v1857
        %v1956 = vadd.f32 %v1926, %v1859
        %v1957 = vadd.f32 %v1927, %v1862
        %v1958 = vadd.f32 %v1928, %v1864
        %v1959 = vadd.f32 %v1929, %v1867
        %v1960 = vadd.f32 %v1930, %v1869
        %v1961 = vadd.f32 %v1931, %v1872
        %v1962 = vadd.f32 %v1932, %v1874
        %v1963 = vadd.f32 %v1933, %v1877
        %v1964 = vadd.f32 %v1934, %v1879
        %v1965 = vadd.f32 %v1935, %v1882
        %v1966 = vadd.f32 %v1936, %v1884
        %v1967 = vadd.f32 %v1937, %v1887
        %v1968 = vadd.f32 %v1938, %v1889
        %v1969 = vadd.f32 %v1939, %v1892
        %v1970 = vadd.f32 %v1940, %v1894
        %v1971 = vadd.f32 %v1941, %v1897
        %v1972 = vadd.f32 %v1942, %v1899
        %v1973 = vadd.f32 %v1943, %v1902
        %v1974 = vadd.f32 %v1944, %v1904
        %v1975 = vadd.f32 %v1945, %v1907
        %v1976 = vadd.f32 %v1946, %v1909
        %v1977 = vadd.f32 %v1947, %v1912
        %v1978 = vadd.f32 %v1948, %v1914
        %v1979 = vadd.f32 %v1949, %v1917
        %v1980 = vadd.f32 %v1950, %v1919
        %1981 = vst [vmem:[#allocation2] sm:$0xff] %v1951
        %1982 = vst [vmem:[#allocation2 + $0x8] sm:$0xff] %v1952
        %1983 = vst [vmem:[#allocation2 + $0x10] sm:$0xff] %v1953
        %1984 = vst [vmem:[#allocation2 + $0x18] sm:$0xff] %v1954
        %1985 = vst [vmem:[#allocation2 + $0x20] sm:$0xff] %v1955
        %1986 = vst [vmem:[#allocation2 + $0x28] sm:$0xff] %v1956
        %1987 = vst [vmem:[#allocation2 + $0x30] sm:$0xff] %v1957
        %1988 = vst [vmem:[#allocation2 + $0x38] sm:$0xff] %v1958
        %1989 = vst [vmem:[#allocation2 + $0x40] sm:$0xff] %v1959
        %1990 = vst [vmem:[#allocation2 + $0x48] sm:$0xff] %v1960
        %1991 = vst [vmem:[#allocation2 + $0x50] sm:$0xff] %v1961
        %1992 = vst [vmem:[#allocation2 + $0x58] sm:$0xff] %v1962
        %1993 = vst [vmem:[#allocation2 + $0x60] sm:$0xff] %v1963
        %1994 = vst [vmem:[#allocation2 + $0x68] sm:$0xff] %v1964
        %1995 = vst [vmem:[#allocation2 + $0x70] sm:$0xff] %v1965
        %1996 = vst [vmem:[#allocation2 + $0x78] sm:$0xff] %v1966
        %1997 = vst [vmem:[#allocation2 + $0x80] sm:$0xff] %v1967
        %1998 = vst [vmem:[#allocation2 + $0x88] sm:$0xff] %v1968
        %1999 = vst [vmem:[#allocation2 + $0x90] sm:$0xff] %v1969
        %2000 = vst [vmem:[#allocation2 + $0x98] sm:$0xff] %v1970
        %2001 = vst [vmem:[#allocation2 + $0xa0] sm:$0xff] %v1971
        %2002 = vst [vmem:[#allocation2 + $0xa8] sm:$0xff] %v1972
        %2003 = vst [vmem:[#allocation2 + $0xb0] sm:$0xff] %v1973
        %2004 = vst [vmem:[#allocation2 + $0xb8] sm:$0xff] %v1974
        %2005 = vst [vmem:[#allocation2 + $0xc0] sm:$0xff] %v1975
        %2006 = vst [vmem:[#allocation2 + $0xc8] sm:$0xff] %v1976
        %2007 = vst [vmem:[#allocation2 + $0xd0] sm:$0xff] %v1977
        %2008 = vst [vmem:[#allocation2 + $0xd8] sm:$0xff] %v1978
        %2009 = vst [vmem:[#allocation2 + $0xe0] sm:$0xff] %v1979
        %2010 = vst [vmem:[#allocation2 + $0xe8] sm:$0xff] %v1980
        %s2011 = sadd.s32 %s238, 2
        %s2012 = smul.u32 %s2011, 24
        %s2013 = scalar_lea.vmem %s236, %s2012
        %v2014 = vld [vmem:[%s2013] sm:$0xff]
        %v2015 = vld [vmem:[%s2013 + $0x8] sm:$0xff]
        %v2016 = vld [vmem:[%s2013 + $0x10] sm:$0xff]
        %v2017 = vld [vmem:[%s2013 + $0x18] sm:$0xff]
        %v2018 = vld [vmem:[%s2013 + $0x20] sm:$0xff]
        %v2019 = vld [vmem:[%s2013 + $0x28] sm:$0xff]
        %v2020 = vld [vmem:[%s2013 + $0x30] sm:$0xff]
        %v2021 = vld [vmem:[%s2013 + $0x38] sm:$0xff]
        %v2022 = vld [vmem:[%s2013 + $0x40] sm:$0xff]
        %v2023 = vld [vmem:[%s2013 + $0x48] sm:$0xff]
        %v2024 = vld [vmem:[%s2013 + $0x50] sm:$0xff]
        %v2025 = vld [vmem:[%s2013 + $0x58] sm:$0xff]
        %v2026 = vld [vmem:[%s2013 + $0x60] sm:$0xff]
        %v2027 = vld [vmem:[%s2013 + $0x68] sm:$0xff]
        %v2028 = vld [vmem:[%s2013 + $0x70] sm:$0xff]
        %v2029 = vld [vmem:[%s2013 + $0x78] sm:$0xff]
        %v2030 = vld [vmem:[%s2013 + $0x80] sm:$0xff]
        %v2031 = vld [vmem:[%s2013 + $0x88] sm:$0xff]
        %v2032 = vld [vmem:[%s2013 + $0x90] sm:$0xff]
        %v2033 = vld [vmem:[%s2013 + $0x98] sm:$0xff]
        %v2034 = vld [vmem:[%s2013 + $0xa0] sm:$0xff]
        %v2035 = vld [vmem:[%s2013 + $0xa8] sm:$0xff]
        %v2036 = vld [vmem:[%s2013 + $0xb0] sm:$0xff]
        %v2037 = vld [vmem:[%s2013 + $0xb8] sm:$0xff]
        %v2038 = vld [vmem:[%s2013 + $0xc0] sm:$0xff]
        %v2039 = vld [vmem:[%s2013 + $0xc8] sm:$0xff]
        %v2040 = vld [vmem:[%s2013 + $0xd0] sm:$0xff]
        %v2041 = vld [vmem:[%s2013 + $0xd8] sm:$0xff]
        %v2042 = vld [vmem:[%s2013 + $0xe0] sm:$0xff]
        %v2043 = vld [vmem:[%s2013 + $0xe8] sm:$0xff]
        %v2044 = vpack.c.bf16 %v2015, %v2014
        %v2045 = vpack.c.bf16 %v2017, %v2016
        %v2046 = vpack.c.bf16 %v2019, %v2018
        %v2047 = vpack.c.bf16 %v2021, %v2020
        %v2048 = vpack.c.bf16 %v2023, %v2022
        %v2049 = vpack.c.bf16 %v2025, %v2024
        %v2050 = vpack.c.bf16 %v2027, %v2026
        %v2051 = vpack.c.bf16 %v2029, %v2028
        %v2052 = vpack.c.bf16 %v2031, %v2030
        %v2053 = vpack.c.bf16 %v2033, %v2032
        %v2054 = vpack.c.bf16 %v2035, %v2034
        %v2055 = vpack.c.bf16 %v2037, %v2036
        %v2056 = vpack.c.bf16 %v2039, %v2038
        %v2057 = vpack.c.bf16 %v2041, %v2040
        %v2058 = vpack.c.bf16 %v2043, %v2042
        %s2059 = scalar_lea.vmem %s1, 384
        %v2060 = vld [vmem:[%s2059] sm:$0xf]
        %v2061 = vld [vmem:[%s2059 + $0x4] sm:$0xf]
        %v2062 = vld [vmem:[%s2059 + $0x8] sm:$0xf]
        %v2063 = vld [vmem:[%s2059 + $0xc] sm:$0xf]
        %v2064 = vld [vmem:[%s2059 + $0x10] sm:$0xf]
        %v2065 = vld [vmem:[%s2059 + $0x14] sm:$0xf]
        %v2066 = vld [vmem:[%s2059 + $0x18] sm:$0xf]
        %v2067 = vld [vmem:[%s2059 + $0x1c] sm:$0xf]
        %v2068 = vld [vmem:[%s2059 + $0x20] sm:$0xf]
        %v2069 = vld [vmem:[%s2059 + $0x24] sm:$0xf]
        %v2070 = vld [vmem:[%s2059 + $0x28] sm:$0xf]
        %v2071 = vld [vmem:[%s2059 + $0x2c] sm:$0xf]
        %v2072 = vld [vmem:[%s2059 + $0x30] sm:$0xf]
        %v2073 = vld [vmem:[%s2059 + $0x34] sm:$0xf]
        %v2074 = vld [vmem:[%s2059 + $0x38] sm:$0xf]
        %v2075 = vld [vmem:[%s2059 + $0x3c] sm:$0xf]
        %v2092 = vunpack.c.l.b16 %v2060
        %v2093 = vunpack.c.l.b16 %v2061
        %v2094 = vunpack.c.l.b16 %v2062
        %v2095 = vunpack.c.l.b16 %v2063
        %v2096 = vunpack.c.l.b16 %v2064
        %v2097 = vunpack.c.l.b16 %v2065
        %v2098 = vunpack.c.l.b16 %v2066
        %v2099 = vunpack.c.l.b16 %v2067
        %v2100 = vunpack.c.l.b16 %v2068
        %v2101 = vunpack.c.l.b16 %v2069
        %v2102 = vunpack.c.l.b16 %v2070
        %v2103 = vunpack.c.l.b16 %v2071
        %v2104 = vunpack.c.l.b16 %v2072
        %v2105 = vunpack.c.l.b16 %v2073
        %v2106 = vunpack.c.l.b16 %v2074
        %v2107 = vunpack.c.l.b16 %v2075
        %v2108 = vpack.c.b16 %v2093, %v2092
        %v2109 = vpack.c.b16 %v2095, %v2094
        %v2110 = vpack.c.b16 %v2097, %v2096
        %v2111 = vpack.c.b16 %v2099, %v2098
        %v2112 = vpack.c.b16 %v2101, %v2100
        %v2113 = vpack.c.b16 %v2103, %v2102
        %v2114 = vpack.c.b16 %v2105, %v2104
        %v2115 = vpack.c.b16 %v2107, %v2106
        %2124 = vmatpush.bf16.msra.mxu0 %v2115
        %2125 = vmatpush.bf16.msra.mxu0 %v2114
        %2126 = vmatpush.bf16.msra.mxu0 %v2113
        %2127 = vmatpush.bf16.msra.mxu0 %v2112
        %2128 = vmatpush.bf16.msra.mxu0 %v2111
        %2129 = vmatpush.bf16.msra.mxu0 %v2110
        %2130 = vmatpush.bf16.msra.mxu0 %v2109
        %2131 = vmatpush.bf16.msra.mxu0 %v2108
        %2132 = vmatmul.bf16.gmra.mxu0 %v2044
        %v2133 = vpop.f32.mrf.mxu0
        %v2134 = vadd.f32 0.0, %v2133
        %v2135 = vpop.f32.mrf.mxu0
        %v2136 = vadd.f32 0.0, %v2135
        %2137 = vmatmul.bf16.gmra.mxu0 %v2045
        %v2138 = vpop.f32.mrf.mxu0
        %v2139 = vadd.f32 0.0, %v2138
        %v2140 = vpop.f32.mrf.mxu0
        %v2141 = vadd.f32 0.0, %v2140
        %2142 = vmatmul.bf16.gmra.mxu0 %v2046
        %v2143 = vpop.f32.mrf.mxu0
        %v2144 = vadd.f32 0.0, %v2143
        %v2145 = vpop.f32.mrf.mxu0
        %v2146 = vadd.f32 0.0, %v2145
        %2147 = vmatmul.bf16.gmra.mxu0 %v2047
        %v2148 = vpop.f32.mrf.mxu0
        %v2149 = vadd.f32 0.0, %v2148
        %v2150 = vpop.f32.mrf.mxu0
        %v2151 = vadd.f32 0.0, %v2150
        %2152 = vmatmul.bf16.gmra.mxu0 %v2048
        %v2153 = vpop.f32.mrf.mxu0
        %v2154 = vadd.f32 0.0, %v2153
        %v2155 = vpop.f32.mrf.mxu0
        %v2156 = vadd.f32 0.0, %v2155
        %2157 = vmatmul.bf16.gmra.mxu0 %v2049
        %v2158 = vpop.f32.mrf.mxu0
        %v2159 = vadd.f32 0.0, %v2158
        %v2160 = vpop.f32.mrf.mxu0
        %v2161 = vadd.f32 0.0, %v2160
        %2162 = vmatmul.bf16.gmra.mxu0 %v2050
        %v2163 = vpop.f32.mrf.mxu0
        %v2164 = vadd.f32 0.0, %v2163
        %v2165 = vpop.f32.mrf.mxu0
        %v2166 = vadd.f32 0.0, %v2165
        %2167 = vmatmul.bf16.gmra.mxu0 %v2051
        %v2168 = vpop.f32.mrf.mxu0
        %v2169 = vadd.f32 0.0, %v2168
        %v2170 = vpop.f32.mrf.mxu0
        %v2171 = vadd.f32 0.0, %v2170
        %2172 = vmatmul.bf16.gmra.mxu0 %v2052
        %v2173 = vpop.f32.mrf.mxu0
        %v2174 = vadd.f32 0.0, %v2173
        %v2175 = vpop.f32.mrf.mxu0
        %v2176 = vadd.f32 0.0, %v2175
        %2177 = vmatmul.bf16.gmra.mxu0 %v2053
        %v2178 = vpop.f32.mrf.mxu0
        %v2179 = vadd.f32 0.0, %v2178
        %v2180 = vpop.f32.mrf.mxu0
        %v2181 = vadd.f32 0.0, %v2180
        %2182 = vmatmul.bf16.gmra.mxu0 %v2054
        %v2183 = vpop.f32.mrf.mxu0
        %v2184 = vadd.f32 0.0, %v2183
        %v2185 = vpop.f32.mrf.mxu0
        %v2186 = vadd.f32 0.0, %v2185
        %2187 = vmatmul.bf16.gmra.mxu0 %v2055
        %v2188 = vpop.f32.mrf.mxu0
        %v2189 = vadd.f32 0.0, %v2188
        %v2190 = vpop.f32.mrf.mxu0
        %v2191 = vadd.f32 0.0, %v2190
        %2192 = vmatmul.bf16.gmra.mxu0 %v2056
        %v2193 = vpop.f32.mrf.mxu0
        %v2194 = vadd.f32 0.0, %v2193
        %v2195 = vpop.f32.mrf.mxu0
        %v2196 = vadd.f32 0.0, %v2195
        %2197 = vmatmul.bf16.gmra.mxu0 %v2057
        %v2198 = vpop.f32.mrf.mxu0
        %v2199 = vadd.f32 0.0, %v2198
        %v2200 = vpop.f32.mrf.mxu0
        %v2201 = vadd.f32 0.0, %v2200
        %2202 = vmatmul.bf16.gmra.mxu0 %v2058
        %v2203 = vpop.f32.mrf.mxu0
        %v2204 = vadd.f32 0.0, %v2203
        %v2205 = vpop.f32.mrf.mxu0
        %v2206 = vadd.f32 0.0, %v2205
        %2207 = vdwg.mxu0
        %v2208 = vld [vmem:[#allocation2] sm:$0xff]
        %v2209 = vld [vmem:[#allocation2 + $0x8] sm:$0xff]
        %v2210 = vld [vmem:[#allocation2 + $0x10] sm:$0xff]
        %v2211 = vld [vmem:[#allocation2 + $0x18] sm:$0xff]
        %v2212 = vld [vmem:[#allocation2 + $0x20] sm:$0xff]
        %v2213 = vld [vmem:[#allocation2 + $0x28] sm:$0xff]
        %v2214 = vld [vmem:[#allocation2 + $0x30] sm:$0xff]
        %v2215 = vld [vmem:[#allocation2 + $0x38] sm:$0xff]
        %v2216 = vld [vmem:[#allocation2 + $0x40] sm:$0xff]
        %v2217 = vld [vmem:[#allocation2 + $0x48] sm:$0xff]
        %v2218 = vld [vmem:[#allocation2 + $0x50] sm:$0xff]
        %v2219 = vld [vmem:[#allocation2 + $0x58] sm:$0xff]
        %v2220 = vld [vmem:[#allocation2 + $0x60] sm:$0xff]
        %v2221 = vld [vmem:[#allocation2 + $0x68] sm:$0xff]
        %v2222 = vld [vmem:[#allocation2 + $0x70] sm:$0xff]
        %v2223 = vld [vmem:[#allocation2 + $0x78] sm:$0xff]
        %v2224 = vld [vmem:[#allocation2 + $0x80] sm:$0xff]
        %v2225 = vld [vmem:[#allocation2 + $0x88] sm:$0xff]
        %v2226 = vld [vmem:[#allocation2 + $0x90] sm:$0xff]
        %v2227 = vld [vmem:[#allocation2 + $0x98] sm:$0xff]
        %v2228 = vld [vmem:[#allocation2 + $0xa0] sm:$0xff]
        %v2229 = vld [vmem:[#allocation2 + $0xa8] sm:$0xff]
        %v2230 = vld [vmem:[#allocation2 + $0xb0] sm:$0xff]
        %v2231 = vld [vmem:[#allocation2 + $0xb8] sm:$0xff]
        %v2232 = vld [vmem:[#allocation2 + $0xc0] sm:$0xff]
        %v2233 = vld [vmem:[#allocation2 + $0xc8] sm:$0xff]
        %v2234 = vld [vmem:[#allocation2 + $0xd0] sm:$0xff]
        %v2235 = vld [vmem:[#allocation2 + $0xd8] sm:$0xff]
        %v2236 = vld [vmem:[#allocation2 + $0xe0] sm:$0xff]
        %v2237 = vld [vmem:[#allocation2 + $0xe8] sm:$0xff]
        %v2238 = vadd.f32 %v2208, %v2134
        %v2239 = vadd.f32 %v2209, %v2136
        %v2240 = vadd.f32 %v2210, %v2139
        %v2241 = vadd.f32 %v2211, %v2141
        %v2242 = vadd.f32 %v2212, %v2144
        %v2243 = vadd.f32 %v2213, %v2146
        %v2244 = vadd.f32 %v2214, %v2149
        %v2245 = vadd.f32 %v2215, %v2151
        %v2246 = vadd.f32 %v2216, %v2154
        %v2247 = vadd.f32 %v2217, %v2156
        %v2248 = vadd.f32 %v2218, %v2159
        %v2249 = vadd.f32 %v2219, %v2161
        %v2250 = vadd.f32 %v2220, %v2164
        %v2251 = vadd.f32 %v2221, %v2166
        %v2252 = vadd.f32 %v2222, %v2169
        %v2253 = vadd.f32 %v2223, %v2171
        %v2254 = vadd.f32 %v2224, %v2174
        %v2255 = vadd.f32 %v2225, %v2176
        %v2256 = vadd.f32 %v2226, %v2179
        %v2257 = vadd.f32 %v2227, %v2181
        %v2258 = vadd.f32 %v2228, %v2184
        %v2259 = vadd.f32 %v2229, %v2186
        %v2260 = vadd.f32 %v2230, %v2189
        %v2261 = vadd.f32 %v2231, %v2191
        %v2262 = vadd.f32 %v2232, %v2194
        %v2263 = vadd.f32 %v2233, %v2196
        %v2264 = vadd.f32 %v2234, %v2199
        %v2265 = vadd.f32 %v2235, %v2201
        %v2266 = vadd.f32 %v2236, %v2204
        %v2267 = vadd.f32 %v2237, %v2206
        %2268 = vst [vmem:[#allocation2] sm:$0xff] %v2238
        %2269 = vst [vmem:[#allocation2 + $0x8] sm:$0xff] %v2239
        %2270 = vst [vmem:[#allocation2 + $0x10] sm:$0xff] %v2240
        %2271 = vst [vmem:[#allocation2 + $0x18] sm:$0xff] %v2241
        %2272 = vst [vmem:[#allocation2 + $0x20] sm:$0xff] %v2242
        %2273 = vst [vmem:[#allocation2 + $0x28] sm:$0xff] %v2243
        %2274 = vst [vmem:[#allocation2 + $0x30] sm:$0xff] %v2244
        %2275 = vst [vmem:[#allocation2 + $0x38] sm:$0xff] %v2245
        %2276 = vst [vmem:[#allocation2 + $0x40] sm:$0xff] %v2246
        %2277 = vst [vmem:[#allocation2 + $0x48] sm:$0xff] %v2247
        %2278 = vst [vmem:[#allocation2 + $0x50] sm:$0xff] %v2248
        %2279 = vst [vmem:[#allocation2 + $0x58] sm:$0xff] %v2249
        %2280 = vst [vmem:[#allocation2 + $0x60] sm:$0xff] %v2250
        %2281 = vst [vmem:[#allocation2 + $0x68] sm:$0xff] %v2251
        %2282 = vst [vmem:[#allocation2 + $0x70] sm:$0xff] %v2252
        %2283 = vst [vmem:[#allocation2 + $0x78] sm:$0xff] %v2253
        %2284 = vst [vmem:[#allocation2 + $0x80] sm:$0xff] %v2254
        %2285 = vst [vmem:[#allocation2 + $0x88] sm:$0xff] %v2255
        %2286 = vst [vmem:[#allocation2 + $0x90] sm:$0xff] %v2256
        %2287 = vst [vmem:[#allocation2 + $0x98] sm:$0xff] %v2257
        %2288 = vst [vmem:[#allocation2 + $0xa0] sm:$0xff] %v2258
        %2289 = vst [vmem:[#allocation2 + $0xa8] sm:$0xff] %v2259
        %2290 = vst [vmem:[#allocation2 + $0xb0] sm:$0xff] %v2260
        %2291 = vst [vmem:[#allocation2 + $0xb8] sm:$0xff] %v2261
        %2292 = vst [vmem:[#allocation2 + $0xc0] sm:$0xff] %v2262
        %2293 = vst [vmem:[#allocation2 + $0xc8] sm:$0xff] %v2263
        %2294 = vst [vmem:[#allocation2 + $0xd0] sm:$0xff] %v2264
        %2295 = vst [vmem:[#allocation2 + $0xd8] sm:$0xff] %v2265
        %2296 = vst [vmem:[#allocation2 + $0xe0] sm:$0xff] %v2266
        %2297 = vst [vmem:[#allocation2 + $0xe8] sm:$0xff] %v2267
        %v2298 = vrot.slane %v2014, 1
        %v2299 = vrot.slane %v2017, 1
        %v2300 = vrot.slane %v2020, 1
        %v2301 = vrot.slane %v2023, 1
        %v2302 = vrot.slane %v2026, 1
        %v2303 = vrot.slane %v2029, 1
        %v2304 = vrot.slane %v2032, 1
        %v2305 = vrot.slane %v2035, 1
        %v2306 = vrot.slane %v2038, 1
        %v2307 = vrot.slane %v2041, 1
        %v2308 = vrot.slane %v2015, 1
        %v2309 = vrot.slane %v2018, 1
        %v2310 = vrot.slane %v2021, 1
        %v2311 = vrot.slane %v2024, 1
        %v2312 = vrot.slane %v2027, 1
        %v2313 = vrot.slane %v2030, 1
        %v2314 = vrot.slane %v2033, 1
        %v2315 = vrot.slane %v2036, 1
        %v2316 = vrot.slane %v2039, 1
        %v2317 = vrot.slane %v2042, 1
        %v2318 = vrot.slane %v2016, 1
        %v2319 = vrot.slane %v2019, 1
        %v2320 = vrot.slane %v2022, 1
        %v2321 = vrot.slane %v2025, 1
        %v2322 = vrot.slane %v2028, 1
        %v2323 = vrot.slane %v2031, 1
        %v2324 = vrot.slane %v2034, 1
        %v2325 = vrot.slane %v2037, 1
        %v2326 = vrot.slane %v2040, 1
        %v2327 = vrot.slane %v2043, 1
        %v2328 = vsel %vm496, %v2308, %v2318
        %v2329 = vsel %vm496, %v2309, %v2319
        %v2330 = vsel %vm496, %v2310, %v2320
        %v2331 = vsel %vm496, %v2311, %v2321
        %v2332 = vsel %vm496, %v2312, %v2322
        %v2333 = vsel %vm496, %v2313, %v2323
        %v2334 = vsel %vm496, %v2314, %v2324
        %v2335 = vsel %vm496, %v2315, %v2325
        %v2336 = vsel %vm496, %v2316, %v2326
        %v2337 = vsel %vm496, %v2317, %v2327
        %v2338 = vsel %vm496, %v2298, %v2308
        %v2339 = vsel %vm496, %v2299, %v2309
        %v2340 = vsel %vm496, %v2300, %v2310
        %v2341 = vsel %vm496, %v2301, %v2311
        %v2342 = vsel %vm496, %v2302, %v2312
        %v2343 = vsel %vm496, %v2303, %v2313
        %v2344 = vsel %vm496, %v2304, %v2314
        %v2345 = vsel %vm496, %v2305, %v2315
        %v2346 = vsel %vm496, %v2306, %v2316
        %v2347 = vsel %vm496, %v2307, %v2317
        %v2348 = vsel %vm496, %v2318, %v2298
        %v2349 = vsel %vm496, %v2319, %v2299
        %v2350 = vsel %vm496, %v2320, %v2300
        %v2351 = vsel %vm496, %v2321, %v2301
        %v2352 = vsel %vm496, %v2322, %v2302
        %v2353 = vsel %vm496, %v2323, %v2303
        %v2354 = vsel %vm496, %v2324, %v2304
        %v2355 = vsel %vm496, %v2325, %v2305
        %v2356 = vsel %vm496, %v2326, %v2306
        %v2357 = vsel %vm496, %v2327, %v2307
        %v2358 = vpack.c.bf16 %v2328, %v2338
        %v2359 = vpack.c.bf16 %v2339, %v2348
        %v2360 = vpack.c.bf16 %v2349, %v2329
        %v2361 = vpack.c.bf16 %v2330, %v2340
        %v2362 = vpack.c.bf16 %v2341, %v2350
        %v2363 = vpack.c.bf16 %v2351, %v2331
        %v2364 = vpack.c.bf16 %v2332, %v2342
        %v2365 = vpack.c.bf16 %v2343, %v2352
        %v2366 = vpack.c.bf16 %v2353, %v2333
        %v2367 = vpack.c.bf16 %v2334, %v2344
        %v2368 = vpack.c.bf16 %v2345, %v2354
        %v2369 = vpack.c.bf16 %v2355, %v2335
        %v2370 = vpack.c.bf16 %v2336, %v2346
        %v2371 = vpack.c.bf16 %v2347, %v2356
        %v2372 = vpack.c.bf16 %v2357, %v2337
        %s2373 = scalar_lea.vmem %s1, 448
        %v2374 = vld [vmem:[%s2373] sm:$0xf]
        %v2375 = vld [vmem:[%s2373 + $0x4] sm:$0xf]
        %v2376 = vld [vmem:[%s2373 + $0x8] sm:$0xf]
        %v2377 = vld [vmem:[%s2373 + $0xc] sm:$0xf]
        %v2378 = vld [vmem:[%s2373 + $0x10] sm:$0xf]
        %v2379 = vld [vmem:[%s2373 + $0x14] sm:$0xf]
        %v2380 = vld [vmem:[%s2373 + $0x18] sm:$0xf]
        %v2381 = vld [vmem:[%s2373 + $0x1c] sm:$0xf]
        %v2382 = vld [vmem:[%s2373 + $0x20] sm:$0xf]
        %v2383 = vld [vmem:[%s2373 + $0x24] sm:$0xf]
        %v2384 = vld [vmem:[%s2373 + $0x28] sm:$0xf]
        %v2385 = vld [vmem:[%s2373 + $0x2c] sm:$0xf]
        %v2386 = vld [vmem:[%s2373 + $0x30] sm:$0xf]
        %v2387 = vld [vmem:[%s2373 + $0x34] sm:$0xf]
        %v2388 = vld [vmem:[%s2373 + $0x38] sm:$0xf]
        %v2389 = vld [vmem:[%s2373 + $0x3c] sm:$0xf]
        %v2406 = vunpack.c.l.b16 %v2374
        %v2407 = vunpack.c.l.b16 %v2375
        %v2408 = vunpack.c.l.b16 %v2376
        %v2409 = vunpack.c.l.b16 %v2377
        %v2410 = vunpack.c.l.b16 %v2378
        %v2411 = vunpack.c.l.b16 %v2379
        %v2412 = vunpack.c.l.b16 %v2380
        %v2413 = vunpack.c.l.b16 %v2381
        %v2414 = vunpack.c.l.b16 %v2382
        %v2415 = vunpack.c.l.b16 %v2383
        %v2416 = vunpack.c.l.b16 %v2384
        %v2417 = vunpack.c.l.b16 %v2385
        %v2418 = vunpack.c.l.b16 %v2386
        %v2419 = vunpack.c.l.b16 %v2387
        %v2420 = vunpack.c.l.b16 %v2388
        %v2421 = vunpack.c.l.b16 %v2389
        %v2422 = vpack.c.b16 %v2407, %v2406
        %v2423 = vpack.c.b16 %v2409, %v2408
        %v2424 = vpack.c.b16 %v2411, %v2410
        %v2425 = vpack.c.b16 %v2413, %v2412
        %v2426 = vpack.c.b16 %v2415, %v2414
        %v2427 = vpack.c.b16 %v2417, %v2416
        %v2428 = vpack.c.b16 %v2419, %v2418
        %v2429 = vpack.c.b16 %v2421, %v2420
        %2438 = vmatpush.bf16.msra.mxu0 %v2429
        %2439 = vmatpush.bf16.msra.mxu0 %v2428
        %2440 = vmatpush.bf16.msra.mxu0 %v2427
        %2441 = vmatpush.bf16.msra.mxu0 %v2426
        %2442 = vmatpush.bf16.msra.mxu0 %v2425
        %2443 = vmatpush.bf16.msra.mxu0 %v2424
        %2444 = vmatpush.bf16.msra.mxu0 %v2423
        %2445 = vmatpush.bf16.msra.mxu0 %v2422
        %2446 = vmatmul.bf16.gmra.mxu0 %v2358
        %v2447 = vpop.f32.mrf.mxu0
        %v2448 = vadd.f32 0.0, %v2447
        %v2449 = vpop.f32.mrf.mxu0
        %v2450 = vadd.f32 0.0, %v2449
        %2451 = vmatmul.bf16.gmra.mxu0 %v2359
        %v2452 = vpop.f32.mrf.mxu0
        %v2453 = vadd.f32 0.0, %v2452
        %v2454 = vpop.f32.mrf.mxu0
        %v2455 = vadd.f32 0.0, %v2454
        %2456 = vmatmul.bf16.gmra.mxu0 %v2360
        %v2457 = vpop.f32.mrf.mxu0
        %v2458 = vadd.f32 0.0, %v2457
        %v2459 = vpop.f32.mrf.mxu0
        %v2460 = vadd.f32 0.0, %v2459
        %2461 = vmatmul.bf16.gmra.mxu0 %v2361
        %v2462 = vpop.f32.mrf.mxu0
        %v2463 = vadd.f32 0.0, %v2462
        %v2464 = vpop.f32.mrf.mxu0
        %v2465 = vadd.f32 0.0, %v2464
        %2466 = vmatmul.bf16.gmra.mxu0 %v2362
        %v2467 = vpop.f32.mrf.mxu0
        %v2468 = vadd.f32 0.0, %v2467
        %v2469 = vpop.f32.mrf.mxu0
        %v2470 = vadd.f32 0.0, %v2469
        %2471 = vmatmul.bf16.gmra.mxu0 %v2363
        %v2472 = vpop.f32.mrf.mxu0
        %v2473 = vadd.f32 0.0, %v2472
        %v2474 = vpop.f32.mrf.mxu0
        %v2475 = vadd.f32 0.0, %v2474
        %2476 = vmatmul.bf16.gmra.mxu0 %v2364
        %v2477 = vpop.f32.mrf.mxu0
        %v2478 = vadd.f32 0.0, %v2477
        %v2479 = vpop.f32.mrf.mxu0
        %v2480 = vadd.f32 0.0, %v2479
        %2481 = vmatmul.bf16.gmra.mxu0 %v2365
        %v2482 = vpop.f32.mrf.mxu0
        %v2483 = vadd.f32 0.0, %v2482
        %v2484 = vpop.f32.mrf.mxu0
        %v2485 = vadd.f32 0.0, %v2484
        %2486 = vmatmul.bf16.gmra.mxu0 %v2366
        %v2487 = vpop.f32.mrf.mxu0
        %v2488 = vadd.f32 0.0, %v2487
        %v2489 = vpop.f32.mrf.mxu0
        %v2490 = vadd.f32 0.0, %v2489
        %2491 = vmatmul.bf16.gmra.mxu0 %v2367
        %v2492 = vpop.f32.mrf.mxu0
        %v2493 = vadd.f32 0.0, %v2492
        %v2494 = vpop.f32.mrf.mxu0
        %v2495 = vadd.f32 0.0, %v2494
        %2496 = vmatmul.bf16.gmra.mxu0 %v2368
        %v2497 = vpop.f32.mrf.mxu0
        %v2498 = vadd.f32 0.0, %v2497
        %v2499 = vpop.f32.mrf.mxu0
        %v2500 = vadd.f32 0.0, %v2499
        %2501 = vmatmul.bf16.gmra.mxu0 %v2369
        %v2502 = vpop.f32.mrf.mxu0
        %v2503 = vadd.f32 0.0, %v2502
        %v2504 = vpop.f32.mrf.mxu0
        %v2505 = vadd.f32 0.0, %v2504
        %2506 = vmatmul.bf16.gmra.mxu0 %v2370
        %v2507 = vpop.f32.mrf.mxu0
        %v2508 = vadd.f32 0.0, %v2507
        %v2509 = vpop.f32.mrf.mxu0
        %v2510 = vadd.f32 0.0, %v2509
        %2511 = vmatmul.bf16.gmra.mxu0 %v2371
        %v2512 = vpop.f32.mrf.mxu0
        %v2513 = vadd.f32 0.0, %v2512
        %v2514 = vpop.f32.mrf.mxu0
        %v2515 = vadd.f32 0.0, %v2514
        %2516 = vmatmul.bf16.gmra.mxu0 %v2372
        %v2517 = vpop.f32.mrf.mxu0
        %v2518 = vadd.f32 0.0, %v2517
        %v2519 = vpop.f32.mrf.mxu0
        %v2520 = vadd.f32 0.0, %v2519
        %2521 = vdwg.mxu0
        %v2522 = vld [vmem:[#allocation2] sm:$0xff]
        %v2523 = vld [vmem:[#allocation2 + $0x8] sm:$0xff]
        %v2524 = vld [vmem:[#allocation2 + $0x10] sm:$0xff]
        %v2525 = vld [vmem:[#allocation2 + $0x18] sm:$0xff]
        %v2526 = vld [vmem:[#allocation2 + $0x20] sm:$0xff]
        %v2527 = vld [vmem:[#allocation2 + $0x28] sm:$0xff]
        %v2528 = vld [vmem:[#allocation2 + $0x30] sm:$0xff]
        %v2529 = vld [vmem:[#allocation2 + $0x38] sm:$0xff]
        %v2530 = vld [vmem:[#allocation2 + $0x40] sm:$0xff]
        %v2531 = vld [vmem:[#allocation2 + $0x48] sm:$0xff]
        %v2532 = vld [vmem:[#allocation2 + $0x50] sm:$0xff]
        %v2533 = vld [vmem:[#allocation2 + $0x58] sm:$0xff]
        %v2534 = vld [vmem:[#allocation2 + $0x60] sm:$0xff]
        %v2535 = vld [vmem:[#allocation2 + $0x68] sm:$0xff]
        %v2536 = vld [vmem:[#allocation2 + $0x70] sm:$0xff]
        %v2537 = vld [vmem:[#allocation2 + $0x78] sm:$0xff]
        %v2538 = vld [vmem:[#allocation2 + $0x80] sm:$0xff]
        %v2539 = vld [vmem:[#allocation2 + $0x88] sm:$0xff]
        %v2540 = vld [vmem:[#allocation2 + $0x90] sm:$0xff]
        %v2541 = vld [vmem:[#allocation2 + $0x98] sm:$0xff]
        %v2542 = vld [vmem:[#allocation2 + $0xa0] sm:$0xff]
        %v2543 = vld [vmem:[#allocation2 + $0xa8] sm:$0xff]
        %v2544 = vld [vmem:[#allocation2 + $0xb0] sm:$0xff]
        %v2545 = vld [vmem:[#allocation2 + $0xb8] sm:$0xff]
        %v2546 = vld [vmem:[#allocation2 + $0xc0] sm:$0xff]
        %v2547 = vld [vmem:[#allocation2 + $0xc8] sm:$0xff]
        %v2548 = vld [vmem:[#allocation2 + $0xd0] sm:$0xff]
        %v2549 = vld [vmem:[#allocation2 + $0xd8] sm:$0xff]
        %v2550 = vld [vmem:[#allocation2 + $0xe0] sm:$0xff]
        %v2551 = vld [vmem:[#allocation2 + $0xe8] sm:$0xff]
        %v2552 = vadd.f32 %v2522, %v2448
        %v2553 = vadd.f32 %v2523, %v2450
        %v2554 = vadd.f32 %v2524, %v2453
        %v2555 = vadd.f32 %v2525, %v2455
        %v2556 = vadd.f32 %v2526, %v2458
        %v2557 = vadd.f32 %v2527, %v2460
        %v2558 = vadd.f32 %v2528, %v2463
        %v2559 = vadd.f32 %v2529, %v2465
        %v2560 = vadd.f32 %v2530, %v2468
        %v2561 = vadd.f32 %v2531, %v2470
        %v2562 = vadd.f32 %v2532, %v2473
        %v2563 = vadd.f32 %v2533, %v2475
        %v2564 = vadd.f32 %v2534, %v2478
        %v2565 = vadd.f32 %v2535, %v2480
        %v2566 = vadd.f32 %v2536, %v2483
        %v2567 = vadd.f32 %v2537, %v2485
        %v2568 = vadd.f32 %v2538, %v2488
        %v2569 = vadd.f32 %v2539, %v2490
        %v2570 = vadd.f32 %v2540, %v2493
        %v2571 = vadd.f32 %v2541, %v2495
        %v2572 = vadd.f32 %v2542, %v2498
        %v2573 = vadd.f32 %v2543, %v2500
        %v2574 = vadd.f32 %v2544, %v2503
        %v2575 = vadd.f32 %v2545, %v2505
        %v2576 = vadd.f32 %v2546, %v2508
        %v2577 = vadd.f32 %v2547, %v2510
        %v2578 = vadd.f32 %v2548, %v2513
        %v2579 = vadd.f32 %v2549, %v2515
        %v2580 = vadd.f32 %v2550, %v2518
        %v2581 = vadd.f32 %v2551, %v2520
        %2582 = vst [vmem:[#allocation2] sm:$0xff] %v2552
        %2583 = vst [vmem:[#allocation2 + $0x8] sm:$0xff] %v2553
        %2584 = vst [vmem:[#allocation2 + $0x10] sm:$0xff] %v2554
        %2585 = vst [vmem:[#allocation2 + $0x18] sm:$0xff] %v2555
        %2586 = vst [vmem:[#allocation2 + $0x20] sm:$0xff] %v2556
        %2587 = vst [vmem:[#allocation2 + $0x28] sm:$0xff] %v2557
        %2588 = vst [vmem:[#allocation2 + $0x30] sm:$0xff] %v2558
        %2589 = vst [vmem:[#allocation2 + $0x38] sm:$0xff] %v2559
        %2590 = vst [vmem:[#allocation2 + $0x40] sm:$0xff] %v2560
        %2591 = vst [vmem:[#allocation2 + $0x48] sm:$0xff] %v2561
        %2592 = vst [vmem:[#allocation2 + $0x50] sm:$0xff] %v2562
        %2593 = vst [vmem:[#allocation2 + $0x58] sm:$0xff] %v2563
        %2594 = vst [vmem:[#allocation2 + $0x60] sm:$0xff] %v2564
        %2595 = vst [vmem:[#allocation2 + $0x68] sm:$0xff] %v2565
        %2596 = vst [vmem:[#allocation2 + $0x70] sm:$0xff] %v2566
        %2597 = vst [vmem:[#allocation2 + $0x78] sm:$0xff] %v2567
        %2598 = vst [vmem:[#allocation2 + $0x80] sm:$0xff] %v2568
        %2599 = vst [vmem:[#allocation2 + $0x88] sm:$0xff] %v2569
        %2600 = vst [vmem:[#allocation2 + $0x90] sm:$0xff] %v2570
        %2601 = vst [vmem:[#allocation2 + $0x98] sm:$0xff] %v2571
        %2602 = vst [vmem:[#allocation2 + $0xa0] sm:$0xff] %v2572
        %2603 = vst [vmem:[#allocation2 + $0xa8] sm:$0xff] %v2573
        %2604 = vst [vmem:[#allocation2 + $0xb0] sm:$0xff] %v2574
        %2605 = vst [vmem:[#allocation2 + $0xb8] sm:$0xff] %v2575
        %2606 = vst [vmem:[#allocation2 + $0xc0] sm:$0xff] %v2576
        %2607 = vst [vmem:[#allocation2 + $0xc8] sm:$0xff] %v2577
        %2608 = vst [vmem:[#allocation2 + $0xd0] sm:$0xff] %v2578
        %2609 = vst [vmem:[#allocation2 + $0xd8] sm:$0xff] %v2579
        %2610 = vst [vmem:[#allocation2 + $0xe0] sm:$0xff] %v2580
        %2611 = vst [vmem:[#allocation2 + $0xe8] sm:$0xff] %v2581
        %v2612 = vrot.slane %v2014, 2
        %v2613 = vrot.slane %v2017, 2
        %v2614 = vrot.slane %v2020, 2
        %v2615 = vrot.slane %v2023, 2
        %v2616 = vrot.slane %v2026, 2
        %v2617 = vrot.slane %v2029, 2
        %v2618 = vrot.slane %v2032, 2
        %v2619 = vrot.slane %v2035, 2
        %v2620 = vrot.slane %v2038, 2
        %v2621 = vrot.slane %v2041, 2
        %v2622 = vrot.slane %v2015, 2
        %v2623 = vrot.slane %v2018, 2
        %v2624 = vrot.slane %v2021, 2
        %v2625 = vrot.slane %v2024, 2
        %v2626 = vrot.slane %v2027, 2
        %v2627 = vrot.slane %v2030, 2
        %v2628 = vrot.slane %v2033, 2
        %v2629 = vrot.slane %v2036, 2
        %v2630 = vrot.slane %v2039, 2
        %v2631 = vrot.slane %v2042, 2
        %v2632 = vrot.slane %v2016, 2
        %v2633 = vrot.slane %v2019, 2
        %v2634 = vrot.slane %v2022, 2
        %v2635 = vrot.slane %v2025, 2
        %v2636 = vrot.slane %v2028, 2
        %v2637 = vrot.slane %v2031, 2
        %v2638 = vrot.slane %v2034, 2
        %v2639 = vrot.slane %v2037, 2
        %v2640 = vrot.slane %v2040, 2
        %v2641 = vrot.slane %v2043, 2
        %v2642 = vsel %vm811, %v2622, %v2632
        %v2643 = vsel %vm811, %v2623, %v2633
        %v2644 = vsel %vm811, %v2624, %v2634
        %v2645 = vsel %vm811, %v2625, %v2635
        %v2646 = vsel %vm811, %v2626, %v2636
        %v2647 = vsel %vm811, %v2627, %v2637
        %v2648 = vsel %vm811, %v2628, %v2638
        %v2649 = vsel %vm811, %v2629, %v2639
        %v2650 = vsel %vm811, %v2630, %v2640
        %v2651 = vsel %vm811, %v2631, %v2641
        %v2652 = vsel %vm811, %v2612, %v2622
        %v2653 = vsel %vm811, %v2613, %v2623
        %v2654 = vsel %vm811, %v2614, %v2624
        %v2655 = vsel %vm811, %v2615, %v2625
        %v2656 = vsel %vm811, %v2616, %v2626
        %v2657 = vsel %vm811, %v2617, %v2627
        %v2658 = vsel %vm811, %v2618, %v2628
        %v2659 = vsel %vm811, %v2619, %v2629
        %v2660 = vsel %vm811, %v2620, %v2630
        %v2661 = vsel %vm811, %v2621, %v2631
        %v2662 = vsel %vm811, %v2632, %v2612
        %v2663 = vsel %vm811, %v2633, %v2613
        %v2664 = vsel %vm811, %v2634, %v2614
        %v2665 = vsel %vm811, %v2635, %v2615
        %v2666 = vsel %vm811, %v2636, %v2616
        %v2667 = vsel %vm811, %v2637, %v2617
        %v2668 = vsel %vm811, %v2638, %v2618
        %v2669 = vsel %vm811, %v2639, %v2619
        %v2670 = vsel %vm811, %v2640, %v2620
        %v2671 = vsel %vm811, %v2641, %v2621
        %v2672 = vpack.c.bf16 %v2642, %v2652
        %v2673 = vpack.c.bf16 %v2653, %v2662
        %v2674 = vpack.c.bf16 %v2663, %v2643
        %v2675 = vpack.c.bf16 %v2644, %v2654
        %v2676 = vpack.c.bf16 %v2655, %v2664
        %v2677 = vpack.c.bf16 %v2665, %v2645
        %v2678 = vpack.c.bf16 %v2646, %v2656
        %v2679 = vpack.c.bf16 %v2657, %v2666
        %v2680 = vpack.c.bf16 %v2667, %v2647
        %v2681 = vpack.c.bf16 %v2648, %v2658
        %v2682 = vpack.c.bf16 %v2659, %v2668
        %v2683 = vpack.c.bf16 %v2669, %v2649
        %v2684 = vpack.c.bf16 %v2650, %v2660
        %v2685 = vpack.c.bf16 %v2661, %v2670
        %v2686 = vpack.c.bf16 %v2671, %v2651
        %s2687 = scalar_lea.vmem %s1, 512
        %v2688 = vld [vmem:[%s2687] sm:$0xf]
        %v2689 = vld [vmem:[%s2687 + $0x4] sm:$0xf]
        %v2690 = vld [vmem:[%s2687 + $0x8] sm:$0xf]
        %v2691 = vld [vmem:[%s2687 + $0xc] sm:$0xf]
        %v2692 = vld [vmem:[%s2687 + $0x10] sm:$0xf]
        %v2693 = vld [vmem:[%s2687 + $0x14] sm:$0xf]
        %v2694 = vld [vmem:[%s2687 + $0x18] sm:$0xf]
        %v2695 = vld [vmem:[%s2687 + $0x1c] sm:$0xf]
        %v2696 = vld [vmem:[%s2687 + $0x20] sm:$0xf]
        %v2697 = vld [vmem:[%s2687 + $0x24] sm:$0xf]
        %v2698 = vld [vmem:[%s2687 + $0x28] sm:$0xf]
        %v2699 = vld [vmem:[%s2687 + $0x2c] sm:$0xf]
        %v2700 = vld [vmem:[%s2687 + $0x30] sm:$0xf]
        %v2701 = vld [vmem:[%s2687 + $0x34] sm:$0xf]
        %v2702 = vld [vmem:[%s2687 + $0x38] sm:$0xf]
        %v2703 = vld [vmem:[%s2687 + $0x3c] sm:$0xf]
        %v2720 = vunpack.c.l.b16 %v2688
        %v2721 = vunpack.c.l.b16 %v2689
        %v2722 = vunpack.c.l.b16 %v2690
        %v2723 = vunpack.c.l.b16 %v2691
        %v2724 = vunpack.c.l.b16 %v2692
        %v2725 = vunpack.c.l.b16 %v2693
        %v2726 = vunpack.c.l.b16 %v2694
        %v2727 = vunpack.c.l.b16 %v2695
        %v2728 = vunpack.c.l.b16 %v2696
        %v2729 = vunpack.c.l.b16 %v2697
        %v2730 = vunpack.c.l.b16 %v2698
        %v2731 = vunpack.c.l.b16 %v2699
        %v2732 = vunpack.c.l.b16 %v2700
        %v2733 = vunpack.c.l.b16 %v2701
        %v2734 = vunpack.c.l.b16 %v2702
        %v2735 = vunpack.c.l.b16 %v2703
        %v2736 = vpack.c.b16 %v2721, %v2720
        %v2737 = vpack.c.b16 %v2723, %v2722
        %v2738 = vpack.c.b16 %v2725, %v2724
        %v2739 = vpack.c.b16 %v2727, %v2726
        %v2740 = vpack.c.b16 %v2729, %v2728
        %v2741 = vpack.c.b16 %v2731, %v2730
        %v2742 = vpack.c.b16 %v2733, %v2732
        %v2743 = vpack.c.b16 %v2735, %v2734
        %2752 = vmatpush.bf16.msra.mxu0 %v2743
        %2753 = vmatpush.bf16.msra.mxu0 %v2742
        %2754 = vmatpush.bf16.msra.mxu0 %v2741
        %2755 = vmatpush.bf16.msra.mxu0 %v2740
        %2756 = vmatpush.bf16.msra.mxu0 %v2739
        %2757 = vmatpush.bf16.msra.mxu0 %v2738
        %2758 = vmatpush.bf16.msra.mxu0 %v2737
        %2759 = vmatpush.bf16.msra.mxu0 %v2736
        %2760 = vmatmul.bf16.gmra.mxu0 %v2672
        %v2761 = vpop.f32.mrf.mxu0
        %v2762 = vadd.f32 0.0, %v2761
        %v2763 = vpop.f32.mrf.mxu0
        %v2764 = vadd.f32 0.0, %v2763
        %2765 = vmatmul.bf16.gmra.mxu0 %v2673
        %v2766 = vpop.f32.mrf.mxu0
        %v2767 = vadd.f32 0.0, %v2766
        %v2768 = vpop.f32.mrf.mxu0
        %v2769 = vadd.f32 0.0, %v2768
        %2770 = vmatmul.bf16.gmra.mxu0 %v2674
        %v2771 = vpop.f32.mrf.mxu0
        %v2772 = vadd.f32 0.0, %v2771
        %v2773 = vpop.f32.mrf.mxu0
        %v2774 = vadd.f32 0.0, %v2773
        %2775 = vmatmul.bf16.gmra.mxu0 %v2675
        %v2776 = vpop.f32.mrf.mxu0
        %v2777 = vadd.f32 0.0, %v2776
        %v2778 = vpop.f32.mrf.mxu0
        %v2779 = vadd.f32 0.0, %v2778
        %2780 = vmatmul.bf16.gmra.mxu0 %v2676
        %v2781 = vpop.f32.mrf.mxu0
        %v2782 = vadd.f32 0.0, %v2781
        %v2783 = vpop.f32.mrf.mxu0
        %v2784 = vadd.f32 0.0, %v2783
        %2785 = vmatmul.bf16.gmra.mxu0 %v2677
        %v2786 = vpop.f32.mrf.mxu0
        %v2787 = vadd.f32 0.0, %v2786
        %v2788 = vpop.f32.mrf.mxu0
        %v2789 = vadd.f32 0.0, %v2788
        %2790 = vmatmul.bf16.gmra.mxu0 %v2678
        %v2791 = vpop.f32.mrf.mxu0
        %v2792 = vadd.f32 0.0, %v2791
        %v2793 = vpop.f32.mrf.mxu0
        %v2794 = vadd.f32 0.0, %v2793
        %2795 = vmatmul.bf16.gmra.mxu0 %v2679
        %v2796 = vpop.f32.mrf.mxu0
        %v2797 = vadd.f32 0.0, %v2796
        %v2798 = vpop.f32.mrf.mxu0
        %v2799 = vadd.f32 0.0, %v2798
        %2800 = vmatmul.bf16.gmra.mxu0 %v2680
        %v2801 = vpop.f32.mrf.mxu0
        %v2802 = vadd.f32 0.0, %v2801
        %v2803 = vpop.f32.mrf.mxu0
        %v2804 = vadd.f32 0.0, %v2803
        %2805 = vmatmul.bf16.gmra.mxu0 %v2681
        %v2806 = vpop.f32.mrf.mxu0
        %v2807 = vadd.f32 0.0, %v2806
        %v2808 = vpop.f32.mrf.mxu0
        %v2809 = vadd.f32 0.0, %v2808
        %2810 = vmatmul.bf16.gmra.mxu0 %v2682
        %v2811 = vpop.f32.mrf.mxu0
        %v2812 = vadd.f32 0.0, %v2811
        %v2813 = vpop.f32.mrf.mxu0
        %v2814 = vadd.f32 0.0, %v2813
        %2815 = vmatmul.bf16.gmra.mxu0 %v2683
        %v2816 = vpop.f32.mrf.mxu0
        %v2817 = vadd.f32 0.0, %v2816
        %v2818 = vpop.f32.mrf.mxu0
        %v2819 = vadd.f32 0.0, %v2818
        %2820 = vmatmul.bf16.gmra.mxu0 %v2684
        %v2821 = vpop.f32.mrf.mxu0
        %v2822 = vadd.f32 0.0, %v2821
        %v2823 = vpop.f32.mrf.mxu0
        %v2824 = vadd.f32 0.0, %v2823
        %2825 = vmatmul.bf16.gmra.mxu0 %v2685
        %v2826 = vpop.f32.mrf.mxu0
        %v2827 = vadd.f32 0.0, %v2826
        %v2828 = vpop.f32.mrf.mxu0
        %v2829 = vadd.f32 0.0, %v2828
        %2830 = vmatmul.bf16.gmra.mxu0 %v2686
        %v2831 = vpop.f32.mrf.mxu0
        %v2832 = vadd.f32 0.0, %v2831
        %v2833 = vpop.f32.mrf.mxu0
        %v2834 = vadd.f32 0.0, %v2833
        %2835 = vdwg.mxu0
        %v2836 = vld [vmem:[#allocation2] sm:$0xff]
        %v2837 = vld [vmem:[#allocation2 + $0x8] sm:$0xff]
        %v2838 = vld [vmem:[#allocation2 + $0x10] sm:$0xff]
        %v2839 = vld [vmem:[#allocation2 + $0x18] sm:$0xff]
        %v2840 = vld [vmem:[#allocation2 + $0x20] sm:$0xff]
        %v2841 = vld [vmem:[#allocation2 + $0x28] sm:$0xff]
        %v2842 = vld [vmem:[#allocation2 + $0x30] sm:$0xff]
        %v2843 = vld [vmem:[#allocation2 + $0x38] sm:$0xff]
        %v2844 = vld [vmem:[#allocation2 + $0x40] sm:$0xff]
        %v2845 = vld [vmem:[#allocation2 + $0x48] sm:$0xff]
        %v2846 = vld [vmem:[#allocation2 + $0x50] sm:$0xff]
        %v2847 = vld [vmem:[#allocation2 + $0x58] sm:$0xff]
        %v2848 = vld [vmem:[#allocation2 + $0x60] sm:$0xff]
        %v2849 = vld [vmem:[#allocation2 + $0x68] sm:$0xff]
        %v2850 = vld [vmem:[#allocation2 + $0x70] sm:$0xff]
        %v2851 = vld [vmem:[#allocation2 + $0x78] sm:$0xff]
        %v2852 = vld [vmem:[#allocation2 + $0x80] sm:$0xff]
        %v2853 = vld [vmem:[#allocation2 + $0x88] sm:$0xff]
        %v2854 = vld [vmem:[#allocation2 + $0x90] sm:$0xff]
        %v2855 = vld [vmem:[#allocation2 + $0x98] sm:$0xff]
        %v2856 = vld [vmem:[#allocation2 + $0xa0] sm:$0xff]
        %v2857 = vld [vmem:[#allocation2 + $0xa8] sm:$0xff]
        %v2858 = vld [vmem:[#allocation2 + $0xb0] sm:$0xff]
        %v2859 = vld [vmem:[#allocation2 + $0xb8] sm:$0xff]
        %v2860 = vld [vmem:[#allocation2 + $0xc0] sm:$0xff]
        %v2861 = vld [vmem:[#allocation2 + $0xc8] sm:$0xff]
        %v2862 = vld [vmem:[#allocation2 + $0xd0] sm:$0xff]
        %v2863 = vld [vmem:[#allocation2 + $0xd8] sm:$0xff]
        %v2864 = vld [vmem:[#allocation2 + $0xe0] sm:$0xff]
        %v2865 = vld [vmem:[#allocation2 + $0xe8] sm:$0xff]
        %v2866 = vadd.f32 %v2836, %v2762
        %v2867 = vadd.f32 %v2837, %v2764
        %v2868 = vadd.f32 %v2838, %v2767
        %v2869 = vadd.f32 %v2839, %v2769
        %v2870 = vadd.f32 %v2840, %v2772
        %v2871 = vadd.f32 %v2841, %v2774
        %v2872 = vadd.f32 %v2842, %v2777
        %v2873 = vadd.f32 %v2843, %v2779
        %v2874 = vadd.f32 %v2844, %v2782
        %v2875 = vadd.f32 %v2845, %v2784
        %v2876 = vadd.f32 %v2846, %v2787
        %v2877 = vadd.f32 %v2847, %v2789
        %v2878 = vadd.f32 %v2848, %v2792
        %v2879 = vadd.f32 %v2849, %v2794
        %v2880 = vadd.f32 %v2850, %v2797
        %v2881 = vadd.f32 %v2851, %v2799
        %v2882 = vadd.f32 %v2852, %v2802
        %v2883 = vadd.f32 %v2853, %v2804
        %v2884 = vadd.f32 %v2854, %v2807
        %v2885 = vadd.f32 %v2855, %v2809
        %v2886 = vadd.f32 %v2856, %v2812
        %v2887 = vadd.f32 %v2857, %v2814
        %v2888 = vadd.f32 %v2858, %v2817
        %v2889 = vadd.f32 %v2859, %v2819
        %v2890 = vadd.f32 %v2860, %v2822
        %v2891 = vadd.f32 %v2861, %v2824
        %v2892 = vadd.f32 %v2862, %v2827
        %v2893 = vadd.f32 %v2863, %v2829
        %v2894 = vadd.f32 %v2864, %v2832
        %v2895 = vadd.f32 %v2865, %v2834
        %2896 = vst [vmem:[#allocation2] sm:$0xff] %v2866
        %2897 = vst [vmem:[#allocation2 + $0x8] sm:$0xff] %v2867
        %2898 = vst [vmem:[#allocation2 + $0x10] sm:$0xff] %v2868
        %2899 = vst [vmem:[#allocation2 + $0x18] sm:$0xff] %v2869
        %2900 = vst [vmem:[#allocation2 + $0x20] sm:$0xff] %v2870
        %2901 = vst [vmem:[#allocation2 + $0x28] sm:$0xff] %v2871
        %2902 = vst [vmem:[#allocation2 + $0x30] sm:$0xff] %v2872
        %2903 = vst [vmem:[#allocation2 + $0x38] sm:$0xff] %v2873
        %2904 = vst [vmem:[#allocation2 + $0x40] sm:$0xff] %v2874
        %2905 = vst [vmem:[#allocation2 + $0x48] sm:$0xff] %v2875
        %2906 = vst [vmem:[#allocation2 + $0x50] sm:$0xff] %v2876
        %2907 = vst [vmem:[#allocation2 + $0x58] sm:$0xff] %v2877
        %2908 = vst [vmem:[#allocation2 + $0x60] sm:$0xff] %v2878
        %2909 = vst [vmem:[#allocation2 + $0x68] sm:$0xff] %v2879
        %2910 = vst [vmem:[#allocation2 + $0x70] sm:$0xff] %v2880
        %2911 = vst [vmem:[#allocation2 + $0x78] sm:$0xff] %v2881
        %2912 = vst [vmem:[#allocation2 + $0x80] sm:$0xff] %v2882
        %2913 = vst [vmem:[#allocation2 + $0x88] sm:$0xff] %v2883
        %2914 = vst [vmem:[#allocation2 + $0x90] sm:$0xff] %v2884
        %2915 = vst [vmem:[#allocation2 + $0x98] sm:$0xff] %v2885
        %2916 = vst [vmem:[#allocation2 + $0xa0] sm:$0xff] %v2886
        %2917 = vst [vmem:[#allocation2 + $0xa8] sm:$0xff] %v2887
        %2918 = vst [vmem:[#allocation2 + $0xb0] sm:$0xff] %v2888
        %2919 = vst [vmem:[#allocation2 + $0xb8] sm:$0xff] %v2889
        %2920 = vst [vmem:[#allocation2 + $0xc0] sm:$0xff] %v2890
        %2921 = vst [vmem:[#allocation2 + $0xc8] sm:$0xff] %v2891
        %2922 = vst [vmem:[#allocation2 + $0xd0] sm:$0xff] %v2892
        %2923 = vst [vmem:[#allocation2 + $0xd8] sm:$0xff] %v2893
        %2924 = vst [vmem:[#allocation2 + $0xe0] sm:$0xff] %v2894
        %2925 = vst [vmem:[#allocation2 + $0xe8] sm:$0xff] %v2895
        %v2926 = vld [vmem:[#allocation2] sm:$0xff]
        %v2927 = vld [vmem:[#allocation2 + $0x8] sm:$0xff]
        %v2928 = vld [vmem:[#allocation2 + $0x10] sm:$0xff]
        %v2929 = vld [vmem:[#allocation2 + $0x18] sm:$0xff]
        %v2930 = vld [vmem:[#allocation2 + $0x20] sm:$0xff]
        %v2931 = vld [vmem:[#allocation2 + $0x28] sm:$0xff]
        %v2932 = vld [vmem:[#allocation2 + $0x30] sm:$0xff]
        %v2933 = vld [vmem:[#allocation2 + $0x38] sm:$0xff]
        %v2934 = vld [vmem:[#allocation2 + $0x40] sm:$0xff]
        %v2935 = vld [vmem:[#allocation2 + $0x48] sm:$0xff]
        %v2936 = vld [vmem:[#allocation2 + $0x50] sm:$0xff]
        %v2937 = vld [vmem:[#allocation2 + $0x58] sm:$0xff]
        %v2938 = vld [vmem:[#allocation2 + $0x60] sm:$0xff]
        %v2939 = vld [vmem:[#allocation2 + $0x68] sm:$0xff]
        %v2940 = vld [vmem:[#allocation2 + $0x70] sm:$0xff]
        %v2941 = vld [vmem:[#allocation2 + $0x78] sm:$0xff]
        %v2942 = vld [vmem:[#allocation2 + $0x80] sm:$0xff]
        %v2943 = vld [vmem:[#allocation2 + $0x88] sm:$0xff]
        %v2944 = vld [vmem:[#allocation2 + $0x90] sm:$0xff]
        %v2945 = vld [vmem:[#allocation2 + $0x98] sm:$0xff]
        %v2946 = vld [vmem:[#allocation2 + $0xa0] sm:$0xff]
        %v2947 = vld [vmem:[#allocation2 + $0xa8] sm:$0xff]
        %v2948 = vld [vmem:[#allocation2 + $0xb0] sm:$0xff]
        %v2949 = vld [vmem:[#allocation2 + $0xb8] sm:$0xff]
        %v2950 = vld [vmem:[#allocation2 + $0xc0] sm:$0xff]
        %v2951 = vld [vmem:[#allocation2 + $0xc8] sm:$0xff]
        %v2952 = vld [vmem:[#allocation2 + $0xd0] sm:$0xff]
        %v2953 = vld [vmem:[#allocation2 + $0xd8] sm:$0xff]
        %v2954 = vld [vmem:[#allocation2 + $0xe0] sm:$0xff]
        %v2955 = vld [vmem:[#allocation2 + $0xe8] sm:$0xff]
        %v2956 = vld [vmem:[%s2] sm:$0x1]
        %v2958 = vperm.slane %v2956, 0
        %v2960 = vadd.f32 %v2926, %v2958
        %v2961 = vadd.f32 %v2927, %v2958
        %v2962 = vadd.f32 %v2928, %v2958
        %v2963 = vadd.f32 %v2929, %v2958
        %v2964 = vadd.f32 %v2930, %v2958
        %v2965 = vadd.f32 %v2931, %v2958
        %v2966 = vadd.f32 %v2932, %v2958
        %v2967 = vadd.f32 %v2933, %v2958
        %v2968 = vadd.f32 %v2934, %v2958
        %v2969 = vadd.f32 %v2935, %v2958
        %v2970 = vadd.f32 %v2936, %v2958
        %v2971 = vadd.f32 %v2937, %v2958
        %v2972 = vadd.f32 %v2938, %v2958
        %v2973 = vadd.f32 %v2939, %v2958
        %v2974 = vadd.f32 %v2940, %v2958
        %v2975 = vadd.f32 %v2941, %v2958
        %v2976 = vadd.f32 %v2942, %v2958
        %v2977 = vadd.f32 %v2943, %v2958
        %v2978 = vadd.f32 %v2944, %v2958
        %v2979 = vadd.f32 %v2945, %v2958
        %v2980 = vadd.f32 %v2946, %v2958
        %v2981 = vadd.f32 %v2947, %v2958
        %v2982 = vadd.f32 %v2948, %v2958
        %v2983 = vadd.f32 %v2949, %v2958
        %v2984 = vadd.f32 %v2950, %v2958
        %v2985 = vadd.f32 %v2951, %v2958
        %v2986 = vadd.f32 %v2952, %v2958
        %v2987 = vadd.f32 %v2953, %v2958
        %v2988 = vadd.f32 %v2954, %v2958
        %v2989 = vadd.f32 %v2955, %v2958
        %v2990 = vmax.f32 %v2960, 0.0
        %v2991 = vmax.f32 %v2961, 0.0
        %v2992 = vmax.f32 %v2962, 0.0
        %v2993 = vmax.f32 %v2963, 0.0
        %v2994 = vmax.f32 %v2964, 0.0
        %v2995 = vmax.f32 %v2965, 0.0
        %v2996 = vmax.f32 %v2966, 0.0
        %v2997 = vmax.f32 %v2967, 0.0
        %v2998 = vmax.f32 %v2968, 0.0
        %v2999 = vmax.f32 %v2969, 0.0
        %v3000 = vmax.f32 %v2970, 0.0
        %v3001 = vmax.f32 %v2971, 0.0
        %v3002 = vmax.f32 %v2972, 0.0
        %v3003 = vmax.f32 %v2973, 0.0
        %v3004 = vmax.f32 %v2974, 0.0
        %v3005 = vmax.f32 %v2975, 0.0
        %v3006 = vmax.f32 %v2976, 0.0
        %v3007 = vmax.f32 %v2977, 0.0
        %v3008 = vmax.f32 %v2978, 0.0
        %v3009 = vmax.f32 %v2979, 0.0
        %v3010 = vmax.f32 %v2980, 0.0
        %v3011 = vmax.f32 %v2981, 0.0
        %v3012 = vmax.f32 %v2982, 0.0
        %v3013 = vmax.f32 %v2983, 0.0
        %v3014 = vmax.f32 %v2984, 0.0
        %v3015 = vmax.f32 %v2985, 0.0
        %v3016 = vmax.f32 %v2986, 0.0
        %v3017 = vmax.f32 %v2987, 0.0
        %v3018 = vmax.f32 %v2988, 0.0
        %v3019 = vmax.f32 %v2989, 0.0
        %v3020 = vadd.s32 %v495, 8
        %v3021 = vadd.s32 %v495, 16
        %s3022 = ssub.s32 %s238, 1
        %v3023 = vstv %s3022
        %v3024 = vadd.s32 %v3023, 1
        %v3025 = vadd.s32 %v3023, 2
        %v3026 = vadd.s32 %v3023, 3
        %v3027 = vadd.s32 %v3023, 4
        %v3028 = vadd.s32 %v3023, 5
        %v3029 = vadd.s32 %v3023, 6
        %v3030 = vadd.s32 %v3023, 7
        %v3031 = vadd.s32 %v3023, 8
        %v3032 = vadd.s32 %v3023, 9
        %vm3033 = vcmp.lt.s32.totalorder %v495, 16
        %vm3034 = vcmp.lt.s32.totalorder %v3020, 16
        %vm3035 = vcmp.lt.s32.totalorder %v3021, 16
        %vm3036 = vcmp.ge.s32.totalorder %v3023, 0
        %vm3037 = vcmp.ge.s32.totalorder %v3024, 0
        %vm3038 = vcmp.ge.s32.totalorder %v3025, 0
        %vm3039 = vcmp.ge.s32.totalorder %v3026, 0
        %vm3040 = vcmp.ge.s32.totalorder %v3027, 0
        %vm3041 = vcmp.ge.s32.totalorder %v3028, 0
        %vm3042 = vcmp.ge.s32.totalorder %v3029, 0
        %vm3043 = vcmp.ge.s32.totalorder %v3030, 0
        %vm3044 = vcmp.ge.s32.totalorder %v3031, 0
        %vm3045 = vcmp.ge.s32.totalorder %v3032, 0
        %vm3046 = vmand %vm3033, %vm3036
        %vm3047 = vmand %vm3034, %vm3036
        %vm3048 = vmand %vm3035, %vm3036
        %vm3049 = vmand %vm3033, %vm3037
        %vm3050 = vmand %vm3034, %vm3037
        %vm3051 = vmand %vm3035, %vm3037
        %vm3052 = vmand %vm3033, %vm3038
        %vm3053 = vmand %vm3034, %vm3038
        %vm3054 = vmand %vm3035, %vm3038
        %vm3055 = vmand %vm3033, %vm3039
        %vm3056 = vmand %vm3034, %vm3039
        %vm3057 = vmand %vm3035, %vm3039
        %vm3058 = vmand %vm3033, %vm3040
        %vm3059 = vmand %vm3034, %vm3040
        %vm3060 = vmand %vm3035, %vm3040
        %vm3061 = vmand %vm3033, %vm3041
        %vm3062 = vmand %vm3034, %vm3041
        %vm3063 = vmand %vm3035, %vm3041
        %vm3064 = vmand %vm3033, %vm3042
        %vm3065 = vmand %vm3034, %vm3042
        %vm3066 = vmand %vm3035, %vm3042
        %vm3067 = vmand %vm3033, %vm3043
        %vm3068 = vmand %vm3034, %vm3043
        %vm3069 = vmand %vm3035, %vm3043
        %vm3070 = vmand %vm3033, %vm3044
        %vm3071 = vmand %vm3034, %vm3044
        %vm3072 = vmand %vm3035, %vm3044
        %vm3073 = vmand %vm3033, %vm3045
        %vm3074 = vmand %vm3034, %vm3045
        %vm3075 = vmand %vm3035, %vm3045
        %vm3076 = vcmp.lt.s32.totalorder %v3023, 16
        %vm3077 = vcmp.lt.s32.totalorder %v3024, 16
        %vm3078 = vcmp.lt.s32.totalorder %v3025, 16
        %vm3079 = vcmp.lt.s32.totalorder %v3026, 16
        %vm3080 = vcmp.lt.s32.totalorder %v3027, 16
        %vm3081 = vcmp.lt.s32.totalorder %v3028, 16
        %vm3082 = vcmp.lt.s32.totalorder %v3029, 16
        %vm3083 = vcmp.lt.s32.totalorder %v3030, 16
        %vm3084 = vcmp.lt.s32.totalorder %v3031, 16
        %vm3085 = vcmp.lt.s32.totalorder %v3032, 16
        %vm3086 = vmand %vm3046, %vm3076
        %vm3087 = vmand %vm3047, %vm3076
        %vm3088 = vmand %vm3048, %vm3076
        %vm3089 = vmand %vm3049, %vm3077
        %vm3090 = vmand %vm3050, %vm3077
        %vm3091 = vmand %vm3051, %vm3077
        %vm3092 = vmand %vm3052, %vm3078
        %vm3093 = vmand %vm3053, %vm3078
        %vm3094 = vmand %vm3054, %vm3078
        %vm3095 = vmand %vm3055, %vm3079
        %vm3096 = vmand %vm3056, %vm3079
        %vm3097 = vmand %vm3057, %vm3079
        %vm3098 = vmand %vm3058, %vm3080
        %vm3099 = vmand %vm3059, %vm3080
        %vm3100 = vmand %vm3060, %vm3080
        %vm3101 = vmand %vm3061, %vm3081
        %vm3102 = vmand %vm3062, %vm3081
        %vm3103 = vmand %vm3063, %vm3081
        %vm3104 = vmand %vm3064, %vm3082
        %vm3105 = vmand %vm3065, %vm3082
        %vm3106 = vmand %vm3066, %vm3082
        %vm3107 = vmand %vm3067, %vm3083
        %vm3108 = vmand %vm3068, %vm3083
        %vm3109 = vmand %vm3069, %vm3083
        %vm3110 = vmand %vm3070, %vm3084
        %vm3111 = vmand %vm3071, %vm3084
        %vm3112 = vmand %vm3072, %vm3084
        %vm3113 = vmand %vm3073, %vm3085
        %vm3114 = vmand %vm3074, %vm3085
        %vm3115 = vmand %vm3075, %vm3085
        %v3116 = vsel %vm3086, 1, 0
        %v3117 = vsel %vm3087, 1, 0
        %v3118 = vsel %vm3088, 1, 0
        %v3119 = vsel %vm3089, 1, 0
        %v3120 = vsel %vm3090, 1, 0
        %v3121 = vsel %vm3091, 1, 0
        %v3122 = vsel %vm3092, 1, 0
        %v3123 = vsel %vm3093, 1, 0
        %v3124 = vsel %vm3094, 1, 0
        %v3125 = vsel %vm3095, 1, 0
        %v3126 = vsel %vm3096, 1, 0
        %v3127 = vsel %vm3097, 1, 0
        %v3128 = vsel %vm3098, 1, 0
        %v3129 = vsel %vm3099, 1, 0
        %v3130 = vsel %vm3100, 1, 0
        %v3131 = vsel %vm3101, 1, 0
        %v3132 = vsel %vm3102, 1, 0
        %v3133 = vsel %vm3103, 1, 0
        %v3134 = vsel %vm3104, 1, 0
        %v3135 = vsel %vm3105, 1, 0
        %v3136 = vsel %vm3106, 1, 0
        %v3137 = vsel %vm3107, 1, 0
        %v3138 = vsel %vm3108, 1, 0
        %v3139 = vsel %vm3109, 1, 0
        %v3140 = vsel %vm3110, 1, 0
        %v3141 = vsel %vm3111, 1, 0
        %v3142 = vsel %vm3112, 1, 0
        %v3143 = vsel %vm3113, 1, 0
        %v3144 = vsel %vm3114, 1, 0
        %v3145 = vsel %vm3115, 1, 0
        %vm3146 = vcmp.eq.s32.totalorder %v3116, 1
        %vm3147 = vcmp.eq.s32.totalorder %v3117, 1
        %vm3148 = vcmp.eq.s32.totalorder %v3118, 1
        %vm3149 = vcmp.eq.s32.totalorder %v3119, 1
        %vm3150 = vcmp.eq.s32.totalorder %v3120, 1
        %vm3151 = vcmp.eq.s32.totalorder %v3121, 1
        %vm3152 = vcmp.eq.s32.totalorder %v3122, 1
        %vm3153 = vcmp.eq.s32.totalorder %v3123, 1
        %vm3154 = vcmp.eq.s32.totalorder %v3124, 1
        %vm3155 = vcmp.eq.s32.totalorder %v3125, 1
        %vm3156 = vcmp.eq.s32.totalorder %v3126, 1
        %vm3157 = vcmp.eq.s32.totalorder %v3127, 1
        %vm3158 = vcmp.eq.s32.totalorder %v3128, 1
        %vm3159 = vcmp.eq.s32.totalorder %v3129, 1
        %vm3160 = vcmp.eq.s32.totalorder %v3130, 1
        %vm3161 = vcmp.eq.s32.totalorder %v3131, 1
        %vm3162 = vcmp.eq.s32.totalorder %v3132, 1
        %vm3163 = vcmp.eq.s32.totalorder %v3133, 1
        %vm3164 = vcmp.eq.s32.totalorder %v3134, 1
        %vm3165 = vcmp.eq.s32.totalorder %v3135, 1
        %vm3166 = vcmp.eq.s32.totalorder %v3136, 1
        %vm3167 = vcmp.eq.s32.totalorder %v3137, 1
        %vm3168 = vcmp.eq.s32.totalorder %v3138, 1
        %vm3169 = vcmp.eq.s32.totalorder %v3139, 1
        %vm3170 = vcmp.eq.s32.totalorder %v3140, 1
        %vm3171 = vcmp.eq.s32.totalorder %v3141, 1
        %vm3172 = vcmp.eq.s32.totalorder %v3142, 1
        %vm3173 = vcmp.eq.s32.totalorder %v3143, 1
        %vm3174 = vcmp.eq.s32.totalorder %v3144, 1
        %vm3175 = vcmp.eq.s32.totalorder %v3145, 1
        %v3176 = vsel %vm3146, %v2990, 0.0
        %v3177 = vsel %vm3147, %v2991, 0.0
        %v3178 = vsel %vm3148, %v2992, 0.0
        %v3179 = vsel %vm3149, %v2993, 0.0
        %v3180 = vsel %vm3150, %v2994, 0.0
        %v3181 = vsel %vm3151, %v2995, 0.0
        %v3182 = vsel %vm3152, %v2996, 0.0
        %v3183 = vsel %vm3153, %v2997, 0.0
        %v3184 = vsel %vm3154, %v2998, 0.0
        %v3185 = vsel %vm3155, %v2999, 0.0
        %v3186 = vsel %vm3156, %v3000, 0.0
        %v3187 = vsel %vm3157, %v3001, 0.0
        %v3188 = vsel %vm3158, %v3002, 0.0
        %v3189 = vsel %vm3159, %v3003, 0.0
        %v3190 = vsel %vm3160, %v3004, 0.0
        %v3191 = vsel %vm3161, %v3005, 0.0
        %v3192 = vsel %vm3162, %v3006, 0.0
        %v3193 = vsel %vm3163, %v3007, 0.0
        %v3194 = vsel %vm3164, %v3008, 0.0
        %v3195 = vsel %vm3165, %v3009, 0.0
        %v3196 = vsel %vm3166, %v3010, 0.0
        %v3197 = vsel %vm3167, %v3011, 0.0
        %v3198 = vsel %vm3168, %v3012, 0.0
        %v3199 = vsel %vm3169, %v3013, 0.0
        %v3200 = vsel %vm3170, %v3014, 0.0
        %v3201 = vsel %vm3171, %v3015, 0.0
        %v3202 = vsel %vm3172, %v3016, 0.0
        %v3203 = vsel %vm3173, %v3017, 0.0
        %v3204 = vsel %vm3174, %v3018, 0.0
        %v3205 = vsel %vm3175, %v3019, 0.0
        %v3206 = vrot.slane %v3176, 7
        %v3207 = vrot.slane %v3179, 7
        %v3208 = vrot.slane %v3182, 7
        %v3209 = vrot.slane %v3185, 7
        %v3210 = vrot.slane %v3188, 7
        %v3211 = vrot.slane %v3191, 7
        %v3212 = vrot.slane %v3194, 7
        %v3213 = vrot.slane %v3197, 7
        %v3214 = vrot.slane %v3200, 7
        %v3215 = vrot.slane %v3203, 7
        %v3216 = vrot.slane %v3177, 7
        %v3217 = vrot.slane %v3180, 7
        %v3218 = vrot.slane %v3183, 7
        %v3219 = vrot.slane %v3186, 7
        %v3220 = vrot.slane %v3189, 7
        %v3221 = vrot.slane %v3192, 7
        %v3222 = vrot.slane %v3195, 7
        %v3223 = vrot.slane %v3198, 7
        %v3224 = vrot.slane %v3201, 7
        %v3225 = vrot.slane %v3204, 7
        %v3226 = vrot.slane %v3178, 7
        %v3227 = vrot.slane %v3181, 7
        %v3228 = vrot.slane %v3184, 7
        %v3229 = vrot.slane %v3187, 7
        %v3230 = vrot.slane %v3190, 7
        %v3231 = vrot.slane %v3193, 7
        %v3232 = vrot.slane %v3196, 7
        %v3233 = vrot.slane %v3199, 7
        %v3234 = vrot.slane %v3202, 7
        %v3235 = vrot.slane %v3205, 7
        %vm3236 = vcmp.lt.s32.totalorder %v495, 1
        %v3237 = vsel %vm3236, %v3216, %v3226
        %v3238 = vsel %vm3236, %v3217, %v3227
        %v3239 = vsel %vm3236, %v3218, %v3228
        %v3240 = vsel %vm3236, %v3219, %v3229
        %v3241 = vsel %vm3236, %v3220, %v3230
        %v3242 = vsel %vm3236, %v3221, %v3231
        %v3243 = vsel %vm3236, %v3222, %v3232
        %v3244 = vsel %vm3236, %v3223, %v3233
        %v3245 = vsel %vm3236, %v3224, %v3234
        %v3246 = vsel %vm3236, %v3225, %v3235
        %v3247 = vsel %vm3236, %v3206, %v3216
        %v3248 = vsel %vm3236, %v3207, %v3217
        %v3249 = vsel %vm3236, %v3208, %v3218
        %v3250 = vsel %vm3236, %v3209, %v3219
        %v3251 = vsel %vm3236, %v3210, %v3220
        %v3252 = vsel %vm3236, %v3211, %v3221
        %v3253 = vsel %vm3236, %v3212, %v3222
        %v3254 = vsel %vm3236, %v3213, %v3223
        %v3255 = vsel %vm3236, %v3214, %v3224
        %v3256 = vsel %vm3236, %v3215, %v3225
        %v3257 = vsel %vm3236, %v3226, %v3206
        %v3258 = vsel %vm3236, %v3227, %v3207
        %v3259 = vsel %vm3236, %v3228, %v3208
        %v3260 = vsel %vm3236, %v3229, %v3209
        %v3261 = vsel %vm3236, %v3230, %v3210
        %v3262 = vsel %vm3236, %v3231, %v3211
        %v3263 = vsel %vm3236, %v3232, %v3212
        %v3264 = vsel %vm3236, %v3233, %v3213
        %v3265 = vsel %vm3236, %v3234, %v3214
        %v3266 = vsel %vm3236, %v3235, %v3215
        %3267 = vst [vmem:[#allocation3] sm:$0xff] %v3257
        %3268 = vst [vmem:[#allocation3 + $0x8] sm:$0xff] %v3247
        %3269 = vst [vmem:[#allocation3 + $0x10] sm:$0xff] %v3237
        %3270 = vst [vmem:[#allocation3 + $0x18] sm:$0xff] %v3258
        %3271 = vst [vmem:[#allocation3 + $0x20] sm:$0xff] %v3248
        %3272 = vst [vmem:[#allocation3 + $0x28] sm:$0xff] %v3238
        %3273 = vst [vmem:[#allocation3 + $0x30] sm:$0xff] %v3259
        %3274 = vst [vmem:[#allocation3 + $0x38] sm:$0xff] %v3249
        %3275 = vst [vmem:[#allocation3 + $0x40] sm:$0xff] %v3239
        %3276 = vst [vmem:[#allocation3 + $0x48] sm:$0xff] %v3260
        %3277 = vst [vmem:[#allocation3 + $0x50] sm:$0xff] %v3250
        %3278 = vst [vmem:[#allocation3 + $0x58] sm:$0xff] %v3240
        %3279 = vst [vmem:[#allocation3 + $0x60] sm:$0xff] %v3261
        %3280 = vst [vmem:[#allocation3 + $0x68] sm:$0xff] %v3251
        %3281 = vst [vmem:[#allocation3 + $0x70] sm:$0xff] %v3241
        %3282 = vst [vmem:[#allocation3 + $0x78] sm:$0xff] %v3262
        %3283 = vst [vmem:[#allocation3 + $0x80] sm:$0xff] %v3252
        %3284 = vst [vmem:[#allocation3 + $0x88] sm:$0xff] %v3242
        %3285 = vst [vmem:[#allocation3 + $0x90] sm:$0xff] %v3263
        %3286 = vst [vmem:[#allocation3 + $0x98] sm:$0xff] %v3253
        %3287 = vst [vmem:[#allocation3 + $0xa0] sm:$0xff] %v3243
        %3288 = vst [vmem:[#allocation3 + $0xa8] sm:$0xff] %v3264
        %3289 = vst [vmem:[#allocation3 + $0xb0] sm:$0xff] %v3254
        %3290 = vst [vmem:[#allocation3 + $0xb8] sm:$0xff] %v3244
        %3291 = vst [vmem:[#allocation3 + $0xc0] sm:$0xff] %v3265
        %3292 = vst [vmem:[#allocation3 + $0xc8] sm:$0xff] %v3255
        %3293 = vst [vmem:[#allocation3 + $0xd0] sm:$0xff] %v3245
        %3294 = vst [vmem:[#allocation3 + $0xd8] sm:$0xff] %v3266
        %3295 = vst [vmem:[#allocation3 + $0xe0] sm:$0xff] %v3256
        %3296 = vst [vmem:[#allocation3 + $0xe8] sm:$0xff] %v3246
        %v3297 = vld [vmem:[#allocation3] sm:$0xff]
        %v3298 = vld [vmem:[#allocation3 + $0x8] sm:$0xff]
        %v3299 = vld [vmem:[#allocation3 + $0x10] sm:$0xff]
        %v3300 = vld [vmem:[#allocation3 + $0x18] sm:$0xff]
        %v3301 = vld [vmem:[#allocation3 + $0x20] sm:$0xff]
        %v3302 = vld [vmem:[#allocation3 + $0x28] sm:$0xff]
        %v3303 = vld [vmem:[#allocation3 + $0x30] sm:$0xff]
        %v3304 = vld [vmem:[#allocation3 + $0x38] sm:$0xff]
        %v3305 = vld [vmem:[#allocation3 + $0x40] sm:$0xff]
        %v3306 = vld [vmem:[#allocation3 + $0x48] sm:$0xff]
        %v3307 = vld [vmem:[#allocation3 + $0x50] sm:$0xff]
        %v3308 = vld [vmem:[#allocation3 + $0x58] sm:$0xff]
        %v3309 = vld [vmem:[#allocation3 + $0x60] sm:$0xff]
        %v3310 = vld [vmem:[#allocation3 + $0x68] sm:$0xff]
        %v3311 = vld [vmem:[#allocation3 + $0x70] sm:$0xff]
        %v3312 = vld [vmem:[#allocation3 + $0x78] sm:$0xff]
        %v3313 = vld [vmem:[#allocation3 + $0x80] sm:$0xff]
        %v3314 = vld [vmem:[#allocation3 + $0x88] sm:$0xff]
        %v3315 = vld [vmem:[#allocation3 + $0x90] sm:$0xff]
        %v3316 = vld [vmem:[#allocation3 + $0x98] sm:$0xff]
        %v3317 = vld [vmem:[#allocation3 + $0xa0] sm:$0xff]
        %v3318 = vld [vmem:[#allocation3 + $0xa8] sm:$0xff]
        %v3319 = vld [vmem:[#allocation3 + $0xb0] sm:$0xff]
        %v3320 = vld [vmem:[#allocation3 + $0xb8] sm:$0xff]
        %v3321 = vpack.c.bf16 %v3298, %v3297
        %v3322 = vpack.c.bf16 %v3300, %v3299
        %v3323 = vpack.c.bf16 %v3302, %v3301
        %v3324 = vpack.c.bf16 %v3304, %v3303
        %v3325 = vpack.c.bf16 %v3306, %v3305
        %v3326 = vpack.c.bf16 %v3308, %v3307
        %v3327 = vpack.c.bf16 %v3310, %v3309
        %v3328 = vpack.c.bf16 %v3312, %v3311
        %v3329 = vpack.c.bf16 %v3314, %v3313
        %v3330 = vpack.c.bf16 %v3316, %v3315
        %v3331 = vpack.c.bf16 %v3318, %v3317
        %v3332 = vpack.c.bf16 %v3320, %v3319
        %v3333 = vld [vmem:[%s3] sm:$0xf]
        %v3334 = vld [vmem:[%s3 + $0x4] sm:$0xf]
        %v3335 = vld [vmem:[%s3 + $0x8] sm:$0xf]
        %v3336 = vld [vmem:[%s3 + $0xc] sm:$0xf]
        %v3337 = vld [vmem:[%s3 + $0x10] sm:$0xf]
        %v3338 = vld [vmem:[%s3 + $0x14] sm:$0xf]
        %v3339 = vld [vmem:[%s3 + $0x18] sm:$0xf]
        %v3340 = vld [vmem:[%s3 + $0x1c] sm:$0xf]
        %v3341 = vld [vmem:[%s3 + $0x20] sm:$0xf]
        %v3342 = vld [vmem:[%s3 + $0x24] sm:$0xf]
        %v3343 = vld [vmem:[%s3 + $0x28] sm:$0xf]
        %v3344 = vld [vmem:[%s3 + $0x2c] sm:$0xf]
        %v3345 = vld [vmem:[%s3 + $0x30] sm:$0xf]
        %v3346 = vld [vmem:[%s3 + $0x34] sm:$0xf]
        %v3347 = vld [vmem:[%s3 + $0x38] sm:$0xf]
        %v3348 = vld [vmem:[%s3 + $0x3c] sm:$0xf]
        %v3365 = vunpack.c.l.b16 %v3333
        %v3366 = vunpack.c.l.b16 %v3334
        %v3367 = vunpack.c.l.b16 %v3335
        %v3368 = vunpack.c.l.b16 %v3336
        %v3369 = vunpack.c.l.b16 %v3337
        %v3370 = vunpack.c.l.b16 %v3338
        %v3371 = vunpack.c.l.b16 %v3339
        %v3372 = vunpack.c.l.b16 %v3340
        %v3373 = vunpack.c.l.b16 %v3341
        %v3374 = vunpack.c.l.b16 %v3342
        %v3375 = vunpack.c.l.b16 %v3343
        %v3376 = vunpack.c.l.b16 %v3344
        %v3377 = vunpack.c.l.b16 %v3345
        %v3378 = vunpack.c.l.b16 %v3346
        %v3379 = vunpack.c.l.b16 %v3347
        %v3380 = vunpack.c.l.b16 %v3348
        %v3381 = vpack.c.b16 %v3366, %v3365
        %v3382 = vpack.c.b16 %v3368, %v3367
        %v3383 = vpack.c.b16 %v3370, %v3369
        %v3384 = vpack.c.b16 %v3372, %v3371
        %v3385 = vpack.c.b16 %v3374, %v3373
        %v3386 = vpack.c.b16 %v3376, %v3375
        %v3387 = vpack.c.b16 %v3378, %v3377
        %v3388 = vpack.c.b16 %v3380, %v3379
        %3397 = vmatpush.bf16.msra.mxu0 %v3388
        %3398 = vmatpush.bf16.msra.mxu0 %v3387
        %3399 = vmatpush.bf16.msra.mxu0 %v3386
        %3400 = vmatpush.bf16.msra.mxu0 %v3385
        %3401 = vmatpush.bf16.msra.mxu0 %v3384
        %3402 = vmatpush.bf16.msra.mxu0 %v3383
        %3403 = vmatpush.bf16.msra.mxu0 %v3382
        %3404 = vmatpush.bf16.msra.mxu0 %v3381
        %3405 = vmatmul.bf16.gmra.mxu0 %v3321
        %v3406 = vpop.f32.mrf.mxu0
        %v3407 = vadd.f32 0.0, %v3406
        %v3408 = vpop.f32.mrf.mxu0
        %v3409 = vadd.f32 0.0, %v3408
        %3410 = vmatmul.bf16.gmra.mxu0 %v3322
        %v3411 = vpop.f32.mrf.mxu0
        %v3412 = vadd.f32 0.0, %v3411
        %v3413 = vpop.f32.mrf.mxu0
        %v3414 = vadd.f32 0.0, %v3413
        %3415 = vmatmul.bf16.gmra.mxu0 %v3323
        %v3416 = vpop.f32.mrf.mxu0
        %v3417 = vadd.f32 0.0, %v3416
        %v3418 = vpop.f32.mrf.mxu0
        %v3419 = vadd.f32 0.0, %v3418
        %3420 = vmatmul.bf16.gmra.mxu0 %v3324
        %v3421 = vpop.f32.mrf.mxu0
        %v3422 = vadd.f32 0.0, %v3421
        %v3423 = vpop.f32.mrf.mxu0
        %v3424 = vadd.f32 0.0, %v3423
        %3425 = vmatmul.bf16.gmra.mxu0 %v3325
        %v3426 = vpop.f32.mrf.mxu0
        %v3427 = vadd.f32 0.0, %v3426
        %v3428 = vpop.f32.mrf.mxu0
        %v3429 = vadd.f32 0.0, %v3428
        %3430 = vmatmul.bf16.gmra.mxu0 %v3326
        %v3431 = vpop.f32.mrf.mxu0
        %v3432 = vadd.f32 0.0, %v3431
        %v3433 = vpop.f32.mrf.mxu0
        %v3434 = vadd.f32 0.0, %v3433
        %3435 = vmatmul.bf16.gmra.mxu0 %v3327
        %v3436 = vpop.f32.mrf.mxu0
        %v3437 = vadd.f32 0.0, %v3436
        %v3438 = vpop.f32.mrf.mxu0
        %v3439 = vadd.f32 0.0, %v3438
        %3440 = vmatmul.bf16.gmra.mxu0 %v3328
        %v3441 = vpop.f32.mrf.mxu0
        %v3442 = vadd.f32 0.0, %v3441
        %v3443 = vpop.f32.mrf.mxu0
        %v3444 = vadd.f32 0.0, %v3443
        %3445 = vmatmul.bf16.gmra.mxu0 %v3329
        %v3446 = vpop.f32.mrf.mxu0
        %v3447 = vadd.f32 0.0, %v3446
        %v3448 = vpop.f32.mrf.mxu0
        %v3449 = vadd.f32 0.0, %v3448
        %3450 = vmatmul.bf16.gmra.mxu0 %v3330
        %v3451 = vpop.f32.mrf.mxu0
        %v3452 = vadd.f32 0.0, %v3451
        %v3453 = vpop.f32.mrf.mxu0
        %v3454 = vadd.f32 0.0, %v3453
        %3455 = vmatmul.bf16.gmra.mxu0 %v3331
        %v3456 = vpop.f32.mrf.mxu0
        %v3457 = vadd.f32 0.0, %v3456
        %v3458 = vpop.f32.mrf.mxu0
        %v3459 = vadd.f32 0.0, %v3458
        %3460 = vmatmul.bf16.gmra.mxu0 %v3332
        %v3461 = vpop.f32.mrf.mxu0
        %v3462 = vadd.f32 0.0, %v3461
        %v3463 = vpop.f32.mrf.mxu0
        %v3464 = vadd.f32 0.0, %v3463
        %3465 = vdwg.mxu0
        %3466 = vst [vmem:[#allocation4] sm:$0xff] %v3407
        %3467 = vst [vmem:[#allocation4 + $0x8] sm:$0xff] %v3409
        %3468 = vst [vmem:[#allocation4 + $0x10] sm:$0xff] %v3412
        %3469 = vst [vmem:[#allocation4 + $0x18] sm:$0xff] %v3414
        %3470 = vst [vmem:[#allocation4 + $0x20] sm:$0xff] %v3417
        %3471 = vst [vmem:[#allocation4 + $0x28] sm:$0xff] %v3419
        %3472 = vst [vmem:[#allocation4 + $0x30] sm:$0xff] %v3422
        %3473 = vst [vmem:[#allocation4 + $0x38] sm:$0xff] %v3424
        %3474 = vst [vmem:[#allocation4 + $0x40] sm:$0xff] %v3427
        %3475 = vst [vmem:[#allocation4 + $0x48] sm:$0xff] %v3429
        %3476 = vst [vmem:[#allocation4 + $0x50] sm:$0xff] %v3432
        %3477 = vst [vmem:[#allocation4 + $0x58] sm:$0xff] %v3434
        %3478 = vst [vmem:[#allocation4 + $0x60] sm:$0xff] %v3437
        %3479 = vst [vmem:[#allocation4 + $0x68] sm:$0xff] %v3439
        %3480 = vst [vmem:[#allocation4 + $0x70] sm:$0xff] %v3442
        %3481 = vst [vmem:[#allocation4 + $0x78] sm:$0xff] %v3444
        %3482 = vst [vmem:[#allocation4 + $0x80] sm:$0xff] %v3447
        %3483 = vst [vmem:[#allocation4 + $0x88] sm:$0xff] %v3449
        %3484 = vst [vmem:[#allocation4 + $0x90] sm:$0xff] %v3452
        %3485 = vst [vmem:[#allocation4 + $0x98] sm:$0xff] %v3454
        %3486 = vst [vmem:[#allocation4 + $0xa0] sm:$0xff] %v3457
        %3487 = vst [vmem:[#allocation4 + $0xa8] sm:$0xff] %v3459
        %3488 = vst [vmem:[#allocation4 + $0xb0] sm:$0xff] %v3462
        %3489 = vst [vmem:[#allocation4 + $0xb8] sm:$0xff] %v3464
        %v3490 = vrot.slane %v3297, 1
        %v3491 = vrot.slane %v3300, 1
        %v3492 = vrot.slane %v3303, 1
        %v3493 = vrot.slane %v3306, 1
        %v3494 = vrot.slane %v3309, 1
        %v3495 = vrot.slane %v3312, 1
        %v3496 = vrot.slane %v3315, 1
        %v3497 = vrot.slane %v3318, 1
        %v3498 = vrot.slane %v3298, 1
        %v3499 = vrot.slane %v3301, 1
        %v3500 = vrot.slane %v3304, 1
        %v3501 = vrot.slane %v3307, 1
        %v3502 = vrot.slane %v3310, 1
        %v3503 = vrot.slane %v3313, 1
        %v3504 = vrot.slane %v3316, 1
        %v3505 = vrot.slane %v3319, 1
        %v3506 = vrot.slane %v3299, 1
        %v3507 = vrot.slane %v3302, 1
        %v3508 = vrot.slane %v3305, 1
        %v3509 = vrot.slane %v3308, 1
        %v3510 = vrot.slane %v3311, 1
        %v3511 = vrot.slane %v3314, 1
        %v3512 = vrot.slane %v3317, 1
        %v3513 = vrot.slane %v3320, 1
        %v3514 = vsel %vm496, %v3498, %v3506
        %v3515 = vsel %vm496, %v3499, %v3507
        %v3516 = vsel %vm496, %v3500, %v3508
        %v3517 = vsel %vm496, %v3501, %v3509
        %v3518 = vsel %vm496, %v3502, %v3510
        %v3519 = vsel %vm496, %v3503, %v3511
        %v3520 = vsel %vm496, %v3504, %v3512
        %v3521 = vsel %vm496, %v3505, %v3513
        %v3522 = vsel %vm496, %v3490, %v3498
        %v3523 = vsel %vm496, %v3491, %v3499
        %v3524 = vsel %vm496, %v3492, %v3500
        %v3525 = vsel %vm496, %v3493, %v3501
        %v3526 = vsel %vm496, %v3494, %v3502
        %v3527 = vsel %vm496, %v3495, %v3503
        %v3528 = vsel %vm496, %v3496, %v3504
        %v3529 = vsel %vm496, %v3497, %v3505
        %v3530 = vsel %vm496, %v3506, %v3490
        %v3531 = vsel %vm496, %v3507, %v3491
        %v3532 = vsel %vm496, %v3508, %v3492
        %v3533 = vsel %vm496, %v3509, %v3493
        %v3534 = vsel %vm496, %v3510, %v3494
        %v3535 = vsel %vm496, %v3511, %v3495
        %v3536 = vsel %vm496, %v3512, %v3496
        %v3537 = vsel %vm496, %v3513, %v3497
        %v3538 = vpack.c.bf16 %v3514, %v3522
        %v3539 = vpack.c.bf16 %v3523, %v3530
        %v3540 = vpack.c.bf16 %v3531, %v3515
        %v3541 = vpack.c.bf16 %v3516, %v3524
        %v3542 = vpack.c.bf16 %v3525, %v3532
        %v3543 = vpack.c.bf16 %v3533, %v3517
        %v3544 = vpack.c.bf16 %v3518, %v3526
        %v3545 = vpack.c.bf16 %v3527, %v3534
        %v3546 = vpack.c.bf16 %v3535, %v3519
        %v3547 = vpack.c.bf16 %v3520, %v3528
        %v3548 = vpack.c.bf16 %v3529, %v3536
        %v3549 = vpack.c.bf16 %v3537, %v3521
        %s3550 = scalar_lea.vmem %s3, 64
        %v3551 = vld [vmem:[%s3550] sm:$0xf]
        %v3552 = vld [vmem:[%s3550 + $0x4] sm:$0xf]
        %v3553 = vld [vmem:[%s3550 + $0x8] sm:$0xf]
        %v3554 = vld [vmem:[%s3550 + $0xc] sm:$0xf]
        %v3555 = vld [vmem:[%s3550 + $0x10] sm:$0xf]
        %v3556 = vld [vmem:[%s3550 + $0x14] sm:$0xf]
        %v3557 = vld [vmem:[%s3550 + $0x18] sm:$0xf]
        %v3558 = vld [vmem:[%s3550 + $0x1c] sm:$0xf]
        %v3559 = vld [vmem:[%s3550 + $0x20] sm:$0xf]
        %v3560 = vld [vmem:[%s3550 + $0x24] sm:$0xf]
        %v3561 = vld [vmem:[%s3550 + $0x28] sm:$0xf]
        %v3562 = vld [vmem:[%s3550 + $0x2c] sm:$0xf]
        %v3563 = vld [vmem:[%s3550 + $0x30] sm:$0xf]
        %v3564 = vld [vmem:[%s3550 + $0x34] sm:$0xf]
        %v3565 = vld [vmem:[%s3550 + $0x38] sm:$0xf]
        %v3566 = vld [vmem:[%s3550 + $0x3c] sm:$0xf]
        %v3583 = vunpack.c.l.b16 %v3551
        %v3584 = vunpack.c.l.b16 %v3552
        %v3585 = vunpack.c.l.b16 %v3553
        %v3586 = vunpack.c.l.b16 %v3554
        %v3587 = vunpack.c.l.b16 %v3555
        %v3588 = vunpack.c.l.b16 %v3556
        %v3589 = vunpack.c.l.b16 %v3557
        %v3590 = vunpack.c.l.b16 %v3558
        %v3591 = vunpack.c.l.b16 %v3559
        %v3592 = vunpack.c.l.b16 %v3560
        %v3593 = vunpack.c.l.b16 %v3561
        %v3594 = vunpack.c.l.b16 %v3562
        %v3595 = vunpack.c.l.b16 %v3563
        %v3596 = vunpack.c.l.b16 %v3564
        %v3597 = vunpack.c.l.b16 %v3565
        %v3598 = vunpack.c.l.b16 %v3566
        %v3599 = vpack.c.b16 %v3584, %v3583
        %v3600 = vpack.c.b16 %v3586, %v3585
        %v3601 = vpack.c.b16 %v3588, %v3587
        %v3602 = vpack.c.b16 %v3590, %v3589
        %v3603 = vpack.c.b16 %v3592, %v3591
        %v3604 = vpack.c.b16 %v3594, %v3593
        %v3605 = vpack.c.b16 %v3596, %v3595
        %v3606 = vpack.c.b16 %v3598, %v3597
        %3615 = vmatpush.bf16.msra.mxu0 %v3606
        %3616 = vmatpush.bf16.msra.mxu0 %v3605
        %3617 = vmatpush.bf16.msra.mxu0 %v3604
        %3618 = vmatpush.bf16.msra.mxu0 %v3603
        %3619 = vmatpush.bf16.msra.mxu0 %v3602
        %3620 = vmatpush.bf16.msra.mxu0 %v3601
        %3621 = vmatpush.bf16.msra.mxu0 %v3600
        %3622 = vmatpush.bf16.msra.mxu0 %v3599
        %3623 = vmatmul.bf16.gmra.mxu0 %v3538
        %v3624 = vpop.f32.mrf.mxu0
        %v3625 = vadd.f32 0.0, %v3624
        %v3626 = vpop.f32.mrf.mxu0
        %v3627 = vadd.f32 0.0, %v3626
        %3628 = vmatmul.bf16.gmra.mxu0 %v3539
        %v3629 = vpop.f32.mrf.mxu0
        %v3630 = vadd.f32 0.0, %v3629
        %v3631 = vpop.f32.mrf.mxu0
        %v3632 = vadd.f32 0.0, %v3631
        %3633 = vmatmul.bf16.gmra.mxu0 %v3540
        %v3634 = vpop.f32.mrf.mxu0
        %v3635 = vadd.f32 0.0, %v3634
        %v3636 = vpop.f32.mrf.mxu0
        %v3637 = vadd.f32 0.0, %v3636
        %3638 = vmatmul.bf16.gmra.mxu0 %v3541
        %v3639 = vpop.f32.mrf.mxu0
        %v3640 = vadd.f32 0.0, %v3639
        %v3641 = vpop.f32.mrf.mxu0
        %v3642 = vadd.f32 0.0, %v3641
        %3643 = vmatmul.bf16.gmra.mxu0 %v3542
        %v3644 = vpop.f32.mrf.mxu0
        %v3645 = vadd.f32 0.0, %v3644
        %v3646 = vpop.f32.mrf.mxu0
        %v3647 = vadd.f32 0.0, %v3646
        %3648 = vmatmul.bf16.gmra.mxu0 %v3543
        %v3649 = vpop.f32.mrf.mxu0
        %v3650 = vadd.f32 0.0, %v3649
        %v3651 = vpop.f32.mrf.mxu0
        %v3652 = vadd.f32 0.0, %v3651
        %3653 = vmatmul.bf16.gmra.mxu0 %v3544
        %v3654 = vpop.f32.mrf.mxu0
        %v3655 = vadd.f32 0.0, %v3654
        %v3656 = vpop.f32.mrf.mxu0
        %v3657 = vadd.f32 0.0, %v3656
        %3658 = vmatmul.bf16.gmra.mxu0 %v3545
        %v3659 = vpop.f32.mrf.mxu0
        %v3660 = vadd.f32 0.0, %v3659
        %v3661 = vpop.f32.mrf.mxu0
        %v3662 = vadd.f32 0.0, %v3661
        %3663 = vmatmul.bf16.gmra.mxu0 %v3546
        %v3664 = vpop.f32.mrf.mxu0
        %v3665 = vadd.f32 0.0, %v3664
        %v3666 = vpop.f32.mrf.mxu0
        %v3667 = vadd.f32 0.0, %v3666
        %3668 = vmatmul.bf16.gmra.mxu0 %v3547
        %v3669 = vpop.f32.mrf.mxu0
        %v3670 = vadd.f32 0.0, %v3669
        %v3671 = vpop.f32.mrf.mxu0
        %v3672 = vadd.f32 0.0, %v3671
        %3673 = vmatmul.bf16.gmra.mxu0 %v3548
        %v3674 = vpop.f32.mrf.mxu0
        %v3675 = vadd.f32 0.0, %v3674
        %v3676 = vpop.f32.mrf.mxu0
        %v3677 = vadd.f32 0.0, %v3676
        %3678 = vmatmul.bf16.gmra.mxu0 %v3549
        %v3679 = vpop.f32.mrf.mxu0
        %v3680 = vadd.f32 0.0, %v3679
        %v3681 = vpop.f32.mrf.mxu0
        %v3682 = vadd.f32 0.0, %v3681
        %3683 = vdwg.mxu0
        %v3684 = vld [vmem:[#allocation4] sm:$0xff]
        %v3685 = vld [vmem:[#allocation4 + $0x8] sm:$0xff]
        %v3686 = vld [vmem:[#allocation4 + $0x10] sm:$0xff]
        %v3687 = vld [vmem:[#allocation4 + $0x18] sm:$0xff]
        %v3688 = vld [vmem:[#allocation4 + $0x20] sm:$0xff]
        %v3689 = vld [vmem:[#allocation4 + $0x28] sm:$0xff]
        %v3690 = vld [vmem:[#allocation4 + $0x30] sm:$0xff]
        %v3691 = vld [vmem:[#allocation4 + $0x38] sm:$0xff]
        %v3692 = vld [vmem:[#allocation4 + $0x40] sm:$0xff]
        %v3693 = vld [vmem:[#allocation4 + $0x48] sm:$0xff]
        %v3694 = vld [vmem:[#allocation4 + $0x50] sm:$0xff]
        %v3695 = vld [vmem:[#allocation4 + $0x58] sm:$0xff]
        %v3696 = vld [vmem:[#allocation4 + $0x60] sm:$0xff]
        %v3697 = vld [vmem:[#allocation4 + $0x68] sm:$0xff]
        %v3698 = vld [vmem:[#allocation4 + $0x70] sm:$0xff]
        %v3699 = vld [vmem:[#allocation4 + $0x78] sm:$0xff]
        %v3700 = vld [vmem:[#allocation4 + $0x80] sm:$0xff]
        %v3701 = vld [vmem:[#allocation4 + $0x88] sm:$0xff]
        %v3702 = vld [vmem:[#allocation4 + $0x90] sm:$0xff]
        %v3703 = vld [vmem:[#allocation4 + $0x98] sm:$0xff]
        %v3704 = vld [vmem:[#allocation4 + $0xa0] sm:$0xff]
        %v3705 = vld [vmem:[#allocation4 + $0xa8] sm:$0xff]
        %v3706 = vld [vmem:[#allocation4 + $0xb0] sm:$0xff]
        %v3707 = vld [vmem:[#allocation4 + $0xb8] sm:$0xff]
        %v3708 = vadd.f32 %v3684, %v3625
        %v3709 = vadd.f32 %v3685, %v3627
        %v3710 = vadd.f32 %v3686, %v3630
        %v3711 = vadd.f32 %v3687, %v3632
        %v3712 = vadd.f32 %v3688, %v3635
        %v3713 = vadd.f32 %v3689, %v3637
        %v3714 = vadd.f32 %v3690, %v3640
        %v3715 = vadd.f32 %v3691, %v3642
        %v3716 = vadd.f32 %v3692, %v3645
        %v3717 = vadd.f32 %v3693, %v3647
        %v3718 = vadd.f32 %v3694, %v3650
        %v3719 = vadd.f32 %v3695, %v3652
        %v3720 = vadd.f32 %v3696, %v3655
        %v3721 = vadd.f32 %v3697, %v3657
        %v3722 = vadd.f32 %v3698, %v3660
        %v3723 = vadd.f32 %v3699, %v3662
        %v3724 = vadd.f32 %v3700, %v3665
        %v3725 = vadd.f32 %v3701, %v3667
        %v3726 = vadd.f32 %v3702, %v3670
        %v3727 = vadd.f32 %v3703, %v3672
        %v3728 = vadd.f32 %v3704, %v3675
        %v3729 = vadd.f32 %v3705, %v3677
        %v3730 = vadd.f32 %v3706, %v3680
        %v3731 = vadd.f32 %v3707, %v3682
        %3732 = vst [vmem:[#allocation4] sm:$0xff] %v3708
        %3733 = vst [vmem:[#allocation4 + $0x8] sm:$0xff] %v3709
        %3734 = vst [vmem:[#allocation4 + $0x10] sm:$0xff] %v3710
        %3735 = vst [vmem:[#allocation4 + $0x18] sm:$0xff] %v3711
        %3736 = vst [vmem:[#allocation4 + $0x20] sm:$0xff] %v3712
        %3737 = vst [vmem:[#allocation4 + $0x28] sm:$0xff] %v3713
        %3738 = vst [vmem:[#allocation4 + $0x30] sm:$0xff] %v3714
        %3739 = vst [vmem:[#allocation4 + $0x38] sm:$0xff] %v3715
        %3740 = vst [vmem:[#allocation4 + $0x40] sm:$0xff] %v3716
        %3741 = vst [vmem:[#allocation4 + $0x48] sm:$0xff] %v3717
        %3742 = vst [vmem:[#allocation4 + $0x50] sm:$0xff] %v3718
        %3743 = vst [vmem:[#allocation4 + $0x58] sm:$0xff] %v3719
        %3744 = vst [vmem:[#allocation4 + $0x60] sm:$0xff] %v3720
        %3745 = vst [vmem:[#allocation4 + $0x68] sm:$0xff] %v3721
        %3746 = vst [vmem:[#allocation4 + $0x70] sm:$0xff] %v3722
        %3747 = vst [vmem:[#allocation4 + $0x78] sm:$0xff] %v3723
        %3748 = vst [vmem:[#allocation4 + $0x80] sm:$0xff] %v3724
        %3749 = vst [vmem:[#allocation4 + $0x88] sm:$0xff] %v3725
        %3750 = vst [vmem:[#allocation4 + $0x90] sm:$0xff] %v3726
        %3751 = vst [vmem:[#allocation4 + $0x98] sm:$0xff] %v3727
        %3752 = vst [vmem:[#allocation4 + $0xa0] sm:$0xff] %v3728
        %3753 = vst [vmem:[#allocation4 + $0xa8] sm:$0xff] %v3729
        %3754 = vst [vmem:[#allocation4 + $0xb0] sm:$0xff] %v3730
        %3755 = vst [vmem:[#allocation4 + $0xb8] sm:$0xff] %v3731
        %v3756 = vrot.slane %v3297, 2
        %v3757 = vrot.slane %v3300, 2
        %v3758 = vrot.slane %v3303, 2
        %v3759 = vrot.slane %v3306, 2
        %v3760 = vrot.slane %v3309, 2
        %v3761 = vrot.slane %v3312, 2
        %v3762 = vrot.slane %v3315, 2
        %v3763 = vrot.slane %v3318, 2
        %v3764 = vrot.slane %v3298, 2
        %v3765 = vrot.slane %v3301, 2
        %v3766 = vrot.slane %v3304, 2
        %v3767 = vrot.slane %v3307, 2
        %v3768 = vrot.slane %v3310, 2
        %v3769 = vrot.slane %v3313, 2
        %v3770 = vrot.slane %v3316, 2
        %v3771 = vrot.slane %v3319, 2
        %v3772 = vrot.slane %v3299, 2
        %v3773 = vrot.slane %v3302, 2
        %v3774 = vrot.slane %v3305, 2
        %v3775 = vrot.slane %v3308, 2
        %v3776 = vrot.slane %v3311, 2
        %v3777 = vrot.slane %v3314, 2
        %v3778 = vrot.slane %v3317, 2
        %v3779 = vrot.slane %v3320, 2
        %v3780 = vsel %vm811, %v3764, %v3772
        %v3781 = vsel %vm811, %v3765, %v3773
        %v3782 = vsel %vm811, %v3766, %v3774
        %v3783 = vsel %vm811, %v3767, %v3775
        %v3784 = vsel %vm811, %v3768, %v3776
        %v3785 = vsel %vm811, %v3769, %v3777
        %v3786 = vsel %vm811, %v3770, %v3778
        %v3787 = vsel %vm811, %v3771, %v3779
        %v3788 = vsel %vm811, %v3756, %v3764
        %v3789 = vsel %vm811, %v3757, %v3765
        %v3790 = vsel %vm811, %v3758, %v3766
        %v3791 = vsel %vm811, %v3759, %v3767
        %v3792 = vsel %vm811, %v3760, %v3768
        %v3793 = vsel %vm811, %v3761, %v3769
        %v3794 = vsel %vm811, %v3762, %v3770
        %v3795 = vsel %vm811, %v3763, %v3771
        %v3796 = vsel %vm811, %v3772, %v3756
        %v3797 = vsel %vm811, %v3773, %v3757
        %v3798 = vsel %vm811, %v3774, %v3758
        %v3799 = vsel %vm811, %v3775, %v3759
        %v3800 = vsel %vm811, %v3776, %v3760
        %v3801 = vsel %vm811, %v3777, %v3761
        %v3802 = vsel %vm811, %v3778, %v3762
        %v3803 = vsel %vm811, %v3779, %v3763
        %v3804 = vpack.c.bf16 %v3780, %v3788
        %v3805 = vpack.c.bf16 %v3789, %v3796
        %v3806 = vpack.c.bf16 %v3797, %v3781
        %v3807 = vpack.c.bf16 %v3782, %v3790
        %v3808 = vpack.c.bf16 %v3791, %v3798
        %v3809 = vpack.c.bf16 %v3799, %v3783
        %v3810 = vpack.c.bf16 %v3784, %v3792
        %v3811 = vpack.c.bf16 %v3793, %v3800
        %v3812 = vpack.c.bf16 %v3801, %v3785
        %v3813 = vpack.c.bf16 %v3786, %v3794
        %v3814 = vpack.c.bf16 %v3795, %v3802
        %v3815 = vpack.c.bf16 %v3803, %v3787
        %s3816 = scalar_lea.vmem %s3, 128
        %v3817 = vld [vmem:[%s3816] sm:$0xf]
        %v3818 = vld [vmem:[%s3816 + $0x4] sm:$0xf]
        %v3819 = vld [vmem:[%s3816 + $0x8] sm:$0xf]
        %v3820 = vld [vmem:[%s3816 + $0xc] sm:$0xf]
        %v3821 = vld [vmem:[%s3816 + $0x10] sm:$0xf]
        %v3822 = vld [vmem:[%s3816 + $0x14] sm:$0xf]
        %v3823 = vld [vmem:[%s3816 + $0x18] sm:$0xf]
        %v3824 = vld [vmem:[%s3816 + $0x1c] sm:$0xf]
        %v3825 = vld [vmem:[%s3816 + $0x20] sm:$0xf]
        %v3826 = vld [vmem:[%s3816 + $0x24] sm:$0xf]
        %v3827 = vld [vmem:[%s3816 + $0x28] sm:$0xf]
        %v3828 = vld [vmem:[%s3816 + $0x2c] sm:$0xf]
        %v3829 = vld [vmem:[%s3816 + $0x30] sm:$0xf]
        %v3830 = vld [vmem:[%s3816 + $0x34] sm:$0xf]
        %v3831 = vld [vmem:[%s3816 + $0x38] sm:$0xf]
        %v3832 = vld [vmem:[%s3816 + $0x3c] sm:$0xf]
        %v3849 = vunpack.c.l.b16 %v3817
        %v3850 = vunpack.c.l.b16 %v3818
        %v3851 = vunpack.c.l.b16 %v3819
        %v3852 = vunpack.c.l.b16 %v3820
        %v3853 = vunpack.c.l.b16 %v3821
        %v3854 = vunpack.c.l.b16 %v3822
        %v3855 = vunpack.c.l.b16 %v3823
        %v3856 = vunpack.c.l.b16 %v3824
        %v3857 = vunpack.c.l.b16 %v3825
        %v3858 = vunpack.c.l.b16 %v3826
        %v3859 = vunpack.c.l.b16 %v3827
        %v3860 = vunpack.c.l.b16 %v3828
        %v3861 = vunpack.c.l.b16 %v3829
        %v3862 = vunpack.c.l.b16 %v3830
        %v3863 = vunpack.c.l.b16 %v3831
        %v3864 = vunpack.c.l.b16 %v3832
        %v3865 = vpack.c.b16 %v3850, %v3849
        %v3866 = vpack.c.b16 %v3852, %v3851
        %v3867 = vpack.c.b16 %v3854, %v3853
        %v3868 = vpack.c.b16 %v3856, %v3855
        %v3869 = vpack.c.b16 %v3858, %v3857
        %v3870 = vpack.c.b16 %v3860, %v3859
        %v3871 = vpack.c.b16 %v3862, %v3861
        %v3872 = vpack.c.b16 %v3864, %v3863
        %3881 = vmatpush.bf16.msra.mxu0 %v3872
        %3882 = vmatpush.bf16.msra.mxu0 %v3871
        %3883 = vmatpush.bf16.msra.mxu0 %v3870
        %3884 = vmatpush.bf16.msra.mxu0 %v3869
        %3885 = vmatpush.bf16.msra.mxu0 %v3868
        %3886 = vmatpush.bf16.msra.mxu0 %v3867
        %3887 = vmatpush.bf16.msra.mxu0 %v3866
        %3888 = vmatpush.bf16.msra.mxu0 %v3865
        %3889 = vmatmul.bf16.gmra.mxu0 %v3804
        %v3890 = vpop.f32.mrf.mxu0
        %v3891 = vadd.f32 0.0, %v3890
        %v3892 = vpop.f32.mrf.mxu0
        %v3893 = vadd.f32 0.0, %v3892
        %3894 = vmatmul.bf16.gmra.mxu0 %v3805
        %v3895 = vpop.f32.mrf.mxu0
        %v3896 = vadd.f32 0.0, %v3895
        %v3897 = vpop.f32.mrf.mxu0
        %v3898 = vadd.f32 0.0, %v3897
        %3899 = vmatmul.bf16.gmra.mxu0 %v3806
        %v3900 = vpop.f32.mrf.mxu0
        %v3901 = vadd.f32 0.0, %v3900
        %v3902 = vpop.f32.mrf.mxu0
        %v3903 = vadd.f32 0.0, %v3902
        %3904 = vmatmul.bf16.gmra.mxu0 %v3807
        %v3905 = vpop.f32.mrf.mxu0
        %v3906 = vadd.f32 0.0, %v3905
        %v3907 = vpop.f32.mrf.mxu0
        %v3908 = vadd.f32 0.0, %v3907
        %3909 = vmatmul.bf16.gmra.mxu0 %v3808
        %v3910 = vpop.f32.mrf.mxu0
        %v3911 = vadd.f32 0.0, %v3910
        %v3912 = vpop.f32.mrf.mxu0
        %v3913 = vadd.f32 0.0, %v3912
        %3914 = vmatmul.bf16.gmra.mxu0 %v3809
        %v3915 = vpop.f32.mrf.mxu0
        %v3916 = vadd.f32 0.0, %v3915
        %v3917 = vpop.f32.mrf.mxu0
        %v3918 = vadd.f32 0.0, %v3917
        %3919 = vmatmul.bf16.gmra.mxu0 %v3810
        %v3920 = vpop.f32.mrf.mxu0
        %v3921 = vadd.f32 0.0, %v3920
        %v3922 = vpop.f32.mrf.mxu0
        %v3923 = vadd.f32 0.0, %v3922
        %3924 = vmatmul.bf16.gmra.mxu0 %v3811
        %v3925 = vpop.f32.mrf.mxu0
        %v3926 = vadd.f32 0.0, %v3925
        %v3927 = vpop.f32.mrf.mxu0
        %v3928 = vadd.f32 0.0, %v3927
        %3929 = vmatmul.bf16.gmra.mxu0 %v3812
        %v3930 = vpop.f32.mrf.mxu0
        %v3931 = vadd.f32 0.0, %v3930
        %v3932 = vpop.f32.mrf.mxu0
        %v3933 = vadd.f32 0.0, %v3932
        %3934 = vmatmul.bf16.gmra.mxu0 %v3813
        %v3935 = vpop.f32.mrf.mxu0
        %v3936 = vadd.f32 0.0, %v3935
        %v3937 = vpop.f32.mrf.mxu0
        %v3938 = vadd.f32 0.0, %v3937
        %3939 = vmatmul.bf16.gmra.mxu0 %v3814
        %v3940 = vpop.f32.mrf.mxu0
        %v3941 = vadd.f32 0.0, %v3940
        %v3942 = vpop.f32.mrf.mxu0
        %v3943 = vadd.f32 0.0, %v3942
        %3944 = vmatmul.bf16.gmra.mxu0 %v3815
        %v3945 = vpop.f32.mrf.mxu0
        %v3946 = vadd.f32 0.0, %v3945
        %v3947 = vpop.f32.mrf.mxu0
        %v3948 = vadd.f32 0.0, %v3947
        %3949 = vdwg.mxu0
        %v3950 = vld [vmem:[#allocation4] sm:$0xff]
        %v3951 = vld [vmem:[#allocation4 + $0x8] sm:$0xff]
        %v3952 = vld [vmem:[#allocation4 + $0x10] sm:$0xff]
        %v3953 = vld [vmem:[#allocation4 + $0x18] sm:$0xff]
        %v3954 = vld [vmem:[#allocation4 + $0x20] sm:$0xff]
        %v3955 = vld [vmem:[#allocation4 + $0x28] sm:$0xff]
        %v3956 = vld [vmem:[#allocation4 + $0x30] sm:$0xff]
        %v3957 = vld [vmem:[#allocation4 + $0x38] sm:$0xff]
        %v3958 = vld [vmem:[#allocation4 + $0x40] sm:$0xff]
        %v3959 = vld [vmem:[#allocation4 + $0x48] sm:$0xff]
        %v3960 = vld [vmem:[#allocation4 + $0x50] sm:$0xff]
        %v3961 = vld [vmem:[#allocation4 + $0x58] sm:$0xff]
        %v3962 = vld [vmem:[#allocation4 + $0x60] sm:$0xff]
        %v3963 = vld [vmem:[#allocation4 + $0x68] sm:$0xff]
        %v3964 = vld [vmem:[#allocation4 + $0x70] sm:$0xff]
        %v3965 = vld [vmem:[#allocation4 + $0x78] sm:$0xff]
        %v3966 = vld [vmem:[#allocation4 + $0x80] sm:$0xff]
        %v3967 = vld [vmem:[#allocation4 + $0x88] sm:$0xff]
        %v3968 = vld [vmem:[#allocation4 + $0x90] sm:$0xff]
        %v3969 = vld [vmem:[#allocation4 + $0x98] sm:$0xff]
        %v3970 = vld [vmem:[#allocation4 + $0xa0] sm:$0xff]
        %v3971 = vld [vmem:[#allocation4 + $0xa8] sm:$0xff]
        %v3972 = vld [vmem:[#allocation4 + $0xb0] sm:$0xff]
        %v3973 = vld [vmem:[#allocation4 + $0xb8] sm:$0xff]
        %v3974 = vadd.f32 %v3950, %v3891
        %v3975 = vadd.f32 %v3951, %v3893
        %v3976 = vadd.f32 %v3952, %v3896
        %v3977 = vadd.f32 %v3953, %v3898
        %v3978 = vadd.f32 %v3954, %v3901
        %v3979 = vadd.f32 %v3955, %v3903
        %v3980 = vadd.f32 %v3956, %v3906
        %v3981 = vadd.f32 %v3957, %v3908
        %v3982 = vadd.f32 %v3958, %v3911
        %v3983 = vadd.f32 %v3959, %v3913
        %v3984 = vadd.f32 %v3960, %v3916
        %v3985 = vadd.f32 %v3961, %v3918
        %v3986 = vadd.f32 %v3962, %v3921
        %v3987 = vadd.f32 %v3963, %v3923
        %v3988 = vadd.f32 %v3964, %v3926
        %v3989 = vadd.f32 %v3965, %v3928
        %v3990 = vadd.f32 %v3966, %v3931
        %v3991 = vadd.f32 %v3967, %v3933
        %v3992 = vadd.f32 %v3968, %v3936
        %v3993 = vadd.f32 %v3969, %v3938
        %v3994 = vadd.f32 %v3970, %v3941
        %v3995 = vadd.f32 %v3971, %v3943
        %v3996 = vadd.f32 %v3972, %v3946
        %v3997 = vadd.f32 %v3973, %v3948
        %3998 = vst [vmem:[#allocation4] sm:$0xff] %v3974
        %3999 = vst [vmem:[#allocation4 + $0x8] sm:$0xff] %v3975
        %4000 = vst [vmem:[#allocation4 + $0x10] sm:$0xff] %v3976
        %4001 = vst [vmem:[#allocation4 + $0x18] sm:$0xff] %v3977
        %4002 = vst [vmem:[#allocation4 + $0x20] sm:$0xff] %v3978
        %4003 = vst [vmem:[#allocation4 + $0x28] sm:$0xff] %v3979
        %4004 = vst [vmem:[#allocation4 + $0x30] sm:$0xff] %v3980
        %4005 = vst [vmem:[#allocation4 + $0x38] sm:$0xff] %v3981
        %4006 = vst [vmem:[#allocation4 + $0x40] sm:$0xff] %v3982
        %4007 = vst [vmem:[#allocation4 + $0x48] sm:$0xff] %v3983
        %4008 = vst [vmem:[#allocation4 + $0x50] sm:$0xff] %v3984
        %4009 = vst [vmem:[#allocation4 + $0x58] sm:$0xff] %v3985
        %4010 = vst [vmem:[#allocation4 + $0x60] sm:$0xff] %v3986
        %4011 = vst [vmem:[#allocation4 + $0x68] sm:$0xff] %v3987
        %4012 = vst [vmem:[#allocation4 + $0x70] sm:$0xff] %v3988
        %4013 = vst [vmem:[#allocation4 + $0x78] sm:$0xff] %v3989
        %4014 = vst [vmem:[#allocation4 + $0x80] sm:$0xff] %v3990
        %4015 = vst [vmem:[#allocation4 + $0x88] sm:$0xff] %v3991
        %4016 = vst [vmem:[#allocation4 + $0x90] sm:$0xff] %v3992
        %4017 = vst [vmem:[#allocation4 + $0x98] sm:$0xff] %v3993
        %4018 = vst [vmem:[#allocation4 + $0xa0] sm:$0xff] %v3994
        %4019 = vst [vmem:[#allocation4 + $0xa8] sm:$0xff] %v3995
        %4020 = vst [vmem:[#allocation4 + $0xb0] sm:$0xff] %v3996
        %4021 = vst [vmem:[#allocation4 + $0xb8] sm:$0xff] %v3997
        %s4022 = scalar_lea.vmem [#allocation3], 24
        %v4023 = vld [vmem:[%s4022] sm:$0xff]
        %v4024 = vld [vmem:[%s4022 + $0x8] sm:$0xff]
        %v4025 = vld [vmem:[%s4022 + $0x10] sm:$0xff]
        %v4026 = vld [vmem:[%s4022 + $0x18] sm:$0xff]
        %v4027 = vld [vmem:[%s4022 + $0x20] sm:$0xff]
        %v4028 = vld [vmem:[%s4022 + $0x28] sm:$0xff]
        %v4029 = vld [vmem:[%s4022 + $0x30] sm:$0xff]
        %v4030 = vld [vmem:[%s4022 + $0x38] sm:$0xff]
        %v4031 = vld [vmem:[%s4022 + $0x40] sm:$0xff]
        %v4032 = vld [vmem:[%s4022 + $0x48] sm:$0xff]
        %v4033 = vld [vmem:[%s4022 + $0x50] sm:$0xff]
        %v4034 = vld [vmem:[%s4022 + $0x58] sm:$0xff]
        %v4035 = vld [vmem:[%s4022 + $0x60] sm:$0xff]
        %v4036 = vld [vmem:[%s4022 + $0x68] sm:$0xff]
        %v4037 = vld [vmem:[%s4022 + $0x70] sm:$0xff]
        %v4038 = vld [vmem:[%s4022 + $0x78] sm:$0xff]
        %v4039 = vld [vmem:[%s4022 + $0x80] sm:$0xff]
        %v4040 = vld [vmem:[%s4022 + $0x88] sm:$0xff]
        %v4041 = vld [vmem:[%s4022 + $0x90] sm:$0xff]
        %v4042 = vld [vmem:[%s4022 + $0x98] sm:$0xff]
        %v4043 = vld [vmem:[%s4022 + $0xa0] sm:$0xff]
        %v4044 = vld [vmem:[%s4022 + $0xa8] sm:$0xff]
        %v4045 = vld [vmem:[%s4022 + $0xb0] sm:$0xff]
        %v4046 = vld [vmem:[%s4022 + $0xb8] sm:$0xff]
        %v4047 = vpack.c.bf16 %v4024, %v4023
        %v4048 = vpack.c.bf16 %v4026, %v4025
        %v4049 = vpack.c.bf16 %v4028, %v4027
        %v4050 = vpack.c.bf16 %v4030, %v4029
        %v4051 = vpack.c.bf16 %v4032, %v4031
        %v4052 = vpack.c.bf16 %v4034, %v4033
        %v4053 = vpack.c.bf16 %v4036, %v4035
        %v4054 = vpack.c.bf16 %v4038, %v4037
        %v4055 = vpack.c.bf16 %v4040, %v4039
        %v4056 = vpack.c.bf16 %v4042, %v4041
        %v4057 = vpack.c.bf16 %v4044, %v4043
        %v4058 = vpack.c.bf16 %v4046, %v4045
        %s4059 = scalar_lea.vmem %s3, 192
        %v4060 = vld [vmem:[%s4059] sm:$0xf]
        %v4061 = vld [vmem:[%s4059 + $0x4] sm:$0xf]
        %v4062 = vld [vmem:[%s4059 + $0x8] sm:$0xf]
        %v4063 = vld [vmem:[%s4059 + $0xc] sm:$0xf]
        %v4064 = vld [vmem:[%s4059 + $0x10] sm:$0xf]
        %v4065 = vld [vmem:[%s4059 + $0x14] sm:$0xf]
        %v4066 = vld [vmem:[%s4059 + $0x18] sm:$0xf]
        %v4067 = vld [vmem:[%s4059 + $0x1c] sm:$0xf]
        %v4068 = vld [vmem:[%s4059 + $0x20] sm:$0xf]
        %v4069 = vld [vmem:[%s4059 + $0x24] sm:$0xf]
        %v4070 = vld [vmem:[%s4059 + $0x28] sm:$0xf]
        %v4071 = vld [vmem:[%s4059 + $0x2c] sm:$0xf]
        %v4072 = vld [vmem:[%s4059 + $0x30] sm:$0xf]
        %v4073 = vld [vmem:[%s4059 + $0x34] sm:$0xf]
        %v4074 = vld [vmem:[%s4059 + $0x38] sm:$0xf]
        %v4075 = vld [vmem:[%s4059 + $0x3c] sm:$0xf]
        %v4092 = vunpack.c.l.b16 %v4060
        %v4093 = vunpack.c.l.b16 %v4061
        %v4094 = vunpack.c.l.b16 %v4062
        %v4095 = vunpack.c.l.b16 %v4063
        %v4096 = vunpack.c.l.b16 %v4064
        %v4097 = vunpack.c.l.b16 %v4065
        %v4098 = vunpack.c.l.b16 %v4066
        %v4099 = vunpack.c.l.b16 %v4067
        %v4100 = vunpack.c.l.b16 %v4068
        %v4101 = vunpack.c.l.b16 %v4069
        %v4102 = vunpack.c.l.b16 %v4070
        %v4103 = vunpack.c.l.b16 %v4071
        %v4104 = vunpack.c.l.b16 %v4072
        %v4105 = vunpack.c.l.b16 %v4073
        %v4106 = vunpack.c.l.b16 %v4074
        %v4107 = vunpack.c.l.b16 %v4075
        %v4108 = vpack.c.b16 %v4093, %v4092
        %v4109 = vpack.c.b16 %v4095, %v4094
        %v4110 = vpack.c.b16 %v4097, %v4096
        %v4111 = vpack.c.b16 %v4099, %v4098
        %v4112 = vpack.c.b16 %v4101, %v4100
        %v4113 = vpack.c.b16 %v4103, %v4102
        %v4114 = vpack.c.b16 %v4105, %v4104
        %v4115 = vpack.c.b16 %v4107, %v4106
        %4124 = vmatpush.bf16.msra.mxu0 %v4115
        %4125 = vmatpush.bf16.msra.mxu0 %v4114
        %4126 = vmatpush.bf16.msra.mxu0 %v4113
        %4127 = vmatpush.bf16.msra.mxu0 %v4112
        %4128 = vmatpush.bf16.msra.mxu0 %v4111
        %4129 = vmatpush.bf16.msra.mxu0 %v4110
        %4130 = vmatpush.bf16.msra.mxu0 %v4109
        %4131 = vmatpush.bf16.msra.mxu0 %v4108
        %4132 = vmatmul.bf16.gmra.mxu0 %v4047
        %v4133 = vpop.f32.mrf.mxu0
        %v4134 = vadd.f32 0.0, %v4133
        %v4135 = vpop.f32.mrf.mxu0
        %v4136 = vadd.f32 0.0, %v4135
        %4137 = vmatmul.bf16.gmra.mxu0 %v4048
        %v4138 = vpop.f32.mrf.mxu0
        %v4139 = vadd.f32 0.0, %v4138
        %v4140 = vpop.f32.mrf.mxu0
        %v4141 = vadd.f32 0.0, %v4140
        %4142 = vmatmul.bf16.gmra.mxu0 %v4049
        %v4143 = vpop.f32.mrf.mxu0
        %v4144 = vadd.f32 0.0, %v4143
        %v4145 = vpop.f32.mrf.mxu0
        %v4146 = vadd.f32 0.0, %v4145
        %4147 = vmatmul.bf16.gmra.mxu0 %v4050
        %v4148 = vpop.f32.mrf.mxu0
        %v4149 = vadd.f32 0.0, %v4148
        %v4150 = vpop.f32.mrf.mxu0
        %v4151 = vadd.f32 0.0, %v4150
        %4152 = vmatmul.bf16.gmra.mxu0 %v4051
        %v4153 = vpop.f32.mrf.mxu0
        %v4154 = vadd.f32 0.0, %v4153
        %v4155 = vpop.f32.mrf.mxu0
        %v4156 = vadd.f32 0.0, %v4155
        %4157 = vmatmul.bf16.gmra.mxu0 %v4052
        %v4158 = vpop.f32.mrf.mxu0
        %v4159 = vadd.f32 0.0, %v4158
        %v4160 = vpop.f32.mrf.mxu0
        %v4161 = vadd.f32 0.0, %v4160
        %4162 = vmatmul.bf16.gmra.mxu0 %v4053
        %v4163 = vpop.f32.mrf.mxu0
        %v4164 = vadd.f32 0.0, %v4163
        %v4165 = vpop.f32.mrf.mxu0
        %v4166 = vadd.f32 0.0, %v4165
        %4167 = vmatmul.bf16.gmra.mxu0 %v4054
        %v4168 = vpop.f32.mrf.mxu0
        %v4169 = vadd.f32 0.0, %v4168
        %v4170 = vpop.f32.mrf.mxu0
        %v4171 = vadd.f32 0.0, %v4170
        %4172 = vmatmul.bf16.gmra.mxu0 %v4055
        %v4173 = vpop.f32.mrf.mxu0
        %v4174 = vadd.f32 0.0, %v4173
        %v4175 = vpop.f32.mrf.mxu0
        %v4176 = vadd.f32 0.0, %v4175
        %4177 = vmatmul.bf16.gmra.mxu0 %v4056
        %v4178 = vpop.f32.mrf.mxu0
        %v4179 = vadd.f32 0.0, %v4178
        %v4180 = vpop.f32.mrf.mxu0
        %v4181 = vadd.f32 0.0, %v4180
        %4182 = vmatmul.bf16.gmra.mxu0 %v4057
        %v4183 = vpop.f32.mrf.mxu0
        %v4184 = vadd.f32 0.0, %v4183
        %v4185 = vpop.f32.mrf.mxu0
        %v4186 = vadd.f32 0.0, %v4185
        %4187 = vmatmul.bf16.gmra.mxu0 %v4058
        %v4188 = vpop.f32.mrf.mxu0
        %v4189 = vadd.f32 0.0, %v4188
        %v4190 = vpop.f32.mrf.mxu0
        %v4191 = vadd.f32 0.0, %v4190
        %4192 = vdwg.mxu0
        %v4193 = vld [vmem:[#allocation4] sm:$0xff]
        %v4194 = vld [vmem:[#allocation4 + $0x8] sm:$0xff]
        %v4195 = vld [vmem:[#allocation4 + $0x10] sm:$0xff]
        %v4196 = vld [vmem:[#allocation4 + $0x18] sm:$0xff]
        %v4197 = vld [vmem:[#allocation4 + $0x20] sm:$0xff]
        %v4198 = vld [vmem:[#allocation4 + $0x28] sm:$0xff]
        %v4199 = vld [vmem:[#allocation4 + $0x30] sm:$0xff]
        %v4200 = vld [vmem:[#allocation4 + $0x38] sm:$0xff]
        %v4201 = vld [vmem:[#allocation4 + $0x40] sm:$0xff]
        %v4202 = vld [vmem:[#allocation4 + $0x48] sm:$0xff]
        %v4203 = vld [vmem:[#allocation4 + $0x50] sm:$0xff]
        %v4204 = vld [vmem:[#allocation4 + $0x58] sm:$0xff]
        %v4205 = vld [vmem:[#allocation4 + $0x60] sm:$0xff]
        %v4206 = vld [vmem:[#allocation4 + $0x68] sm:$0xff]
        %v4207 = vld [vmem:[#allocation4 + $0x70] sm:$0xff]
        %v4208 = vld [vmem:[#allocation4 + $0x78] sm:$0xff]
        %v4209 = vld [vmem:[#allocation4 + $0x80] sm:$0xff]
        %v4210 = vld [vmem:[#allocation4 + $0x88] sm:$0xff]
        %v4211 = vld [vmem:[#allocation4 + $0x90] sm:$0xff]
        %v4212 = vld [vmem:[#allocation4 + $0x98] sm:$0xff]
        %v4213 = vld [vmem:[#allocation4 + $0xa0] sm:$0xff]
        %v4214 = vld [vmem:[#allocation4 + $0xa8] sm:$0xff]
        %v4215 = vld [vmem:[#allocation4 + $0xb0] sm:$0xff]
        %v4216 = vld [vmem:[#allocation4 + $0xb8] sm:$0xff]
        %v4217 = vadd.f32 %v4193, %v4134
        %v4218 = vadd.f32 %v4194, %v4136
        %v4219 = vadd.f32 %v4195, %v4139
        %v4220 = vadd.f32 %v4196, %v4141
        %v4221 = vadd.f32 %v4197, %v4144
        %v4222 = vadd.f32 %v4198, %v4146
        %v4223 = vadd.f32 %v4199, %v4149
        %v4224 = vadd.f32 %v4200, %v4151
        %v4225 = vadd.f32 %v4201, %v4154
        %v4226 = vadd.f32 %v4202, %v4156
        %v4227 = vadd.f32 %v4203, %v4159
        %v4228 = vadd.f32 %v4204, %v4161
        %v4229 = vadd.f32 %v4205, %v4164
        %v4230 = vadd.f32 %v4206, %v4166
        %v4231 = vadd.f32 %v4207, %v4169
        %v4232 = vadd.f32 %v4208, %v4171
        %v4233 = vadd.f32 %v4209, %v4174
        %v4234 = vadd.f32 %v4210, %v4176
        %v4235 = vadd.f32 %v4211, %v4179
        %v4236 = vadd.f32 %v4212, %v4181
        %v4237 = vadd.f32 %v4213, %v4184
        %v4238 = vadd.f32 %v4214, %v4186
        %v4239 = vadd.f32 %v4215, %v4189
        %v4240 = vadd.f32 %v4216, %v4191
        %4241 = vst [vmem:[#allocation4] sm:$0xff] %v4217
        %4242 = vst [vmem:[#allocation4 + $0x8] sm:$0xff] %v4218
        %4243 = vst [vmem:[#allocation4 + $0x10] sm:$0xff] %v4219
        %4244 = vst [vmem:[#allocation4 + $0x18] sm:$0xff] %v4220
        %4245 = vst [vmem:[#allocation4 + $0x20] sm:$0xff] %v4221
        %4246 = vst [vmem:[#allocation4 + $0x28] sm:$0xff] %v4222
        %4247 = vst [vmem:[#allocation4 + $0x30] sm:$0xff] %v4223
        %4248 = vst [vmem:[#allocation4 + $0x38] sm:$0xff] %v4224
        %4249 = vst [vmem:[#allocation4 + $0x40] sm:$0xff] %v4225
        %4250 = vst [vmem:[#allocation4 + $0x48] sm:$0xff] %v4226
        %4251 = vst [vmem:[#allocation4 + $0x50] sm:$0xff] %v4227
        %4252 = vst [vmem:[#allocation4 + $0x58] sm:$0xff] %v4228
        %4253 = vst [vmem:[#allocation4 + $0x60] sm:$0xff] %v4229
        %4254 = vst [vmem:[#allocation4 + $0x68] sm:$0xff] %v4230
        %4255 = vst [vmem:[#allocation4 + $0x70] sm:$0xff] %v4231
        %4256 = vst [vmem:[#allocation4 + $0x78] sm:$0xff] %v4232
        %4257 = vst [vmem:[#allocation4 + $0x80] sm:$0xff] %v4233
        %4258 = vst [vmem:[#allocation4 + $0x88] sm:$0xff] %v4234
        %4259 = vst [vmem:[#allocation4 + $0x90] sm:$0xff] %v4235
        %4260 = vst [vmem:[#allocation4 + $0x98] sm:$0xff] %v4236
        %4261 = vst [vmem:[#allocation4 + $0xa0] sm:$0xff] %v4237
        %4262 = vst [vmem:[#allocation4 + $0xa8] sm:$0xff] %v4238
        %4263 = vst [vmem:[#allocation4 + $0xb0] sm:$0xff] %v4239
        %4264 = vst [vmem:[#allocation4 + $0xb8] sm:$0xff] %v4240
        %v4265 = vrot.slane %v4023, 1
        %v4266 = vrot.slane %v4026, 1
        %v4267 = vrot.slane %v4029, 1
        %v4268 = vrot.slane %v4032, 1
        %v4269 = vrot.slane %v4035, 1
        %v4270 = vrot.slane %v4038, 1
        %v4271 = vrot.slane %v4041, 1
        %v4272 = vrot.slane %v4044, 1
        %v4273 = vrot.slane %v4024, 1
        %v4274 = vrot.slane %v4027, 1
        %v4275 = vrot.slane %v4030, 1
        %v4276 = vrot.slane %v4033, 1
        %v4277 = vrot.slane %v4036, 1
        %v4278 = vrot.slane %v4039, 1
        %v4279 = vrot.slane %v4042, 1
        %v4280 = vrot.slane %v4045, 1
        %v4281 = vrot.slane %v4025, 1
        %v4282 = vrot.slane %v4028, 1
        %v4283 = vrot.slane %v4031, 1
        %v4284 = vrot.slane %v4034, 1
        %v4285 = vrot.slane %v4037, 1
        %v4286 = vrot.slane %v4040, 1
        %v4287 = vrot.slane %v4043, 1
        %v4288 = vrot.slane %v4046, 1
        %v4289 = vsel %vm496, %v4273, %v4281
        %v4290 = vsel %vm496, %v4274, %v4282
        %v4291 = vsel %vm496, %v4275, %v4283
        %v4292 = vsel %vm496, %v4276, %v4284
        %v4293 = vsel %vm496, %v4277, %v4285
        %v4294 = vsel %vm496, %v4278, %v4286
        %v4295 = vsel %vm496, %v4279, %v4287
        %v4296 = vsel %vm496, %v4280, %v4288
        %v4297 = vsel %vm496, %v4265, %v4273
        %v4298 = vsel %vm496, %v4266, %v4274
        %v4299 = vsel %vm496, %v4267, %v4275
        %v4300 = vsel %vm496, %v4268, %v4276
        %v4301 = vsel %vm496, %v4269, %v4277
        %v4302 = vsel %vm496, %v4270, %v4278
        %v4303 = vsel %vm496, %v4271, %v4279
        %v4304 = vsel %vm496, %v4272, %v4280
        %v4305 = vsel %vm496, %v4281, %v4265
        %v4306 = vsel %vm496, %v4282, %v4266
        %v4307 = vsel %vm496, %v4283, %v4267
        %v4308 = vsel %vm496, %v4284, %v4268
        %v4309 = vsel %vm496, %v4285, %v4269
        %v4310 = vsel %vm496, %v4286, %v4270
        %v4311 = vsel %vm496, %v4287, %v4271
        %v4312 = vsel %vm496, %v4288, %v4272
        %v4313 = vpack.c.bf16 %v4289, %v4297
        %v4314 = vpack.c.bf16 %v4298, %v4305
        %v4315 = vpack.c.bf16 %v4306, %v4290
        %v4316 = vpack.c.bf16 %v4291, %v4299
        %v4317 = vpack.c.bf16 %v4300, %v4307
        %v4318 = vpack.c.bf16 %v4308, %v4292
        %v4319 = vpack.c.bf16 %v4293, %v4301
        %v4320 = vpack.c.bf16 %v4302, %v4309
        %v4321 = vpack.c.bf16 %v4310, %v4294
        %v4322 = vpack.c.bf16 %v4295, %v4303
        %v4323 = vpack.c.bf16 %v4304, %v4311
        %v4324 = vpack.c.bf16 %v4312, %v4296
        %s4325 = scalar_lea.vmem %s3, 256
        %v4326 = vld [vmem:[%s4325] sm:$0xf]
        %v4327 = vld [vmem:[%s4325 + $0x4] sm:$0xf]
        %v4328 = vld [vmem:[%s4325 + $0x8] sm:$0xf]
        %v4329 = vld [vmem:[%s4325 + $0xc] sm:$0xf]
        %v4330 = vld [vmem:[%s4325 + $0x10] sm:$0xf]
        %v4331 = vld [vmem:[%s4325 + $0x14] sm:$0xf]
        %v4332 = vld [vmem:[%s4325 + $0x18] sm:$0xf]
        %v4333 = vld [vmem:[%s4325 + $0x1c] sm:$0xf]
        %v4334 = vld [vmem:[%s4325 + $0x20] sm:$0xf]
        %v4335 = vld [vmem:[%s4325 + $0x24] sm:$0xf]
        %v4336 = vld [vmem:[%s4325 + $0x28] sm:$0xf]
        %v4337 = vld [vmem:[%s4325 + $0x2c] sm:$0xf]
        %v4338 = vld [vmem:[%s4325 + $0x30] sm:$0xf]
        %v4339 = vld [vmem:[%s4325 + $0x34] sm:$0xf]
        %v4340 = vld [vmem:[%s4325 + $0x38] sm:$0xf]
        %v4341 = vld [vmem:[%s4325 + $0x3c] sm:$0xf]
        %v4358 = vunpack.c.l.b16 %v4326
        %v4359 = vunpack.c.l.b16 %v4327
        %v4360 = vunpack.c.l.b16 %v4328
        %v4361 = vunpack.c.l.b16 %v4329
        %v4362 = vunpack.c.l.b16 %v4330
        %v4363 = vunpack.c.l.b16 %v4331
        %v4364 = vunpack.c.l.b16 %v4332
        %v4365 = vunpack.c.l.b16 %v4333
        %v4366 = vunpack.c.l.b16 %v4334
        %v4367 = vunpack.c.l.b16 %v4335
        %v4368 = vunpack.c.l.b16 %v4336
        %v4369 = vunpack.c.l.b16 %v4337
        %v4370 = vunpack.c.l.b16 %v4338
        %v4371 = vunpack.c.l.b16 %v4339
        %v4372 = vunpack.c.l.b16 %v4340
        %v4373 = vunpack.c.l.b16 %v4341
        %v4374 = vpack.c.b16 %v4359, %v4358
        %v4375 = vpack.c.b16 %v4361, %v4360
        %v4376 = vpack.c.b16 %v4363, %v4362
        %v4377 = vpack.c.b16 %v4365, %v4364
        %v4378 = vpack.c.b16 %v4367, %v4366
        %v4379 = vpack.c.b16 %v4369, %v4368
        %v4380 = vpack.c.b16 %v4371, %v4370
        %v4381 = vpack.c.b16 %v4373, %v4372
        %4390 = vmatpush.bf16.msra.mxu0 %v4381
        %4391 = vmatpush.bf16.msra.mxu0 %v4380
        %4392 = vmatpush.bf16.msra.mxu0 %v4379
        %4393 = vmatpush.bf16.msra.mxu0 %v4378
        %4394 = vmatpush.bf16.msra.mxu0 %v4377
        %4395 = vmatpush.bf16.msra.mxu0 %v4376
        %4396 = vmatpush.bf16.msra.mxu0 %v4375
        %4397 = vmatpush.bf16.msra.mxu0 %v4374
        %4398 = vmatmul.bf16.gmra.mxu0 %v4313
        %v4399 = vpop.f32.mrf.mxu0
        %v4400 = vadd.f32 0.0, %v4399
        %v4401 = vpop.f32.mrf.mxu0
        %v4402 = vadd.f32 0.0, %v4401
        %4403 = vmatmul.bf16.gmra.mxu0 %v4314
        %v4404 = vpop.f32.mrf.mxu0
        %v4405 = vadd.f32 0.0, %v4404
        %v4406 = vpop.f32.mrf.mxu0
        %v4407 = vadd.f32 0.0, %v4406
        %4408 = vmatmul.bf16.gmra.mxu0 %v4315
        %v4409 = vpop.f32.mrf.mxu0
        %v4410 = vadd.f32 0.0, %v4409
        %v4411 = vpop.f32.mrf.mxu0
        %v4412 = vadd.f32 0.0, %v4411
        %4413 = vmatmul.bf16.gmra.mxu0 %v4316
        %v4414 = vpop.f32.mrf.mxu0
        %v4415 = vadd.f32 0.0, %v4414
        %v4416 = vpop.f32.mrf.mxu0
        %v4417 = vadd.f32 0.0, %v4416
        %4418 = vmatmul.bf16.gmra.mxu0 %v4317
        %v4419 = vpop.f32.mrf.mxu0
        %v4420 = vadd.f32 0.0, %v4419
        %v4421 = vpop.f32.mrf.mxu0
        %v4422 = vadd.f32 0.0, %v4421
        %4423 = vmatmul.bf16.gmra.mxu0 %v4318
        %v4424 = vpop.f32.mrf.mxu0
        %v4425 = vadd.f32 0.0, %v4424
        %v4426 = vpop.f32.mrf.mxu0
        %v4427 = vadd.f32 0.0, %v4426
        %4428 = vmatmul.bf16.gmra.mxu0 %v4319
        %v4429 = vpop.f32.mrf.mxu0
        %v4430 = vadd.f32 0.0, %v4429
        %v4431 = vpop.f32.mrf.mxu0
        %v4432 = vadd.f32 0.0, %v4431
        %4433 = vmatmul.bf16.gmra.mxu0 %v4320
        %v4434 = vpop.f32.mrf.mxu0
        %v4435 = vadd.f32 0.0, %v4434
        %v4436 = vpop.f32.mrf.mxu0
        %v4437 = vadd.f32 0.0, %v4436
        %4438 = vmatmul.bf16.gmra.mxu0 %v4321
        %v4439 = vpop.f32.mrf.mxu0
        %v4440 = vadd.f32 0.0, %v4439
        %v4441 = vpop.f32.mrf.mxu0
        %v4442 = vadd.f32 0.0, %v4441
        %4443 = vmatmul.bf16.gmra.mxu0 %v4322
        %v4444 = vpop.f32.mrf.mxu0
        %v4445 = vadd.f32 0.0, %v4444
        %v4446 = vpop.f32.mrf.mxu0
        %v4447 = vadd.f32 0.0, %v4446
        %4448 = vmatmul.bf16.gmra.mxu0 %v4323
        %v4449 = vpop.f32.mrf.mxu0
        %v4450 = vadd.f32 0.0, %v4449
        %v4451 = vpop.f32.mrf.mxu0
        %v4452 = vadd.f32 0.0, %v4451
        %4453 = vmatmul.bf16.gmra.mxu0 %v4324
        %v4454 = vpop.f32.mrf.mxu0
        %v4455 = vadd.f32 0.0, %v4454
        %v4456 = vpop.f32.mrf.mxu0
        %v4457 = vadd.f32 0.0, %v4456
        %4458 = vdwg.mxu0
        %v4459 = vld [vmem:[#allocation4] sm:$0xff]
        %v4460 = vld [vmem:[#allocation4 + $0x8] sm:$0xff]
        %v4461 = vld [vmem:[#allocation4 + $0x10] sm:$0xff]
        %v4462 = vld [vmem:[#allocation4 + $0x18] sm:$0xff]
        %v4463 = vld [vmem:[#allocation4 + $0x20] sm:$0xff]
        %v4464 = vld [vmem:[#allocation4 + $0x28] sm:$0xff]
        %v4465 = vld [vmem:[#allocation4 + $0x30] sm:$0xff]
        %v4466 = vld [vmem:[#allocation4 + $0x38] sm:$0xff]
        %v4467 = vld [vmem:[#allocation4 + $0x40] sm:$0xff]
        %v4468 = vld [vmem:[#allocation4 + $0x48] sm:$0xff]
        %v4469 = vld [vmem:[#allocation4 + $0x50] sm:$0xff]
        %v4470 = vld [vmem:[#allocation4 + $0x58] sm:$0xff]
        %v4471 = vld [vmem:[#allocation4 + $0x60] sm:$0xff]
        %v4472 = vld [vmem:[#allocation4 + $0x68] sm:$0xff]
        %v4473 = vld [vmem:[#allocation4 + $0x70] sm:$0xff]
        %v4474 = vld [vmem:[#allocation4 + $0x78] sm:$0xff]
        %v4475 = vld [vmem:[#allocation4 + $0x80] sm:$0xff]
        %v4476 = vld [vmem:[#allocation4 + $0x88] sm:$0xff]
        %v4477 = vld [vmem:[#allocation4 + $0x90] sm:$0xff]
        %v4478 = vld [vmem:[#allocation4 + $0x98] sm:$0xff]
        %v4479 = vld [vmem:[#allocation4 + $0xa0] sm:$0xff]
        %v4480 = vld [vmem:[#allocation4 + $0xa8] sm:$0xff]
        %v4481 = vld [vmem:[#allocation4 + $0xb0] sm:$0xff]
        %v4482 = vld [vmem:[#allocation4 + $0xb8] sm:$0xff]
        %v4483 = vadd.f32 %v4459, %v4400
        %v4484 = vadd.f32 %v4460, %v4402
        %v4485 = vadd.f32 %v4461, %v4405
        %v4486 = vadd.f32 %v4462, %v4407
        %v4487 = vadd.f32 %v4463, %v4410
        %v4488 = vadd.f32 %v4464, %v4412
        %v4489 = vadd.f32 %v4465, %v4415
        %v4490 = vadd.f32 %v4466, %v4417
        %v4491 = vadd.f32 %v4467, %v4420
        %v4492 = vadd.f32 %v4468, %v4422
        %v4493 = vadd.f32 %v4469, %v4425
        %v4494 = vadd.f32 %v4470, %v4427
        %v4495 = vadd.f32 %v4471, %v4430
        %v4496 = vadd.f32 %v4472, %v4432
        %v4497 = vadd.f32 %v4473, %v4435
        %v4498 = vadd.f32 %v4474, %v4437
        %v4499 = vadd.f32 %v4475, %v4440
        %v4500 = vadd.f32 %v4476, %v4442
        %v4501 = vadd.f32 %v4477, %v4445
        %v4502 = vadd.f32 %v4478, %v4447
        %v4503 = vadd.f32 %v4479, %v4450
        %v4504 = vadd.f32 %v4480, %v4452
        %v4505 = vadd.f32 %v4481, %v4455
        %v4506 = vadd.f32 %v4482, %v4457
        %4507 = vst [vmem:[#allocation4] sm:$0xff] %v4483
        %4508 = vst [vmem:[#allocation4 + $0x8] sm:$0xff] %v4484
        %4509 = vst [vmem:[#allocation4 + $0x10] sm:$0xff] %v4485
        %4510 = vst [vmem:[#allocation4 + $0x18] sm:$0xff] %v4486
        %4511 = vst [vmem:[#allocation4 + $0x20] sm:$0xff] %v4487
        %4512 = vst [vmem:[#allocation4 + $0x28] sm:$0xff] %v4488
        %4513 = vst [vmem:[#allocation4 + $0x30] sm:$0xff] %v4489
        %4514 = vst [vmem:[#allocation4 + $0x38] sm:$0xff] %v4490
        %4515 = vst [vmem:[#allocation4 + $0x40] sm:$0xff] %v4491
        %4516 = vst [vmem:[#allocation4 + $0x48] sm:$0xff] %v4492
        %4517 = vst [vmem:[#allocation4 + $0x50] sm:$0xff] %v4493
        %4518 = vst [vmem:[#allocation4 + $0x58] sm:$0xff] %v4494
        %4519 = vst [vmem:[#allocation4 + $0x60] sm:$0xff] %v4495
        %4520 = vst [vmem:[#allocation4 + $0x68] sm:$0xff] %v4496
        %4521 = vst [vmem:[#allocation4 + $0x70] sm:$0xff] %v4497
        %4522 = vst [vmem:[#allocation4 + $0x78] sm:$0xff] %v4498
        %4523 = vst [vmem:[#allocation4 + $0x80] sm:$0xff] %v4499
        %4524 = vst [vmem:[#allocation4 + $0x88] sm:$0xff] %v4500
        %4525 = vst [vmem:[#allocation4 + $0x90] sm:$0xff] %v4501
        %4526 = vst [vmem:[#allocation4 + $0x98] sm:$0xff] %v4502
        %4527 = vst [vmem:[#allocation4 + $0xa0] sm:$0xff] %v4503
        %4528 = vst [vmem:[#allocation4 + $0xa8] sm:$0xff] %v4504
        %4529 = vst [vmem:[#allocation4 + $0xb0] sm:$0xff] %v4505
        %4530 = vst [vmem:[#allocation4 + $0xb8] sm:$0xff] %v4506
        %v4531 = vrot.slane %v4023, 2
        %v4532 = vrot.slane %v4026, 2
        %v4533 = vrot.slane %v4029, 2
        %v4534 = vrot.slane %v4032, 2
        %v4535 = vrot.slane %v4035, 2
        %v4536 = vrot.slane %v4038, 2
        %v4537 = vrot.slane %v4041, 2
        %v4538 = vrot.slane %v4044, 2
        %v4539 = vrot.slane %v4024, 2
        %v4540 = vrot.slane %v4027, 2
        %v4541 = vrot.slane %v4030, 2
        %v4542 = vrot.slane %v4033, 2
        %v4543 = vrot.slane %v4036, 2
        %v4544 = vrot.slane %v4039, 2
        %v4545 = vrot.slane %v4042, 2
        %v4546 = vrot.slane %v4045, 2
        %v4547 = vrot.slane %v4025, 2
        %v4548 = vrot.slane %v4028, 2
        %v4549 = vrot.slane %v4031, 2
        %v4550 = vrot.slane %v4034, 2
        %v4551 = vrot.slane %v4037, 2
        %v4552 = vrot.slane %v4040, 2
        %v4553 = vrot.slane %v4043, 2
        %v4554 = vrot.slane %v4046, 2
        %v4555 = vsel %vm811, %v4539, %v4547
        %v4556 = vsel %vm811, %v4540, %v4548
        %v4557 = vsel %vm811, %v4541, %v4549
        %v4558 = vsel %vm811, %v4542, %v4550
        %v4559 = vsel %vm811, %v4543, %v4551
        %v4560 = vsel %vm811, %v4544, %v4552
        %v4561 = vsel %vm811, %v4545, %v4553
        %v4562 = vsel %vm811, %v4546, %v4554
        %v4563 = vsel %vm811, %v4531, %v4539
        %v4564 = vsel %vm811, %v4532, %v4540
        %v4565 = vsel %vm811, %v4533, %v4541
        %v4566 = vsel %vm811, %v4534, %v4542
        %v4567 = vsel %vm811, %v4535, %v4543
        %v4568 = vsel %vm811, %v4536, %v4544
        %v4569 = vsel %vm811, %v4537, %v4545
        %v4570 = vsel %vm811, %v4538, %v4546
        %v4571 = vsel %vm811, %v4547, %v4531
        %v4572 = vsel %vm811, %v4548, %v4532
        %v4573 = vsel %vm811, %v4549, %v4533
        %v4574 = vsel %vm811, %v4550, %v4534
        %v4575 = vsel %vm811, %v4551, %v4535
        %v4576 = vsel %vm811, %v4552, %v4536
        %v4577 = vsel %vm811, %v4553, %v4537
        %v4578 = vsel %vm811, %v4554, %v4538
        %v4579 = vpack.c.bf16 %v4555, %v4563
        %v4580 = vpack.c.bf16 %v4564, %v4571
        %v4581 = vpack.c.bf16 %v4572, %v4556
        %v4582 = vpack.c.bf16 %v4557, %v4565
        %v4583 = vpack.c.bf16 %v4566, %v4573
        %v4584 = vpack.c.bf16 %v4574, %v4558
        %v4585 = vpack.c.bf16 %v4559, %v4567
        %v4586 = vpack.c.bf16 %v4568, %v4575
        %v4587 = vpack.c.bf16 %v4576, %v4560
        %v4588 = vpack.c.bf16 %v4561, %v4569
        %v4589 = vpack.c.bf16 %v4570, %v4577
        %v4590 = vpack.c.bf16 %v4578, %v4562
        %s4591 = scalar_lea.vmem %s3, 320
        %v4592 = vld [vmem:[%s4591] sm:$0xf]
        %v4593 = vld [vmem:[%s4591 + $0x4] sm:$0xf]
        %v4594 = vld [vmem:[%s4591 + $0x8] sm:$0xf]
        %v4595 = vld [vmem:[%s4591 + $0xc] sm:$0xf]
        %v4596 = vld [vmem:[%s4591 + $0x10] sm:$0xf]
        %v4597 = vld [vmem:[%s4591 + $0x14] sm:$0xf]
        %v4598 = vld [vmem:[%s4591 + $0x18] sm:$0xf]
        %v4599 = vld [vmem:[%s4591 + $0x1c] sm:$0xf]
        %v4600 = vld [vmem:[%s4591 + $0x20] sm:$0xf]
        %v4601 = vld [vmem:[%s4591 + $0x24] sm:$0xf]
        %v4602 = vld [vmem:[%s4591 + $0x28] sm:$0xf]
        %v4603 = vld [vmem:[%s4591 + $0x2c] sm:$0xf]
        %v4604 = vld [vmem:[%s4591 + $0x30] sm:$0xf]
        %v4605 = vld [vmem:[%s4591 + $0x34] sm:$0xf]
        %v4606 = vld [vmem:[%s4591 + $0x38] sm:$0xf]
        %v4607 = vld [vmem:[%s4591 + $0x3c] sm:$0xf]
        %v4624 = vunpack.c.l.b16 %v4592
        %v4625 = vunpack.c.l.b16 %v4593
        %v4626 = vunpack.c.l.b16 %v4594
        %v4627 = vunpack.c.l.b16 %v4595
        %v4628 = vunpack.c.l.b16 %v4596
        %v4629 = vunpack.c.l.b16 %v4597
        %v4630 = vunpack.c.l.b16 %v4598
        %v4631 = vunpack.c.l.b16 %v4599
        %v4632 = vunpack.c.l.b16 %v4600
        %v4633 = vunpack.c.l.b16 %v4601
        %v4634 = vunpack.c.l.b16 %v4602
        %v4635 = vunpack.c.l.b16 %v4603
        %v4636 = vunpack.c.l.b16 %v4604
        %v4637 = vunpack.c.l.b16 %v4605
        %v4638 = vunpack.c.l.b16 %v4606
        %v4639 = vunpack.c.l.b16 %v4607
        %v4640 = vpack.c.b16 %v4625, %v4624
        %v4641 = vpack.c.b16 %v4627, %v4626
        %v4642 = vpack.c.b16 %v4629, %v4628
        %v4643 = vpack.c.b16 %v4631, %v4630
        %v4644 = vpack.c.b16 %v4633, %v4632
        %v4645 = vpack.c.b16 %v4635, %v4634
        %v4646 = vpack.c.b16 %v4637, %v4636
        %v4647 = vpack.c.b16 %v4639, %v4638
        %4656 = vmatpush.bf16.msra.mxu0 %v4647
        %4657 = vmatpush.bf16.msra.mxu0 %v4646
        %4658 = vmatpush.bf16.msra.mxu0 %v4645
        %4659 = vmatpush.bf16.msra.mxu0 %v4644
        %4660 = vmatpush.bf16.msra.mxu0 %v4643
        %4661 = vmatpush.bf16.msra.mxu0 %v4642
        %4662 = vmatpush.bf16.msra.mxu0 %v4641
        %4663 = vmatpush.bf16.msra.mxu0 %v4640
        %4664 = vmatmul.bf16.gmra.mxu0 %v4579
        %v4665 = vpop.f32.mrf.mxu0
        %v4666 = vadd.f32 0.0, %v4665
        %v4667 = vpop.f32.mrf.mxu0
        %v4668 = vadd.f32 0.0, %v4667
        %4669 = vmatmul.bf16.gmra.mxu0 %v4580
        %v4670 = vpop.f32.mrf.mxu0
        %v4671 = vadd.f32 0.0, %v4670
        %v4672 = vpop.f32.mrf.mxu0
        %v4673 = vadd.f32 0.0, %v4672
        %4674 = vmatmul.bf16.gmra.mxu0 %v4581
        %v4675 = vpop.f32.mrf.mxu0
        %v4676 = vadd.f32 0.0, %v4675
        %v4677 = vpop.f32.mrf.mxu0
        %v4678 = vadd.f32 0.0, %v4677
        %4679 = vmatmul.bf16.gmra.mxu0 %v4582
        %v4680 = vpop.f32.mrf.mxu0
        %v4681 = vadd.f32 0.0, %v4680
        %v4682 = vpop.f32.mrf.mxu0
        %v4683 = vadd.f32 0.0, %v4682
        %4684 = vmatmul.bf16.gmra.mxu0 %v4583
        %v4685 = vpop.f32.mrf.mxu0
        %v4686 = vadd.f32 0.0, %v4685
        %v4687 = vpop.f32.mrf.mxu0
        %v4688 = vadd.f32 0.0, %v4687
        %4689 = vmatmul.bf16.gmra.mxu0 %v4584
        %v4690 = vpop.f32.mrf.mxu0
        %v4691 = vadd.f32 0.0, %v4690
        %v4692 = vpop.f32.mrf.mxu0
        %v4693 = vadd.f32 0.0, %v4692
        %4694 = vmatmul.bf16.gmra.mxu0 %v4585
        %v4695 = vpop.f32.mrf.mxu0
        %v4696 = vadd.f32 0.0, %v4695
        %v4697 = vpop.f32.mrf.mxu0
        %v4698 = vadd.f32 0.0, %v4697
        %4699 = vmatmul.bf16.gmra.mxu0 %v4586
        %v4700 = vpop.f32.mrf.mxu0
        %v4701 = vadd.f32 0.0, %v4700
        %v4702 = vpop.f32.mrf.mxu0
        %v4703 = vadd.f32 0.0, %v4702
        %4704 = vmatmul.bf16.gmra.mxu0 %v4587
        %v4705 = vpop.f32.mrf.mxu0
        %v4706 = vadd.f32 0.0, %v4705
        %v4707 = vpop.f32.mrf.mxu0
        %v4708 = vadd.f32 0.0, %v4707
        %4709 = vmatmul.bf16.gmra.mxu0 %v4588
        %v4710 = vpop.f32.mrf.mxu0
        %v4711 = vadd.f32 0.0, %v4710
        %v4712 = vpop.f32.mrf.mxu0
        %v4713 = vadd.f32 0.0, %v4712
        %4714 = vmatmul.bf16.gmra.mxu0 %v4589
        %v4715 = vpop.f32.mrf.mxu0
        %v4716 = vadd.f32 0.0, %v4715
        %v4717 = vpop.f32.mrf.mxu0
        %v4718 = vadd.f32 0.0, %v4717
        %4719 = vmatmul.bf16.gmra.mxu0 %v4590
        %v4720 = vpop.f32.mrf.mxu0
        %v4721 = vadd.f32 0.0, %v4720
        %v4722 = vpop.f32.mrf.mxu0
        %v4723 = vadd.f32 0.0, %v4722
        %4724 = vdwg.mxu0
        %v4725 = vld [vmem:[#allocation4] sm:$0xff]
        %v4726 = vld [vmem:[#allocation4 + $0x8] sm:$0xff]
        %v4727 = vld [vmem:[#allocation4 + $0x10] sm:$0xff]
        %v4728 = vld [vmem:[#allocation4 + $0x18] sm:$0xff]
        %v4729 = vld [vmem:[#allocation4 + $0x20] sm:$0xff]
        %v4730 = vld [vmem:[#allocation4 + $0x28] sm:$0xff]
        %v4731 = vld [vmem:[#allocation4 + $0x30] sm:$0xff]
        %v4732 = vld [vmem:[#allocation4 + $0x38] sm:$0xff]
        %v4733 = vld [vmem:[#allocation4 + $0x40] sm:$0xff]
        %v4734 = vld [vmem:[#allocation4 + $0x48] sm:$0xff]
        %v4735 = vld [vmem:[#allocation4 + $0x50] sm:$0xff]
        %v4736 = vld [vmem:[#allocation4 + $0x58] sm:$0xff]
        %v4737 = vld [vmem:[#allocation4 + $0x60] sm:$0xff]
        %v4738 = vld [vmem:[#allocation4 + $0x68] sm:$0xff]
        %v4739 = vld [vmem:[#allocation4 + $0x70] sm:$0xff]
        %v4740 = vld [vmem:[#allocation4 + $0x78] sm:$0xff]
        %v4741 = vld [vmem:[#allocation4 + $0x80] sm:$0xff]
        %v4742 = vld [vmem:[#allocation4 + $0x88] sm:$0xff]
        %v4743 = vld [vmem:[#allocation4 + $0x90] sm:$0xff]
        %v4744 = vld [vmem:[#allocation4 + $0x98] sm:$0xff]
        %v4745 = vld [vmem:[#allocation4 + $0xa0] sm:$0xff]
        %v4746 = vld [vmem:[#allocation4 + $0xa8] sm:$0xff]
        %v4747 = vld [vmem:[#allocation4 + $0xb0] sm:$0xff]
        %v4748 = vld [vmem:[#allocation4 + $0xb8] sm:$0xff]
        %v4749 = vadd.f32 %v4725, %v4666
        %v4750 = vadd.f32 %v4726, %v4668
        %v4751 = vadd.f32 %v4727, %v4671
        %v4752 = vadd.f32 %v4728, %v4673
        %v4753 = vadd.f32 %v4729, %v4676
        %v4754 = vadd.f32 %v4730, %v4678
        %v4755 = vadd.f32 %v4731, %v4681
        %v4756 = vadd.f32 %v4732, %v4683
        %v4757 = vadd.f32 %v4733, %v4686
        %v4758 = vadd.f32 %v4734, %v4688
        %v4759 = vadd.f32 %v4735, %v4691
        %v4760 = vadd.f32 %v4736, %v4693
        %v4761 = vadd.f32 %v4737, %v4696
        %v4762 = vadd.f32 %v4738, %v4698
        %v4763 = vadd.f32 %v4739, %v4701
        %v4764 = vadd.f32 %v4740, %v4703
        %v4765 = vadd.f32 %v4741, %v4706
        %v4766 = vadd.f32 %v4742, %v4708
        %v4767 = vadd.f32 %v4743, %v4711
        %v4768 = vadd.f32 %v4744, %v4713
        %v4769 = vadd.f32 %v4745, %v4716
        %v4770 = vadd.f32 %v4746, %v4718
        %v4771 = vadd.f32 %v4747, %v4721
        %v4772 = vadd.f32 %v4748, %v4723
        %4773 = vst [vmem:[#allocation4] sm:$0xff] %v4749
        %4774 = vst [vmem:[#allocation4 + $0x8] sm:$0xff] %v4750
        %4775 = vst [vmem:[#allocation4 + $0x10] sm:$0xff] %v4751
        %4776 = vst [vmem:[#allocation4 + $0x18] sm:$0xff] %v4752
        %4777 = vst [vmem:[#allocation4 + $0x20] sm:$0xff] %v4753
        %4778 = vst [vmem:[#allocation4 + $0x28] sm:$0xff] %v4754
        %4779 = vst [vmem:[#allocation4 + $0x30] sm:$0xff] %v4755
        %4780 = vst [vmem:[#allocation4 + $0x38] sm:$0xff] %v4756
        %4781 = vst [vmem:[#allocation4 + $0x40] sm:$0xff] %v4757
        %4782 = vst [vmem:[#allocation4 + $0x48] sm:$0xff] %v4758
        %4783 = vst [vmem:[#allocation4 + $0x50] sm:$0xff] %v4759
        %4784 = vst [vmem:[#allocation4 + $0x58] sm:$0xff] %v4760
        %4785 = vst [vmem:[#allocation4 + $0x60] sm:$0xff] %v4761
        %4786 = vst [vmem:[#allocation4 + $0x68] sm:$0xff] %v4762
        %4787 = vst [vmem:[#allocation4 + $0x70] sm:$0xff] %v4763
        %4788 = vst [vmem:[#allocation4 + $0x78] sm:$0xff] %v4764
        %4789 = vst [vmem:[#allocation4 + $0x80] sm:$0xff] %v4765
        %4790 = vst [vmem:[#allocation4 + $0x88] sm:$0xff] %v4766
        %4791 = vst [vmem:[#allocation4 + $0x90] sm:$0xff] %v4767
        %4792 = vst [vmem:[#allocation4 + $0x98] sm:$0xff] %v4768
        %4793 = vst [vmem:[#allocation4 + $0xa0] sm:$0xff] %v4769
        %4794 = vst [vmem:[#allocation4 + $0xa8] sm:$0xff] %v4770
        %4795 = vst [vmem:[#allocation4 + $0xb0] sm:$0xff] %v4771
        %4796 = vst [vmem:[#allocation4 + $0xb8] sm:$0xff] %v4772
        %s4797 = scalar_lea.vmem [#allocation3], 48
        %v4798 = vld [vmem:[%s4797] sm:$0xff]
        %v4799 = vld [vmem:[%s4797 + $0x8] sm:$0xff]
        %v4800 = vld [vmem:[%s4797 + $0x10] sm:$0xff]
        %v4801 = vld [vmem:[%s4797 + $0x18] sm:$0xff]
        %v4802 = vld [vmem:[%s4797 + $0x20] sm:$0xff]
        %v4803 = vld [vmem:[%s4797 + $0x28] sm:$0xff]
        %v4804 = vld [vmem:[%s4797 + $0x30] sm:$0xff]
        %v4805 = vld [vmem:[%s4797 + $0x38] sm:$0xff]
        %v4806 = vld [vmem:[%s4797 + $0x40] sm:$0xff]
        %v4807 = vld [vmem:[%s4797 + $0x48] sm:$0xff]
        %v4808 = vld [vmem:[%s4797 + $0x50] sm:$0xff]
        %v4809 = vld [vmem:[%s4797 + $0x58] sm:$0xff]
        %v4810 = vld [vmem:[%s4797 + $0x60] sm:$0xff]
        %v4811 = vld [vmem:[%s4797 + $0x68] sm:$0xff]
        %v4812 = vld [vmem:[%s4797 + $0x70] sm:$0xff]
        %v4813 = vld [vmem:[%s4797 + $0x78] sm:$0xff]
        %v4814 = vld [vmem:[%s4797 + $0x80] sm:$0xff]
        %v4815 = vld [vmem:[%s4797 + $0x88] sm:$0xff]
        %v4816 = vld [vmem:[%s4797 + $0x90] sm:$0xff]
        %v4817 = vld [vmem:[%s4797 + $0x98] sm:$0xff]
        %v4818 = vld [vmem:[%s4797 + $0xa0] sm:$0xff]
        %v4819 = vld [vmem:[%s4797 + $0xa8] sm:$0xff]
        %v4820 = vld [vmem:[%s4797 + $0xb0] sm:$0xff]
        %v4821 = vld [vmem:[%s4797 + $0xb8] sm:$0xff]
        %v4822 = vpack.c.bf16 %v4799, %v4798
        %v4823 = vpack.c.bf16 %v4801, %v4800
        %v4824 = vpack.c.bf16 %v4803, %v4802
        %v4825 = vpack.c.bf16 %v4805, %v4804
        %v4826 = vpack.c.bf16 %v4807, %v4806
        %v4827 = vpack.c.bf16 %v4809, %v4808
        %v4828 = vpack.c.bf16 %v4811, %v4810
        %v4829 = vpack.c.bf16 %v4813, %v4812
        %v4830 = vpack.c.bf16 %v4815, %v4814
        %v4831 = vpack.c.bf16 %v4817, %v4816
        %v4832 = vpack.c.bf16 %v4819, %v4818
        %v4833 = vpack.c.bf16 %v4821, %v4820
        %s4834 = scalar_lea.vmem %s3, 384
        %v4835 = vld [vmem:[%s4834] sm:$0xf]
        %v4836 = vld [vmem:[%s4834 + $0x4] sm:$0xf]
        %v4837 = vld [vmem:[%s4834 + $0x8] sm:$0xf]
        %v4838 = vld [vmem:[%s4834 + $0xc] sm:$0xf]
        %v4839 = vld [vmem:[%s4834 + $0x10] sm:$0xf]
        %v4840 = vld [vmem:[%s4834 + $0x14] sm:$0xf]
        %v4841 = vld [vmem:[%s4834 + $0x18] sm:$0xf]
        %v4842 = vld [vmem:[%s4834 + $0x1c] sm:$0xf]
        %v4843 = vld [vmem:[%s4834 + $0x20] sm:$0xf]
        %v4844 = vld [vmem:[%s4834 + $0x24] sm:$0xf]
        %v4845 = vld [vmem:[%s4834 + $0x28] sm:$0xf]
        %v4846 = vld [vmem:[%s4834 + $0x2c] sm:$0xf]
        %v4847 = vld [vmem:[%s4834 + $0x30] sm:$0xf]
        %v4848 = vld [vmem:[%s4834 + $0x34] sm:$0xf]
        %v4849 = vld [vmem:[%s4834 + $0x38] sm:$0xf]
        %v4850 = vld [vmem:[%s4834 + $0x3c] sm:$0xf]
        %v4867 = vunpack.c.l.b16 %v4835
        %v4868 = vunpack.c.l.b16 %v4836
        %v4869 = vunpack.c.l.b16 %v4837
        %v4870 = vunpack.c.l.b16 %v4838
        %v4871 = vunpack.c.l.b16 %v4839
        %v4872 = vunpack.c.l.b16 %v4840
        %v4873 = vunpack.c.l.b16 %v4841
        %v4874 = vunpack.c.l.b16 %v4842
        %v4875 = vunpack.c.l.b16 %v4843
        %v4876 = vunpack.c.l.b16 %v4844
        %v4877 = vunpack.c.l.b16 %v4845
        %v4878 = vunpack.c.l.b16 %v4846
        %v4879 = vunpack.c.l.b16 %v4847
        %v4880 = vunpack.c.l.b16 %v4848
        %v4881 = vunpack.c.l.b16 %v4849
        %v4882 = vunpack.c.l.b16 %v4850
        %v4883 = vpack.c.b16 %v4868, %v4867
        %v4884 = vpack.c.b16 %v4870, %v4869
        %v4885 = vpack.c.b16 %v4872, %v4871
        %v4886 = vpack.c.b16 %v4874, %v4873
        %v4887 = vpack.c.b16 %v4876, %v4875
        %v4888 = vpack.c.b16 %v4878, %v4877
        %v4889 = vpack.c.b16 %v4880, %v4879
        %v4890 = vpack.c.b16 %v4882, %v4881
        %4899 = vmatpush.bf16.msra.mxu0 %v4890
        %4900 = vmatpush.bf16.msra.mxu0 %v4889
        %4901 = vmatpush.bf16.msra.mxu0 %v4888
        %4902 = vmatpush.bf16.msra.mxu0 %v4887
        %4903 = vmatpush.bf16.msra.mxu0 %v4886
        %4904 = vmatpush.bf16.msra.mxu0 %v4885
        %4905 = vmatpush.bf16.msra.mxu0 %v4884
        %4906 = vmatpush.bf16.msra.mxu0 %v4883
        %4907 = vmatmul.bf16.gmra.mxu0 %v4822
        %v4908 = vpop.f32.mrf.mxu0
        %v4909 = vadd.f32 0.0, %v4908
        %v4910 = vpop.f32.mrf.mxu0
        %v4911 = vadd.f32 0.0, %v4910
        %4912 = vmatmul.bf16.gmra.mxu0 %v4823
        %v4913 = vpop.f32.mrf.mxu0
        %v4914 = vadd.f32 0.0, %v4913
        %v4915 = vpop.f32.mrf.mxu0
        %v4916 = vadd.f32 0.0, %v4915
        %4917 = vmatmul.bf16.gmra.mxu0 %v4824
        %v4918 = vpop.f32.mrf.mxu0
        %v4919 = vadd.f32 0.0, %v4918
        %v4920 = vpop.f32.mrf.mxu0
        %v4921 = vadd.f32 0.0, %v4920
        %4922 = vmatmul.bf16.gmra.mxu0 %v4825
        %v4923 = vpop.f32.mrf.mxu0
        %v4924 = vadd.f32 0.0, %v4923
        %v4925 = vpop.f32.mrf.mxu0
        %v4926 = vadd.f32 0.0, %v4925
        %4927 = vmatmul.bf16.gmra.mxu0 %v4826
        %v4928 = vpop.f32.mrf.mxu0
        %v4929 = vadd.f32 0.0, %v4928
        %v4930 = vpop.f32.mrf.mxu0
        %v4931 = vadd.f32 0.0, %v4930
        %4932 = vmatmul.bf16.gmra.mxu0 %v4827
        %v4933 = vpop.f32.mrf.mxu0
        %v4934 = vadd.f32 0.0, %v4933
        %v4935 = vpop.f32.mrf.mxu0
        %v4936 = vadd.f32 0.0, %v4935
        %4937 = vmatmul.bf16.gmra.mxu0 %v4828
        %v4938 = vpop.f32.mrf.mxu0
        %v4939 = vadd.f32 0.0, %v4938
        %v4940 = vpop.f32.mrf.mxu0
        %v4941 = vadd.f32 0.0, %v4940
        %4942 = vmatmul.bf16.gmra.mxu0 %v4829
        %v4943 = vpop.f32.mrf.mxu0
        %v4944 = vadd.f32 0.0, %v4943
        %v4945 = vpop.f32.mrf.mxu0
        %v4946 = vadd.f32 0.0, %v4945
        %4947 = vmatmul.bf16.gmra.mxu0 %v4830
        %v4948 = vpop.f32.mrf.mxu0
        %v4949 = vadd.f32 0.0, %v4948
        %v4950 = vpop.f32.mrf.mxu0
        %v4951 = vadd.f32 0.0, %v4950
        %4952 = vmatmul.bf16.gmra.mxu0 %v4831
        %v4953 = vpop.f32.mrf.mxu0
        %v4954 = vadd.f32 0.0, %v4953
        %v4955 = vpop.f32.mrf.mxu0
        %v4956 = vadd.f32 0.0, %v4955
        %4957 = vmatmul.bf16.gmra.mxu0 %v4832
        %v4958 = vpop.f32.mrf.mxu0
        %v4959 = vadd.f32 0.0, %v4958
        %v4960 = vpop.f32.mrf.mxu0
        %v4961 = vadd.f32 0.0, %v4960
        %4962 = vmatmul.bf16.gmra.mxu0 %v4833
        %v4963 = vpop.f32.mrf.mxu0
        %v4964 = vadd.f32 0.0, %v4963
        %v4965 = vpop.f32.mrf.mxu0
        %v4966 = vadd.f32 0.0, %v4965
        %4967 = vdwg.mxu0
        %v4968 = vld [vmem:[#allocation4] sm:$0xff]
        %v4969 = vld [vmem:[#allocation4 + $0x8] sm:$0xff]
        %v4970 = vld [vmem:[#allocation4 + $0x10] sm:$0xff]
        %v4971 = vld [vmem:[#allocation4 + $0x18] sm:$0xff]
        %v4972 = vld [vmem:[#allocation4 + $0x20] sm:$0xff]
        %v4973 = vld [vmem:[#allocation4 + $0x28] sm:$0xff]
        %v4974 = vld [vmem:[#allocation4 + $0x30] sm:$0xff]
        %v4975 = vld [vmem:[#allocation4 + $0x38] sm:$0xff]
        %v4976 = vld [vmem:[#allocation4 + $0x40] sm:$0xff]
        %v4977 = vld [vmem:[#allocation4 + $0x48] sm:$0xff]
        %v4978 = vld [vmem:[#allocation4 + $0x50] sm:$0xff]
        %v4979 = vld [vmem:[#allocation4 + $0x58] sm:$0xff]
        %v4980 = vld [vmem:[#allocation4 + $0x60] sm:$0xff]
        %v4981 = vld [vmem:[#allocation4 + $0x68] sm:$0xff]
        %v4982 = vld [vmem:[#allocation4 + $0x70] sm:$0xff]
        %v4983 = vld [vmem:[#allocation4 + $0x78] sm:$0xff]
        %v4984 = vld [vmem:[#allocation4 + $0x80] sm:$0xff]
        %v4985 = vld [vmem:[#allocation4 + $0x88] sm:$0xff]
        %v4986 = vld [vmem:[#allocation4 + $0x90] sm:$0xff]
        %v4987 = vld [vmem:[#allocation4 + $0x98] sm:$0xff]
        %v4988 = vld [vmem:[#allocation4 + $0xa0] sm:$0xff]
        %v4989 = vld [vmem:[#allocation4 + $0xa8] sm:$0xff]
        %v4990 = vld [vmem:[#allocation4 + $0xb0] sm:$0xff]
        %v4991 = vld [vmem:[#allocation4 + $0xb8] sm:$0xff]
        %v4992 = vadd.f32 %v4968, %v4909
        %v4993 = vadd.f32 %v4969, %v4911
        %v4994 = vadd.f32 %v4970, %v4914
        %v4995 = vadd.f32 %v4971, %v4916
        %v4996 = vadd.f32 %v4972, %v4919
        %v4997 = vadd.f32 %v4973, %v4921
        %v4998 = vadd.f32 %v4974, %v4924
        %v4999 = vadd.f32 %v4975, %v4926
        %v5000 = vadd.f32 %v4976, %v4929
        %v5001 = vadd.f32 %v4977, %v4931
        %v5002 = vadd.f32 %v4978, %v4934
        %v5003 = vadd.f32 %v4979, %v4936
        %v5004 = vadd.f32 %v4980, %v4939
        %v5005 = vadd.f32 %v4981, %v4941
        %v5006 = vadd.f32 %v4982, %v4944
        %v5007 = vadd.f32 %v4983, %v4946
        %v5008 = vadd.f32 %v4984, %v4949
        %v5009 = vadd.f32 %v4985, %v4951
        %v5010 = vadd.f32 %v4986, %v4954
        %v5011 = vadd.f32 %v4987, %v4956
        %v5012 = vadd.f32 %v4988, %v4959
        %v5013 = vadd.f32 %v4989, %v4961
        %v5014 = vadd.f32 %v4990, %v4964
        %v5015 = vadd.f32 %v4991, %v4966
        %5016 = vst [vmem:[#allocation4] sm:$0xff] %v4992
        %5017 = vst [vmem:[#allocation4 + $0x8] sm:$0xff] %v4993
        %5018 = vst [vmem:[#allocation4 + $0x10] sm:$0xff] %v4994
        %5019 = vst [vmem:[#allocation4 + $0x18] sm:$0xff] %v4995
        %5020 = vst [vmem:[#allocation4 + $0x20] sm:$0xff] %v4996
        %5021 = vst [vmem:[#allocation4 + $0x28] sm:$0xff] %v4997
        %5022 = vst [vmem:[#allocation4 + $0x30] sm:$0xff] %v4998
        %5023 = vst [vmem:[#allocation4 + $0x38] sm:$0xff] %v4999
        %5024 = vst [vmem:[#allocation4 + $0x40] sm:$0xff] %v5000
        %5025 = vst [vmem:[#allocation4 + $0x48] sm:$0xff] %v5001
        %5026 = vst [vmem:[#allocation4 + $0x50] sm:$0xff] %v5002
        %5027 = vst [vmem:[#allocation4 + $0x58] sm:$0xff] %v5003
        %5028 = vst [vmem:[#allocation4 + $0x60] sm:$0xff] %v5004
        %5029 = vst [vmem:[#allocation4 + $0x68] sm:$0xff] %v5005
        %5030 = vst [vmem:[#allocation4 + $0x70] sm:$0xff] %v5006
        %5031 = vst [vmem:[#allocation4 + $0x78] sm:$0xff] %v5007
        %5032 = vst [vmem:[#allocation4 + $0x80] sm:$0xff] %v5008
        %5033 = vst [vmem:[#allocation4 + $0x88] sm:$0xff] %v5009
        %5034 = vst [vmem:[#allocation4 + $0x90] sm:$0xff] %v5010
        %5035 = vst [vmem:[#allocation4 + $0x98] sm:$0xff] %v5011
        %5036 = vst [vmem:[#allocation4 + $0xa0] sm:$0xff] %v5012
        %5037 = vst [vmem:[#allocation4 + $0xa8] sm:$0xff] %v5013
        %5038 = vst [vmem:[#allocation4 + $0xb0] sm:$0xff] %v5014
        %5039 = vst [vmem:[#allocation4 + $0xb8] sm:$0xff] %v5015
        %v5040 = vrot.slane %v4798, 1
        %v5041 = vrot.slane %v4801, 1
        %v5042 = vrot.slane %v4804, 1
        %v5043 = vrot.slane %v4807, 1
        %v5044 = vrot.slane %v4810, 1
        %v5045 = vrot.slane %v4813, 1
        %v5046 = vrot.slane %v4816, 1
        %v5047 = vrot.slane %v4819, 1
        %v5048 = vrot.slane %v4799, 1
        %v5049 = vrot.slane %v4802, 1
        %v5050 = vrot.slane %v4805, 1
        %v5051 = vrot.slane %v4808, 1
        %v5052 = vrot.slane %v4811, 1
        %v5053 = vrot.slane %v4814, 1
        %v5054 = vrot.slane %v4817, 1
        %v5055 = vrot.slane %v4820, 1
        %v5056 = vrot.slane %v4800, 1
        %v5057 = vrot.slane %v4803, 1
        %v5058 = vrot.slane %v4806, 1
        %v5059 = vrot.slane %v4809, 1
        %v5060 = vrot.slane %v4812, 1
        %v5061 = vrot.slane %v4815, 1
        %v5062 = vrot.slane %v4818, 1
        %v5063 = vrot.slane %v4821, 1
        %v5064 = vsel %vm496, %v5048, %v5056
        %v5065 = vsel %vm496, %v5049, %v5057
        %v5066 = vsel %vm496, %v5050, %v5058
        %v5067 = vsel %vm496, %v5051, %v5059
        %v5068 = vsel %vm496, %v5052, %v5060
        %v5069 = vsel %vm496, %v5053, %v5061
        %v5070 = vsel %vm496, %v5054, %v5062
        %v5071 = vsel %vm496, %v5055, %v5063
        %v5072 = vsel %vm496, %v5040, %v5048
        %v5073 = vsel %vm496, %v5041, %v5049
        %v5074 = vsel %vm496, %v5042, %v5050
        %v5075 = vsel %vm496, %v5043, %v5051
        %v5076 = vsel %vm496, %v5044, %v5052
        %v5077 = vsel %vm496, %v5045, %v5053
        %v5078 = vsel %vm496, %v5046, %v5054
        %v5079 = vsel %vm496, %v5047, %v5055
        %v5080 = vsel %vm496, %v5056, %v5040
        %v5081 = vsel %vm496, %v5057, %v5041
        %v5082 = vsel %vm496, %v5058, %v5042
        %v5083 = vsel %vm496, %v5059, %v5043
        %v5084 = vsel %vm496, %v5060, %v5044
        %v5085 = vsel %vm496, %v5061, %v5045
        %v5086 = vsel %vm496, %v5062, %v5046
        %v5087 = vsel %vm496, %v5063, %v5047
        %v5088 = vpack.c.bf16 %v5064, %v5072
        %v5089 = vpack.c.bf16 %v5073, %v5080
        %v5090 = vpack.c.bf16 %v5081, %v5065
        %v5091 = vpack.c.bf16 %v5066, %v5074
        %v5092 = vpack.c.bf16 %v5075, %v5082
        %v5093 = vpack.c.bf16 %v5083, %v5067
        %v5094 = vpack.c.bf16 %v5068, %v5076
        %v5095 = vpack.c.bf16 %v5077, %v5084
        %v5096 = vpack.c.bf16 %v5085, %v5069
        %v5097 = vpack.c.bf16 %v5070, %v5078
        %v5098 = vpack.c.bf16 %v5079, %v5086
        %v5099 = vpack.c.bf16 %v5087, %v5071
        %s5100 = scalar_lea.vmem %s3, 448
        %v5101 = vld [vmem:[%s5100] sm:$0xf]
        %v5102 = vld [vmem:[%s5100 + $0x4] sm:$0xf]
        %v5103 = vld [vmem:[%s5100 + $0x8] sm:$0xf]
        %v5104 = vld [vmem:[%s5100 + $0xc] sm:$0xf]
        %v5105 = vld [vmem:[%s5100 + $0x10] sm:$0xf]
        %v5106 = vld [vmem:[%s5100 + $0x14] sm:$0xf]
        %v5107 = vld [vmem:[%s5100 + $0x18] sm:$0xf]
        %v5108 = vld [vmem:[%s5100 + $0x1c] sm:$0xf]
        %v5109 = vld [vmem:[%s5100 + $0x20] sm:$0xf]
        %v5110 = vld [vmem:[%s5100 + $0x24] sm:$0xf]
        %v5111 = vld [vmem:[%s5100 + $0x28] sm:$0xf]
        %v5112 = vld [vmem:[%s5100 + $0x2c] sm:$0xf]
        %v5113 = vld [vmem:[%s5100 + $0x30] sm:$0xf]
        %v5114 = vld [vmem:[%s5100 + $0x34] sm:$0xf]
        %v5115 = vld [vmem:[%s5100 + $0x38] sm:$0xf]
        %v5116 = vld [vmem:[%s5100 + $0x3c] sm:$0xf]
        %v5133 = vunpack.c.l.b16 %v5101
        %v5134 = vunpack.c.l.b16 %v5102
        %v5135 = vunpack.c.l.b16 %v5103
        %v5136 = vunpack.c.l.b16 %v5104
        %v5137 = vunpack.c.l.b16 %v5105
        %v5138 = vunpack.c.l.b16 %v5106
        %v5139 = vunpack.c.l.b16 %v5107
        %v5140 = vunpack.c.l.b16 %v5108
        %v5141 = vunpack.c.l.b16 %v5109
        %v5142 = vunpack.c.l.b16 %v5110
        %v5143 = vunpack.c.l.b16 %v5111
        %v5144 = vunpack.c.l.b16 %v5112
        %v5145 = vunpack.c.l.b16 %v5113
        %v5146 = vunpack.c.l.b16 %v5114
        %v5147 = vunpack.c.l.b16 %v5115
        %v5148 = vunpack.c.l.b16 %v5116
        %v5149 = vpack.c.b16 %v5134, %v5133
        %v5150 = vpack.c.b16 %v5136, %v5135
        %v5151 = vpack.c.b16 %v5138, %v5137
        %v5152 = vpack.c.b16 %v5140, %v5139
        %v5153 = vpack.c.b16 %v5142, %v5141
        %v5154 = vpack.c.b16 %v5144, %v5143
        %v5155 = vpack.c.b16 %v5146, %v5145
        %v5156 = vpack.c.b16 %v5148, %v5147
        %5165 = vmatpush.bf16.msra.mxu0 %v5156
        %5166 = vmatpush.bf16.msra.mxu0 %v5155
        %5167 = vmatpush.bf16.msra.mxu0 %v5154
        %5168 = vmatpush.bf16.msra.mxu0 %v5153
        %5169 = vmatpush.bf16.msra.mxu0 %v5152
        %5170 = vmatpush.bf16.msra.mxu0 %v5151
        %5171 = vmatpush.bf16.msra.mxu0 %v5150
        %5172 = vmatpush.bf16.msra.mxu0 %v5149
        %5173 = vmatmul.bf16.gmra.mxu0 %v5088
        %v5174 = vpop.f32.mrf.mxu0
        %v5175 = vadd.f32 0.0, %v5174
        %v5176 = vpop.f32.mrf.mxu0
        %v5177 = vadd.f32 0.0, %v5176
        %5178 = vmatmul.bf16.gmra.mxu0 %v5089
        %v5179 = vpop.f32.mrf.mxu0
        %v5180 = vadd.f32 0.0, %v5179
        %v5181 = vpop.f32.mrf.mxu0
        %v5182 = vadd.f32 0.0, %v5181
        %5183 = vmatmul.bf16.gmra.mxu0 %v5090
        %v5184 = vpop.f32.mrf.mxu0
        %v5185 = vadd.f32 0.0, %v5184
        %v5186 = vpop.f32.mrf.mxu0
        %v5187 = vadd.f32 0.0, %v5186
        %5188 = vmatmul.bf16.gmra.mxu0 %v5091
        %v5189 = vpop.f32.mrf.mxu0
        %v5190 = vadd.f32 0.0, %v5189
        %v5191 = vpop.f32.mrf.mxu0
        %v5192 = vadd.f32 0.0, %v5191
        %5193 = vmatmul.bf16.gmra.mxu0 %v5092
        %v5194 = vpop.f32.mrf.mxu0
        %v5195 = vadd.f32 0.0, %v5194
        %v5196 = vpop.f32.mrf.mxu0
        %v5197 = vadd.f32 0.0, %v5196
        %5198 = vmatmul.bf16.gmra.mxu0 %v5093
        %v5199 = vpop.f32.mrf.mxu0
        %v5200 = vadd.f32 0.0, %v5199
        %v5201 = vpop.f32.mrf.mxu0
        %v5202 = vadd.f32 0.0, %v5201
        %5203 = vmatmul.bf16.gmra.mxu0 %v5094
        %v5204 = vpop.f32.mrf.mxu0
        %v5205 = vadd.f32 0.0, %v5204
        %v5206 = vpop.f32.mrf.mxu0
        %v5207 = vadd.f32 0.0, %v5206
        %5208 = vmatmul.bf16.gmra.mxu0 %v5095
        %v5209 = vpop.f32.mrf.mxu0
        %v5210 = vadd.f32 0.0, %v5209
        %v5211 = vpop.f32.mrf.mxu0
        %v5212 = vadd.f32 0.0, %v5211
        %5213 = vmatmul.bf16.gmra.mxu0 %v5096
        %v5214 = vpop.f32.mrf.mxu0
        %v5215 = vadd.f32 0.0, %v5214
        %v5216 = vpop.f32.mrf.mxu0
        %v5217 = vadd.f32 0.0, %v5216
        %5218 = vmatmul.bf16.gmra.mxu0 %v5097
        %v5219 = vpop.f32.mrf.mxu0
        %v5220 = vadd.f32 0.0, %v5219
        %v5221 = vpop.f32.mrf.mxu0
        %v5222 = vadd.f32 0.0, %v5221
        %5223 = vmatmul.bf16.gmra.mxu0 %v5098
        %v5224 = vpop.f32.mrf.mxu0
        %v5225 = vadd.f32 0.0, %v5224
        %v5226 = vpop.f32.mrf.mxu0
        %v5227 = vadd.f32 0.0, %v5226
        %5228 = vmatmul.bf16.gmra.mxu0 %v5099
        %v5229 = vpop.f32.mrf.mxu0
        %v5230 = vadd.f32 0.0, %v5229
        %v5231 = vpop.f32.mrf.mxu0
        %v5232 = vadd.f32 0.0, %v5231
        %5233 = vdwg.mxu0
        %v5234 = vld [vmem:[#allocation4] sm:$0xff]
        %v5235 = vld [vmem:[#allocation4 + $0x8] sm:$0xff]
        %v5236 = vld [vmem:[#allocation4 + $0x10] sm:$0xff]
        %v5237 = vld [vmem:[#allocation4 + $0x18] sm:$0xff]
        %v5238 = vld [vmem:[#allocation4 + $0x20] sm:$0xff]
        %v5239 = vld [vmem:[#allocation4 + $0x28] sm:$0xff]
        %v5240 = vld [vmem:[#allocation4 + $0x30] sm:$0xff]
        %v5241 = vld [vmem:[#allocation4 + $0x38] sm:$0xff]
        %v5242 = vld [vmem:[#allocation4 + $0x40] sm:$0xff]
        %v5243 = vld [vmem:[#allocation4 + $0x48] sm:$0xff]
        %v5244 = vld [vmem:[#allocation4 + $0x50] sm:$0xff]
        %v5245 = vld [vmem:[#allocation4 + $0x58] sm:$0xff]
        %v5246 = vld [vmem:[#allocation4 + $0x60] sm:$0xff]
        %v5247 = vld [vmem:[#allocation4 + $0x68] sm:$0xff]
        %v5248 = vld [vmem:[#allocation4 + $0x70] sm:$0xff]
        %v5249 = vld [vmem:[#allocation4 + $0x78] sm:$0xff]
        %v5250 = vld [vmem:[#allocation4 + $0x80] sm:$0xff]
        %v5251 = vld [vmem:[#allocation4 + $0x88] sm:$0xff]
        %v5252 = vld [vmem:[#allocation4 + $0x90] sm:$0xff]
        %v5253 = vld [vmem:[#allocation4 + $0x98] sm:$0xff]
        %v5254 = vld [vmem:[#allocation4 + $0xa0] sm:$0xff]
        %v5255 = vld [vmem:[#allocation4 + $0xa8] sm:$0xff]
        %v5256 = vld [vmem:[#allocation4 + $0xb0] sm:$0xff]
        %v5257 = vld [vmem:[#allocation4 + $0xb8] sm:$0xff]
        %v5258 = vadd.f32 %v5234, %v5175
        %v5259 = vadd.f32 %v5235, %v5177
        %v5260 = vadd.f32 %v5236, %v5180
        %v5261 = vadd.f32 %v5237, %v5182
        %v5262 = vadd.f32 %v5238, %v5185
        %v5263 = vadd.f32 %v5239, %v5187
        %v5264 = vadd.f32 %v5240, %v5190
        %v5265 = vadd.f32 %v5241, %v5192
        %v5266 = vadd.f32 %v5242, %v5195
        %v5267 = vadd.f32 %v5243, %v5197
        %v5268 = vadd.f32 %v5244, %v5200
        %v5269 = vadd.f32 %v5245, %v5202
        %v5270 = vadd.f32 %v5246, %v5205
        %v5271 = vadd.f32 %v5247, %v5207
        %v5272 = vadd.f32 %v5248, %v5210
        %v5273 = vadd.f32 %v5249, %v5212
        %v5274 = vadd.f32 %v5250, %v5215
        %v5275 = vadd.f32 %v5251, %v5217
        %v5276 = vadd.f32 %v5252, %v5220
        %v5277 = vadd.f32 %v5253, %v5222
        %v5278 = vadd.f32 %v5254, %v5225
        %v5279 = vadd.f32 %v5255, %v5227
        %v5280 = vadd.f32 %v5256, %v5230
        %v5281 = vadd.f32 %v5257, %v5232
        %5282 = vst [vmem:[#allocation4] sm:$0xff] %v5258
        %5283 = vst [vmem:[#allocation4 + $0x8] sm:$0xff] %v5259
        %5284 = vst [vmem:[#allocation4 + $0x10] sm:$0xff] %v5260
        %5285 = vst [vmem:[#allocation4 + $0x18] sm:$0xff] %v5261
        %5286 = vst [vmem:[#allocation4 + $0x20] sm:$0xff] %v5262
        %5287 = vst [vmem:[#allocation4 + $0x28] sm:$0xff] %v5263
        %5288 = vst [vmem:[#allocation4 + $0x30] sm:$0xff] %v5264
        %5289 = vst [vmem:[#allocation4 + $0x38] sm:$0xff] %v5265
        %5290 = vst [vmem:[#allocation4 + $0x40] sm:$0xff] %v5266
        %5291 = vst [vmem:[#allocation4 + $0x48] sm:$0xff] %v5267
        %5292 = vst [vmem:[#allocation4 + $0x50] sm:$0xff] %v5268
        %5293 = vst [vmem:[#allocation4 + $0x58] sm:$0xff] %v5269
        %5294 = vst [vmem:[#allocation4 + $0x60] sm:$0xff] %v5270
        %5295 = vst [vmem:[#allocation4 + $0x68] sm:$0xff] %v5271
        %5296 = vst [vmem:[#allocation4 + $0x70] sm:$0xff] %v5272
        %5297 = vst [vmem:[#allocation4 + $0x78] sm:$0xff] %v5273
        %5298 = vst [vmem:[#allocation4 + $0x80] sm:$0xff] %v5274
        %5299 = vst [vmem:[#allocation4 + $0x88] sm:$0xff] %v5275
        %5300 = vst [vmem:[#allocation4 + $0x90] sm:$0xff] %v5276
        %5301 = vst [vmem:[#allocation4 + $0x98] sm:$0xff] %v5277
        %5302 = vst [vmem:[#allocation4 + $0xa0] sm:$0xff] %v5278
        %5303 = vst [vmem:[#allocation4 + $0xa8] sm:$0xff] %v5279
        %5304 = vst [vmem:[#allocation4 + $0xb0] sm:$0xff] %v5280
        %5305 = vst [vmem:[#allocation4 + $0xb8] sm:$0xff] %v5281
        %v5306 = vrot.slane %v4798, 2
        %v5307 = vrot.slane %v4801, 2
        %v5308 = vrot.slane %v4804, 2
        %v5309 = vrot.slane %v4807, 2
        %v5310 = vrot.slane %v4810, 2
        %v5311 = vrot.slane %v4813, 2
        %v5312 = vrot.slane %v4816, 2
        %v5313 = vrot.slane %v4819, 2
        %v5314 = vrot.slane %v4799, 2
        %v5315 = vrot.slane %v4802, 2
        %v5316 = vrot.slane %v4805, 2
        %v5317 = vrot.slane %v4808, 2
        %v5318 = vrot.slane %v4811, 2
        %v5319 = vrot.slane %v4814, 2
        %v5320 = vrot.slane %v4817, 2
        %v5321 = vrot.slane %v4820, 2
        %v5322 = vrot.slane %v4800, 2
        %v5323 = vrot.slane %v4803, 2
        %v5324 = vrot.slane %v4806, 2
        %v5325 = vrot.slane %v4809, 2
        %v5326 = vrot.slane %v4812, 2
        %v5327 = vrot.slane %v4815, 2
        %v5328 = vrot.slane %v4818, 2
        %v5329 = vrot.slane %v4821, 2
        %v5330 = vsel %vm811, %v5314, %v5322
        %v5331 = vsel %vm811, %v5315, %v5323
        %v5332 = vsel %vm811, %v5316, %v5324
        %v5333 = vsel %vm811, %v5317, %v5325
        %v5334 = vsel %vm811, %v5318, %v5326
        %v5335 = vsel %vm811, %v5319, %v5327
        %v5336 = vsel %vm811, %v5320, %v5328
        %v5337 = vsel %vm811, %v5321, %v5329
        %v5338 = vsel %vm811, %v5306, %v5314
        %v5339 = vsel %vm811, %v5307, %v5315
        %v5340 = vsel %vm811, %v5308, %v5316
        %v5341 = vsel %vm811, %v5309, %v5317
        %v5342 = vsel %vm811, %v5310, %v5318
        %v5343 = vsel %vm811, %v5311, %v5319
        %v5344 = vsel %vm811, %v5312, %v5320
        %v5345 = vsel %vm811, %v5313, %v5321
        %v5346 = vsel %vm811, %v5322, %v5306
        %v5347 = vsel %vm811, %v5323, %v5307
        %v5348 = vsel %vm811, %v5324, %v5308
        %v5349 = vsel %vm811, %v5325, %v5309
        %v5350 = vsel %vm811, %v5326, %v5310
        %v5351 = vsel %vm811, %v5327, %v5311
        %v5352 = vsel %vm811, %v5328, %v5312
        %v5353 = vsel %vm811, %v5329, %v5313
        %v5354 = vpack.c.bf16 %v5330, %v5338
        %v5355 = vpack.c.bf16 %v5339, %v5346
        %v5356 = vpack.c.bf16 %v5347, %v5331
        %v5357 = vpack.c.bf16 %v5332, %v5340
        %v5358 = vpack.c.bf16 %v5341, %v5348
        %v5359 = vpack.c.bf16 %v5349, %v5333
        %v5360 = vpack.c.bf16 %v5334, %v5342
        %v5361 = vpack.c.bf16 %v5343, %v5350
        %v5362 = vpack.c.bf16 %v5351, %v5335
        %v5363 = vpack.c.bf16 %v5336, %v5344
        %v5364 = vpack.c.bf16 %v5345, %v5352
        %v5365 = vpack.c.bf16 %v5353, %v5337
        %s5366 = scalar_lea.vmem %s3, 512
        %v5367 = vld [vmem:[%s5366] sm:$0xf]
        %v5368 = vld [vmem:[%s5366 + $0x4] sm:$0xf]
        %v5369 = vld [vmem:[%s5366 + $0x8] sm:$0xf]
        %v5370 = vld [vmem:[%s5366 + $0xc] sm:$0xf]
        %v5371 = vld [vmem:[%s5366 + $0x10] sm:$0xf]
        %v5372 = vld [vmem:[%s5366 + $0x14] sm:$0xf]
        %v5373 = vld [vmem:[%s5366 + $0x18] sm:$0xf]
        %v5374 = vld [vmem:[%s5366 + $0x1c] sm:$0xf]
        %v5375 = vld [vmem:[%s5366 + $0x20] sm:$0xf]
        %v5376 = vld [vmem:[%s5366 + $0x24] sm:$0xf]
        %v5377 = vld [vmem:[%s5366 + $0x28] sm:$0xf]
        %v5378 = vld [vmem:[%s5366 + $0x2c] sm:$0xf]
        %v5379 = vld [vmem:[%s5366 + $0x30] sm:$0xf]
        %v5380 = vld [vmem:[%s5366 + $0x34] sm:$0xf]
        %v5381 = vld [vmem:[%s5366 + $0x38] sm:$0xf]
        %v5382 = vld [vmem:[%s5366 + $0x3c] sm:$0xf]
        %v5399 = vunpack.c.l.b16 %v5367
        %v5400 = vunpack.c.l.b16 %v5368
        %v5401 = vunpack.c.l.b16 %v5369
        %v5402 = vunpack.c.l.b16 %v5370
        %v5403 = vunpack.c.l.b16 %v5371
        %v5404 = vunpack.c.l.b16 %v5372
        %v5405 = vunpack.c.l.b16 %v5373
        %v5406 = vunpack.c.l.b16 %v5374
        %v5407 = vunpack.c.l.b16 %v5375
        %v5408 = vunpack.c.l.b16 %v5376
        %v5409 = vunpack.c.l.b16 %v5377
        %v5410 = vunpack.c.l.b16 %v5378
        %v5411 = vunpack.c.l.b16 %v5379
        %v5412 = vunpack.c.l.b16 %v5380
        %v5413 = vunpack.c.l.b16 %v5381
        %v5414 = vunpack.c.l.b16 %v5382
        %v5415 = vpack.c.b16 %v5400, %v5399
        %v5416 = vpack.c.b16 %v5402, %v5401
        %v5417 = vpack.c.b16 %v5404, %v5403
        %v5418 = vpack.c.b16 %v5406, %v5405
        %v5419 = vpack.c.b16 %v5408, %v5407
        %v5420 = vpack.c.b16 %v5410, %v5409
        %v5421 = vpack.c.b16 %v5412, %v5411
        %v5422 = vpack.c.b16 %v5414, %v5413
        %5431 = vmatpush.bf16.msra.mxu0 %v5422
        %5432 = vmatpush.bf16.msra.mxu0 %v5421
        %5433 = vmatpush.bf16.msra.mxu0 %v5420
        %5434 = vmatpush.bf16.msra.mxu0 %v5419
        %5435 = vmatpush.bf16.msra.mxu0 %v5418
        %5436 = vmatpush.bf16.msra.mxu0 %v5417
        %5437 = vmatpush.bf16.msra.mxu0 %v5416
        %5438 = vmatpush.bf16.msra.mxu0 %v5415
        %5439 = vmatmul.bf16.gmra.mxu0 %v5354
        %v5440 = vpop.f32.mrf.mxu0
        %v5441 = vadd.f32 0.0, %v5440
        %v5442 = vpop.f32.mrf.mxu0
        %v5443 = vadd.f32 0.0, %v5442
        %5444 = vmatmul.bf16.gmra.mxu0 %v5355
        %v5445 = vpop.f32.mrf.mxu0
        %v5446 = vadd.f32 0.0, %v5445
        %v5447 = vpop.f32.mrf.mxu0
        %v5448 = vadd.f32 0.0, %v5447
        %5449 = vmatmul.bf16.gmra.mxu0 %v5356
        %v5450 = vpop.f32.mrf.mxu0
        %v5451 = vadd.f32 0.0, %v5450
        %v5452 = vpop.f32.mrf.mxu0
        %v5453 = vadd.f32 0.0, %v5452
        %5454 = vmatmul.bf16.gmra.mxu0 %v5357
        %v5455 = vpop.f32.mrf.mxu0
        %v5456 = vadd.f32 0.0, %v5455
        %v5457 = vpop.f32.mrf.mxu0
        %v5458 = vadd.f32 0.0, %v5457
        %5459 = vmatmul.bf16.gmra.mxu0 %v5358
        %v5460 = vpop.f32.mrf.mxu0
        %v5461 = vadd.f32 0.0, %v5460
        %v5462 = vpop.f32.mrf.mxu0
        %v5463 = vadd.f32 0.0, %v5462
        %5464 = vmatmul.bf16.gmra.mxu0 %v5359
        %v5465 = vpop.f32.mrf.mxu0
        %v5466 = vadd.f32 0.0, %v5465
        %v5467 = vpop.f32.mrf.mxu0
        %v5468 = vadd.f32 0.0, %v5467
        %5469 = vmatmul.bf16.gmra.mxu0 %v5360
        %v5470 = vpop.f32.mrf.mxu0
        %v5471 = vadd.f32 0.0, %v5470
        %v5472 = vpop.f32.mrf.mxu0
        %v5473 = vadd.f32 0.0, %v5472
        %5474 = vmatmul.bf16.gmra.mxu0 %v5361
        %v5475 = vpop.f32.mrf.mxu0
        %v5476 = vadd.f32 0.0, %v5475
        %v5477 = vpop.f32.mrf.mxu0
        %v5478 = vadd.f32 0.0, %v5477
        %5479 = vmatmul.bf16.gmra.mxu0 %v5362
        %v5480 = vpop.f32.mrf.mxu0
        %v5481 = vadd.f32 0.0, %v5480
        %v5482 = vpop.f32.mrf.mxu0
        %v5483 = vadd.f32 0.0, %v5482
        %5484 = vmatmul.bf16.gmra.mxu0 %v5363
        %v5485 = vpop.f32.mrf.mxu0
        %v5486 = vadd.f32 0.0, %v5485
        %v5487 = vpop.f32.mrf.mxu0
        %v5488 = vadd.f32 0.0, %v5487
        %5489 = vmatmul.bf16.gmra.mxu0 %v5364
        %v5490 = vpop.f32.mrf.mxu0
        %v5491 = vadd.f32 0.0, %v5490
        %v5492 = vpop.f32.mrf.mxu0
        %v5493 = vadd.f32 0.0, %v5492
        %5494 = vmatmul.bf16.gmra.mxu0 %v5365
        %v5495 = vpop.f32.mrf.mxu0
        %v5496 = vadd.f32 0.0, %v5495
        %v5497 = vpop.f32.mrf.mxu0
        %v5498 = vadd.f32 0.0, %v5497
        %5499 = vdwg.mxu0
        %v5500 = vld [vmem:[#allocation4] sm:$0xff]
        %v5501 = vld [vmem:[#allocation4 + $0x8] sm:$0xff]
        %v5502 = vld [vmem:[#allocation4 + $0x10] sm:$0xff]
        %v5503 = vld [vmem:[#allocation4 + $0x18] sm:$0xff]
        %v5504 = vld [vmem:[#allocation4 + $0x20] sm:$0xff]
        %v5505 = vld [vmem:[#allocation4 + $0x28] sm:$0xff]
        %v5506 = vld [vmem:[#allocation4 + $0x30] sm:$0xff]
        %v5507 = vld [vmem:[#allocation4 + $0x38] sm:$0xff]
        %v5508 = vld [vmem:[#allocation4 + $0x40] sm:$0xff]
        %v5509 = vld [vmem:[#allocation4 + $0x48] sm:$0xff]
        %v5510 = vld [vmem:[#allocation4 + $0x50] sm:$0xff]
        %v5511 = vld [vmem:[#allocation4 + $0x58] sm:$0xff]
        %v5512 = vld [vmem:[#allocation4 + $0x60] sm:$0xff]
        %v5513 = vld [vmem:[#allocation4 + $0x68] sm:$0xff]
        %v5514 = vld [vmem:[#allocation4 + $0x70] sm:$0xff]
        %v5515 = vld [vmem:[#allocation4 + $0x78] sm:$0xff]
        %v5516 = vld [vmem:[#allocation4 + $0x80] sm:$0xff]
        %v5517 = vld [vmem:[#allocation4 + $0x88] sm:$0xff]
        %v5518 = vld [vmem:[#allocation4 + $0x90] sm:$0xff]
        %v5519 = vld [vmem:[#allocation4 + $0x98] sm:$0xff]
        %v5520 = vld [vmem:[#allocation4 + $0xa0] sm:$0xff]
        %v5521 = vld [vmem:[#allocation4 + $0xa8] sm:$0xff]
        %v5522 = vld [vmem:[#allocation4 + $0xb0] sm:$0xff]
        %v5523 = vld [vmem:[#allocation4 + $0xb8] sm:$0xff]
        %v5524 = vadd.f32 %v5500, %v5441
        %v5525 = vadd.f32 %v5501, %v5443
        %v5526 = vadd.f32 %v5502, %v5446
        %v5527 = vadd.f32 %v5503, %v5448
        %v5528 = vadd.f32 %v5504, %v5451
        %v5529 = vadd.f32 %v5505, %v5453
        %v5530 = vadd.f32 %v5506, %v5456
        %v5531 = vadd.f32 %v5507, %v5458
        %v5532 = vadd.f32 %v5508, %v5461
        %v5533 = vadd.f32 %v5509, %v5463
        %v5534 = vadd.f32 %v5510, %v5466
        %v5535 = vadd.f32 %v5511, %v5468
        %v5536 = vadd.f32 %v5512, %v5471
        %v5537 = vadd.f32 %v5513, %v5473
        %v5538 = vadd.f32 %v5514, %v5476
        %v5539 = vadd.f32 %v5515, %v5478
        %v5540 = vadd.f32 %v5516, %v5481
        %v5541 = vadd.f32 %v5517, %v5483
        %v5542 = vadd.f32 %v5518, %v5486
        %v5543 = vadd.f32 %v5519, %v5488
        %v5544 = vadd.f32 %v5520, %v5491
        %v5545 = vadd.f32 %v5521, %v5493
        %v5546 = vadd.f32 %v5522, %v5496
        %v5547 = vadd.f32 %v5523, %v5498
        %5548 = vst [vmem:[#allocation4] sm:$0xff] %v5524
        %5549 = vst [vmem:[#allocation4 + $0x8] sm:$0xff] %v5525
        %5550 = vst [vmem:[#allocation4 + $0x10] sm:$0xff] %v5526
        %5551 = vst [vmem:[#allocation4 + $0x18] sm:$0xff] %v5527
        %5552 = vst [vmem:[#allocation4 + $0x20] sm:$0xff] %v5528
        %5553 = vst [vmem:[#allocation4 + $0x28] sm:$0xff] %v5529
        %5554 = vst [vmem:[#allocation4 + $0x30] sm:$0xff] %v5530
        %5555 = vst [vmem:[#allocation4 + $0x38] sm:$0xff] %v5531
        %5556 = vst [vmem:[#allocation4 + $0x40] sm:$0xff] %v5532
        %5557 = vst [vmem:[#allocation4 + $0x48] sm:$0xff] %v5533
        %5558 = vst [vmem:[#allocation4 + $0x50] sm:$0xff] %v5534
        %5559 = vst [vmem:[#allocation4 + $0x58] sm:$0xff] %v5535
        %5560 = vst [vmem:[#allocation4 + $0x60] sm:$0xff] %v5536
        %5561 = vst [vmem:[#allocation4 + $0x68] sm:$0xff] %v5537
        %5562 = vst [vmem:[#allocation4 + $0x70] sm:$0xff] %v5538
        %5563 = vst [vmem:[#allocation4 + $0x78] sm:$0xff] %v5539
        %5564 = vst [vmem:[#allocation4 + $0x80] sm:$0xff] %v5540
        %5565 = vst [vmem:[#allocation4 + $0x88] sm:$0xff] %v5541
        %5566 = vst [vmem:[#allocation4 + $0x90] sm:$0xff] %v5542
        %5567 = vst [vmem:[#allocation4 + $0x98] sm:$0xff] %v5543
        %5568 = vst [vmem:[#allocation4 + $0xa0] sm:$0xff] %v5544
        %5569 = vst [vmem:[#allocation4 + $0xa8] sm:$0xff] %v5545
        %5570 = vst [vmem:[#allocation4 + $0xb0] sm:$0xff] %v5546
        %5571 = vst [vmem:[#allocation4 + $0xb8] sm:$0xff] %v5547
        %v5572 = vld [vmem:[%s2013] sm:$0xff]
        %v5573 = vld [vmem:[%s2013 + $0x8] sm:$0xff]
        %v5574 = vld [vmem:[%s2013 + $0x10] sm:$0xff]
        %v5575 = vld [vmem:[%s2013 + $0x18] sm:$0xff]
        %v5576 = vld [vmem:[%s2013 + $0x20] sm:$0xff]
        %v5577 = vld [vmem:[%s2013 + $0x28] sm:$0xff]
        %v5578 = vld [vmem:[%s2013 + $0x30] sm:$0xff]
        %v5579 = vld [vmem:[%s2013 + $0x38] sm:$0xff]
        %v5580 = vld [vmem:[%s2013 + $0x40] sm:$0xff]
        %v5581 = vld [vmem:[%s2013 + $0x48] sm:$0xff]
        %v5582 = vld [vmem:[%s2013 + $0x50] sm:$0xff]
        %v5583 = vld [vmem:[%s2013 + $0x58] sm:$0xff]
        %v5584 = vld [vmem:[%s2013 + $0x60] sm:$0xff]
        %v5585 = vld [vmem:[%s2013 + $0x68] sm:$0xff]
        %v5586 = vld [vmem:[%s2013 + $0x70] sm:$0xff]
        %v5587 = vld [vmem:[%s2013 + $0x78] sm:$0xff]
        %v5588 = vld [vmem:[%s2013 + $0x80] sm:$0xff]
        %v5589 = vld [vmem:[%s2013 + $0x88] sm:$0xff]
        %v5590 = vld [vmem:[%s2013 + $0x90] sm:$0xff]
        %v5591 = vld [vmem:[%s2013 + $0x98] sm:$0xff]
        %v5592 = vld [vmem:[%s2013 + $0xa0] sm:$0xff]
        %v5593 = vld [vmem:[%s2013 + $0xa8] sm:$0xff]
        %v5594 = vld [vmem:[%s2013 + $0xb0] sm:$0xff]
        %v5595 = vld [vmem:[%s2013 + $0xb8] sm:$0xff]
        %v5596 = vrot.slane %v5572, 1
        %v5597 = vrot.slane %v5575, 1
        %v5598 = vrot.slane %v5578, 1
        %v5599 = vrot.slane %v5581, 1
        %v5600 = vrot.slane %v5584, 1
        %v5601 = vrot.slane %v5587, 1
        %v5602 = vrot.slane %v5590, 1
        %v5603 = vrot.slane %v5593, 1
        %v5604 = vrot.slane %v5573, 1
        %v5605 = vrot.slane %v5576, 1
        %v5606 = vrot.slane %v5579, 1
        %v5607 = vrot.slane %v5582, 1
        %v5608 = vrot.slane %v5585, 1
        %v5609 = vrot.slane %v5588, 1
        %v5610 = vrot.slane %v5591, 1
        %v5611 = vrot.slane %v5594, 1
        %v5612 = vrot.slane %v5574, 1
        %v5613 = vrot.slane %v5577, 1
        %v5614 = vrot.slane %v5580, 1
        %v5615 = vrot.slane %v5583, 1
        %v5616 = vrot.slane %v5586, 1
        %v5617 = vrot.slane %v5589, 1
        %v5618 = vrot.slane %v5592, 1
        %v5619 = vrot.slane %v5595, 1
        %v5620 = vsel %vm496, %v5604, %v5612
        %v5621 = vsel %vm496, %v5605, %v5613
        %v5622 = vsel %vm496, %v5606, %v5614
        %v5623 = vsel %vm496, %v5607, %v5615
        %v5624 = vsel %vm496, %v5608, %v5616
        %v5625 = vsel %vm496, %v5609, %v5617
        %v5626 = vsel %vm496, %v5610, %v5618
        %v5627 = vsel %vm496, %v5611, %v5619
        %v5628 = vsel %vm496, %v5596, %v5604
        %v5629 = vsel %vm496, %v5597, %v5605
        %v5630 = vsel %vm496, %v5598, %v5606
        %v5631 = vsel %vm496, %v5599, %v5607
        %v5632 = vsel %vm496, %v5600, %v5608
        %v5633 = vsel %vm496, %v5601, %v5609
        %v5634 = vsel %vm496, %v5602, %v5610
        %v5635 = vsel %vm496, %v5603, %v5611
        %v5636 = vld [vmem:[#allocation4] sm:$0xff]
        %v5637 = vld [vmem:[#allocation4 + $0x8] sm:$0xff]
        %v5638 = vld [vmem:[#allocation4 + $0x18] sm:$0xff]
        %v5639 = vld [vmem:[#allocation4 + $0x20] sm:$0xff]
        %v5640 = vld [vmem:[#allocation4 + $0x30] sm:$0xff]
        %v5641 = vld [vmem:[#allocation4 + $0x38] sm:$0xff]
        %v5642 = vld [vmem:[#allocation4 + $0x48] sm:$0xff]
        %v5643 = vld [vmem:[#allocation4 + $0x50] sm:$0xff]
        %v5644 = vld [vmem:[#allocation4 + $0x60] sm:$0xff]
        %v5645 = vld [vmem:[#allocation4 + $0x68] sm:$0xff]
        %v5646 = vld [vmem:[#allocation4 + $0x78] sm:$0xff]
        %v5647 = vld [vmem:[#allocation4 + $0x80] sm:$0xff]
        %v5648 = vld [vmem:[#allocation4 + $0x90] sm:$0xff]
        %v5649 = vld [vmem:[#allocation4 + $0x98] sm:$0xff]
        %v5650 = vld [vmem:[#allocation4 + $0xa8] sm:$0xff]
        %v5651 = vld [vmem:[#allocation4 + $0xb0] sm:$0xff]
        %v5652 = vld [vmem:[%s4] sm:$0x1]
        %v5654 = vperm.slane %v5652, 0
        %v5656 = vadd.f32 %v5636, %v5654
        %v5657 = vadd.f32 %v5637, %v5654
        %v5658 = vadd.f32 %v5638, %v5654
        %v5659 = vadd.f32 %v5639, %v5654
        %v5660 = vadd.f32 %v5640, %v5654
        %v5661 = vadd.f32 %v5641, %v5654
        %v5662 = vadd.f32 %v5642, %v5654
        %v5663 = vadd.f32 %v5643, %v5654
        %v5664 = vadd.f32 %v5644, %v5654
        %v5665 = vadd.f32 %v5645, %v5654
        %v5666 = vadd.f32 %v5646, %v5654
        %v5667 = vadd.f32 %v5647, %v5654
        %v5668 = vadd.f32 %v5648, %v5654
        %v5669 = vadd.f32 %v5649, %v5654
        %v5670 = vadd.f32 %v5650, %v5654
        %v5671 = vadd.f32 %v5651, %v5654
        %v5672 = vadd.f32 %v5656, %v5628
        %v5673 = vadd.f32 %v5657, %v5620
        %v5674 = vadd.f32 %v5658, %v5629
        %v5675 = vadd.f32 %v5659, %v5621
        %v5676 = vadd.f32 %v5660, %v5630
        %v5677 = vadd.f32 %v5661, %v5622
        %v5678 = vadd.f32 %v5662, %v5631
        %v5679 = vadd.f32 %v5663, %v5623
        %v5680 = vadd.f32 %v5664, %v5632
        %v5681 = vadd.f32 %v5665, %v5624
        %v5682 = vadd.f32 %v5666, %v5633
        %v5683 = vadd.f32 %v5667, %v5625
        %v5684 = vadd.f32 %v5668, %v5634
        %v5685 = vadd.f32 %v5669, %v5626
        %v5686 = vadd.f32 %v5670, %v5635
        %v5687 = vadd.f32 %v5671, %v5627
        %v5688 = vmax.f32 %v5672, 0.0
        %v5689 = vmax.f32 %v5673, 0.0
        %v5690 = vmax.f32 %v5674, 0.0
        %v5691 = vmax.f32 %v5675, 0.0
        %v5692 = vmax.f32 %v5676, 0.0
        %v5693 = vmax.f32 %v5677, 0.0
        %v5694 = vmax.f32 %v5678, 0.0
        %v5695 = vmax.f32 %v5679, 0.0
        %v5696 = vmax.f32 %v5680, 0.0
        %v5697 = vmax.f32 %v5681, 0.0
        %v5698 = vmax.f32 %v5682, 0.0
        %v5699 = vmax.f32 %v5683, 0.0
        %v5700 = vmax.f32 %v5684, 0.0
        %v5701 = vmax.f32 %v5685, 0.0
        %v5702 = vmax.f32 %v5686, 0.0
        %v5703 = vmax.f32 %v5687, 0.0
        %5704 = vst [vmem:[%s231] sm:$0xff] %v5688
        %5705 = vst [vmem:[%s231 + $0x8] sm:$0xff] %v5689
        %5706 = vst [vmem:[%s231 + $0x10] sm:$0xff] %v5690
        %5707 = vst [vmem:[%s231 + $0x18] sm:$0xff] %v5691
        %5708 = vst [vmem:[%s231 + $0x20] sm:$0xff] %v5692
        %5709 = vst [vmem:[%s231 + $0x28] sm:$0xff] %v5693
        %5710 = vst [vmem:[%s231 + $0x30] sm:$0xff] %v5694
        %5711 = vst [vmem:[%s231 + $0x38] sm:$0xff] %v5695
        %5712 = vst [vmem:[%s231 + $0x40] sm:$0xff] %v5696
        %5713 = vst [vmem:[%s231 + $0x48] sm:$0xff] %v5697
        %5714 = vst [vmem:[%s231 + $0x50] sm:$0xff] %v5698
        %5715 = vst [vmem:[%s231 + $0x58] sm:$0xff] %v5699
        %5716 = vst [vmem:[%s231 + $0x60] sm:$0xff] %v5700
        %5717 = vst [vmem:[%s231 + $0x68] sm:$0xff] %v5701
        %5718 = vst [vmem:[%s231 + $0x70] sm:$0xff] %v5702
        %5719 = vst [vmem:[%s231 + $0x78] sm:$0xff] %v5703
        %s5720 = sand.u32 %s151, 1
        %s5721 = scalar_lea.sflag [#allocation6], %s5720
        %s5722 = sand.u32 %s151, 1
        %s5723 = smul.addr %s5722, 128
        %s5724 = scalar_lea.vmem [#allocation5], %s5723
        // Predicated region
        $region41: #{basic_block.1} parent=39 // pred_check
          %p5725 = pneg %p161
        $region42: #{basic_block.1} parent=39 // pred_check_branch
          %5727 = sbr.rel (%p5725) target = $region44
        $region43: #{basic_block.1} parent=39 // pred_region
          %s5728 = smul.u32 8, %s24
          %5730 = vsyncadd %s5721, 0
          %s5731 = smul.addr %s5728, 2
          %s5732 = smul.addr %s23, 32
          %s5733 = sadd.s32 %s5731, %s5732
          %s5734 = smul.addr %s5733, 8
          %s5735 = scalar_lea.hbm %s5, %s5734
          %s5736 = sshll.u32 %s5724, 4
          %s5737 = int_to_ptr.vmem [resolvable:$true] %s5736
          %s5738 = sshll.u32 %s5735, 4
          %s5739 = int_to_ptr.hbm [resolvable:$true] %s5738
          %5744 = dma.vmem_to_hbm [thread:$0]  %s5737, 2048, %s5739, %s5721, 128, 128, 8
        $region44: #{basic_block.1} parent=39 // pred_fallthru
          _
      $region40: #{basic_block.1} parent=5 // pred_fallthru
        _
      %p5745 = scmp.le.s32.totalorder 2, %s14
      // Predicated region
      $region45: #{basic_block.1} parent=5 // pred_check
        %p5746 = pneg %p5745
      $region46: #{basic_block.1} parent=5 // pred_check_branch
        %5748 = sbr.rel (%p5746) target = $region48
      $region47: #{basic_block.1} parent=5 // pred_region
        %s5749 = ssub.s32 %s14, 2
        // Predicated region
        $region49: #{basic_block.1} parent=47 // pred_check
          %p5750 = pneg %p167
        $region50: #{basic_block.1} parent=47 // pred_check_branch
          %5752 = sbr.rel (%p5750) target = $region52
        $region51: #{basic_block.1} parent=47 // pred_region
          %s5753 = sand.u32 %s152, 1
          %s5754 = scalar_lea.sflag [#allocation6], %s5753
          %s5755 = sand.u32 %s152, 1
          %s5756 = smul.addr %s5755, 128
          %s5757 = scalar_lea.vmem [#allocation5], %s5756
          %5759 = dma.done %s5754, 2048
        $region52: #{basic_block.1} parent=47 // pred_fallthru
          _
      $region48: #{basic_block.1} parent=5 // pred_fallthru
        _
    $region6: #{basic_block.1} parent=1 // loop_footer
      %s18 = sadd.s32 1, %s14
    $region7: #{basic_block.1} parent=1 // loop_footer_branch
      %13 = sbr.rel target = $region3
    $region8: #{basic_block.1} parent=1 // loop_exit
      _
    %5760 = vsyncpa [#allocation6], 1
    %s5761 = scalar_lea.sflag [#allocation6], 1
    %5762 = vsyncpa %s5761, 1

</llo_original>
